<compile_context>
chip_gen: v6e
topology: v6e:2x2x1
jax: 0.10.0
libtpu: 0.0.40
codegen_flags: <defaults>
</compile_context>

<pallas_src>
import functools

import numpy as np

import jax
import jax.numpy as jnp
from jax.experimental import pallas as pl
from jax.experimental.pallas import tpu as pltpu

_BT = 8  # images per grid step (selector matrices are built for this tile size)


# ----------------------------------------------------------------------------
# One-off host-side weight lowering ("prepare" step)
# ----------------------------------------------------------------------------
def prepare_params(params, *, bt=_BT):
    f32 = np.float32
    bf16 = jnp.bfloat16

    w1 = np.asarray(params["conv1_w"], f32)            # (6, 3, 5, 5)
    w2 = np.asarray(params["conv2_w"], f32)            # (16, 6, 5, 5)
    conv1_b = np.asarray(params["conv1_b"], f32)
    conv2_b = np.asarray(params["conv2_b"], f32)
    fc1_w = np.asarray(params["fc1_w"], f32)            # (120, 400)
    fc1_b = np.asarray(params["fc1_b"], f32)
    fc2_w = np.asarray(params["fc2_w"], f32)            # (84, 120)
    fc2_b = np.asarray(params["fc2_b"], f32)
    fc3_w = np.asarray(params["fc3_w"], f32)            # (feat, 84)
    fc3_b = np.asarray(params["fc3_b"], f32)
    feat = fc3_w.shape[0]
    fpad = ((feat + 127) // 128) * 128

    # conv1 banded (Toeplitz) weights, one slab per kernel row ki:
    #   rows = input lanes (j*3 + c, padded 96->128)
    #   cols = conv1 output lanes (co*28 + jo, padded 168->256)
    a1 = np.zeros((5, 128, 256), f32)
    for ki in range(5):
        for co in range(6):
            for jo in range(28):
                for c in range(3):
                    for kj in range(5):
                        a1[ki, (jo + kj) * 3 + c, co * 28 + jo] = w1[co, c, ki, kj]
    b1 = np.zeros((1, 256), f32)
    for co in range(6):
        b1[0, co * 28:(co + 1) * 28] = conv1_b[co]

    # conv2: input lanes are pooled conv1 lanes c*28 + 2*jp (pool column
    # down-sample absorbed here); output lanes co*10 + jo (padded 160->256).
    a2 = np.zeros((5, 256, 256), f32)
    for ki in range(5):
        for co in range(16):
            for jo in range(10):
                for c in range(6):
                    for kj in range(5):
                        a2[ki, c * 28 + 2 * (jo + kj), co * 10 + jo] = w2[co, c, ki, kj]
    b2 = np.zeros((1, 256), f32)
    for co in range(16):
        b2[0, co * 10:(co + 1) * 10] = conv2_b[co]

    # Row-pair max-pool selectors for the batch-stacked row layouts (fixed bt).
    # Extra zero rows pad the pooled row counts to multiples of 8.
    se1 = np.zeros((bt * 16 + 8, bt * 40 - 8), f32)
    so1 = np.zeros_like(se1)
    for b in range(bt):
        for r in range(14):
            se1[b * 16 + r, b * 40 + 2 * r] = 1.0
            so1[b * 16 + r, b * 40 + 2 * r + 1] = 1.0
    se2 = np.zeros((bt * 8 + 8, bt * 16), f32)
    so2 = np.zeros_like(se2)
    for b in range(bt):
        for r in range(5):
            se2[b * 8 + r, b * 16 + 2 * r] = 1.0
            so2[b * 8 + r, b * 16 + 2 * r + 1] = 1.0

    # Lane-shift matrix: (x @ s)[:, l] == x[:, l + 1]  (column-pair max-pool).
    s = np.eye(256, k=-1).astype(f32)

    # fc1 with the pool2 column-downsample AND the PyTorch NCHW flatten order
    # (idx = c*25 + i*5 + j) absorbed; one slab per pooled row i.
    wf1 = np.zeros((5, 256, 128), f32)
    for i in range(5):
        for c in range(16):
            for j in range(5):
                wf1[i, c * 10 + 2 * j, :120] = fc1_w[:, c * 25 + i * 5 + j]
    bf1 = np.zeros((1, 128), f32)
    bf1[0, :120] = fc1_b
    wf2 = np.zeros((128, 128), f32)
    wf2[:120, :84] = fc2_w.T
    bf2 = np.zeros((1, 128), f32)
    bf2[0, :84] = fc2_b
    wf3 = np.zeros((128, fpad), f32)
    wf3[:84, :feat] = fc3_w.T
    bf3 = np.zeros((1, fpad), f32)
    bf3[0, :feat] = fc3_b

    return {
        "a1": jnp.asarray(a1, bf16), "b1": jnp.asarray(b1),
        "se1": jnp.asarray(se1, bf16), "so1": jnp.asarray(so1, bf16),
        "s": jnp.asarray(s, bf16),
        "a2": jnp.asarray(a2, bf16), "b2": jnp.asarray(b2),
        "se2": jnp.asarray(se2, bf16), "so2": jnp.asarray(so2, bf16),
        "wf1": jnp.asarray(wf1, bf16), "bf1": jnp.asarray(bf1),
        "wf2": jnp.asarray(wf2, bf16), "bf2": jnp.asarray(bf2),
        "wf3": jnp.asarray(wf3, bf16), "bf3": jnp.asarray(bf3),
        "gamma": jnp.asarray(np.asarray(params["bn_gamma"], f32).reshape(1, feat)),
        "beta": jnp.asarray(np.asarray(params["bn_beta"], f32).reshape(1, feat)),
    }


# ----------------------------------------------------------------------------
# The fused Pallas kernel (one batch tile of `bt` images per grid step)
# ----------------------------------------------------------------------------
def _lenet_kernel(x_ref, a1_ref, b1_ref, se1_ref, so1_ref, s_ref,
                  a2_ref, b2_ref, se2_ref, so2_ref,
                  wf1_ref, bf1_ref, wf2_ref, bf2_ref, wf3_ref, bf3_ref,
                  out_ref, p1_ref, p2_ref, *, bt):
    f32, bf16 = jnp.float32, jnp.bfloat16
    R1 = bt * 40 - 8     # conv1 rows carried (valid rows: b*40 + [0, 28))
    R2 = bt * 16         # conv2 rows carried (valid rows: b*16 + [0, 10))
    RO = bt * 8          # fc rows carried    (valid row:  b*8)

    def mm(a, b):
        return jnp.dot(a, b, preferred_element_type=f32)

    # ---- conv1: 5 banded MXU matmuls over the batch-stacked row slab ----
    v = mm(x_ref[pl.ds(0, R1), :].astype(bf16), a1_ref[0])
    for ki in range(1, 5):
        v = v + mm(x_ref[pl.ds(ki, R1), :].astype(bf16), a1_ref[ki])
    vb = v.astype(bf16)
    # Fused ReLU + 2x2 max-pool: row-pair max via one-hot selectors (MXU),
    # column-pair max via the lane-shift matmul; bias/ReLU after (they commute
    # with max because the bias is constant over a pooling window).
    r = jnp.maximum(mm(se1_ref[...], vb), mm(so1_ref[...], vb))
    r = jnp.maximum(r, mm(r.astype(bf16), s_ref[...]))
    p1_ref[...] = jnp.maximum(r + b1_ref[...], 0.0)      # (bt*16 + 8, 256)

    # ---- conv2 (reads only even conv1 columns; absorbed in a2) ----
    v = mm(p1_ref[pl.ds(0, R2), :].astype(bf16), a2_ref[0])
    for ki in range(1, 5):
        v = v + mm(p1_ref[pl.ds(ki, R2), :].astype(bf16), a2_ref[ki])
    vb = v.astype(bf16)
    r = jnp.maximum(mm(se2_ref[...], vb), mm(so2_ref[...], vb))
    r = jnp.maximum(r, mm(r.astype(bf16), s_ref[...]))
    p2_ref[...] = jnp.maximum(r + b2_ref[...], 0.0)      # (bt*8 + 8, 256)

    # ---- fc1 (pool2 column-downsample + NCHW flatten order absorbed in wf1) ----
    h = mm(p2_ref[pl.ds(0, RO), :].astype(bf16), wf1_ref[0])
    for i in range(1, 5):
        h = h + mm(p2_ref[pl.ds(i, RO), :].astype(bf16), wf1_ref[i])
    h = jnp.maximum(h + bf1_ref[...], 0.0)                # (bt*8, 128)
    # ---- fc2 + ReLU ----
    h = jnp.maximum(mm(h.astype(bf16), wf2_ref[...]) + bf2_ref[...], 0.0)
    # ---- fc3 linear (BatchNorm runs outside the kernel) ----
    # Row b*8 of the output block carries image b; other rows are harmless junk.
    out_ref[...] = mm(h.astype(bf16), wf3_ref[...]) + bf3_ref[...]


# ----------------------------------------------------------------------------
# Wrapper
# ----------------------------------------------------------------------------
def lenet_forward(prep, x, *, bt=_BT):
    n = x.shape[0]
    assert x.shape[1:] == (3, 32, 32), "LeNet expects 3x32x32 inputs"
    n_pad = ((n + bt - 1) // bt) * bt
    tiles = n_pad // bt
    fpad = prep["bf3"].shape[1]
    feat = prep["gamma"].shape[1]

    # NCHW -> per-image row slabs: rows padded 32->40 (zero), lanes (j, c)
    # padded 96->128 (zero), then batch-stacked to a single 2-D slab so each
    # grid step gets a lane-dense (bt*40, 128) input block.
    xs = jnp.transpose(x, (0, 2, 3, 1)).reshape(n, 32, 96)
    xs = jnp.pad(xs, ((0, n_pad - n), (0, 8), (0, 32)))
    xs = xs.reshape(n_pad * 40, 128)

    def const_spec(a):
        nd = a.ndim
        return pl.BlockSpec(a.shape, lambda t, _n=nd: (0,) * _n)

    weights = (prep["a1"], prep["b1"], prep["se1"], prep["so1"], prep["s"],
               prep["a2"], prep["b2"], prep["se2"], prep["so2"],
               prep["wf1"], prep["bf1"], prep["wf2"], prep["bf2"],
               prep["wf3"], prep["bf3"])

    out_full = pl.pallas_call(
        functools.partial(_lenet_kernel, bt=bt),
        out_shape=jax.ShapeDtypeStruct((n_pad * 8, fpad), jnp.float32),
        grid=(tiles,),
        in_specs=[pl.BlockSpec((bt * 40, 128), lambda t: (t, 0))]
                 + [const_spec(w) for w in weights],
        out_specs=pl.BlockSpec((bt * 8, fpad), lambda t: (t, 0)),
        scratch_shapes=[
            pltpu.VMEM((bt * 16 + 8, 256), jnp.float32),   # pooled conv1 rows
            pltpu.VMEM((bt * 8 + 8, 256), jnp.float32),    # pooled conv2 rows
        ],
        compiler_params=pltpu.CompilerParams(
            dimension_semantics=("parallel",)),
    )(xs, *weights)

    # Row b*8 of every (bt*8)-row block is image b's fc3 output.
    z = out_full.reshape(n_pad, 8, fpad)[:n, 0, :feat]

    # BatchNorm1d, training mode: batch mean / biased variance, eps=1e-5.
    # Done in plain JAX (full-batch reduction) so the kernel can tile the batch.
    # TODO(synk): running_mean/running_var updates are not emitted.
    mean = jnp.mean(z, axis=0, keepdims=True)
    var = jnp.mean(jnp.square(z - mean), axis=0, keepdims=True)
    zhat = (z - mean) * jax.lax.rsqrt(var + 1e-5)
    return zhat * prep["gamma"] + prep["beta"]


# ----------------------------------------------------------------------------
# Parameters (PyTorch layouts) + demo
# ----------------------------------------------------------------------------
def init_lenet_params(key, feat_dim=256):
    ks = jax.random.split(key, 10)
    scale = 0.05
    return {
        "conv1_w": scale * jax.random.normal(ks[0], (6, 3, 5, 5), jnp.float32),
        "conv1_b": scale * jax.random.normal(ks[1], (6,), jnp.float32),
        "conv2_w": scale * jax.random.normal(ks[2], (16, 6, 5, 5), jnp.float32),
        "conv2_b": scale * jax.random.normal(ks[3], (16,), jnp.float32),
        "fc1_w": scale * jax.random.normal(ks[4], (120, 16 * 5 * 5), jnp.float32),
        "fc1_b": scale * jax.random.normal(ks[5], (120,), jnp.float32),
        "fc2_w": scale * jax.random.normal(ks[6], (84, 120), jnp.float32),
        "fc2_b": scale * jax.random.normal(ks[7], (84,), jnp.float32),
        "fc3_w": scale * jax.random.normal(ks[8], (feat_dim, 84), jnp.float32),
        "fc3_b": scale * jax.random.normal(ks[9], (feat_dim,), jnp.float32),
        # BatchNorm1d default init: weight=1, bias=0
        "bn_gamma": jnp.ones((feat_dim,), jnp.float32),
        "bn_beta": jnp.zeros((feat_dim,), jnp.float32),
    }


if __name__ == "__main__":
    key = jax.random.PRNGKey(0)
    pkey, xkey = jax.random.split(key)

    feat_dim = 256
    params = init_lenet_params(pkey, feat_dim=feat_dim)
    prep = prepare_params(params)          # one-off host-side weight lowering

    x = jax.random.normal(xkey, (2, 3, 32, 32), jnp.float32)

    fwd = jax.jit(lenet_forward)
    out = jax.block_until_ready(fwd(prep, x))

    assert out.shape == (2, feat_dim), out.shape
    assert bool(jnp.all(jnp.isfinite(out)))
    print("KERNEL_OK")
</pallas_src>

<mosaic_0001>
module attributes {stable_mosaic.version = 11 : i64} {
  func.func @_lenet_kernel(%arg0: i32, %arg1: memref<320x128xf32, #tpu.memory_space<vmem>>, %arg2: memref<5x128x256xbf16, #tpu.memory_space<vmem>>, %arg3: memref<1x256xf32, #tpu.memory_space<vmem>>, %arg4: memref<136x312xbf16, #tpu.memory_space<vmem>>, %arg5: memref<136x312xbf16, #tpu.memory_space<vmem>>, %arg6: memref<256x256xbf16, #tpu.memory_space<vmem>>, %arg7: memref<5x256x256xbf16, #tpu.memory_space<vmem>>, %arg8: memref<1x256xf32, #tpu.memory_space<vmem>>, %arg9: memref<72x128xbf16, #tpu.memory_space<vmem>>, %arg10: memref<72x128xbf16, #tpu.memory_space<vmem>>, %arg11: memref<5x256x128xbf16, #tpu.memory_space<vmem>>, %arg12: memref<1x128xf32, #tpu.memory_space<vmem>>, %arg13: memref<128x128xbf16, #tpu.memory_space<vmem>>, %arg14: memref<1x128xf32, #tpu.memory_space<vmem>>, %arg15: memref<128x256xbf16, #tpu.memory_space<vmem>>, %arg16: memref<1x256xf32, #tpu.memory_space<vmem>>, %arg17: memref<64x256xf32, #tpu.memory_space<vmem>>, %arg18: memref<136x256xf32, #tpu.memory_space<vmem>>, %arg19: memref<72x256xf32, #tpu.memory_space<vmem>>) attributes {dimension_semantics = [#tpu.dimension_semantics<parallel>], iteration_bounds = array<i64: 1>, scalar_prefetch = 0 : i64, scratch_operands = 2 : i64, tpu.core_type = #tpu.core_type<tc>, window_params = [{transform_indices = @transform_0, window_bounds = array<i64: 320, 128>}, {pipeline_mode = #tpu.pipeline_mode<synchronous>, transform_indices = @transform_1, window_bounds = array<i64: 5, 128, 256>}, {pipeline_mode = #tpu.pipeline_mode<synchronous>, transform_indices = @transform_2, window_bounds = array<i64: 1, 256>}, {pipeline_mode = #tpu.pipeline_mode<synchronous>, transform_indices = @transform_3, window_bounds = array<i64: 136, 312>}, {pipeline_mode = #tpu.pipeline_mode<synchronous>, transform_indices = @transform_4, window_bounds = array<i64: 136, 312>}, {pipeline_mode = #tpu.pipeline_mode<synchronous>, transform_indices = @transform_5, window_bounds = array<i64: 256, 256>}, {pipeline_mode = #tpu.pipeline_mode<synchronous>, transform_indices = @transform_6, window_bounds = array<i64: 5, 256, 256>}, {pipeline_mode = #tpu.pipeline_mode<synchronous>, transform_indices = @transform_7, window_bounds = array<i64: 1, 256>}, {pipeline_mode = #tpu.pipeline_mode<synchronous>, transform_indices = @transform_8, window_bounds = array<i64: 72, 128>}, {pipeline_mode = #tpu.pipeline_mode<synchronous>, transform_indices = @transform_9, window_bounds = array<i64: 72, 128>}, {pipeline_mode = #tpu.pipeline_mode<synchronous>, transform_indices = @transform_10, window_bounds = array<i64: 5, 256, 128>}, {pipeline_mode = #tpu.pipeline_mode<synchronous>, transform_indices = @transform_11, window_bounds = array<i64: 1, 128>}, {pipeline_mode = #tpu.pipeline_mode<synchronous>, transform_indices = @transform_12, window_bounds = array<i64: 128, 128>}, {pipeline_mode = #tpu.pipeline_mode<synchronous>, transform_indices = @transform_13, window_bounds = array<i64: 1, 128>}, {pipeline_mode = #tpu.pipeline_mode<synchronous>, transform_indices = @transform_14, window_bounds = array<i64: 128, 256>}, {pipeline_mode = #tpu.pipeline_mode<synchronous>, transform_indices = @transform_15, window_bounds = array<i64: 1, 256>}, {transform_indices = @transform_16, window_bounds = array<i64: 64, 256>}]} {
    %c0 = arith.constant 0 : index
    %c0_0 = arith.constant 0 : index
    %0 = vector.load %arg1[%c0, %c0_0] : memref<320x128xf32, #tpu.memory_space<vmem>>, vector<312x128xf32>
    %1 = arith.truncf %0 : vector<312x128xf32> to vector<312x128xbf16>
    %c0_1 = arith.constant 0 : index
    %c0_2 = arith.constant 0 : index
    %c0_3 = arith.constant 0 : index
    %2 = vector.load %arg2[%c0_1, %c0_2, %c0_3] : memref<5x128x256xbf16, #tpu.memory_space<vmem>>, vector<1x128x256xbf16>
    %3 = vector.shape_cast %2 : vector<1x128x256xbf16> to vector<128x256xbf16>
    %cst = arith.constant dense<0.000000e+00> : vector<312x256xf32>
    %4 = tpu.matmul %1, %3, %cst {dimension_numbers = #tpu.dot_dimension_numbers<[1], [0], [0], [1], [0, 0, 1, 1], [], []>} : vector<312x128xbf16>, vector<128x256xbf16>, vector<312x256xf32> -> vector<312x256xf32>
    %c1 = arith.constant 1 : index
    %c0_4 = arith.constant 0 : index
    %5 = vector.load %arg1[%c1, %c0_4] : memref<320x128xf32, #tpu.memory_space<vmem>>, vector<312x128xf32>
    %6 = arith.truncf %5 : vector<312x128xf32> to vector<312x128xbf16>
    %c1_5 = arith.constant 1 : index
    %c0_6 = arith.constant 0 : index
    %c0_7 = arith.constant 0 : index
    %7 = vector.load %arg2[%c1_5, %c0_6, %c0_7] : memref<5x128x256xbf16, #tpu.memory_space<vmem>>, vector<1x128x256xbf16>
    %8 = vector.shape_cast %7 : vector<1x128x256xbf16> to vector<128x256xbf16>
    %cst_8 = arith.constant dense<0.000000e+00> : vector<312x256xf32>
    %9 = tpu.matmul %6, %8, %cst_8 {dimension_numbers = #tpu.dot_dimension_numbers<[1], [0], [0], [1], [0, 0, 1, 1], [], []>} : vector<312x128xbf16>, vector<128x256xbf16>, vector<312x256xf32> -> vector<312x256xf32>
    %10 = arith.addf %4, %9 : vector<312x256xf32>
    %c2 = arith.constant 2 : index
    %c0_9 = arith.constant 0 : index
    %11 = vector.load %arg1[%c2, %c0_9] : memref<320x128xf32, #tpu.memory_space<vmem>>, vector<312x128xf32>
    %12 = arith.truncf %11 : vector<312x128xf32> to vector<312x128xbf16>
    %c2_10 = arith.constant 2 : index
    %c0_11 = arith.constant 0 : index
    %c0_12 = arith.constant 0 : index
    %13 = vector.load %arg2[%c2_10, %c0_11, %c0_12] : memref<5x128x256xbf16, #tpu.memory_space<vmem>>, vector<1x128x256xbf16>
    %14 = vector.shape_cast %13 : vector<1x128x256xbf16> to vector<128x256xbf16>
    %cst_13 = arith.constant dense<0.000000e+00> : vector<312x256xf32>
    %15 = tpu.matmul %12, %14, %cst_13 {dimension_numbers = #tpu.dot_dimension_numbers<[1], [0], [0], [1], [0, 0, 1, 1], [], []>} : vector<312x128xbf16>, vector<128x256xbf16>, vector<312x256xf32> -> vector<312x256xf32>
    %16 = arith.addf %10, %15 : vector<312x256xf32>
    %c3 = arith.constant 3 : index
    %c0_14 = arith.constant 0 : index
    %17 = vector.load %arg1[%c3, %c0_14] : memref<320x128xf32, #tpu.memory_space<vmem>>, vector<312x128xf32>
    %18 = arith.truncf %17 : vector<312x128xf32> to vector<312x128xbf16>
    %c3_15 = arith.constant 3 : index
    %c0_16 = arith.constant 0 : index
    %c0_17 = arith.constant 0 : index
    %19 = vector.load %arg2[%c3_15, %c0_16, %c0_17] : memref<5x128x256xbf16, #tpu.memory_space<vmem>>, vector<1x128x256xbf16>
    %20 = vector.shape_cast %19 : vector<1x128x256xbf16> to vector<128x256xbf16>
    %cst_18 = arith.constant dense<0.000000e+00> : vector<312x256xf32>
    %21 = tpu.matmul %18, %20, %cst_18 {dimension_numbers = #tpu.dot_dimension_numbers<[1], [0], [0], [1], [0, 0, 1, 1], [], []>} : vector<312x128xbf16>, vector<128x256xbf16>, vector<312x256xf32> -> vector<312x256xf32>
    %22 = arith.addf %16, %21 : vector<312x256xf32>
    %c4 = arith.constant 4 : index
    %c0_19 = arith.constant 0 : index
    %23 = vector.load %arg1[%c4, %c0_19] : memref<320x128xf32, #tpu.memory_space<vmem>>, vector<312x128xf32>
    %24 = arith.truncf %23 : vector<312x128xf32> to vector<312x128xbf16>
    %c4_20 = arith.constant 4 : index
    %c0_21 = arith.constant 0 : index
    %c0_22 = arith.constant 0 : index
    %25 = vector.load %arg2[%c4_20, %c0_21, %c0_22] : memref<5x128x256xbf16, #tpu.memory_space<vmem>>, vector<1x128x256xbf16>
    %26 = vector.shape_cast %25 : vector<1x128x256xbf16> to vector<128x256xbf16>
    %cst_23 = arith.constant dense<0.000000e+00> : vector<312x256xf32>
    %27 = tpu.matmul %24, %26, %cst_23 {dimension_numbers = #tpu.dot_dimension_numbers<[1], [0], [0], [1], [0, 0, 1, 1], [], []>} : vector<312x128xbf16>, vector<128x256xbf16>, vector<312x256xf32> -> vector<312x256xf32>
    %28 = arith.addf %22, %27 : vector<312x256xf32>
    %29 = arith.truncf %28 : vector<312x256xf32> to vector<312x256xbf16>
    %c0_24 = arith.constant 0 : index
    %c0_25 = arith.constant 0 : index
    %30 = vector.load %arg4[%c0_24, %c0_25] : memref<136x312xbf16, #tpu.memory_space<vmem>>, vector<136x312xbf16>
    %cst_26 = arith.constant dense<0.000000e+00> : vector<136x256xf32>
    %31 = tpu.matmul %30, %29, %cst_26 {dimension_numbers = #tpu.dot_dimension_numbers<[1], [0], [0], [1], [0, 0, 1, 1], [], []>} : vector<136x312xbf16>, vector<312x256xbf16>, vector<136x256xf32> -> vector<136x256xf32>
    %c0_27 = arith.constant 0 : index
    %c0_28 = arith.constant 0 : index
    %32 = vector.load %arg5[%c0_27, %c0_28] : memref<136x312xbf16, #tpu.memory_space<vmem>>, vector<136x312xbf16>
    %cst_29 = arith.constant dense<0.000000e+00> : vector<136x256xf32>
    %33 = tpu.matmul %32, %29, %cst_29 {dimension_numbers = #tpu.dot_dimension_numbers<[1], [0], [0], [1], [0, 0, 1, 1], [], []>} : vector<136x312xbf16>, vector<312x256xbf16>, vector<136x256xf32> -> vector<136x256xf32>
    %34 = arith.maximumf %31, %33 : vector<136x256xf32>
    %35 = arith.truncf %34 : vector<136x256xf32> to vector<136x256xbf16>
    %c0_30 = arith.constant 0 : index
    %c0_31 = arith.constant 0 : index
    %36 = vector.load %arg6[%c0_30, %c0_31] : memref<256x256xbf16, #tpu.memory_space<vmem>>, vector<256x256xbf16>
    %cst_32 = arith.constant dense<0.000000e+00> : vector<136x256xf32>
    %37 = tpu.matmul %35, %36, %cst_32 {dimension_numbers = #tpu.dot_dimension_numbers<[1], [0], [0], [1], [0, 0, 1, 1], [], []>} : vector<136x256xbf16>, vector<256x256xbf16>, vector<136x256xf32> -> vector<136x256xf32>
    %38 = arith.maximumf %34, %37 : vector<136x256xf32>
    %c0_33 = arith.constant 0 : index
    %c0_34 = arith.constant 0 : index
    %39 = vector.load %arg3[%c0_33, %c0_34] : memref<1x256xf32, #tpu.memory_space<vmem>>, vector<1x256xf32>
    %40 = vector.broadcast %39 : vector<1x256xf32> to vector<136x256xf32>
    %41 = arith.addf %38, %40 : vector<136x256xf32>
    %cst_35 = arith.constant 0.000000e+00 : f32
    %42 = vector.broadcast %cst_35 : f32 to vector<136x256xf32>
    %43 = arith.maximumf %41, %42 : vector<136x256xf32>
    %c0_36 = arith.constant 0 : index
    %c0_37 = arith.constant 0 : index
    %44 = vector.load %arg18[%c0_36, %c0_37] : memref<136x256xf32, #tpu.memory_space<vmem>>, vector<136x256xf32>
    tpu.vector_store %arg18[%c0_36, %c0_37], %43 {strides = array<i32>} : memref<136x256xf32, #tpu.memory_space<vmem>>, vector<136x256xf32>,
    %c0_38 = arith.constant 0 : index
    %c0_39 = arith.constant 0 : index
    %45 = vector.load %arg18[%c0_38, %c0_39] : memref<136x256xf32, #tpu.memory_space<vmem>>, vector<128x256xf32>
    %46 = arith.truncf %45 : vector<128x256xf32> to vector<128x256xbf16>
    %c0_40 = arith.constant 0 : index
    %c0_41 = arith.constant 0 : index
    %c0_42 = arith.constant 0 : index
    %47 = vector.load %arg7[%c0_40, %c0_41, %c0_42] : memref<5x256x256xbf16, #tpu.memory_space<vmem>>, vector<1x256x256xbf16>
    %48 = vector.shape_cast %47 : vector<1x256x256xbf16> to vector<256x256xbf16>
    %cst_43 = arith.constant dense<0.000000e+00> : vector<128x256xf32>
    %49 = tpu.matmul %46, %48, %cst_43 {dimension_numbers = #tpu.dot_dimension_numbers<[1], [0], [0], [1], [0, 0, 1, 1], [], []>} : vector<128x256xbf16>, vector<256x256xbf16>, vector<128x256xf32> -> vector<128x256xf32>
    %c1_44 = arith.constant 1 : index
    %c0_45 = arith.constant 0 : index
    %50 = vector.load %arg18[%c1_44, %c0_45] : memref<136x256xf32, #tpu.memory_space<vmem>>, vector<128x256xf32>
    %51 = arith.truncf %50 : vector<128x256xf32> to vector<128x256xbf16>
    %c1_46 = arith.constant 1 : index
    %c0_47 = arith.constant 0 : index
    %c0_48 = arith.constant 0 : index
    %52 = vector.load %arg7[%c1_46, %c0_47, %c0_48] : memref<5x256x256xbf16, #tpu.memory_space<vmem>>, vector<1x256x256xbf16>
    %53 = vector.shape_cast %52 : vector<1x256x256xbf16> to vector<256x256xbf16>
    %cst_49 = arith.constant dense<0.000000e+00> : vector<128x256xf32>
    %54 = tpu.matmul %51, %53, %cst_49 {dimension_numbers = #tpu.dot_dimension_numbers<[1], [0], [0], [1], [0, 0, 1, 1], [], []>} : vector<128x256xbf16>, vector<256x256xbf16>, vector<128x256xf32> -> vector<128x256xf32>
    %55 = arith.addf %49, %54 : vector<128x256xf32>
    %c2_50 = arith.constant 2 : index
    %c0_51 = arith.constant 0 : index
    %56 = vector.load %arg18[%c2_50, %c0_51] : memref<136x256xf32, #tpu.memory_space<vmem>>, vector<128x256xf32>
    %57 = arith.truncf %56 : vector<128x256xf32> to vector<128x256xbf16>
    %c2_52 = arith.constant 2 : index
    %c0_53 = arith.constant 0 : index
    %c0_54 = arith.constant 0 : index
    %58 = vector.load %arg7[%c2_52, %c0_53, %c0_54] : memref<5x256x256xbf16, #tpu.memory_space<vmem>>, vector<1x256x256xbf16>
    %59 = vector.shape_cast %58 : vector<1x256x256xbf16> to vector<256x256xbf16>
    %cst_55 = arith.constant dense<0.000000e+00> : vector<128x256xf32>
    %60 = tpu.matmul %57, %59, %cst_55 {dimension_numbers = #tpu.dot_dimension_numbers<[1], [0], [0], [1], [0, 0, 1, 1], [], []>} : vector<128x256xbf16>, vector<256x256xbf16>, vector<128x256xf32> -> vector<128x256xf32>
    %61 = arith.addf %55, %60 : vector<128x256xf32>
    %c3_56 = arith.constant 3 : index
    %c0_57 = arith.constant 0 : index
    %62 = vector.load %arg18[%c3_56, %c0_57] : memref<136x256xf32, #tpu.memory_space<vmem>>, vector<128x256xf32>
    %63 = arith.truncf %62 : vector<128x256xf32> to vector<128x256xbf16>
    %c3_58 = arith.constant 3 : index
    %c0_59 = arith.constant 0 : index
    %c0_60 = arith.constant 0 : index
    %64 = vector.load %arg7[%c3_58, %c0_59, %c0_60] : memref<5x256x256xbf16, #tpu.memory_space<vmem>>, vector<1x256x256xbf16>
    %65 = vector.shape_cast %64 : vector<1x256x256xbf16> to vector<256x256xbf16>
    %cst_61 = arith.constant dense<0.000000e+00> : vector<128x256xf32>
    %66 = tpu.matmul %63, %65, %cst_61 {dimension_numbers = #tpu.dot_dimension_numbers<[1], [0], [0], [1], [0, 0, 1, 1], [], []>} : vector<128x256xbf16>, vector<256x256xbf16>, vector<128x256xf32> -> vector<128x256xf32>
    %67 = arith.addf %61, %66 : vector<128x256xf32>
    %c4_62 = arith.constant 4 : index
    %c0_63 = arith.constant 0 : index
    %68 = vector.load %arg18[%c4_62, %c0_63] : memref<136x256xf32, #tpu.memory_space<vmem>>, vector<128x256xf32>
    %69 = arith.truncf %68 : vector<128x256xf32> to vector<128x256xbf16>
    %c4_64 = arith.constant 4 : index
    %c0_65 = arith.constant 0 : index
    %c0_66 = arith.constant 0 : index
    %70 = vector.load %arg7[%c4_64, %c0_65, %c0_66] : memref<5x256x256xbf16, #tpu.memory_space<vmem>>, vector<1x256x256xbf16>
    %71 = vector.shape_cast %70 : vector<1x256x256xbf16> to vector<256x256xbf16>
    %cst_67 = arith.constant dense<0.000000e+00> : vector<128x256xf32>
    %72 = tpu.matmul %69, %71, %cst_67 {dimension_numbers = #tpu.dot_dimension_numbers<[1], [0], [0], [1], [0, 0, 1, 1], [], []>} : vector<128x256xbf16>, vector<256x256xbf16>, vector<128x256xf32> -> vector<128x256xf32>
    %73 = arith.addf %67, %72 : vector<128x256xf32>
    %74 = arith.truncf %73 : vector<128x256xf32> to vector<128x256xbf16>
    %c0_68 = arith.constant 0 : index
    %c0_69 = arith.constant 0 : index
    %75 = vector.load %arg9[%c0_68, %c0_69] : memref<72x128xbf16, #tpu.memory_space<vmem>>, vector<72x128xbf16>
    %cst_70 = arith.constant dense<0.000000e+00> : vector<72x256xf32>
    %76 = tpu.matmul %75, %74, %cst_70 {dimension_numbers = #tpu.dot_dimension_numbers<[1], [0], [0], [1], [0, 0, 1, 1], [], []>} : vector<72x128xbf16>, vector<128x256xbf16>, vector<72x256xf32> -> vector<72x256xf32>
    %c0_71 = arith.constant 0 : index
    %c0_72 = arith.constant 0 : index
    %77 = vector.load %arg10[%c0_71, %c0_72] : memref<72x128xbf16, #tpu.memory_space<vmem>>, vector<72x128xbf16>
    %cst_73 = arith.constant dense<0.000000e+00> : vector<72x256xf32>
    %78 = tpu.matmul %77, %74, %cst_73 {dimension_numbers = #tpu.dot_dimension_numbers<[1], [0], [0], [1], [0, 0, 1, 1], [], []>} : vector<72x128xbf16>, vector<128x256xbf16>, vector<72x256xf32> -> vector<72x256xf32>
    %79 = arith.maximumf %76, %78 : vector<72x256xf32>
    %80 = arith.truncf %79 : vector<72x256xf32> to vector<72x256xbf16>
    %c0_74 = arith.constant 0 : index
    %c0_75 = arith.constant 0 : index
    %81 = vector.load %arg6[%c0_74, %c0_75] : memref<256x256xbf16, #tpu.memory_space<vmem>>, vector<256x256xbf16>
    %cst_76 = arith.constant dense<0.000000e+00> : vector<72x256xf32>
    %82 = tpu.matmul %80, %81, %cst_76 {dimension_numbers = #tpu.dot_dimension_numbers<[1], [0], [0], [1], [0, 0, 1, 1], [], []>} : vector<72x256xbf16>, vector<256x256xbf16>, vector<72x256xf32> -> vector<72x256xf32>
    %83 = arith.maximumf %79, %82 : vector<72x256xf32>
    %c0_77 = arith.constant 0 : index
    %c0_78 = arith.constant 0 : index
    %84 = vector.load %arg8[%c0_77, %c0_78] : memref<1x256xf32, #tpu.memory_space<vmem>>, vector<1x256xf32>
    %85 = vector.broadcast %84 : vector<1x256xf32> to vector<72x256xf32>
    %86 = arith.addf %83, %85 : vector<72x256xf32>
    %cst_79 = arith.constant 0.000000e+00 : f32
    %87 = vector.broadcast %cst_79 : f32 to vector<72x256xf32>
    %88 = arith.maximumf %86, %87 : vector<72x256xf32>
    %c0_80 = arith.constant 0 : index
    %c0_81 = arith.constant 0 : index
    %89 = vector.load %arg19[%c0_80, %c0_81] : memref<72x256xf32, #tpu.memory_space<vmem>>, vector<72x256xf32>
    tpu.vector_store %arg19[%c0_80, %c0_81], %88 {strides = array<i32>} : memref<72x256xf32, #tpu.memory_space<vmem>>, vector<72x256xf32>,
    %c0_82 = arith.constant 0 : index
    %c0_83 = arith.constant 0 : index
    %90 = vector.load %arg19[%c0_82, %c0_83] : memref<72x256xf32, #tpu.memory_space<vmem>>, vector<64x256xf32>
    %91 = arith.truncf %90 : vector<64x256xf32> to vector<64x256xbf16>
    %c0_84 = arith.constant 0 : index
    %c0_85 = arith.constant 0 : index
    %c0_86 = arith.constant 0 : index
    %92 = vector.load %arg11[%c0_84, %c0_85, %c0_86] : memref<5x256x128xbf16, #tpu.memory_space<vmem>>, vector<1x256x128xbf16>
    %93 = vector.shape_cast %92 : vector<1x256x128xbf16> to vector<256x128xbf16>
    %cst_87 = arith.constant dense<0.000000e+00> : vector<64x128xf32>
    %94 = tpu.matmul %91, %93, %cst_87 {dimension_numbers = #tpu.dot_dimension_numbers<[1], [0], [0], [1], [0, 0, 1, 1], [], []>} : vector<64x256xbf16>, vector<256x128xbf16>, vector<64x128xf32> -> vector<64x128xf32>
    %c1_88 = arith.constant 1 : index
    %c0_89 = arith.constant 0 : index
    %95 = vector.load %arg19[%c1_88, %c0_89] : memref<72x256xf32, #tpu.memory_space<vmem>>, vector<64x256xf32>
    %96 = arith.truncf %95 : vector<64x256xf32> to vector<64x256xbf16>
    %c1_90 = arith.constant 1 : index
    %c0_91 = arith.constant 0 : index
    %c0_92 = arith.constant 0 : index
    %97 = vector.load %arg11[%c1_90, %c0_91, %c0_92] : memref<5x256x128xbf16, #tpu.memory_space<vmem>>, vector<1x256x128xbf16>
    %98 = vector.shape_cast %97 : vector<1x256x128xbf16> to vector<256x128xbf16>
    %cst_93 = arith.constant dense<0.000000e+00> : vector<64x128xf32>
    %99 = tpu.matmul %96, %98, %cst_93 {dimension_numbers = #tpu.dot_dimension_numbers<[1], [0], [0], [1], [0, 0, 1, 1], [], []>} : vector<64x256xbf16>, vector<256x128xbf16>, vector<64x128xf32> -> vector<64x128xf32>
    %100 = arith.addf %94, %99 : vector<64x128xf32>
    %c2_94 = arith.constant 2 : index
    %c0_95 = arith.constant 0 : index
    %101 = vector.load %arg19[%c2_94, %c0_95] : memref<72x256xf32, #tpu.memory_space<vmem>>, vector<64x256xf32>
    %102 = arith.truncf %101 : vector<64x256xf32> to vector<64x256xbf16>
    %c2_96 = arith.constant 2 : index
    %c0_97 = arith.constant 0 : index
    %c0_98 = arith.constant 0 : index
    %103 = vector.load %arg11[%c2_96, %c0_97, %c0_98] : memref<5x256x128xbf16, #tpu.memory_space<vmem>>, vector<1x256x128xbf16>
    %104 = vector.shape_cast %103 : vector<1x256x128xbf16> to vector<256x128xbf16>
    %cst_99 = arith.constant dense<0.000000e+00> : vector<64x128xf32>
    %105 = tpu.matmul %102, %104, %cst_99 {dimension_numbers = #tpu.dot_dimension_numbers<[1], [0], [0], [1], [0, 0, 1, 1], [], []>} : vector<64x256xbf16>, vector<256x128xbf16>, vector<64x128xf32> -> vector<64x128xf32>
    %106 = arith.addf %100, %105 : vector<64x128xf32>
    %c3_100 = arith.constant 3 : index
    %c0_101 = arith.constant 0 : index
    %107 = vector.load %arg19[%c3_100, %c0_101] : memref<72x256xf32, #tpu.memory_space<vmem>>, vector<64x256xf32>
    %108 = arith.truncf %107 : vector<64x256xf32> to vector<64x256xbf16>
    %c3_102 = arith.constant 3 : index
    %c0_103 = arith.constant 0 : index
    %c0_104 = arith.constant 0 : index
    %109 = vector.load %arg11[%c3_102, %c0_103, %c0_104] : memref<5x256x128xbf16, #tpu.memory_space<vmem>>, vector<1x256x128xbf16>
    %110 = vector.shape_cast %109 : vector<1x256x128xbf16> to vector<256x128xbf16>
    %cst_105 = arith.constant dense<0.000000e+00> : vector<64x128xf32>
    %111 = tpu.matmul %108, %110, %cst_105 {dimension_numbers = #tpu.dot_dimension_numbers<[1], [0], [0], [1], [0, 0, 1, 1], [], []>} : vector<64x256xbf16>, vector<256x128xbf16>, vector<64x128xf32> -> vector<64x128xf32>
    %112 = arith.addf %106, %111 : vector<64x128xf32>
    %c4_106 = arith.constant 4 : index
    %c0_107 = arith.constant 0 : index
    %113 = vector.load %arg19[%c4_106, %c0_107] : memref<72x256xf32, #tpu.memory_space<vmem>>, vector<64x256xf32>
    %114 = arith.truncf %113 : vector<64x256xf32> to vector<64x256xbf16>
    %c4_108 = arith.constant 4 : index
    %c0_109 = arith.constant 0 : index
    %c0_110 = arith.constant 0 : index
    %115 = vector.load %arg11[%c4_108, %c0_109, %c0_110] : memref<5x256x128xbf16, #tpu.memory_space<vmem>>, vector<1x256x128xbf16>
    %116 = vector.shape_cast %115 : vector<1x256x128xbf16> to vector<256x128xbf16>
    %cst_111 = arith.constant dense<0.000000e+00> : vector<64x128xf32>
    %117 = tpu.matmul %114, %116, %cst_111 {dimension_numbers = #tpu.dot_dimension_numbers<[1], [0], [0], [1], [0, 0, 1, 1], [], []>} : vector<64x256xbf16>, vector<256x128xbf16>, vector<64x128xf32> -> vector<64x128xf32>
    %118 = arith.addf %112, %117 : vector<64x128xf32>
    %c0_112 = arith.constant 0 : index
    %c0_113 = arith.constant 0 : index
    %119 = vector.load %arg12[%c0_112, %c0_113] : memref<1x128xf32, #tpu.memory_space<vmem>>, vector<1x128xf32>
    %120 = vector.broadcast %119 : vector<1x128xf32> to vector<64x128xf32>
    %121 = arith.addf %118, %120 : vector<64x128xf32>
    %cst_114 = arith.constant 0.000000e+00 : f32
    %122 = vector.broadcast %cst_114 : f32 to vector<64x128xf32>
    %123 = arith.maximumf %121, %122 : vector<64x128xf32>
    %124 = arith.truncf %123 : vector<64x128xf32> to vector<64x128xbf16>
    %c0_115 = arith.constant 0 : index
    %c0_116 = arith.constant 0 : index
    %125 = vector.load %arg13[%c0_115, %c0_116] : memref<128x128xbf16, #tpu.memory_space<vmem>>, vector<128x128xbf16>
    %cst_117 = arith.constant dense<0.000000e+00> : vector<64x128xf32>
    %126 = tpu.matmul %124, %125, %cst_117 {dimension_numbers = #tpu.dot_dimension_numbers<[1], [0], [0], [1], [0, 0, 1, 1], [], []>} : vector<64x128xbf16>, vector<128x128xbf16>, vector<64x128xf32> -> vector<64x128xf32>
    %c0_118 = arith.constant 0 : index
    %c0_119 = arith.constant 0 : index
    %127 = vector.load %arg14[%c0_118, %c0_119] : memref<1x128xf32, #tpu.memory_space<vmem>>, vector<1x128xf32>
    %128 = vector.broadcast %127 : vector<1x128xf32> to vector<64x128xf32>
    %129 = arith.addf %126, %128 : vector<64x128xf32>
    %cst_120 = arith.constant 0.000000e+00 : f32
    %130 = vector.broadcast %cst_120 : f32 to vector<64x128xf32>
    %131 = arith.maximumf %129, %130 : vector<64x128xf32>
    %132 = arith.truncf %131 : vector<64x128xf32> to vector<64x128xbf16>
    %c0_121 = arith.constant 0 : index
    %c0_122 = arith.constant 0 : index
    %133 = vector.load %arg15[%c0_121, %c0_122] : memref<128x256xbf16, #tpu.memory_space<vmem>>, vector<128x256xbf16>
    %cst_123 = arith.constant dense<0.000000e+00> : vector<64x256xf32>
    %134 = tpu.matmul %132, %133, %cst_123 {dimension_numbers = #tpu.dot_dimension_numbers<[1], [0], [0], [1], [0, 0, 1, 1], [], []>} : vector<64x128xbf16>, vector<128x256xbf16>, vector<64x256xf32> -> vector<64x256xf32>
    %c0_124 = arith.constant 0 : index
    %c0_125 = arith.constant 0 : index
    %135 = vector.load %arg16[%c0_124, %c0_125] : memref<1x256xf32, #tpu.memory_space<vmem>>, vector<1x256xf32>
    %136 = vector.broadcast %135 : vector<1x256xf32> to vector<64x256xf32>
    %137 = arith.addf %134, %136 : vector<64x256xf32>
    %c0_126 = arith.constant 0 : index
    %c0_127 = arith.constant 0 : index
    %138 = vector.load %arg17[%c0_126, %c0_127] : memref<64x256xf32, #tpu.memory_space<vmem>>, vector<64x256xf32>
    tpu.vector_store %arg17[%c0_126, %c0_127], %137 {strides = array<i32>} : memref<64x256xf32, #tpu.memory_space<vmem>>, vector<64x256xf32>,
    return
  }
  func.func @transform_0(%arg0: i32) -> (i32, i32) {
    %c0_i32 = arith.constant 0 : i32
    %c0_i32_0 = arith.constant 0 : i32
    return %arg0, %c0_i32 : i32, i32
  }
  func.func @transform_1(%arg0: i32) -> (i32, i32, i32) {
    %c0_i32 = arith.constant 0 : i32
    %c0_i32_0 = arith.constant 0 : i32
    %c0_i32_1 = arith.constant 0 : i32
    %c0_i32_2 = arith.constant 0 : i32
    return %c0_i32, %c0_i32_0, %c0_i32_1 : i32, i32, i32
  }
  func.func @transform_2(%arg0: i32) -> (i32, i32) {
    %c0_i32 = arith.constant 0 : i32
    %c0_i32_0 = arith.constant 0 : i32
    %c0_i32_1 = arith.constant 0 : i32
    return %c0_i32, %c0_i32_0 : i32, i32
  }
  func.func @transform_3(%arg0: i32) -> (i32, i32) {
    %c0_i32 = arith.constant 0 : i32
    %c0_i32_0 = arith.constant 0 : i32
    %c0_i32_1 = arith.constant 0 : i32
    return %c0_i32, %c0_i32_0 : i32, i32
  }
  func.func @transform_4(%arg0: i32) -> (i32, i32) {
    %c0_i32 = arith.constant 0 : i32
    %c0_i32_0 = arith.constant 0 : i32
    %c0_i32_1 = arith.constant 0 : i32
    return %c0_i32, %c0_i32_0 : i32, i32
  }
  func.func @transform_5(%arg0: i32) -> (i32, i32) {
    %c0_i32 = arith.constant 0 : i32
    %c0_i32_0 = arith.constant 0 : i32
    %c0_i32_1 = arith.constant 0 : i32
    return %c0_i32, %c0_i32_0 : i32, i32
  }
  func.func @transform_6(%arg0: i32) -> (i32, i32, i32) {
    %c0_i32 = arith.constant 0 : i32
    %c0_i32_0 = arith.constant 0 : i32
    %c0_i32_1 = arith.constant 0 : i32
    %c0_i32_2 = arith.constant 0 : i32
    return %c0_i32, %c0_i32_0, %c0_i32_1 : i32, i32, i32
  }
  func.func @transform_7(%arg0: i32) -> (i32, i32) {
    %c0_i32 = arith.constant 0 : i32
    %c0_i32_0 = arith.constant 0 : i32
    %c0_i32_1 = arith.constant 0 : i32
    return %c0_i32, %c0_i32_0 : i32, i32
  }
  func.func @transform_8(%arg0: i32) -> (i32, i32) {
    %c0_i32 = arith.constant 0 : i32
    %c0_i32_0 = arith.constant 0 : i32
    %c0_i32_1 = arith.constant 0 : i32
    return %c0_i32, %c0_i32_0 : i32, i32
  }
  func.func @transform_9(%arg0: i32) -> (i32, i32) {
    %c0_i32 = arith.constant 0 : i32
    %c0_i32_0 = arith.constant 0 : i32
    %c0_i32_1 = arith.constant 0 : i32
    return %c0_i32, %c0_i32_0 : i32, i32
  }
  func.func @transform_10(%arg0: i32) -> (i32, i32, i32) {
    %c0_i32 = arith.constant 0 : i32
    %c0_i32_0 = arith.constant 0 : i32
    %c0_i32_1 = arith.constant 0 : i32
    %c0_i32_2 = arith.constant 0 : i32
    return %c0_i32, %c0_i32_0, %c0_i32_1 : i32, i32, i32
  }
  func.func @transform_11(%arg0: i32) -> (i32, i32) {
    %c0_i32 = arith.constant 0 : i32
    %c0_i32_0 = arith.constant 0 : i32
    %c0_i32_1 = arith.constant 0 : i32
    return %c0_i32, %c0_i32_0 : i32, i32
  }
  func.func @transform_12(%arg0: i32) -> (i32, i32) {
    %c0_i32 = arith.constant 0 : i32
    %c0_i32_0 = arith.constant 0 : i32
    %c0_i32_1 = arith.constant 0 : i32
    return %c0_i32, %c0_i32_0 : i32, i32
  }
  func.func @transform_13(%arg0: i32) -> (i32, i32) {
    %c0_i32 = arith.constant 0 : i32
    %c0_i32_0 = arith.constant 0 : i32
    %c0_i32_1 = arith.constant 0 : i32
    return %c0_i32, %c0_i32_0 : i32, i32
  }
  func.func @transform_14(%arg0: i32) -> (i32, i32) {
    %c0_i32 = arith.constant 0 : i32
    %c0_i32_0 = arith.constant 0 : i32
    %c0_i32_1 = arith.constant 0 : i32
    return %c0_i32, %c0_i32_0 : i32, i32
  }
  func.func @transform_15(%arg0: i32) -> (i32, i32) {
    %c0_i32 = arith.constant 0 : i32
    %c0_i32_0 = arith.constant 0 : i32
    %c0_i32_1 = arith.constant 0 : i32
    return %c0_i32, %c0_i32_0 : i32, i32
  }
  func.func @transform_16(%arg0: i32) -> (i32, i32) {
    %c0_i32 = arith.constant 0 : i32
    %c0_i32_0 = arith.constant 0 : i32
    return %arg0, %c0_i32 : i32, i32
  }
}

</mosaic_0001>

<llo_original>
// kernel: lenet_forward.1
$region0: #{lenet_forward.1}
  #allocation0 [shape = 'u32[]', space=smem, size = 0x4, offset = 0x4, fixed_abs, tag = 'smem constant byte address 0x4 - core index']
  #allocation1 [shape = 'u32[144,128]{1,0:T(1,128)}', space=vmem, size = 0x12000, scoped, tag = 'internal scratch']
  #allocation2 [shape = 'f32[136,256]{1,0:T(8,128)}', space=vmem, size = 0x22000, scoped, tag = 'scratch operand']
  #allocation3 [shape = 'f32[72,256]{1,0:T(8,128)}', space=vmem, size = 0x12000, scoped, tag = 'scratch operand']
  %s0 = inlined_call_operand.vmem [shape: f32[320,128], index: 0, kind: input, shape index: {}]
  %s1 = inlined_call_operand.vmem [shape: bf16[5,128,256], index: 1, kind: input, shape index: {}]
  %s2 = inlined_call_operand.vmem [shape: f32[1,256], index: 2, kind: input, shape index: {}]
  %s3 = inlined_call_operand.hbm [shape: bf16[136,312], index: 3, kind: input, shape index: {}]
  %s4 = inlined_call_operand.hbm [shape: bf16[136,312], index: 4, kind: input, shape index: {}]
  %s5 = inlined_call_operand.vmem [shape: bf16[256,256], index: 5, kind: input, shape index: {}]
  %s6 = inlined_call_operand.hbm [shape: bf16[5,256,256], index: 6, kind: input, shape index: {}]
  %s7 = inlined_call_operand.vmem [shape: f32[1,256], index: 7, kind: input, shape index: {}]
  %s8 = inlined_call_operand.hbm [shape: bf16[72,128], index: 8, kind: input, shape index: {}]
  %s9 = inlined_call_operand.hbm [shape: bf16[72,128], index: 9, kind: input, shape index: {}]
  %s10 = inlined_call_operand.hbm [shape: bf16[5,256,128], index: 10, kind: input, shape index: {}]
  %s11 = inlined_call_operand.vmem [shape: f32[1,128], index: 11, kind: input, shape index: {}]
  %s12 = inlined_call_operand.hbm [shape: bf16[128,128], index: 12, kind: input, shape index: {}]
  %s13 = inlined_call_operand.vmem [shape: f32[1,128], index: 13, kind: input, shape index: {}]
  %s14 = inlined_call_operand.vmem [shape: bf16[128,256], index: 14, kind: input, shape index: {}]
  %s15 = inlined_call_operand.vmem [shape: f32[1,256], index: 15, kind: input, shape index: {}]
  %s16 = inlined_call_operand.vmem [shape: f32[64,256], index: 16, kind: output, shape index: {}]
  %s17 = sld [smem:[#allocation0]]
  $region102: #{lenet_forward.1} parent=0
    _
  %s19 = ssub.s32 1, %s17
  %s20 = scalar_select 0, %s19, %s17
  $region1: #{lenet_forward.1} parent=0
    #allocation4 [shape = 'u8[104448]{0}', space=vmem, size = 0x19800, scoped, tag = 'input window, operand 3, single buffered']
    #allocation5 [shape = 's32[1]{0}', space=sflag, size = 0x4, scoped, tag = 'scoped memory for lenet_forward.1']
    #allocation6 [shape = 'u8[104448]{0}', space=vmem, size = 0x19800, scoped, tag = 'input window, operand 4, single buffered']
    #allocation7 [shape = 's32[1]{0}', space=sflag, size = 0x4, scoped, tag = 'scoped memory for lenet_forward.1']
    #allocation8 [shape = 'u8[655360]{0}', space=vmem, size = 0xa0000, scoped, tag = 'input window, operand 6, single buffered']
    #allocation9 [shape = 'u8[18432]{0}', space=vmem, size = 0x4800, scoped, tag = 'input window, operand 8, single buffered']
    #allocation10 [shape = 's32[1]{0}', space=sflag, size = 0x4, scoped, tag = 'scoped memory for lenet_forward.1']
    #allocation11 [shape = 'u8[18432]{0}', space=vmem, size = 0x4800, scoped, tag = 'input window, operand 9, single buffered']
    #allocation12 [shape = 'u8[327680]{0}', space=vmem, size = 0x50000, scoped, tag = 'input window, operand 10, single buffered']
    #allocation13 [shape = 's32[1]{0}', space=sflag, size = 0x4, scoped, tag = 'scoped memory for lenet_forward.1']
    #allocation14 [shape = 'u8[32768]{0}', space=vmem, size = 0x8000, scoped, tag = 'input window, operand 12, single buffered']
    %21 = vsyncpa [#allocation5], 0
    %22 = vsyncpa [#allocation7], 0
    %23 = vsyncpa [#allocation10], 0
    %24 = vsyncpa [#allocation13], 0
    // Predicated region
    $region2: #{lenet_forward.1} parent=1 // pred_check
      _
    $region3: #{lenet_forward.1} parent=1 // pred_check_branch
      %26 = sbr.rel (0) target = $region5
    $region4: #{lenet_forward.1} parent=1 // pred_region
      _
    $region5: #{lenet_forward.1} parent=1 // pred_fallthru
      _
    // Predicated region
    $region6: #{lenet_forward.1} parent=1 // pred_check
      _
    $region7: #{lenet_forward.1} parent=1 // pred_check_branch
      %28 = sbr.rel (0) target = $region9
    $region8: #{lenet_forward.1} parent=1 // pred_region
      _
    $region9: #{lenet_forward.1} parent=1 // pred_fallthru
      _
    // Predicated region
    $region10: #{lenet_forward.1} parent=1 // pred_check
      _
    $region11: #{lenet_forward.1} parent=1 // pred_check_branch
      %30 = sbr.rel (0) target = $region13
    $region12: #{lenet_forward.1} parent=1 // pred_region
      _
    $region13: #{lenet_forward.1} parent=1 // pred_fallthru
      _
    // Predicated region
    $region14: #{lenet_forward.1} parent=1 // pred_check
      _
    $region15: #{lenet_forward.1} parent=1 // pred_check_branch
      %32 = sbr.rel (0) target = $region17
    $region16: #{lenet_forward.1} parent=1 // pred_region
      %s34 = ssub.s32 3264, 3264
      %35 = vsyncadd [#allocation5], %s34
      %s36 = sshll.u32 [#allocation4], 4
      %s37 = int_to_ptr.vmem [resolvable:$true] %s36
      %42 = dma.hbm_to_vmem [thread:$0]  %s3, 3264, %s37, [#allocation5], 192, 192, 12
    $region17: #{lenet_forward.1} parent=1 // pred_fallthru
      _
    // Predicated region
    $region18: #{lenet_forward.1} parent=1 // pred_check
      _
    $region19: #{lenet_forward.1} parent=1 // pred_check_branch
      %44 = sbr.rel (0) target = $region21
    $region20: #{lenet_forward.1} parent=1 // pred_region
      %s46 = ssub.s32 3264, 3264
      %47 = vsyncadd [#allocation7], %s46
      %s48 = sshll.u32 [#allocation6], 4
      %s49 = int_to_ptr.vmem [resolvable:$true] %s48
      %54 = dma.hbm_to_vmem [thread:$0]  %s4, 3264, %s49, [#allocation7], 192, 192, 12
    $region21: #{lenet_forward.1} parent=1 // pred_fallthru
      _
    // Predicated region
    $region22: #{lenet_forward.1} parent=1 // pred_check
      _
    $region23: #{lenet_forward.1} parent=1 // pred_check_branch
      %56 = sbr.rel (0) target = $region25
    $region24: #{lenet_forward.1} parent=1 // pred_region
      _
    $region25: #{lenet_forward.1} parent=1 // pred_fallthru
      _
    // Predicated region
    $region26: #{lenet_forward.1} parent=1 // pred_check
      _
    $region27: #{lenet_forward.1} parent=1 // pred_check_branch
      %58 = sbr.rel (0) target = $region29
    $region28: #{lenet_forward.1} parent=1 // pred_region
      %s60 = ssub.s32 20480, 20480
      %61 = vsyncadd [#allocation7], %s60
      %s62 = sshll.u32 [#allocation8], 4
      %s63 = int_to_ptr.vmem [resolvable:$true] %s62
      %68 = dma.hbm_to_vmem [thread:$0]  %s6, 20480, %s63, [#allocation7], 128, 128, 8
    $region29: #{lenet_forward.1} parent=1 // pred_fallthru
      _
    // Predicated region
    $region30: #{lenet_forward.1} parent=1 // pred_check
      _
    $region31: #{lenet_forward.1} parent=1 // pred_check_branch
      %70 = sbr.rel (0) target = $region33
    $region32: #{lenet_forward.1} parent=1 // pred_region
      _
    $region33: #{lenet_forward.1} parent=1 // pred_fallthru
      _
    // Predicated region
    $region34: #{lenet_forward.1} parent=1 // pred_check
      _
    $region35: #{lenet_forward.1} parent=1 // pred_check_branch
      %72 = sbr.rel (0) target = $region37
    $region36: #{lenet_forward.1} parent=1 // pred_region
      %s74 = ssub.s32 576, 576
      %75 = vsyncadd [#allocation10], %s74
      %s76 = sshll.u32 [#allocation9], 4
      %s77 = int_to_ptr.vmem [resolvable:$true] %s76
      %82 = dma.hbm_to_vmem [thread:$0]  %s8, 576, %s77, [#allocation10], 64, 64, 4
    $region37: #{lenet_forward.1} parent=1 // pred_fallthru
      _
    // Predicated region
    $region38: #{lenet_forward.1} parent=1 // pred_check
      _
    $region39: #{lenet_forward.1} parent=1 // pred_check_branch
      %84 = sbr.rel (0) target = $region41
    $region40: #{lenet_forward.1} parent=1 // pred_region
      %s86 = ssub.s32 576, 576
      %87 = vsyncadd [#allocation10], %s86
      %s88 = sshll.u32 [#allocation11], 4
      %s89 = int_to_ptr.vmem [resolvable:$true] %s88
      %94 = dma.hbm_to_vmem [thread:$0]  %s9, 576, %s89, [#allocation10], 64, 64, 4
    $region41: #{lenet_forward.1} parent=1 // pred_fallthru
      _
    // Predicated region
    $region42: #{lenet_forward.1} parent=1 // pred_check
      _
    $region43: #{lenet_forward.1} parent=1 // pred_check_branch
      %96 = sbr.rel (0) target = $region45
    $region44: #{lenet_forward.1} parent=1 // pred_region
      %s98 = ssub.s32 10240, 10240
      %99 = vsyncadd [#allocation13], %s98
      %s100 = sshll.u32 [#allocation12], 4
      %s101 = int_to_ptr.vmem [resolvable:$true] %s100
      %106 = dma.hbm_to_vmem [thread:$0]  %s10, 10240, %s101, [#allocation13], 64, 64, 4
    $region45: #{lenet_forward.1} parent=1 // pred_fallthru
      _
    // Predicated region
    $region46: #{lenet_forward.1} parent=1 // pred_check
      _
    $region47: #{lenet_forward.1} parent=1 // pred_check_branch
      %108 = sbr.rel (0) target = $region49
    $region48: #{lenet_forward.1} parent=1 // pred_region
      _
    $region49: #{lenet_forward.1} parent=1 // pred_fallthru
      _
    // Predicated region
    $region50: #{lenet_forward.1} parent=1 // pred_check
      _
    $region51: #{lenet_forward.1} parent=1 // pred_check_branch
      %110 = sbr.rel (0) target = $region53
    $region52: #{lenet_forward.1} parent=1 // pred_region
      %s112 = ssub.s32 1024, 1024
      %113 = vsyncadd [#allocation13], %s112
      %s114 = sshll.u32 [#allocation14], 4
      %s115 = int_to_ptr.vmem [resolvable:$true] %s114
      %120 = dma.hbm_to_vmem [thread:$0]  %s12, 1024, %s115, [#allocation13], 64, 64, 4
    $region53: #{lenet_forward.1} parent=1 // pred_fallthru
      _
    // Predicated region
    $region54: #{lenet_forward.1} parent=1 // pred_check
      _
    $region55: #{lenet_forward.1} parent=1 // pred_check_branch
      %122 = sbr.rel (0) target = $region57
    $region56: #{lenet_forward.1} parent=1 // pred_region
      _
    $region57: #{lenet_forward.1} parent=1 // pred_fallthru
      _
    // Predicated region
    $region58: #{lenet_forward.1} parent=1 // pred_check
      _
    $region59: #{lenet_forward.1} parent=1 // pred_check_branch
      %124 = sbr.rel (0) target = $region61
    $region60: #{lenet_forward.1} parent=1 // pred_region
      _
    $region61: #{lenet_forward.1} parent=1 // pred_fallthru
      _
    // Predicated region
    $region62: #{lenet_forward.1} parent=1 // pred_check
      _
    $region63: #{lenet_forward.1} parent=1 // pred_check_branch
      %126 = sbr.rel (0) target = $region65
    $region64: #{lenet_forward.1} parent=1 // pred_region
      _
    $region65: #{lenet_forward.1} parent=1 // pred_fallthru
      _
    // Predicated region
    $region66: #{lenet_forward.1} parent=1 // pred_check
      _
    $region67: #{lenet_forward.1} parent=1 // pred_check_branch
      %128 = sbr.rel (0) target = $region69
    $region68: #{lenet_forward.1} parent=1 // pred_region
      %129 = dma.done [#allocation5], 3264
    $region69: #{lenet_forward.1} parent=1 // pred_fallthru
      _
    // Predicated region
    $region70: #{lenet_forward.1} parent=1 // pred_check
      _
    $region71: #{lenet_forward.1} parent=1 // pred_check_branch
      %131 = sbr.rel (0) target = $region73
    $region72: #{lenet_forward.1} parent=1 // pred_region
      %132 = dma.done [#allocation7], 3264
    $region73: #{lenet_forward.1} parent=1 // pred_fallthru
      _
    // Predicated region
    $region74: #{lenet_forward.1} parent=1 // pred_check
      _
    $region75: #{lenet_forward.1} parent=1 // pred_check_branch
      %134 = sbr.rel (0) target = $region77
    $region76: #{lenet_forward.1} parent=1 // pred_region
      %135 = dma.done [#allocation7], 20480
    $region77: #{lenet_forward.1} parent=1 // pred_fallthru
      _
    // Predicated region
    $region78: #{lenet_forward.1} parent=1 // pred_check
      _
    $region79: #{lenet_forward.1} parent=1 // pred_check_branch
      %137 = sbr.rel (0) target = $region81
    $region80: #{lenet_forward.1} parent=1 // pred_region
      %138 = dma.done [#allocation10], 576
    $region81: #{lenet_forward.1} parent=1 // pred_fallthru
      _
    // Predicated region
    $region82: #{lenet_forward.1} parent=1 // pred_check
      _
    $region83: #{lenet_forward.1} parent=1 // pred_check_branch
      %140 = sbr.rel (0) target = $region85
    $region84: #{lenet_forward.1} parent=1 // pred_region
      %141 = dma.done [#allocation10], 576
    $region85: #{lenet_forward.1} parent=1 // pred_fallthru
      _
    // Predicated region
    $region86: #{lenet_forward.1} parent=1 // pred_check
      _
    $region87: #{lenet_forward.1} parent=1 // pred_check_branch
      %143 = sbr.rel (0) target = $region89
    $region88: #{lenet_forward.1} parent=1 // pred_region
      %144 = dma.done [#allocation13], 10240
    $region89: #{lenet_forward.1} parent=1 // pred_fallthru
      _
    // Predicated region
    $region90: #{lenet_forward.1} parent=1 // pred_check
      _
    $region91: #{lenet_forward.1} parent=1 // pred_check_branch
      %146 = sbr.rel (0) target = $region93
    $region92: #{lenet_forward.1} parent=1 // pred_region
      %147 = dma.done [#allocation13], 1024
    $region93: #{lenet_forward.1} parent=1 // pred_fallthru
      _
    %v149 = vld [vmem:[%s0] sm:$0xff]
    %v150 = vld [vmem:[%s0 + $0x8] sm:$0xff]
    %v151 = vld [vmem:[%s0 + $0x10] sm:$0xff]
    %v152 = vld [vmem:[%s0 + $0x18] sm:$0xff]
    %v153 = vld [vmem:[%s0 + $0x20] sm:$0xff]
    %v154 = vld [vmem:[%s0 + $0x28] sm:$0xff]
    %v155 = vld [vmem:[%s0 + $0x30] sm:$0xff]
    %v156 = vld [vmem:[%s0 + $0x38] sm:$0xff]
    %v157 = vld [vmem:[%s0 + $0x40] sm:$0xff]
    %v158 = vld [vmem:[%s0 + $0x48] sm:$0xff]
    %v159 = vld [vmem:[%s0 + $0x50] sm:$0xff]
    %v160 = vld [vmem:[%s0 + $0x58] sm:$0xff]
    %v161 = vld [vmem:[%s0 + $0x60] sm:$0xff]
    %v162 = vld [vmem:[%s0 + $0x68] sm:$0xff]
    %v163 = vld [vmem:[%s0 + $0x70] sm:$0xff]
    %v164 = vld [vmem:[%s0 + $0x78] sm:$0xff]
    %v165 = vld [vmem:[%s0 + $0x80] sm:$0xff]
    %v166 = vld [vmem:[%s0 + $0x88] sm:$0xff]
    %v167 = vld [vmem:[%s0 + $0x90] sm:$0xff]
    %v168 = vld [vmem:[%s0 + $0x98] sm:$0xff]
    %v169 = vld [vmem:[%s0 + $0xa0] sm:$0xff]
    %v170 = vld [vmem:[%s0 + $0xa8] sm:$0xff]
    %v171 = vld [vmem:[%s0 + $0xb0] sm:$0xff]
    %v172 = vld [vmem:[%s0 + $0xb8] sm:$0xff]
    %v173 = vld [vmem:[%s0 + $0xc0] sm:$0xff]
    %v174 = vld [vmem:[%s0 + $0xc8] sm:$0xff]
    %v175 = vld [vmem:[%s0 + $0xd0] sm:$0xff]
    %v176 = vld [vmem:[%s0 + $0xd8] sm:$0xff]
    %v177 = vld [vmem:[%s0 + $0xe0] sm:$0xff]
    %v178 = vld [vmem:[%s0 + $0xe8] sm:$0xff]
    %v179 = vld [vmem:[%s0 + $0xf0] sm:$0xff]
    %v180 = vld [vmem:[%s0 + $0xf8] sm:$0xff]
    %v181 = vld [vmem:[%s0 + $0x100] sm:$0xff]
    %v182 = vld [vmem:[%s0 + $0x108] sm:$0xff]
    %v183 = vld [vmem:[%s0 + $0x110] sm:$0xff]
    %v184 = vld [vmem:[%s0 + $0x118] sm:$0xff]
    %v185 = vld [vmem:[%s0 + $0x120] sm:$0xff]
    %v186 = vld [vmem:[%s0 + $0x128] sm:$0xff]
    %v187 = vld [vmem:[%s0 + $0x130] sm:$0xff]
    %v188 = vpack.c.bf16 %v150, %v149
    %v189 = vpack.c.bf16 %v152, %v151
    %v190 = vpack.c.bf16 %v154, %v153
    %v191 = vpack.c.bf16 %v156, %v155
    %v192 = vpack.c.bf16 %v158, %v157
    %v193 = vpack.c.bf16 %v160, %v159
    %v194 = vpack.c.bf16 %v162, %v161
    %v195 = vpack.c.bf16 %v164, %v163
    %v196 = vpack.c.bf16 %v166, %v165
    %v197 = vpack.c.bf16 %v168, %v167
    %v198 = vpack.c.bf16 %v170, %v169
    %v199 = vpack.c.bf16 %v172, %v171
    %v200 = vpack.c.bf16 %v174, %v173
    %v201 = vpack.c.bf16 %v176, %v175
    %v202 = vpack.c.bf16 %v178, %v177
    %v203 = vpack.c.bf16 %v180, %v179
    %v204 = vpack.c.bf16 %v182, %v181
    %v205 = vpack.c.bf16 %v184, %v183
    %v206 = vpack.c.bf16 %v186, %v185
    %v207 = vpack.c.bf16 %v187, %v187
    %v208 = vld [vmem:[%s1] sm:$0xff]
    %v209 = vld [vmem:[%s1 + $0x8] sm:$0xff]
    %v210 = vld [vmem:[%s1 + $0x10] sm:$0xff]
    %v211 = vld [vmem:[%s1 + $0x18] sm:$0xff]
    %v212 = vld [vmem:[%s1 + $0x20] sm:$0xff]
    %v213 = vld [vmem:[%s1 + $0x28] sm:$0xff]
    %v214 = vld [vmem:[%s1 + $0x30] sm:$0xff]
    %v215 = vld [vmem:[%s1 + $0x38] sm:$0xff]
    %v216 = vld [vmem:[%s1 + $0x40] sm:$0xff]
    %v217 = vld [vmem:[%s1 + $0x48] sm:$0xff]
    %v218 = vld [vmem:[%s1 + $0x50] sm:$0xff]
    %v219 = vld [vmem:[%s1 + $0x58] sm:$0xff]
    %v220 = vld [vmem:[%s1 + $0x60] sm:$0xff]
    %v221 = vld [vmem:[%s1 + $0x68] sm:$0xff]
    %v222 = vld [vmem:[%s1 + $0x70] sm:$0xff]
    %v223 = vld [vmem:[%s1 + $0x78] sm:$0xff]
    %v224 = vld [vmem:[%s0 + $0x1] sm:$0xff]
    %v225 = vld [vmem:[%s0 + $0x9] sm:$0xff]
    %v226 = vld [vmem:[%s0 + $0x11] sm:$0xff]
    %v227 = vld [vmem:[%s0 + $0x19] sm:$0xff]
    %v228 = vld [vmem:[%s0 + $0x21] sm:$0xff]
    %v229 = vld [vmem:[%s0 + $0x29] sm:$0xff]
    %v230 = vld [vmem:[%s0 + $0x31] sm:$0xff]
    %v231 = vld [vmem:[%s0 + $0x39] sm:$0xff]
    %v232 = vld [vmem:[%s0 + $0x41] sm:$0xff]
    %v233 = vld [vmem:[%s0 + $0x49] sm:$0xff]
    %v234 = vld [vmem:[%s0 + $0x51] sm:$0xff]
    %v235 = vld [vmem:[%s0 + $0x59] sm:$0xff]
    %v236 = vld [vmem:[%s0 + $0x61] sm:$0xff]
    %v237 = vld [vmem:[%s0 + $0x69] sm:$0xff]
    %v238 = vld [vmem:[%s0 + $0x71] sm:$0xff]
    %v239 = vld [vmem:[%s0 + $0x79] sm:$0xff]
    %v240 = vld [vmem:[%s0 + $0x81] sm:$0xff]
    %v241 = vld [vmem:[%s0 + $0x89] sm:$0xff]
    %v242 = vld [vmem:[%s0 + $0x91] sm:$0xff]
    %v243 = vld [vmem:[%s0 + $0x99] sm:$0xff]
    %v244 = vld [vmem:[%s0 + $0xa1] sm:$0xff]
    %v245 = vld [vmem:[%s0 + $0xa9] sm:$0xff]
    %v246 = vld [vmem:[%s0 + $0xb1] sm:$0xff]
    %v247 = vld [vmem:[%s0 + $0xb9] sm:$0xff]
    %v248 = vld [vmem:[%s0 + $0xc1] sm:$0xff]
    %v249 = vld [vmem:[%s0 + $0xc9] sm:$0xff]
    %v250 = vld [vmem:[%s0 + $0xd1] sm:$0xff]
    %v251 = vld [vmem:[%s0 + $0xd9] sm:$0xff]
    %v252 = vld [vmem:[%s0 + $0xe1] sm:$0xff]
    %v253 = vld [vmem:[%s0 + $0xe9] sm:$0xff]
    %v254 = vld [vmem:[%s0 + $0xf1] sm:$0xff]
    %v255 = vld [vmem:[%s0 + $0xf9] sm:$0xff]
    %v256 = vld [vmem:[%s0 + $0x101] sm:$0xff]
    %v257 = vld [vmem:[%s0 + $0x109] sm:$0xff]
    %v258 = vld [vmem:[%s0 + $0x111] sm:$0xff]
    %v259 = vld [vmem:[%s0 + $0x119] sm:$0xff]
    %v260 = vld [vmem:[%s0 + $0x121] sm:$0xff]
    %v261 = vld [vmem:[%s0 + $0x129] sm:$0xff]
    %v262 = vld [vmem:[%s0 + $0x131] sm:$0xff]
    %v263 = vpack.c.bf16 %v225, %v224
    %v264 = vpack.c.bf16 %v227, %v226
    %v265 = vpack.c.bf16 %v229, %v228
    %v266 = vpack.c.bf16 %v231, %v230
    %v267 = vpack.c.bf16 %v233, %v232
    %v268 = vpack.c.bf16 %v235, %v234
    %v269 = vpack.c.bf16 %v237, %v236
    %v270 = vpack.c.bf16 %v239, %v238
    %v271 = vpack.c.bf16 %v241, %v240
    %v272 = vpack.c.bf16 %v243, %v242
    %v273 = vpack.c.bf16 %v245, %v244
    %v274 = vpack.c.bf16 %v247, %v246
    %v275 = vpack.c.bf16 %v249, %v248
    %v276 = vpack.c.bf16 %v251, %v250
    %v277 = vpack.c.bf16 %v253, %v252
    %v278 = vpack.c.bf16 %v255, %v254
    %v279 = vpack.c.bf16 %v257, %v256
    %v280 = vpack.c.bf16 %v259, %v258
    %v281 = vpack.c.bf16 %v261, %v260
    %v282 = vpack.c.bf16 %v262, %v262
    %s283 = scalar_lea.vmem %s1, 128
    %v284 = vld [vmem:[%s283] sm:$0xff]
    %v285 = vld [vmem:[%s283 + $0x8] sm:$0xff]
    %v286 = vld [vmem:[%s283 + $0x10] sm:$0xff]
    %v287 = vld [vmem:[%s283 + $0x18] sm:$0xff]
    %v288 = vld [vmem:[%s283 + $0x20] sm:$0xff]
    %v289 = vld [vmem:[%s283 + $0x28] sm:$0xff]
    %v290 = vld [vmem:[%s283 + $0x30] sm:$0xff]
    %v291 = vld [vmem:[%s283 + $0x38] sm:$0xff]
    %v292 = vld [vmem:[%s283 + $0x40] sm:$0xff]
    %v293 = vld [vmem:[%s283 + $0x48] sm:$0xff]
    %v294 = vld [vmem:[%s283 + $0x50] sm:$0xff]
    %v295 = vld [vmem:[%s283 + $0x58] sm:$0xff]
    %v296 = vld [vmem:[%s283 + $0x60] sm:$0xff]
    %v297 = vld [vmem:[%s283 + $0x68] sm:$0xff]
    %v298 = vld [vmem:[%s283 + $0x70] sm:$0xff]
    %v299 = vld [vmem:[%s283 + $0x78] sm:$0xff]
    %v316 = vunpack.c.l.b16 %v284
    %v317 = vunpack.c.h.b16 %v284
    %v318 = vunpack.c.l.b16 %v285
    %v319 = vunpack.c.h.b16 %v285
    %v320 = vunpack.c.l.b16 %v286
    %v321 = vunpack.c.h.b16 %v286
    %v322 = vunpack.c.l.b16 %v287
    %v323 = vunpack.c.h.b16 %v287
    %v324 = vunpack.c.l.b16 %v288
    %v325 = vunpack.c.h.b16 %v288
    %v326 = vunpack.c.l.b16 %v289
    %v327 = vunpack.c.h.b16 %v289
    %v328 = vunpack.c.l.b16 %v290
    %v329 = vunpack.c.h.b16 %v290
    %v330 = vunpack.c.l.b16 %v291
    %v331 = vunpack.c.h.b16 %v291
    %v332 = vunpack.c.l.b16 %v292
    %v333 = vunpack.c.h.b16 %v292
    %v334 = vunpack.c.l.b16 %v293
    %v335 = vunpack.c.h.b16 %v293
    %v336 = vunpack.c.l.b16 %v294
    %v337 = vunpack.c.h.b16 %v294
    %v338 = vunpack.c.l.b16 %v295
    %v339 = vunpack.c.h.b16 %v295
    %v340 = vunpack.c.l.b16 %v296
    %v341 = vunpack.c.h.b16 %v296
    %v342 = vunpack.c.l.b16 %v297
    %v343 = vunpack.c.h.b16 %v297
    %v344 = vunpack.c.l.b16 %v298
    %v345 = vunpack.c.h.b16 %v298
    %v346 = vunpack.c.l.b16 %v299
    %v347 = vunpack.c.h.b16 %v299
    %v348 = vpack.c.b16 %v318, %v316
    %v349 = vpack.c.b16 %v319, %v317
    %v350 = vpack.c.b16 %v322, %v320
    %v351 = vpack.c.b16 %v323, %v321
    %v352 = vpack.c.b16 %v326, %v324
    %v353 = vpack.c.b16 %v327, %v325
    %v354 = vpack.c.b16 %v330, %v328
    %v355 = vpack.c.b16 %v331, %v329
    %v356 = vpack.c.b16 %v334, %v332
    %v357 = vpack.c.b16 %v335, %v333
    %v358 = vpack.c.b16 %v338, %v336
    %v359 = vpack.c.b16 %v339, %v337
    %v360 = vpack.c.b16 %v342, %v340
    %v361 = vpack.c.b16 %v343, %v341
    %v362 = vpack.c.b16 %v346, %v344
    %v363 = vpack.c.b16 %v347, %v345
    %380 = vmatprep.subr.bf16.mxu0 %v363
    %381 = vmatpush1.bf16.msra.mxu0 %v362
    %382 = vmatprep.subr.bf16.mxu0 %v361
    %383 = vmatpush1.bf16.msra.mxu0 %v360
    %384 = vmatprep.subr.bf16.mxu0 %v359
    %385 = vmatpush1.bf16.msra.mxu0 %v358
    %386 = vmatprep.subr.bf16.mxu0 %v357
    %387 = vmatpush1.bf16.msra.mxu0 %v356
    %388 = vmatprep.subr.bf16.mxu0 %v355
    %389 = vmatpush1.bf16.msra.mxu0 %v354
    %390 = vmatprep.subr.bf16.mxu0 %v353
    %391 = vmatpush1.bf16.msra.mxu0 %v352
    %392 = vmatprep.subr.bf16.mxu0 %v351
    %393 = vmatpush1.bf16.msra.mxu0 %v350
    %394 = vmatprep.subr.bf16.mxu0 %v349
    %395 = vmatpush1.bf16.msra.mxu0 %v348
    %396 = vmatprep.subr.bf16.mxu0 0
    %397 = vmatpush2.bf16.msra.mxu0 0
    %398 = vmatprep.subr.bf16.mxu0 0
    %399 = vmatpush2.bf16.msra.mxu0 0
    %400 = vmatprep.subr.bf16.mxu0 0
    %401 = vmatpush2.bf16.msra.mxu0 0
    %402 = vmatprep.subr.bf16.mxu0 0
    %403 = vmatpush2.bf16.msra.mxu0 0
    %404 = vmatprep.subr.bf16.mxu0 0
    %405 = vmatpush2.bf16.msra.mxu0 0
    %406 = vmatprep.subr.bf16.mxu0 0
    %407 = vmatpush2.bf16.msra.mxu0 0
    %408 = vmatprep.subr.bf16.mxu0 0
    %409 = vmatpush2.bf16.msra.mxu0 0
    %410 = vmatprep.subr.bf16.mxu0 0
    %411 = vmatpush2.bf16.msra.mxu0 0
    %412 = vmatprep.mubr.bf16.mxu0 0
    %413 = vmatmul.mubr.bf16.gmra.mxu0 %v263
    %v414 = vpop.f32.mrf.mxu0
    %v415 = vadd.f32 0.0, %v414
    %v416 = vpop.f32.mrf.mxu0
    %v417 = vadd.f32 0.0, %v416
    %v418 = vpop.f32.mrf.mxu0
    %v419 = vadd.f32 0.0, %v418
    %v420 = vpop.f32.mrf.mxu0
    %v421 = vadd.f32 0.0, %v420
    %422 = vmatprep.mubr.bf16.mxu0 0
    %423 = vmatmul.mubr.bf16.gmra.mxu0 %v264
    %v424 = vpop.f32.mrf.mxu0
    %v425 = vadd.f32 0.0, %v424
    %v426 = vpop.f32.mrf.mxu0
    %v427 = vadd.f32 0.0, %v426
    %v428 = vpop.f32.mrf.mxu0
    %v429 = vadd.f32 0.0, %v428
    %v430 = vpop.f32.mrf.mxu0
    %v431 = vadd.f32 0.0, %v430
    %432 = vmatprep.mubr.bf16.mxu0 0
    %433 = vmatmul.mubr.bf16.gmra.mxu0 %v265
    %v434 = vpop.f32.mrf.mxu0
    %v435 = vadd.f32 0.0, %v434
    %v436 = vpop.f32.mrf.mxu0
    %v437 = vadd.f32 0.0, %v436
    %v438 = vpop.f32.mrf.mxu0
    %v439 = vadd.f32 0.0, %v438
    %v440 = vpop.f32.mrf.mxu0
    %v441 = vadd.f32 0.0, %v440
    %442 = vmatprep.mubr.bf16.mxu0 0
    %443 = vmatmul.mubr.bf16.gmra.mxu0 %v266
    %v444 = vpop.f32.mrf.mxu0
    %v445 = vadd.f32 0.0, %v444
    %v446 = vpop.f32.mrf.mxu0
    %v447 = vadd.f32 0.0, %v446
    %v448 = vpop.f32.mrf.mxu0
    %v449 = vadd.f32 0.0, %v448
    %v450 = vpop.f32.mrf.mxu0
    %v451 = vadd.f32 0.0, %v450
    %452 = vmatprep.mubr.bf16.mxu0 0
    %453 = vmatmul.mubr.bf16.gmra.mxu0 %v267
    %v454 = vpop.f32.mrf.mxu0
    %v455 = vadd.f32 0.0, %v454
    %v456 = vpop.f32.mrf.mxu0
    %v457 = vadd.f32 0.0, %v456
    %v458 = vpop.f32.mrf.mxu0
    %v459 = vadd.f32 0.0, %v458
    %v460 = vpop.f32.mrf.mxu0
    %v461 = vadd.f32 0.0, %v460
    %462 = vmatprep.mubr.bf16.mxu0 0
    %463 = vmatmul.mubr.bf16.gmra.mxu0 %v268
    %v464 = vpop.f32.mrf.mxu0
    %v465 = vadd.f32 0.0, %v464
    %v466 = vpop.f32.mrf.mxu0
    %v467 = vadd.f32 0.0, %v466
    %v468 = vpop.f32.mrf.mxu0
    %v469 = vadd.f32 0.0, %v468
    %v470 = vpop.f32.mrf.mxu0
    %v471 = vadd.f32 0.0, %v470
    %472 = vmatprep.mubr.bf16.mxu0 0
    %473 = vmatmul.mubr.bf16.gmra.mxu0 %v269
    %v474 = vpop.f32.mrf.mxu0
    %v475 = vadd.f32 0.0, %v474
    %v476 = vpop.f32.mrf.mxu0
    %v477 = vadd.f32 0.0, %v476
    %v478 = vpop.f32.mrf.mxu0
    %v479 = vadd.f32 0.0, %v478
    %v480 = vpop.f32.mrf.mxu0
    %v481 = vadd.f32 0.0, %v480
    %482 = vmatprep.mubr.bf16.mxu0 0
    %483 = vmatmul.mubr.bf16.gmra.mxu0 %v270
    %v484 = vpop.f32.mrf.mxu0
    %v485 = vadd.f32 0.0, %v484
    %v486 = vpop.f32.mrf.mxu0
    %v487 = vadd.f32 0.0, %v486
    %v488 = vpop.f32.mrf.mxu0
    %v489 = vadd.f32 0.0, %v488
    %v490 = vpop.f32.mrf.mxu0
    %v491 = vadd.f32 0.0, %v490
    %492 = vmatprep.mubr.bf16.mxu0 0
    %493 = vmatmul.mubr.bf16.gmra.mxu0 %v271
    %v494 = vpop.f32.mrf.mxu0
    %v495 = vadd.f32 0.0, %v494
    %v496 = vpop.f32.mrf.mxu0
    %v497 = vadd.f32 0.0, %v496
    %v498 = vpop.f32.mrf.mxu0
    %v499 = vadd.f32 0.0, %v498
    %v500 = vpop.f32.mrf.mxu0
    %v501 = vadd.f32 0.0, %v500
    %502 = vmatprep.mubr.bf16.mxu0 0
    %503 = vmatmul.mubr.bf16.gmra.mxu0 %v272
    %v504 = vpop.f32.mrf.mxu0
    %v505 = vadd.f32 0.0, %v504
    %v506 = vpop.f32.mrf.mxu0
    %v507 = vadd.f32 0.0, %v506
    %v508 = vpop.f32.mrf.mxu0
    %v509 = vadd.f32 0.0, %v508
    %v510 = vpop.f32.mrf.mxu0
    %v511 = vadd.f32 0.0, %v510
    %512 = vmatprep.mubr.bf16.mxu0 0
    %513 = vmatmul.mubr.bf16.gmra.mxu0 %v273
    %v514 = vpop.f32.mrf.mxu0
    %v515 = vadd.f32 0.0, %v514
    %v516 = vpop.f32.mrf.mxu0
    %v517 = vadd.f32 0.0, %v516
    %v518 = vpop.f32.mrf.mxu0
    %v519 = vadd.f32 0.0, %v518
    %v520 = vpop.f32.mrf.mxu0
    %v521 = vadd.f32 0.0, %v520
    %522 = vmatprep.mubr.bf16.mxu0 0
    %523 = vmatmul.mubr.bf16.gmra.mxu0 %v274
    %v524 = vpop.f32.mrf.mxu0
    %v525 = vadd.f32 0.0, %v524
    %v526 = vpop.f32.mrf.mxu0
    %v527 = vadd.f32 0.0, %v526
    %v528 = vpop.f32.mrf.mxu0
    %v529 = vadd.f32 0.0, %v528
    %v530 = vpop.f32.mrf.mxu0
    %v531 = vadd.f32 0.0, %v530
    %532 = vmatprep.mubr.bf16.mxu0 0
    %533 = vmatmul.mubr.bf16.gmra.mxu0 %v275
    %v534 = vpop.f32.mrf.mxu0
    %v535 = vadd.f32 0.0, %v534
    %v536 = vpop.f32.mrf.mxu0
    %v537 = vadd.f32 0.0, %v536
    %v538 = vpop.f32.mrf.mxu0
    %v539 = vadd.f32 0.0, %v538
    %v540 = vpop.f32.mrf.mxu0
    %v541 = vadd.f32 0.0, %v540
    %542 = vmatprep.mubr.bf16.mxu0 0
    %543 = vmatmul.mubr.bf16.gmra.mxu0 %v276
    %v544 = vpop.f32.mrf.mxu0
    %v545 = vadd.f32 0.0, %v544
    %v546 = vpop.f32.mrf.mxu0
    %v547 = vadd.f32 0.0, %v546
    %v548 = vpop.f32.mrf.mxu0
    %v549 = vadd.f32 0.0, %v548
    %v550 = vpop.f32.mrf.mxu0
    %v551 = vadd.f32 0.0, %v550
    %552 = vmatprep.mubr.bf16.mxu0 0
    %553 = vmatmul.mubr.bf16.gmra.mxu0 %v277
    %v554 = vpop.f32.mrf.mxu0
    %v555 = vadd.f32 0.0, %v554
    %v556 = vpop.f32.mrf.mxu0
    %v557 = vadd.f32 0.0, %v556
    %v558 = vpop.f32.mrf.mxu0
    %v559 = vadd.f32 0.0, %v558
    %v560 = vpop.f32.mrf.mxu0
    %v561 = vadd.f32 0.0, %v560
    %562 = vmatprep.mubr.bf16.mxu0 0
    %563 = vmatmul.mubr.bf16.gmra.mxu0 %v278
    %v564 = vpop.f32.mrf.mxu0
    %v565 = vadd.f32 0.0, %v564
    %v566 = vpop.f32.mrf.mxu0
    %v567 = vadd.f32 0.0, %v566
    %v568 = vpop.f32.mrf.mxu0
    %v569 = vadd.f32 0.0, %v568
    %v570 = vpop.f32.mrf.mxu0
    %v571 = vadd.f32 0.0, %v570
    %572 = vmatprep.mubr.bf16.mxu0 0
    %573 = vmatmul.mubr.bf16.gmra.mxu0 %v279
    %v574 = vpop.f32.mrf.mxu0
    %v575 = vadd.f32 0.0, %v574
    %v576 = vpop.f32.mrf.mxu0
    %v577 = vadd.f32 0.0, %v576
    %v578 = vpop.f32.mrf.mxu0
    %v579 = vadd.f32 0.0, %v578
    %v580 = vpop.f32.mrf.mxu0
    %v581 = vadd.f32 0.0, %v580
    %582 = vmatprep.mubr.bf16.mxu0 0
    %583 = vmatmul.mubr.bf16.gmra.mxu0 %v280
    %v584 = vpop.f32.mrf.mxu0
    %v585 = vadd.f32 0.0, %v584
    %v586 = vpop.f32.mrf.mxu0
    %v587 = vadd.f32 0.0, %v586
    %v588 = vpop.f32.mrf.mxu0
    %v589 = vadd.f32 0.0, %v588
    %v590 = vpop.f32.mrf.mxu0
    %v591 = vadd.f32 0.0, %v590
    %592 = vmatprep.mubr.bf16.mxu0 0
    %593 = vmatmul.mubr.bf16.gmra.mxu0 %v281
    %v594 = vpop.f32.mrf.mxu0
    %v595 = vadd.f32 0.0, %v594
    %v596 = vpop.f32.mrf.mxu0
    %v597 = vadd.f32 0.0, %v596
    %v598 = vpop.f32.mrf.mxu0
    %v599 = vadd.f32 0.0, %v598
    %v600 = vpop.f32.mrf.mxu0
    %v601 = vadd.f32 0.0, %v600
    %602 = vmatprep.mubr.bf16.mxu0 0
    %603 = vmatmul.mubr.bf16.gmra.mxu0 %v282
    %v604 = vpop.f32.mrf.mxu0
    %v605 = vadd.f32 0.0, %v604
    %v606 = vpop.f32.mrf.mxu0
    %v607 = vadd.f32 0.0, %v606
    %v608 = vpop.f32.mrf.mxu0
    %v609 = vpop.f32.mrf.mxu0
    %610 = vdwg.mxu0
    %v627 = vunpack.c.l.b16 %v208
    %v628 = vunpack.c.h.b16 %v208
    %v629 = vunpack.c.l.b16 %v209
    %v630 = vunpack.c.h.b16 %v209
    %v631 = vunpack.c.l.b16 %v210
    %v632 = vunpack.c.h.b16 %v210
    %v633 = vunpack.c.l.b16 %v211
    %v634 = vunpack.c.h.b16 %v211
    %v635 = vunpack.c.l.b16 %v212
    %v636 = vunpack.c.h.b16 %v212
    %v637 = vunpack.c.l.b16 %v213
    %v638 = vunpack.c.h.b16 %v213
    %v639 = vunpack.c.l.b16 %v214
    %v640 = vunpack.c.h.b16 %v214
    %v641 = vunpack.c.l.b16 %v215
    %v642 = vunpack.c.h.b16 %v215
    %v643 = vunpack.c.l.b16 %v216
    %v644 = vunpack.c.h.b16 %v216
    %v645 = vunpack.c.l.b16 %v217
    %v646 = vunpack.c.h.b16 %v217
    %v647 = vunpack.c.l.b16 %v218
    %v648 = vunpack.c.h.b16 %v218
    %v649 = vunpack.c.l.b16 %v219
    %v650 = vunpack.c.h.b16 %v219
    %v651 = vunpack.c.l.b16 %v220
    %v652 = vunpack.c.h.b16 %v220
    %v653 = vunpack.c.l.b16 %v221
    %v654 = vunpack.c.h.b16 %v221
    %v655 = vunpack.c.l.b16 %v222
    %v656 = vunpack.c.h.b16 %v222
    %v657 = vunpack.c.l.b16 %v223
    %v658 = vunpack.c.h.b16 %v223
    %v659 = vpack.c.b16 %v629, %v627
    %v660 = vpack.c.b16 %v630, %v628
    %v661 = vpack.c.b16 %v633, %v631
    %v662 = vpack.c.b16 %v634, %v632
    %v663 = vpack.c.b16 %v637, %v635
    %v664 = vpack.c.b16 %v638, %v636
    %v665 = vpack.c.b16 %v641, %v639
    %v666 = vpack.c.b16 %v642, %v640
    %v667 = vpack.c.b16 %v645, %v643
    %v668 = vpack.c.b16 %v646, %v644
    %v669 = vpack.c.b16 %v649, %v647
    %v670 = vpack.c.b16 %v650, %v648
    %v671 = vpack.c.b16 %v653, %v651
    %v672 = vpack.c.b16 %v654, %v652
    %v673 = vpack.c.b16 %v657, %v655
    %v674 = vpack.c.b16 %v658, %v656
    %691 = vmatprep.subr.bf16.mxu0 %v674
    %692 = vmatpush1.bf16.msra.mxu0 %v673
    %693 = vmatprep.subr.bf16.mxu0 %v672
    %694 = vmatpush1.bf16.msra.mxu0 %v671
    %695 = vmatprep.subr.bf16.mxu0 %v670
    %696 = vmatpush1.bf16.msra.mxu0 %v669
    %697 = vmatprep.subr.bf16.mxu0 %v668
    %698 = vmatpush1.bf16.msra.mxu0 %v667
    %699 = vmatprep.subr.bf16.mxu0 %v666
    %700 = vmatpush1.bf16.msra.mxu0 %v665
    %701 = vmatprep.subr.bf16.mxu0 %v664
    %702 = vmatpush1.bf16.msra.mxu0 %v663
    %703 = vmatprep.subr.bf16.mxu0 %v662
    %704 = vmatpush1.bf16.msra.mxu0 %v661
    %705 = vmatprep.subr.bf16.mxu0 %v660
    %706 = vmatpush1.bf16.msra.mxu0 %v659
    %707 = vmatprep.subr.bf16.mxu0 0
    %708 = vmatpush2.bf16.msra.mxu0 0
    %709 = vmatprep.subr.bf16.mxu0 0
    %710 = vmatpush2.bf16.msra.mxu0 0
    %711 = vmatprep.subr.bf16.mxu0 0
    %712 = vmatpush2.bf16.msra.mxu0 0
    %713 = vmatprep.subr.bf16.mxu0 0
    %714 = vmatpush2.bf16.msra.mxu0 0
    %715 = vmatprep.subr.bf16.mxu0 0
    %716 = vmatpush2.bf16.msra.mxu0 0
    %717 = vmatprep.subr.bf16.mxu0 0
    %718 = vmatpush2.bf16.msra.mxu0 0
    %719 = vmatprep.subr.bf16.mxu0 0
    %720 = vmatpush2.bf16.msra.mxu0 0
    %721 = vmatprep.subr.bf16.mxu0 0
    %722 = vmatpush2.bf16.msra.mxu0 0
    %723 = vmatprep.mubr.bf16.mxu0 0
    %724 = vmatmul.mubr.bf16.gmra.mxu0 %v188
    %v725 = vpop.f32.mrf.mxu0
    %v726 = vadd.f32 %v415, %v725
    %v727 = vpop.f32.mrf.mxu0
    %v728 = vadd.f32 %v417, %v727
    %v729 = vpop.f32.mrf.mxu0
    %v730 = vadd.f32 %v419, %v729
    %v731 = vpop.f32.mrf.mxu0
    %v732 = vadd.f32 %v421, %v731
    %733 = vmatprep.mubr.bf16.mxu0 0
    %734 = vmatmul.mubr.bf16.gmra.mxu0 %v189
    %v735 = vpop.f32.mrf.mxu0
    %v736 = vadd.f32 %v425, %v735
    %v737 = vpop.f32.mrf.mxu0
    %v738 = vadd.f32 %v427, %v737
    %v739 = vpop.f32.mrf.mxu0
    %v740 = vadd.f32 %v429, %v739
    %v741 = vpop.f32.mrf.mxu0
    %v742 = vadd.f32 %v431, %v741
    %743 = vmatprep.mubr.bf16.mxu0 0
    %744 = vmatmul.mubr.bf16.gmra.mxu0 %v190
    %v745 = vpop.f32.mrf.mxu0
    %v746 = vadd.f32 %v435, %v745
    %v747 = vpop.f32.mrf.mxu0
    %v748 = vadd.f32 %v437, %v747
    %v749 = vpop.f32.mrf.mxu0
    %v750 = vadd.f32 %v439, %v749
    %v751 = vpop.f32.mrf.mxu0
    %v752 = vadd.f32 %v441, %v751
    %753 = vmatprep.mubr.bf16.mxu0 0
    %754 = vmatmul.mubr.bf16.gmra.mxu0 %v191
    %v755 = vpop.f32.mrf.mxu0
    %v756 = vadd.f32 %v445, %v755
    %v757 = vpop.f32.mrf.mxu0
    %v758 = vadd.f32 %v447, %v757
    %v759 = vpop.f32.mrf.mxu0
    %v760 = vadd.f32 %v449, %v759
    %v761 = vpop.f32.mrf.mxu0
    %v762 = vadd.f32 %v451, %v761
    %763 = vmatprep.mubr.bf16.mxu0 0
    %764 = vmatmul.mubr.bf16.gmra.mxu0 %v192
    %v765 = vpop.f32.mrf.mxu0
    %v766 = vadd.f32 %v455, %v765
    %v767 = vpop.f32.mrf.mxu0
    %v768 = vadd.f32 %v457, %v767
    %v769 = vpop.f32.mrf.mxu0
    %v770 = vadd.f32 %v459, %v769
    %v771 = vpop.f32.mrf.mxu0
    %v772 = vadd.f32 %v461, %v771
    %773 = vmatprep.mubr.bf16.mxu0 0
    %774 = vmatmul.mubr.bf16.gmra.mxu0 %v193
    %v775 = vpop.f32.mrf.mxu0
    %v776 = vadd.f32 %v465, %v775
    %v777 = vpop.f32.mrf.mxu0
    %v778 = vadd.f32 %v467, %v777
    %v779 = vpop.f32.mrf.mxu0
    %v780 = vadd.f32 %v469, %v779
    %v781 = vpop.f32.mrf.mxu0
    %v782 = vadd.f32 %v471, %v781
    %783 = vmatprep.mubr.bf16.mxu0 0
    %784 = vmatmul.mubr.bf16.gmra.mxu0 %v194
    %v785 = vpop.f32.mrf.mxu0
    %v786 = vadd.f32 %v475, %v785
    %v787 = vpop.f32.mrf.mxu0
    %v788 = vadd.f32 %v477, %v787
    %v789 = vpop.f32.mrf.mxu0
    %v790 = vadd.f32 %v479, %v789
    %v791 = vpop.f32.mrf.mxu0
    %v792 = vadd.f32 %v481, %v791
    %793 = vmatprep.mubr.bf16.mxu0 0
    %794 = vmatmul.mubr.bf16.gmra.mxu0 %v195
    %v795 = vpop.f32.mrf.mxu0
    %v796 = vadd.f32 %v485, %v795
    %v797 = vpop.f32.mrf.mxu0
    %v798 = vadd.f32 %v487, %v797
    %v799 = vpop.f32.mrf.mxu0
    %v800 = vadd.f32 %v489, %v799
    %v801 = vpop.f32.mrf.mxu0
    %v802 = vadd.f32 %v491, %v801
    %803 = vmatprep.mubr.bf16.mxu0 0
    %804 = vmatmul.mubr.bf16.gmra.mxu0 %v196
    %v805 = vpop.f32.mrf.mxu0
    %v806 = vadd.f32 %v495, %v805
    %v807 = vpop.f32.mrf.mxu0
    %v808 = vadd.f32 %v497, %v807
    %v809 = vpop.f32.mrf.mxu0
    %v810 = vadd.f32 %v499, %v809
    %v811 = vpop.f32.mrf.mxu0
    %v812 = vadd.f32 %v501, %v811
    %813 = vmatprep.mubr.bf16.mxu0 0
    %814 = vmatmul.mubr.bf16.gmra.mxu0 %v197
    %v815 = vpop.f32.mrf.mxu0
    %v816 = vadd.f32 %v505, %v815
    %v817 = vpop.f32.mrf.mxu0
    %v818 = vadd.f32 %v507, %v817
    %v819 = vpop.f32.mrf.mxu0
    %v820 = vadd.f32 %v509, %v819
    %v821 = vpop.f32.mrf.mxu0
    %v822 = vadd.f32 %v511, %v821
    %823 = vmatprep.mubr.bf16.mxu0 0
    %824 = vmatmul.mubr.bf16.gmra.mxu0 %v198
    %v825 = vpop.f32.mrf.mxu0
    %v826 = vadd.f32 %v515, %v825
    %v827 = vpop.f32.mrf.mxu0
    %v828 = vadd.f32 %v517, %v827
    %v829 = vpop.f32.mrf.mxu0
    %v830 = vadd.f32 %v519, %v829
    %v831 = vpop.f32.mrf.mxu0
    %v832 = vadd.f32 %v521, %v831
    %833 = vmatprep.mubr.bf16.mxu0 0
    %834 = vmatmul.mubr.bf16.gmra.mxu0 %v199
    %v835 = vpop.f32.mrf.mxu0
    %v836 = vadd.f32 %v525, %v835
    %v837 = vpop.f32.mrf.mxu0
    %v838 = vadd.f32 %v527, %v837
    %v839 = vpop.f32.mrf.mxu0
    %v840 = vadd.f32 %v529, %v839
    %v841 = vpop.f32.mrf.mxu0
    %v842 = vadd.f32 %v531, %v841
    %843 = vmatprep.mubr.bf16.mxu0 0
    %844 = vmatmul.mubr.bf16.gmra.mxu0 %v200
    %v845 = vpop.f32.mrf.mxu0
    %v846 = vadd.f32 %v535, %v845
    %v847 = vpop.f32.mrf.mxu0
    %v848 = vadd.f32 %v537, %v847
    %v849 = vpop.f32.mrf.mxu0
    %v850 = vadd.f32 %v539, %v849
    %v851 = vpop.f32.mrf.mxu0
    %v852 = vadd.f32 %v541, %v851
    %853 = vmatprep.mubr.bf16.mxu0 0
    %854 = vmatmul.mubr.bf16.gmra.mxu0 %v201
    %v855 = vpop.f32.mrf.mxu0
    %v856 = vadd.f32 %v545, %v855
    %v857 = vpop.f32.mrf.mxu0
    %v858 = vadd.f32 %v547, %v857
    %v859 = vpop.f32.mrf.mxu0
    %v860 = vadd.f32 %v549, %v859
    %v861 = vpop.f32.mrf.mxu0
    %v862 = vadd.f32 %v551, %v861
    %863 = vmatprep.mubr.bf16.mxu0 0
    %864 = vmatmul.mubr.bf16.gmra.mxu0 %v202
    %v865 = vpop.f32.mrf.mxu0
    %v866 = vadd.f32 %v555, %v865
    %v867 = vpop.f32.mrf.mxu0
    %v868 = vadd.f32 %v557, %v867
    %v869 = vpop.f32.mrf.mxu0
    %v870 = vadd.f32 %v559, %v869
    %v871 = vpop.f32.mrf.mxu0
    %v872 = vadd.f32 %v561, %v871
    %873 = vmatprep.mubr.bf16.mxu0 0
    %874 = vmatmul.mubr.bf16.gmra.mxu0 %v203
    %v875 = vpop.f32.mrf.mxu0
    %v876 = vadd.f32 %v565, %v875
    %v877 = vpop.f32.mrf.mxu0
    %v878 = vadd.f32 %v567, %v877
    %v879 = vpop.f32.mrf.mxu0
    %v880 = vadd.f32 %v569, %v879
    %v881 = vpop.f32.mrf.mxu0
    %v882 = vadd.f32 %v571, %v881
    %883 = vmatprep.mubr.bf16.mxu0 0
    %884 = vmatmul.mubr.bf16.gmra.mxu0 %v204
    %v885 = vpop.f32.mrf.mxu0
    %v886 = vadd.f32 %v575, %v885
    %v887 = vpop.f32.mrf.mxu0
    %v888 = vadd.f32 %v577, %v887
    %v889 = vpop.f32.mrf.mxu0
    %v890 = vadd.f32 %v579, %v889
    %v891 = vpop.f32.mrf.mxu0
    %v892 = vadd.f32 %v581, %v891
    %893 = vmatprep.mubr.bf16.mxu0 0
    %894 = vmatmul.mubr.bf16.gmra.mxu0 %v205
    %v895 = vpop.f32.mrf.mxu0
    %v896 = vadd.f32 %v585, %v895
    %v897 = vpop.f32.mrf.mxu0
    %v898 = vadd.f32 %v587, %v897
    %v899 = vpop.f32.mrf.mxu0
    %v900 = vadd.f32 %v589, %v899
    %v901 = vpop.f32.mrf.mxu0
    %v902 = vadd.f32 %v591, %v901
    %903 = vmatprep.mubr.bf16.mxu0 0
    %904 = vmatmul.mubr.bf16.gmra.mxu0 %v206
    %v905 = vpop.f32.mrf.mxu0
    %v906 = vadd.f32 %v595, %v905
    %v907 = vpop.f32.mrf.mxu0
    %v908 = vadd.f32 %v597, %v907
    %v909 = vpop.f32.mrf.mxu0
    %v910 = vadd.f32 %v599, %v909
    %v911 = vpop.f32.mrf.mxu0
    %v912 = vadd.f32 %v601, %v911
    %913 = vmatprep.mubr.bf16.mxu0 0
    %914 = vmatmul.mubr.bf16.gmra.mxu0 %v207
    %v915 = vpop.f32.mrf.mxu0
    %v916 = vadd.f32 %v605, %v915
    %v917 = vpop.f32.mrf.mxu0
    %v918 = vadd.f32 %v607, %v917
    %v919 = vpop.f32.mrf.mxu0
    %v920 = vpop.f32.mrf.mxu0
    %921 = vdwg.mxu0
    %v922 = vld [vmem:[%s0 + $0x2] sm:$0xff]
    %v923 = vld [vmem:[%s0 + $0xa] sm:$0xff]
    %v924 = vld [vmem:[%s0 + $0x12] sm:$0xff]
    %v925 = vld [vmem:[%s0 + $0x1a] sm:$0xff]
    %v926 = vld [vmem:[%s0 + $0x22] sm:$0xff]
    %v927 = vld [vmem:[%s0 + $0x2a] sm:$0xff]
    %v928 = vld [vmem:[%s0 + $0x32] sm:$0xff]
    %v929 = vld [vmem:[%s0 + $0x3a] sm:$0xff]
    %v930 = vld [vmem:[%s0 + $0x42] sm:$0xff]
    %v931 = vld [vmem:[%s0 + $0x4a] sm:$0xff]
    %v932 = vld [vmem:[%s0 + $0x52] sm:$0xff]
    %v933 = vld [vmem:[%s0 + $0x5a] sm:$0xff]
    %v934 = vld [vmem:[%s0 + $0x62] sm:$0xff]
    %v935 = vld [vmem:[%s0 + $0x6a] sm:$0xff]
    %v936 = vld [vmem:[%s0 + $0x72] sm:$0xff]
    %v937 = vld [vmem:[%s0 + $0x7a] sm:$0xff]
    %v938 = vld [vmem:[%s0 + $0x82] sm:$0xff]
    %v939 = vld [vmem:[%s0 + $0x8a] sm:$0xff]
    %v940 = vld [vmem:[%s0 + $0x92] sm:$0xff]
    %v941 = vld [vmem:[%s0 + $0x9a] sm:$0xff]
    %v942 = vld [vmem:[%s0 + $0xa2] sm:$0xff]
    %v943 = vld [vmem:[%s0 + $0xaa] sm:$0xff]
    %v944 = vld [vmem:[%s0 + $0xb2] sm:$0xff]
    %v945 = vld [vmem:[%s0 + $0xba] sm:$0xff]
    %v946 = vld [vmem:[%s0 + $0xc2] sm:$0xff]
    %v947 = vld [vmem:[%s0 + $0xca] sm:$0xff]
    %v948 = vld [vmem:[%s0 + $0xd2] sm:$0xff]
    %v949 = vld [vmem:[%s0 + $0xda] sm:$0xff]
    %v950 = vld [vmem:[%s0 + $0xe2] sm:$0xff]
    %v951 = vld [vmem:[%s0 + $0xea] sm:$0xff]
    %v952 = vld [vmem:[%s0 + $0xf2] sm:$0xff]
    %v953 = vld [vmem:[%s0 + $0xfa] sm:$0xff]
    %v954 = vld [vmem:[%s0 + $0x102] sm:$0xff]
    %v955 = vld [vmem:[%s0 + $0x10a] sm:$0xff]
    %v956 = vld [vmem:[%s0 + $0x112] sm:$0xff]
    %v957 = vld [vmem:[%s0 + $0x11a] sm:$0xff]
    %v958 = vld [vmem:[%s0 + $0x122] sm:$0xff]
    %v959 = vld [vmem:[%s0 + $0x12a] sm:$0xff]
    %v960 = vld [vmem:[%s0 + $0x132] sm:$0xff]
    %v961 = vpack.c.bf16 %v923, %v922
    %v962 = vpack.c.bf16 %v925, %v924
    %v963 = vpack.c.bf16 %v927, %v926
    %v964 = vpack.c.bf16 %v929, %v928
    %v965 = vpack.c.bf16 %v931, %v930
    %v966 = vpack.c.bf16 %v933, %v932
    %v967 = vpack.c.bf16 %v935, %v934
    %v968 = vpack.c.bf16 %v937, %v936
    %v969 = vpack.c.bf16 %v939, %v938
    %v970 = vpack.c.bf16 %v941, %v940
    %v971 = vpack.c.bf16 %v943, %v942
    %v972 = vpack.c.bf16 %v945, %v944
    %v973 = vpack.c.bf16 %v947, %v946
    %v974 = vpack.c.bf16 %v949, %v948
    %v975 = vpack.c.bf16 %v951, %v950
    %v976 = vpack.c.bf16 %v953, %v952
    %v977 = vpack.c.bf16 %v955, %v954
    %v978 = vpack.c.bf16 %v957, %v956
    %v979 = vpack.c.bf16 %v959, %v958
    %v980 = vpack.c.bf16 %v960, %v960
    %s981 = scalar_lea.vmem %s1, 256
    %v982 = vld [vmem:[%s981] sm:$0xff]
    %v983 = vld [vmem:[%s981 + $0x8] sm:$0xff]
    %v984 = vld [vmem:[%s981 + $0x10] sm:$0xff]
    %v985 = vld [vmem:[%s981 + $0x18] sm:$0xff]
    %v986 = vld [vmem:[%s981 + $0x20] sm:$0xff]
    %v987 = vld [vmem:[%s981 + $0x28] sm:$0xff]
    %v988 = vld [vmem:[%s981 + $0x30] sm:$0xff]
    %v989 = vld [vmem:[%s981 + $0x38] sm:$0xff]
    %v990 = vld [vmem:[%s981 + $0x40] sm:$0xff]
    %v991 = vld [vmem:[%s981 + $0x48] sm:$0xff]
    %v992 = vld [vmem:[%s981 + $0x50] sm:$0xff]
    %v993 = vld [vmem:[%s981 + $0x58] sm:$0xff]
    %v994 = vld [vmem:[%s981 + $0x60] sm:$0xff]
    %v995 = vld [vmem:[%s981 + $0x68] sm:$0xff]
    %v996 = vld [vmem:[%s981 + $0x70] sm:$0xff]
    %v997 = vld [vmem:[%s981 + $0x78] sm:$0xff]
    %v1014 = vunpack.c.l.b16 %v982
    %v1015 = vunpack.c.h.b16 %v982
    %v1016 = vunpack.c.l.b16 %v983
    %v1017 = vunpack.c.h.b16 %v983
    %v1018 = vunpack.c.l.b16 %v984
    %v1019 = vunpack.c.h.b16 %v984
    %v1020 = vunpack.c.l.b16 %v985
    %v1021 = vunpack.c.h.b16 %v985
    %v1022 = vunpack.c.l.b16 %v986
    %v1023 = vunpack.c.h.b16 %v986
    %v1024 = vunpack.c.l.b16 %v987
    %v1025 = vunpack.c.h.b16 %v987
    %v1026 = vunpack.c.l.b16 %v988
    %v1027 = vunpack.c.h.b16 %v988
    %v1028 = vunpack.c.l.b16 %v989
    %v1029 = vunpack.c.h.b16 %v989
    %v1030 = vunpack.c.l.b16 %v990
    %v1031 = vunpack.c.h.b16 %v990
    %v1032 = vunpack.c.l.b16 %v991
    %v1033 = vunpack.c.h.b16 %v991
    %v1034 = vunpack.c.l.b16 %v992
    %v1035 = vunpack.c.h.b16 %v992
    %v1036 = vunpack.c.l.b16 %v993
    %v1037 = vunpack.c.h.b16 %v993
    %v1038 = vunpack.c.l.b16 %v994
    %v1039 = vunpack.c.h.b16 %v994
    %v1040 = vunpack.c.l.b16 %v995
    %v1041 = vunpack.c.h.b16 %v995
    %v1042 = vunpack.c.l.b16 %v996
    %v1043 = vunpack.c.h.b16 %v996
    %v1044 = vunpack.c.l.b16 %v997
    %v1045 = vunpack.c.h.b16 %v997
    %v1046 = vpack.c.b16 %v1016, %v1014
    %v1047 = vpack.c.b16 %v1017, %v1015
    %v1048 = vpack.c.b16 %v1020, %v1018
    %v1049 = vpack.c.b16 %v1021, %v1019
    %v1050 = vpack.c.b16 %v1024, %v1022
    %v1051 = vpack.c.b16 %v1025, %v1023
    %v1052 = vpack.c.b16 %v1028, %v1026
    %v1053 = vpack.c.b16 %v1029, %v1027
    %v1054 = vpack.c.b16 %v1032, %v1030
    %v1055 = vpack.c.b16 %v1033, %v1031
    %v1056 = vpack.c.b16 %v1036, %v1034
    %v1057 = vpack.c.b16 %v1037, %v1035
    %v1058 = vpack.c.b16 %v1040, %v1038
    %v1059 = vpack.c.b16 %v1041, %v1039
    %v1060 = vpack.c.b16 %v1044, %v1042
    %v1061 = vpack.c.b16 %v1045, %v1043
    %1078 = vmatprep.subr.bf16.mxu0 %v1061
    %1079 = vmatpush1.bf16.msra.mxu0 %v1060
    %1080 = vmatprep.subr.bf16.mxu0 %v1059
    %1081 = vmatpush1.bf16.msra.mxu0 %v1058
    %1082 = vmatprep.subr.bf16.mxu0 %v1057
    %1083 = vmatpush1.bf16.msra.mxu0 %v1056
    %1084 = vmatprep.subr.bf16.mxu0 %v1055
    %1085 = vmatpush1.bf16.msra.mxu0 %v1054
    %1086 = vmatprep.subr.bf16.mxu0 %v1053
    %1087 = vmatpush1.bf16.msra.mxu0 %v1052
    %1088 = vmatprep.subr.bf16.mxu0 %v1051
    %1089 = vmatpush1.bf16.msra.mxu0 %v1050
    %1090 = vmatprep.subr.bf16.mxu0 %v1049
    %1091 = vmatpush1.bf16.msra.mxu0 %v1048
    %1092 = vmatprep.subr.bf16.mxu0 %v1047
    %1093 = vmatpush1.bf16.msra.mxu0 %v1046
    %1094 = vmatprep.subr.bf16.mxu0 0
    %1095 = vmatpush2.bf16.msra.mxu0 0
    %1096 = vmatprep.subr.bf16.mxu0 0
    %1097 = vmatpush2.bf16.msra.mxu0 0
    %1098 = vmatprep.subr.bf16.mxu0 0
    %1099 = vmatpush2.bf16.msra.mxu0 0
    %1100 = vmatprep.subr.bf16.mxu0 0
    %1101 = vmatpush2.bf16.msra.mxu0 0
    %1102 = vmatprep.subr.bf16.mxu0 0
    %1103 = vmatpush2.bf16.msra.mxu0 0
    %1104 = vmatprep.subr.bf16.mxu0 0
    %1105 = vmatpush2.bf16.msra.mxu0 0
    %1106 = vmatprep.subr.bf16.mxu0 0
    %1107 = vmatpush2.bf16.msra.mxu0 0
    %1108 = vmatprep.subr.bf16.mxu0 0
    %1109 = vmatpush2.bf16.msra.mxu0 0
    %1110 = vmatprep.mubr.bf16.mxu0 0
    %1111 = vmatmul.mubr.bf16.gmra.mxu0 %v961
    %v1112 = vpop.f32.mrf.mxu0
    %v1113 = vadd.f32 0.0, %v1112
    %v1114 = vpop.f32.mrf.mxu0
    %v1115 = vadd.f32 0.0, %v1114
    %v1116 = vpop.f32.mrf.mxu0
    %v1117 = vadd.f32 0.0, %v1116
    %v1118 = vpop.f32.mrf.mxu0
    %v1119 = vadd.f32 0.0, %v1118
    %1120 = vmatprep.mubr.bf16.mxu0 0
    %1121 = vmatmul.mubr.bf16.gmra.mxu0 %v962
    %v1122 = vpop.f32.mrf.mxu0
    %v1123 = vadd.f32 0.0, %v1122
    %v1124 = vpop.f32.mrf.mxu0
    %v1125 = vadd.f32 0.0, %v1124
    %v1126 = vpop.f32.mrf.mxu0
    %v1127 = vadd.f32 0.0, %v1126
    %v1128 = vpop.f32.mrf.mxu0
    %v1129 = vadd.f32 0.0, %v1128
    %1130 = vmatprep.mubr.bf16.mxu0 0
    %1131 = vmatmul.mubr.bf16.gmra.mxu0 %v963
    %v1132 = vpop.f32.mrf.mxu0
    %v1133 = vadd.f32 0.0, %v1132
    %v1134 = vpop.f32.mrf.mxu0
    %v1135 = vadd.f32 0.0, %v1134
    %v1136 = vpop.f32.mrf.mxu0
    %v1137 = vadd.f32 0.0, %v1136
    %v1138 = vpop.f32.mrf.mxu0
    %v1139 = vadd.f32 0.0, %v1138
    %1140 = vmatprep.mubr.bf16.mxu0 0
    %1141 = vmatmul.mubr.bf16.gmra.mxu0 %v964
    %v1142 = vpop.f32.mrf.mxu0
    %v1143 = vadd.f32 0.0, %v1142
    %v1144 = vpop.f32.mrf.mxu0
    %v1145 = vadd.f32 0.0, %v1144
    %v1146 = vpop.f32.mrf.mxu0
    %v1147 = vadd.f32 0.0, %v1146
    %v1148 = vpop.f32.mrf.mxu0
    %v1149 = vadd.f32 0.0, %v1148
    %1150 = vmatprep.mubr.bf16.mxu0 0
    %1151 = vmatmul.mubr.bf16.gmra.mxu0 %v965
    %v1152 = vpop.f32.mrf.mxu0
    %v1153 = vadd.f32 0.0, %v1152
    %v1154 = vpop.f32.mrf.mxu0
    %v1155 = vadd.f32 0.0, %v1154
    %v1156 = vpop.f32.mrf.mxu0
    %v1157 = vadd.f32 0.0, %v1156
    %v1158 = vpop.f32.mrf.mxu0
    %v1159 = vadd.f32 0.0, %v1158
    %1160 = vmatprep.mubr.bf16.mxu0 0
    %1161 = vmatmul.mubr.bf16.gmra.mxu0 %v966
    %v1162 = vpop.f32.mrf.mxu0
    %v1163 = vadd.f32 0.0, %v1162
    %v1164 = vpop.f32.mrf.mxu0
    %v1165 = vadd.f32 0.0, %v1164
    %v1166 = vpop.f32.mrf.mxu0
    %v1167 = vadd.f32 0.0, %v1166
    %v1168 = vpop.f32.mrf.mxu0
    %v1169 = vadd.f32 0.0, %v1168
    %1170 = vmatprep.mubr.bf16.mxu0 0
    %1171 = vmatmul.mubr.bf16.gmra.mxu0 %v967
    %v1172 = vpop.f32.mrf.mxu0
    %v1173 = vadd.f32 0.0, %v1172
    %v1174 = vpop.f32.mrf.mxu0
    %v1175 = vadd.f32 0.0, %v1174
    %v1176 = vpop.f32.mrf.mxu0
    %v1177 = vadd.f32 0.0, %v1176
    %v1178 = vpop.f32.mrf.mxu0
    %v1179 = vadd.f32 0.0, %v1178
    %1180 = vmatprep.mubr.bf16.mxu0 0
    %1181 = vmatmul.mubr.bf16.gmra.mxu0 %v968
    %v1182 = vpop.f32.mrf.mxu0
    %v1183 = vadd.f32 0.0, %v1182
    %v1184 = vpop.f32.mrf.mxu0
    %v1185 = vadd.f32 0.0, %v1184
    %v1186 = vpop.f32.mrf.mxu0
    %v1187 = vadd.f32 0.0, %v1186
    %v1188 = vpop.f32.mrf.mxu0
    %v1189 = vadd.f32 0.0, %v1188
    %1190 = vmatprep.mubr.bf16.mxu0 0
    %1191 = vmatmul.mubr.bf16.gmra.mxu0 %v969
    %v1192 = vpop.f32.mrf.mxu0
    %v1193 = vadd.f32 0.0, %v1192
    %v1194 = vpop.f32.mrf.mxu0
    %v1195 = vadd.f32 0.0, %v1194
    %v1196 = vpop.f32.mrf.mxu0
    %v1197 = vadd.f32 0.0, %v1196
    %v1198 = vpop.f32.mrf.mxu0
    %v1199 = vadd.f32 0.0, %v1198
    %1200 = vmatprep.mubr.bf16.mxu0 0
    %1201 = vmatmul.mubr.bf16.gmra.mxu0 %v970
    %v1202 = vpop.f32.mrf.mxu0
    %v1203 = vadd.f32 0.0, %v1202
    %v1204 = vpop.f32.mrf.mxu0
    %v1205 = vadd.f32 0.0, %v1204
    %v1206 = vpop.f32.mrf.mxu0
    %v1207 = vadd.f32 0.0, %v1206
    %v1208 = vpop.f32.mrf.mxu0
    %v1209 = vadd.f32 0.0, %v1208
    %1210 = vmatprep.mubr.bf16.mxu0 0
    %1211 = vmatmul.mubr.bf16.gmra.mxu0 %v971
    %v1212 = vpop.f32.mrf.mxu0
    %v1213 = vadd.f32 0.0, %v1212
    %v1214 = vpop.f32.mrf.mxu0
    %v1215 = vadd.f32 0.0, %v1214
    %v1216 = vpop.f32.mrf.mxu0
    %v1217 = vadd.f32 0.0, %v1216
    %v1218 = vpop.f32.mrf.mxu0
    %v1219 = vadd.f32 0.0, %v1218
    %1220 = vmatprep.mubr.bf16.mxu0 0
    %1221 = vmatmul.mubr.bf16.gmra.mxu0 %v972
    %v1222 = vpop.f32.mrf.mxu0
    %v1223 = vadd.f32 0.0, %v1222
    %v1224 = vpop.f32.mrf.mxu0
    %v1225 = vadd.f32 0.0, %v1224
    %v1226 = vpop.f32.mrf.mxu0
    %v1227 = vadd.f32 0.0, %v1226
    %v1228 = vpop.f32.mrf.mxu0
    %v1229 = vadd.f32 0.0, %v1228
    %1230 = vmatprep.mubr.bf16.mxu0 0
    %1231 = vmatmul.mubr.bf16.gmra.mxu0 %v973
    %v1232 = vpop.f32.mrf.mxu0
    %v1233 = vadd.f32 0.0, %v1232
    %v1234 = vpop.f32.mrf.mxu0
    %v1235 = vadd.f32 0.0, %v1234
    %v1236 = vpop.f32.mrf.mxu0
    %v1237 = vadd.f32 0.0, %v1236
    %v1238 = vpop.f32.mrf.mxu0
    %v1239 = vadd.f32 0.0, %v1238
    %1240 = vmatprep.mubr.bf16.mxu0 0
    %1241 = vmatmul.mubr.bf16.gmra.mxu0 %v974
    %v1242 = vpop.f32.mrf.mxu0
    %v1243 = vadd.f32 0.0, %v1242
    %v1244 = vpop.f32.mrf.mxu0
    %v1245 = vadd.f32 0.0, %v1244
    %v1246 = vpop.f32.mrf.mxu0
    %v1247 = vadd.f32 0.0, %v1246
    %v1248 = vpop.f32.mrf.mxu0
    %v1249 = vadd.f32 0.0, %v1248
    %1250 = vmatprep.mubr.bf16.mxu0 0
    %1251 = vmatmul.mubr.bf16.gmra.mxu0 %v975
    %v1252 = vpop.f32.mrf.mxu0
    %v1253 = vadd.f32 0.0, %v1252
    %v1254 = vpop.f32.mrf.mxu0
    %v1255 = vadd.f32 0.0, %v1254
    %v1256 = vpop.f32.mrf.mxu0
    %v1257 = vadd.f32 0.0, %v1256
    %v1258 = vpop.f32.mrf.mxu0
    %v1259 = vadd.f32 0.0, %v1258
    %1260 = vmatprep.mubr.bf16.mxu0 0
    %1261 = vmatmul.mubr.bf16.gmra.mxu0 %v976
    %v1262 = vpop.f32.mrf.mxu0
    %v1263 = vadd.f32 0.0, %v1262
    %v1264 = vpop.f32.mrf.mxu0
    %v1265 = vadd.f32 0.0, %v1264
    %v1266 = vpop.f32.mrf.mxu0
    %v1267 = vadd.f32 0.0, %v1266
    %v1268 = vpop.f32.mrf.mxu0
    %v1269 = vadd.f32 0.0, %v1268
    %1270 = vmatprep.mubr.bf16.mxu0 0
    %1271 = vmatmul.mubr.bf16.gmra.mxu0 %v977
    %v1272 = vpop.f32.mrf.mxu0
    %v1273 = vadd.f32 0.0, %v1272
    %v1274 = vpop.f32.mrf.mxu0
    %v1275 = vadd.f32 0.0, %v1274
    %v1276 = vpop.f32.mrf.mxu0
    %v1277 = vadd.f32 0.0, %v1276
    %v1278 = vpop.f32.mrf.mxu0
    %v1279 = vadd.f32 0.0, %v1278
    %1280 = vmatprep.mubr.bf16.mxu0 0
    %1281 = vmatmul.mubr.bf16.gmra.mxu0 %v978
    %v1282 = vpop.f32.mrf.mxu0
    %v1283 = vadd.f32 0.0, %v1282
    %v1284 = vpop.f32.mrf.mxu0
    %v1285 = vadd.f32 0.0, %v1284
    %v1286 = vpop.f32.mrf.mxu0
    %v1287 = vadd.f32 0.0, %v1286
    %v1288 = vpop.f32.mrf.mxu0
    %v1289 = vadd.f32 0.0, %v1288
    %1290 = vmatprep.mubr.bf16.mxu0 0
    %1291 = vmatmul.mubr.bf16.gmra.mxu0 %v979
    %v1292 = vpop.f32.mrf.mxu0
    %v1293 = vadd.f32 0.0, %v1292
    %v1294 = vpop.f32.mrf.mxu0
    %v1295 = vadd.f32 0.0, %v1294
    %v1296 = vpop.f32.mrf.mxu0
    %v1297 = vadd.f32 0.0, %v1296
    %v1298 = vpop.f32.mrf.mxu0
    %v1299 = vadd.f32 0.0, %v1298
    %1300 = vmatprep.mubr.bf16.mxu0 0
    %1301 = vmatmul.mubr.bf16.gmra.mxu0 %v980
    %v1302 = vpop.f32.mrf.mxu0
    %v1303 = vadd.f32 0.0, %v1302
    %v1304 = vpop.f32.mrf.mxu0
    %v1305 = vadd.f32 0.0, %v1304
    %v1306 = vpop.f32.mrf.mxu0
    %v1307 = vpop.f32.mrf.mxu0
    %1308 = vdwg.mxu0
    %v1309 = vadd.f32 %v726, %v1113
    %v1310 = vadd.f32 %v728, %v1115
    %v1311 = vadd.f32 %v730, %v1117
    %v1312 = vadd.f32 %v732, %v1119
    %v1313 = vadd.f32 %v736, %v1123
    %v1314 = vadd.f32 %v738, %v1125
    %v1315 = vadd.f32 %v740, %v1127
    %v1316 = vadd.f32 %v742, %v1129
    %v1317 = vadd.f32 %v746, %v1133
    %v1318 = vadd.f32 %v748, %v1135
    %v1319 = vadd.f32 %v750, %v1137
    %v1320 = vadd.f32 %v752, %v1139
    %v1321 = vadd.f32 %v756, %v1143
    %v1322 = vadd.f32 %v758, %v1145
    %v1323 = vadd.f32 %v760, %v1147
    %v1324 = vadd.f32 %v762, %v1149
    %v1325 = vadd.f32 %v766, %v1153
    %v1326 = vadd.f32 %v768, %v1155
    %v1327 = vadd.f32 %v770, %v1157
    %v1328 = vadd.f32 %v772, %v1159
    %v1329 = vadd.f32 %v776, %v1163
    %v1330 = vadd.f32 %v778, %v1165
    %v1331 = vadd.f32 %v780, %v1167
    %v1332 = vadd.f32 %v782, %v1169
    %v1333 = vadd.f32 %v786, %v1173
    %v1334 = vadd.f32 %v788, %v1175
    %v1335 = vadd.f32 %v790, %v1177
    %v1336 = vadd.f32 %v792, %v1179
    %v1337 = vadd.f32 %v796, %v1183
    %v1338 = vadd.f32 %v798, %v1185
    %v1339 = vadd.f32 %v800, %v1187
    %v1340 = vadd.f32 %v802, %v1189
    %v1341 = vadd.f32 %v806, %v1193
    %v1342 = vadd.f32 %v808, %v1195
    %v1343 = vadd.f32 %v810, %v1197
    %v1344 = vadd.f32 %v812, %v1199
    %v1345 = vadd.f32 %v816, %v1203
    %v1346 = vadd.f32 %v818, %v1205
    %v1347 = vadd.f32 %v820, %v1207
    %v1348 = vadd.f32 %v822, %v1209
    %v1349 = vadd.f32 %v826, %v1213
    %v1350 = vadd.f32 %v828, %v1215
    %v1351 = vadd.f32 %v830, %v1217
    %v1352 = vadd.f32 %v832, %v1219
    %v1353 = vadd.f32 %v836, %v1223
    %v1354 = vadd.f32 %v838, %v1225
    %v1355 = vadd.f32 %v840, %v1227
    %v1356 = vadd.f32 %v842, %v1229
    %v1357 = vadd.f32 %v846, %v1233
    %v1358 = vadd.f32 %v848, %v1235
    %v1359 = vadd.f32 %v850, %v1237
    %v1360 = vadd.f32 %v852, %v1239
    %v1361 = vadd.f32 %v856, %v1243
    %v1362 = vadd.f32 %v858, %v1245
    %v1363 = vadd.f32 %v860, %v1247
    %v1364 = vadd.f32 %v862, %v1249
    %v1365 = vadd.f32 %v866, %v1253
    %v1366 = vadd.f32 %v868, %v1255
    %v1367 = vadd.f32 %v870, %v1257
    %v1368 = vadd.f32 %v872, %v1259
    %v1369 = vadd.f32 %v876, %v1263
    %v1370 = vadd.f32 %v878, %v1265
    %v1371 = vadd.f32 %v880, %v1267
    %v1372 = vadd.f32 %v882, %v1269
    %v1373 = vadd.f32 %v886, %v1273
    %v1374 = vadd.f32 %v888, %v1275
    %v1375 = vadd.f32 %v890, %v1277
    %v1376 = vadd.f32 %v892, %v1279
    %v1377 = vadd.f32 %v896, %v1283
    %v1378 = vadd.f32 %v898, %v1285
    %v1379 = vadd.f32 %v900, %v1287
    %v1380 = vadd.f32 %v902, %v1289
    %v1381 = vadd.f32 %v906, %v1293
    %v1382 = vadd.f32 %v908, %v1295
    %v1383 = vadd.f32 %v910, %v1297
    %v1384 = vadd.f32 %v912, %v1299
    %v1385 = vadd.f32 %v916, %v1303
    %v1386 = vadd.f32 %v918, %v1305
    %v1387 = vld [vmem:[%s0 + $0x3] sm:$0xff]
    %v1388 = vld [vmem:[%s0 + $0xb] sm:$0xff]
    %v1389 = vld [vmem:[%s0 + $0x13] sm:$0xff]
    %v1390 = vld [vmem:[%s0 + $0x1b] sm:$0xff]
    %v1391 = vld [vmem:[%s0 + $0x23] sm:$0xff]
    %v1392 = vld [vmem:[%s0 + $0x2b] sm:$0xff]
    %v1393 = vld [vmem:[%s0 + $0x33] sm:$0xff]
    %v1394 = vld [vmem:[%s0 + $0x3b] sm:$0xff]
    %v1395 = vld [vmem:[%s0 + $0x43] sm:$0xff]
    %v1396 = vld [vmem:[%s0 + $0x4b] sm:$0xff]
    %v1397 = vld [vmem:[%s0 + $0x53] sm:$0xff]
    %v1398 = vld [vmem:[%s0 + $0x5b] sm:$0xff]
    %v1399 = vld [vmem:[%s0 + $0x63] sm:$0xff]
    %v1400 = vld [vmem:[%s0 + $0x6b] sm:$0xff]
    %v1401 = vld [vmem:[%s0 + $0x73] sm:$0xff]
    %v1402 = vld [vmem:[%s0 + $0x7b] sm:$0xff]
    %v1403 = vld [vmem:[%s0 + $0x83] sm:$0xff]
    %v1404 = vld [vmem:[%s0 + $0x8b] sm:$0xff]
    %v1405 = vld [vmem:[%s0 + $0x93] sm:$0xff]
    %v1406 = vld [vmem:[%s0 + $0x9b] sm:$0xff]
    %v1407 = vld [vmem:[%s0 + $0xa3] sm:$0xff]
    %v1408 = vld [vmem:[%s0 + $0xab] sm:$0xff]
    %v1409 = vld [vmem:[%s0 + $0xb3] sm:$0xff]
    %v1410 = vld [vmem:[%s0 + $0xbb] sm:$0xff]
    %v1411 = vld [vmem:[%s0 + $0xc3] sm:$0xff]
    %v1412 = vld [vmem:[%s0 + $0xcb] sm:$0xff]
    %v1413 = vld [vmem:[%s0 + $0xd3] sm:$0xff]
    %v1414 = vld [vmem:[%s0 + $0xdb] sm:$0xff]
    %v1415 = vld [vmem:[%s0 + $0xe3] sm:$0xff]
    %v1416 = vld [vmem:[%s0 + $0xeb] sm:$0xff]
    %v1417 = vld [vmem:[%s0 + $0xf3] sm:$0xff]
    %v1418 = vld [vmem:[%s0 + $0xfb] sm:$0xff]
    %v1419 = vld [vmem:[%s0 + $0x103] sm:$0xff]
    %v1420 = vld [vmem:[%s0 + $0x10b] sm:$0xff]
    %v1421 = vld [vmem:[%s0 + $0x113] sm:$0xff]
    %v1422 = vld [vmem:[%s0 + $0x11b] sm:$0xff]
    %v1423 = vld [vmem:[%s0 + $0x123] sm:$0xff]
    %v1424 = vld [vmem:[%s0 + $0x12b] sm:$0xff]
    %v1425 = vld [vmem:[%s0 + $0x133] sm:$0xff]
    %v1426 = vpack.c.bf16 %v1388, %v1387
    %v1427 = vpack.c.bf16 %v1390, %v1389
    %v1428 = vpack.c.bf16 %v1392, %v1391
    %v1429 = vpack.c.bf16 %v1394, %v1393
    %v1430 = vpack.c.bf16 %v1396, %v1395
    %v1431 = vpack.c.bf16 %v1398, %v1397
    %v1432 = vpack.c.bf16 %v1400, %v1399
    %v1433 = vpack.c.bf16 %v1402, %v1401
    %v1434 = vpack.c.bf16 %v1404, %v1403
    %v1435 = vpack.c.bf16 %v1406, %v1405
    %v1436 = vpack.c.bf16 %v1408, %v1407
    %v1437 = vpack.c.bf16 %v1410, %v1409
    %v1438 = vpack.c.bf16 %v1412, %v1411
    %v1439 = vpack.c.bf16 %v1414, %v1413
    %v1440 = vpack.c.bf16 %v1416, %v1415
    %v1441 = vpack.c.bf16 %v1418, %v1417
    %v1442 = vpack.c.bf16 %v1420, %v1419
    %v1443 = vpack.c.bf16 %v1422, %v1421
    %v1444 = vpack.c.bf16 %v1424, %v1423
    %v1445 = vpack.c.bf16 %v1425, %v1425
    %s1446 = scalar_lea.vmem %s1, 384
    %v1447 = vld [vmem:[%s1446] sm:$0xff]
    %v1448 = vld [vmem:[%s1446 + $0x8] sm:$0xff]
    %v1449 = vld [vmem:[%s1446 + $0x10] sm:$0xff]
    %v1450 = vld [vmem:[%s1446 + $0x18] sm:$0xff]
    %v1451 = vld [vmem:[%s1446 + $0x20] sm:$0xff]
    %v1452 = vld [vmem:[%s1446 + $0x28] sm:$0xff]
    %v1453 = vld [vmem:[%s1446 + $0x30] sm:$0xff]
    %v1454 = vld [vmem:[%s1446 + $0x38] sm:$0xff]
    %v1455 = vld [vmem:[%s1446 + $0x40] sm:$0xff]
    %v1456 = vld [vmem:[%s1446 + $0x48] sm:$0xff]
    %v1457 = vld [vmem:[%s1446 + $0x50] sm:$0xff]
    %v1458 = vld [vmem:[%s1446 + $0x58] sm:$0xff]
    %v1459 = vld [vmem:[%s1446 + $0x60] sm:$0xff]
    %v1460 = vld [vmem:[%s1446 + $0x68] sm:$0xff]
    %v1461 = vld [vmem:[%s1446 + $0x70] sm:$0xff]
    %v1462 = vld [vmem:[%s1446 + $0x78] sm:$0xff]
    %v1479 = vunpack.c.l.b16 %v1447
    %v1480 = vunpack.c.h.b16 %v1447
    %v1481 = vunpack.c.l.b16 %v1448
    %v1482 = vunpack.c.h.b16 %v1448
    %v1483 = vunpack.c.l.b16 %v1449
    %v1484 = vunpack.c.h.b16 %v1449
    %v1485 = vunpack.c.l.b16 %v1450
    %v1486 = vunpack.c.h.b16 %v1450
    %v1487 = vunpack.c.l.b16 %v1451
    %v1488 = vunpack.c.h.b16 %v1451
    %v1489 = vunpack.c.l.b16 %v1452
    %v1490 = vunpack.c.h.b16 %v1452
    %v1491 = vunpack.c.l.b16 %v1453
    %v1492 = vunpack.c.h.b16 %v1453
    %v1493 = vunpack.c.l.b16 %v1454
    %v1494 = vunpack.c.h.b16 %v1454
    %v1495 = vunpack.c.l.b16 %v1455
    %v1496 = vunpack.c.h.b16 %v1455
    %v1497 = vunpack.c.l.b16 %v1456
    %v1498 = vunpack.c.h.b16 %v1456
    %v1499 = vunpack.c.l.b16 %v1457
    %v1500 = vunpack.c.h.b16 %v1457
    %v1501 = vunpack.c.l.b16 %v1458
    %v1502 = vunpack.c.h.b16 %v1458
    %v1503 = vunpack.c.l.b16 %v1459
    %v1504 = vunpack.c.h.b16 %v1459
    %v1505 = vunpack.c.l.b16 %v1460
    %v1506 = vunpack.c.h.b16 %v1460
    %v1507 = vunpack.c.l.b16 %v1461
    %v1508 = vunpack.c.h.b16 %v1461
    %v1509 = vunpack.c.l.b16 %v1462
    %v1510 = vunpack.c.h.b16 %v1462
    %v1511 = vpack.c.b16 %v1481, %v1479
    %v1512 = vpack.c.b16 %v1482, %v1480
    %v1513 = vpack.c.b16 %v1485, %v1483
    %v1514 = vpack.c.b16 %v1486, %v1484
    %v1515 = vpack.c.b16 %v1489, %v1487
    %v1516 = vpack.c.b16 %v1490, %v1488
    %v1517 = vpack.c.b16 %v1493, %v1491
    %v1518 = vpack.c.b16 %v1494, %v1492
    %v1519 = vpack.c.b16 %v1497, %v1495
    %v1520 = vpack.c.b16 %v1498, %v1496
    %v1521 = vpack.c.b16 %v1501, %v1499
    %v1522 = vpack.c.b16 %v1502, %v1500
    %v1523 = vpack.c.b16 %v1505, %v1503
    %v1524 = vpack.c.b16 %v1506, %v1504
    %v1525 = vpack.c.b16 %v1509, %v1507
    %v1526 = vpack.c.b16 %v1510, %v1508
    %1543 = vmatprep.subr.bf16.mxu0 %v1526
    %1544 = vmatpush1.bf16.msra.mxu0 %v1525
    %1545 = vmatprep.subr.bf16.mxu0 %v1524
    %1546 = vmatpush1.bf16.msra.mxu0 %v1523
    %1547 = vmatprep.subr.bf16.mxu0 %v1522
    %1548 = vmatpush1.bf16.msra.mxu0 %v1521
    %1549 = vmatprep.subr.bf16.mxu0 %v1520
    %1550 = vmatpush1.bf16.msra.mxu0 %v1519
    %1551 = vmatprep.subr.bf16.mxu0 %v1518
    %1552 = vmatpush1.bf16.msra.mxu0 %v1517
    %1553 = vmatprep.subr.bf16.mxu0 %v1516
    %1554 = vmatpush1.bf16.msra.mxu0 %v1515
    %1555 = vmatprep.subr.bf16.mxu0 %v1514
    %1556 = vmatpush1.bf16.msra.mxu0 %v1513
    %1557 = vmatprep.subr.bf16.mxu0 %v1512
    %1558 = vmatpush1.bf16.msra.mxu0 %v1511
    %1559 = vmatprep.subr.bf16.mxu0 0
    %1560 = vmatpush2.bf16.msra.mxu0 0
    %1561 = vmatprep.subr.bf16.mxu0 0
    %1562 = vmatpush2.bf16.msra.mxu0 0
    %1563 = vmatprep.subr.bf16.mxu0 0
    %1564 = vmatpush2.bf16.msra.mxu0 0
    %1565 = vmatprep.subr.bf16.mxu0 0
    %1566 = vmatpush2.bf16.msra.mxu0 0
    %1567 = vmatprep.subr.bf16.mxu0 0
    %1568 = vmatpush2.bf16.msra.mxu0 0
    %1569 = vmatprep.subr.bf16.mxu0 0
    %1570 = vmatpush2.bf16.msra.mxu0 0
    %1571 = vmatprep.subr.bf16.mxu0 0
    %1572 = vmatpush2.bf16.msra.mxu0 0
    %1573 = vmatprep.subr.bf16.mxu0 0
    %1574 = vmatpush2.bf16.msra.mxu0 0
    %1575 = vmatprep.mubr.bf16.mxu0 0
    %1576 = vmatmul.mubr.bf16.gmra.mxu0 %v1426
    %v1577 = vpop.f32.mrf.mxu0
    %v1578 = vadd.f32 0.0, %v1577
    %v1579 = vpop.f32.mrf.mxu0
    %v1580 = vadd.f32 0.0, %v1579
    %v1581 = vpop.f32.mrf.mxu0
    %v1582 = vadd.f32 0.0, %v1581
    %v1583 = vpop.f32.mrf.mxu0
    %v1584 = vadd.f32 0.0, %v1583
    %1585 = vmatprep.mubr.bf16.mxu0 0
    %1586 = vmatmul.mubr.bf16.gmra.mxu0 %v1427
    %v1587 = vpop.f32.mrf.mxu0
    %v1588 = vadd.f32 0.0, %v1587
    %v1589 = vpop.f32.mrf.mxu0
    %v1590 = vadd.f32 0.0, %v1589
    %v1591 = vpop.f32.mrf.mxu0
    %v1592 = vadd.f32 0.0, %v1591
    %v1593 = vpop.f32.mrf.mxu0
    %v1594 = vadd.f32 0.0, %v1593
    %1595 = vmatprep.mubr.bf16.mxu0 0
    %1596 = vmatmul.mubr.bf16.gmra.mxu0 %v1428
    %v1597 = vpop.f32.mrf.mxu0
    %v1598 = vadd.f32 0.0, %v1597
    %v1599 = vpop.f32.mrf.mxu0
    %v1600 = vadd.f32 0.0, %v1599
    %v1601 = vpop.f32.mrf.mxu0
    %v1602 = vadd.f32 0.0, %v1601
    %v1603 = vpop.f32.mrf.mxu0
    %v1604 = vadd.f32 0.0, %v1603
    %1605 = vmatprep.mubr.bf16.mxu0 0
    %1606 = vmatmul.mubr.bf16.gmra.mxu0 %v1429
    %v1607 = vpop.f32.mrf.mxu0
    %v1608 = vadd.f32 0.0, %v1607
    %v1609 = vpop.f32.mrf.mxu0
    %v1610 = vadd.f32 0.0, %v1609
    %v1611 = vpop.f32.mrf.mxu0
    %v1612 = vadd.f32 0.0, %v1611
    %v1613 = vpop.f32.mrf.mxu0
    %v1614 = vadd.f32 0.0, %v1613
    %1615 = vmatprep.mubr.bf16.mxu0 0
    %1616 = vmatmul.mubr.bf16.gmra.mxu0 %v1430
    %v1617 = vpop.f32.mrf.mxu0
    %v1618 = vadd.f32 0.0, %v1617
    %v1619 = vpop.f32.mrf.mxu0
    %v1620 = vadd.f32 0.0, %v1619
    %v1621 = vpop.f32.mrf.mxu0
    %v1622 = vadd.f32 0.0, %v1621
    %v1623 = vpop.f32.mrf.mxu0
    %v1624 = vadd.f32 0.0, %v1623
    %1625 = vmatprep.mubr.bf16.mxu0 0
    %1626 = vmatmul.mubr.bf16.gmra.mxu0 %v1431
    %v1627 = vpop.f32.mrf.mxu0
    %v1628 = vadd.f32 0.0, %v1627
    %v1629 = vpop.f32.mrf.mxu0
    %v1630 = vadd.f32 0.0, %v1629
    %v1631 = vpop.f32.mrf.mxu0
    %v1632 = vadd.f32 0.0, %v1631
    %v1633 = vpop.f32.mrf.mxu0
    %v1634 = vadd.f32 0.0, %v1633
    %1635 = vmatprep.mubr.bf16.mxu0 0
    %1636 = vmatmul.mubr.bf16.gmra.mxu0 %v1432
    %v1637 = vpop.f32.mrf.mxu0
    %v1638 = vadd.f32 0.0, %v1637
    %v1639 = vpop.f32.mrf.mxu0
    %v1640 = vadd.f32 0.0, %v1639
    %v1641 = vpop.f32.mrf.mxu0
    %v1642 = vadd.f32 0.0, %v1641
    %v1643 = vpop.f32.mrf.mxu0
    %v1644 = vadd.f32 0.0, %v1643
    %1645 = vmatprep.mubr.bf16.mxu0 0
    %1646 = vmatmul.mubr.bf16.gmra.mxu0 %v1433
    %v1647 = vpop.f32.mrf.mxu0
    %v1648 = vadd.f32 0.0, %v1647
    %v1649 = vpop.f32.mrf.mxu0
    %v1650 = vadd.f32 0.0, %v1649
    %v1651 = vpop.f32.mrf.mxu0
    %v1652 = vadd.f32 0.0, %v1651
    %v1653 = vpop.f32.mrf.mxu0
    %v1654 = vadd.f32 0.0, %v1653
    %1655 = vmatprep.mubr.bf16.mxu0 0
    %1656 = vmatmul.mubr.bf16.gmra.mxu0 %v1434
    %v1657 = vpop.f32.mrf.mxu0
    %v1658 = vadd.f32 0.0, %v1657
    %v1659 = vpop.f32.mrf.mxu0
    %v1660 = vadd.f32 0.0, %v1659
    %v1661 = vpop.f32.mrf.mxu0
    %v1662 = vadd.f32 0.0, %v1661
    %v1663 = vpop.f32.mrf.mxu0
    %v1664 = vadd.f32 0.0, %v1663
    %1665 = vmatprep.mubr.bf16.mxu0 0
    %1666 = vmatmul.mubr.bf16.gmra.mxu0 %v1435
    %v1667 = vpop.f32.mrf.mxu0
    %v1668 = vadd.f32 0.0, %v1667
    %v1669 = vpop.f32.mrf.mxu0
    %v1670 = vadd.f32 0.0, %v1669
    %v1671 = vpop.f32.mrf.mxu0
    %v1672 = vadd.f32 0.0, %v1671
    %v1673 = vpop.f32.mrf.mxu0
    %v1674 = vadd.f32 0.0, %v1673
    %1675 = vmatprep.mubr.bf16.mxu0 0
    %1676 = vmatmul.mubr.bf16.gmra.mxu0 %v1436
    %v1677 = vpop.f32.mrf.mxu0
    %v1678 = vadd.f32 0.0, %v1677
    %v1679 = vpop.f32.mrf.mxu0
    %v1680 = vadd.f32 0.0, %v1679
    %v1681 = vpop.f32.mrf.mxu0
    %v1682 = vadd.f32 0.0, %v1681
    %v1683 = vpop.f32.mrf.mxu0
    %v1684 = vadd.f32 0.0, %v1683
    %1685 = vmatprep.mubr.bf16.mxu0 0
    %1686 = vmatmul.mubr.bf16.gmra.mxu0 %v1437
    %v1687 = vpop.f32.mrf.mxu0
    %v1688 = vadd.f32 0.0, %v1687
    %v1689 = vpop.f32.mrf.mxu0
    %v1690 = vadd.f32 0.0, %v1689
    %v1691 = vpop.f32.mrf.mxu0
    %v1692 = vadd.f32 0.0, %v1691
    %v1693 = vpop.f32.mrf.mxu0
    %v1694 = vadd.f32 0.0, %v1693
    %1695 = vmatprep.mubr.bf16.mxu0 0
    %1696 = vmatmul.mubr.bf16.gmra.mxu0 %v1438
    %v1697 = vpop.f32.mrf.mxu0
    %v1698 = vadd.f32 0.0, %v1697
    %v1699 = vpop.f32.mrf.mxu0
    %v1700 = vadd.f32 0.0, %v1699
    %v1701 = vpop.f32.mrf.mxu0
    %v1702 = vadd.f32 0.0, %v1701
    %v1703 = vpop.f32.mrf.mxu0
    %v1704 = vadd.f32 0.0, %v1703
    %1705 = vmatprep.mubr.bf16.mxu0 0
    %1706 = vmatmul.mubr.bf16.gmra.mxu0 %v1439
    %v1707 = vpop.f32.mrf.mxu0
    %v1708 = vadd.f32 0.0, %v1707
    %v1709 = vpop.f32.mrf.mxu0
    %v1710 = vadd.f32 0.0, %v1709
    %v1711 = vpop.f32.mrf.mxu0
    %v1712 = vadd.f32 0.0, %v1711
    %v1713 = vpop.f32.mrf.mxu0
    %v1714 = vadd.f32 0.0, %v1713
    %1715 = vmatprep.mubr.bf16.mxu0 0
    %1716 = vmatmul.mubr.bf16.gmra.mxu0 %v1440
    %v1717 = vpop.f32.mrf.mxu0
    %v1718 = vadd.f32 0.0, %v1717
    %v1719 = vpop.f32.mrf.mxu0
    %v1720 = vadd.f32 0.0, %v1719
    %v1721 = vpop.f32.mrf.mxu0
    %v1722 = vadd.f32 0.0, %v1721
    %v1723 = vpop.f32.mrf.mxu0
    %v1724 = vadd.f32 0.0, %v1723
    %1725 = vmatprep.mubr.bf16.mxu0 0
    %1726 = vmatmul.mubr.bf16.gmra.mxu0 %v1441
    %v1727 = vpop.f32.mrf.mxu0
    %v1728 = vadd.f32 0.0, %v1727
    %v1729 = vpop.f32.mrf.mxu0
    %v1730 = vadd.f32 0.0, %v1729
    %v1731 = vpop.f32.mrf.mxu0
    %v1732 = vadd.f32 0.0, %v1731
    %v1733 = vpop.f32.mrf.mxu0
    %v1734 = vadd.f32 0.0, %v1733
    %1735 = vmatprep.mubr.bf16.mxu0 0
    %1736 = vmatmul.mubr.bf16.gmra.mxu0 %v1442
    %v1737 = vpop.f32.mrf.mxu0
    %v1738 = vadd.f32 0.0, %v1737
    %v1739 = vpop.f32.mrf.mxu0
    %v1740 = vadd.f32 0.0, %v1739
    %v1741 = vpop.f32.mrf.mxu0
    %v1742 = vadd.f32 0.0, %v1741
    %v1743 = vpop.f32.mrf.mxu0
    %v1744 = vadd.f32 0.0, %v1743
    %1745 = vmatprep.mubr.bf16.mxu0 0
    %1746 = vmatmul.mubr.bf16.gmra.mxu0 %v1443
    %v1747 = vpop.f32.mrf.mxu0
    %v1748 = vadd.f32 0.0, %v1747
    %v1749 = vpop.f32.mrf.mxu0
    %v1750 = vadd.f32 0.0, %v1749
    %v1751 = vpop.f32.mrf.mxu0
    %v1752 = vadd.f32 0.0, %v1751
    %v1753 = vpop.f32.mrf.mxu0
    %v1754 = vadd.f32 0.0, %v1753
    %1755 = vmatprep.mubr.bf16.mxu0 0
    %1756 = vmatmul.mubr.bf16.gmra.mxu0 %v1444
    %v1757 = vpop.f32.mrf.mxu0
    %v1758 = vadd.f32 0.0, %v1757
    %v1759 = vpop.f32.mrf.mxu0
    %v1760 = vadd.f32 0.0, %v1759
    %v1761 = vpop.f32.mrf.mxu0
    %v1762 = vadd.f32 0.0, %v1761
    %v1763 = vpop.f32.mrf.mxu0
    %v1764 = vadd.f32 0.0, %v1763
    %1765 = vmatprep.mubr.bf16.mxu0 0
    %1766 = vmatmul.mubr.bf16.gmra.mxu0 %v1445
    %v1767 = vpop.f32.mrf.mxu0
    %v1768 = vadd.f32 0.0, %v1767
    %v1769 = vpop.f32.mrf.mxu0
    %v1770 = vadd.f32 0.0, %v1769
    %v1771 = vpop.f32.mrf.mxu0
    %v1772 = vpop.f32.mrf.mxu0
    %1773 = vdwg.mxu0
    %v1774 = vadd.f32 %v1309, %v1578
    %v1775 = vadd.f32 %v1310, %v1580
    %v1776 = vadd.f32 %v1311, %v1582
    %v1777 = vadd.f32 %v1312, %v1584
    %v1778 = vadd.f32 %v1313, %v1588
    %v1779 = vadd.f32 %v1314, %v1590
    %v1780 = vadd.f32 %v1315, %v1592
    %v1781 = vadd.f32 %v1316, %v1594
    %v1782 = vadd.f32 %v1317, %v1598
    %v1783 = vadd.f32 %v1318, %v1600
    %v1784 = vadd.f32 %v1319, %v1602
    %v1785 = vadd.f32 %v1320, %v1604
    %v1786 = vadd.f32 %v1321, %v1608
    %v1787 = vadd.f32 %v1322, %v1610
    %v1788 = vadd.f32 %v1323, %v1612
    %v1789 = vadd.f32 %v1324, %v1614
    %v1790 = vadd.f32 %v1325, %v1618
    %v1791 = vadd.f32 %v1326, %v1620
    %v1792 = vadd.f32 %v1327, %v1622
    %v1793 = vadd.f32 %v1328, %v1624
    %v1794 = vadd.f32 %v1329, %v1628
    %v1795 = vadd.f32 %v1330, %v1630
    %v1796 = vadd.f32 %v1331, %v1632
    %v1797 = vadd.f32 %v1332, %v1634
    %v1798 = vadd.f32 %v1333, %v1638
    %v1799 = vadd.f32 %v1334, %v1640
    %v1800 = vadd.f32 %v1335, %v1642
    %v1801 = vadd.f32 %v1336, %v1644
    %v1802 = vadd.f32 %v1337, %v1648
    %v1803 = vadd.f32 %v1338, %v1650
    %v1804 = vadd.f32 %v1339, %v1652
    %v1805 = vadd.f32 %v1340, %v1654
    %v1806 = vadd.f32 %v1341, %v1658
    %v1807 = vadd.f32 %v1342, %v1660
    %v1808 = vadd.f32 %v1343, %v1662
    %v1809 = vadd.f32 %v1344, %v1664
    %v1810 = vadd.f32 %v1345, %v1668
    %v1811 = vadd.f32 %v1346, %v1670
    %v1812 = vadd.f32 %v1347, %v1672
    %v1813 = vadd.f32 %v1348, %v1674
    %v1814 = vadd.f32 %v1349, %v1678
    %v1815 = vadd.f32 %v1350, %v1680
    %v1816 = vadd.f32 %v1351, %v1682
    %v1817 = vadd.f32 %v1352, %v1684
    %v1818 = vadd.f32 %v1353, %v1688
    %v1819 = vadd.f32 %v1354, %v1690
    %v1820 = vadd.f32 %v1355, %v1692
    %v1821 = vadd.f32 %v1356, %v1694
    %v1822 = vadd.f32 %v1357, %v1698
    %v1823 = vadd.f32 %v1358, %v1700
    %v1824 = vadd.f32 %v1359, %v1702
    %v1825 = vadd.f32 %v1360, %v1704
    %v1826 = vadd.f32 %v1361, %v1708
    %v1827 = vadd.f32 %v1362, %v1710
    %v1828 = vadd.f32 %v1363, %v1712
    %v1829 = vadd.f32 %v1364, %v1714
    %v1830 = vadd.f32 %v1365, %v1718
    %v1831 = vadd.f32 %v1366, %v1720
    %v1832 = vadd.f32 %v1367, %v1722
    %v1833 = vadd.f32 %v1368, %v1724
    %v1834 = vadd.f32 %v1369, %v1728
    %v1835 = vadd.f32 %v1370, %v1730
    %v1836 = vadd.f32 %v1371, %v1732
    %v1837 = vadd.f32 %v1372, %v1734
    %v1838 = vadd.f32 %v1373, %v1738
    %v1839 = vadd.f32 %v1374, %v1740
    %v1840 = vadd.f32 %v1375, %v1742
    %v1841 = vadd.f32 %v1376, %v1744
    %v1842 = vadd.f32 %v1377, %v1748
    %v1843 = vadd.f32 %v1378, %v1750
    %v1844 = vadd.f32 %v1379, %v1752
    %v1845 = vadd.f32 %v1380, %v1754
    %v1846 = vadd.f32 %v1381, %v1758
    %v1847 = vadd.f32 %v1382, %v1760
    %v1848 = vadd.f32 %v1383, %v1762
    %v1849 = vadd.f32 %v1384, %v1764
    %v1850 = vadd.f32 %v1385, %v1768
    %v1851 = vadd.f32 %v1386, %v1770
    %v1852 = vld [vmem:[%s0 + $0x4] sm:$0xff]
    %v1853 = vld [vmem:[%s0 + $0xc] sm:$0xff]
    %v1854 = vld [vmem:[%s0 + $0x14] sm:$0xff]
    %v1855 = vld [vmem:[%s0 + $0x1c] sm:$0xff]
    %v1856 = vld [vmem:[%s0 + $0x24] sm:$0xff]
    %v1857 = vld [vmem:[%s0 + $0x2c] sm:$0xff]
    %v1858 = vld [vmem:[%s0 + $0x34] sm:$0xff]
    %v1859 = vld [vmem:[%s0 + $0x3c] sm:$0xff]
    %v1860 = vld [vmem:[%s0 + $0x44] sm:$0xff]
    %v1861 = vld [vmem:[%s0 + $0x4c] sm:$0xff]
    %v1862 = vld [vmem:[%s0 + $0x54] sm:$0xff]
    %v1863 = vld [vmem:[%s0 + $0x5c] sm:$0xff]
    %v1864 = vld [vmem:[%s0 + $0x64] sm:$0xff]
    %v1865 = vld [vmem:[%s0 + $0x6c] sm:$0xff]
    %v1866 = vld [vmem:[%s0 + $0x74] sm:$0xff]
    %v1867 = vld [vmem:[%s0 + $0x7c] sm:$0xff]
    %v1868 = vld [vmem:[%s0 + $0x84] sm:$0xff]
    %v1869 = vld [vmem:[%s0 + $0x8c] sm:$0xff]
    %v1870 = vld [vmem:[%s0 + $0x94] sm:$0xff]
    %v1871 = vld [vmem:[%s0 + $0x9c] sm:$0xff]
    %v1872 = vld [vmem:[%s0 + $0xa4] sm:$0xff]
    %v1873 = vld [vmem:[%s0 + $0xac] sm:$0xff]
    %v1874 = vld [vmem:[%s0 + $0xb4] sm:$0xff]
    %v1875 = vld [vmem:[%s0 + $0xbc] sm:$0xff]
    %v1876 = vld [vmem:[%s0 + $0xc4] sm:$0xff]
    %v1877 = vld [vmem:[%s0 + $0xcc] sm:$0xff]
    %v1878 = vld [vmem:[%s0 + $0xd4] sm:$0xff]
    %v1879 = vld [vmem:[%s0 + $0xdc] sm:$0xff]
    %v1880 = vld [vmem:[%s0 + $0xe4] sm:$0xff]
    %v1881 = vld [vmem:[%s0 + $0xec] sm:$0xff]
    %v1882 = vld [vmem:[%s0 + $0xf4] sm:$0xff]
    %v1883 = vld [vmem:[%s0 + $0xfc] sm:$0xff]
    %v1884 = vld [vmem:[%s0 + $0x104] sm:$0xff]
    %v1885 = vld [vmem:[%s0 + $0x10c] sm:$0xff]
    %v1886 = vld [vmem:[%s0 + $0x114] sm:$0xff]
    %v1887 = vld [vmem:[%s0 + $0x11c] sm:$0xff]
    %v1888 = vld [vmem:[%s0 + $0x124] sm:$0xff]
    %v1889 = vld [vmem:[%s0 + $0x12c] sm:$0xff]
    %v1890 = vld [vmem:[%s0 + $0x134] sm:$0xff]
    %v1891 = vpack.c.bf16 %v1853, %v1852
    %v1892 = vpack.c.bf16 %v1855, %v1854
    %v1893 = vpack.c.bf16 %v1857, %v1856
    %v1894 = vpack.c.bf16 %v1859, %v1858
    %v1895 = vpack.c.bf16 %v1861, %v1860
    %v1896 = vpack.c.bf16 %v1863, %v1862
    %v1897 = vpack.c.bf16 %v1865, %v1864
    %v1898 = vpack.c.bf16 %v1867, %v1866
    %v1899 = vpack.c.bf16 %v1869, %v1868
    %v1900 = vpack.c.bf16 %v1871, %v1870
    %v1901 = vpack.c.bf16 %v1873, %v1872
    %v1902 = vpack.c.bf16 %v1875, %v1874
    %v1903 = vpack.c.bf16 %v1877, %v1876
    %v1904 = vpack.c.bf16 %v1879, %v1878
    %v1905 = vpack.c.bf16 %v1881, %v1880
    %v1906 = vpack.c.bf16 %v1883, %v1882
    %v1907 = vpack.c.bf16 %v1885, %v1884
    %v1908 = vpack.c.bf16 %v1887, %v1886
    %v1909 = vpack.c.bf16 %v1889, %v1888
    %v1910 = vpack.c.bf16 %v1890, %v1890
    %s1911 = scalar_lea.vmem %s1, 512
    %v1912 = vld [vmem:[%s1911] sm:$0xff]
    %v1913 = vld [vmem:[%s1911 + $0x8] sm:$0xff]
    %v1914 = vld [vmem:[%s1911 + $0x10] sm:$0xff]
    %v1915 = vld [vmem:[%s1911 + $0x18] sm:$0xff]
    %v1916 = vld [vmem:[%s1911 + $0x20] sm:$0xff]
    %v1917 = vld [vmem:[%s1911 + $0x28] sm:$0xff]
    %v1918 = vld [vmem:[%s1911 + $0x30] sm:$0xff]
    %v1919 = vld [vmem:[%s1911 + $0x38] sm:$0xff]
    %v1920 = vld [vmem:[%s1911 + $0x40] sm:$0xff]
    %v1921 = vld [vmem:[%s1911 + $0x48] sm:$0xff]
    %v1922 = vld [vmem:[%s1911 + $0x50] sm:$0xff]
    %v1923 = vld [vmem:[%s1911 + $0x58] sm:$0xff]
    %v1924 = vld [vmem:[%s1911 + $0x60] sm:$0xff]
    %v1925 = vld [vmem:[%s1911 + $0x68] sm:$0xff]
    %v1926 = vld [vmem:[%s1911 + $0x70] sm:$0xff]
    %v1927 = vld [vmem:[%s1911 + $0x78] sm:$0xff]
    %v1944 = vunpack.c.l.b16 %v1912
    %v1945 = vunpack.c.h.b16 %v1912
    %v1946 = vunpack.c.l.b16 %v1913
    %v1947 = vunpack.c.h.b16 %v1913
    %v1948 = vunpack.c.l.b16 %v1914
    %v1949 = vunpack.c.h.b16 %v1914
    %v1950 = vunpack.c.l.b16 %v1915
    %v1951 = vunpack.c.h.b16 %v1915
    %v1952 = vunpack.c.l.b16 %v1916
    %v1953 = vunpack.c.h.b16 %v1916
    %v1954 = vunpack.c.l.b16 %v1917
    %v1955 = vunpack.c.h.b16 %v1917
    %v1956 = vunpack.c.l.b16 %v1918
    %v1957 = vunpack.c.h.b16 %v1918
    %v1958 = vunpack.c.l.b16 %v1919
    %v1959 = vunpack.c.h.b16 %v1919
    %v1960 = vunpack.c.l.b16 %v1920
    %v1961 = vunpack.c.h.b16 %v1920
    %v1962 = vunpack.c.l.b16 %v1921
    %v1963 = vunpack.c.h.b16 %v1921
    %v1964 = vunpack.c.l.b16 %v1922
    %v1965 = vunpack.c.h.b16 %v1922
    %v1966 = vunpack.c.l.b16 %v1923
    %v1967 = vunpack.c.h.b16 %v1923
    %v1968 = vunpack.c.l.b16 %v1924
    %v1969 = vunpack.c.h.b16 %v1924
    %v1970 = vunpack.c.l.b16 %v1925
    %v1971 = vunpack.c.h.b16 %v1925
    %v1972 = vunpack.c.l.b16 %v1926
    %v1973 = vunpack.c.h.b16 %v1926
    %v1974 = vunpack.c.l.b16 %v1927
    %v1975 = vunpack.c.h.b16 %v1927
    %v1976 = vpack.c.b16 %v1946, %v1944
    %v1977 = vpack.c.b16 %v1947, %v1945
    %v1978 = vpack.c.b16 %v1950, %v1948
    %v1979 = vpack.c.b16 %v1951, %v1949
    %v1980 = vpack.c.b16 %v1954, %v1952
    %v1981 = vpack.c.b16 %v1955, %v1953
    %v1982 = vpack.c.b16 %v1958, %v1956
    %v1983 = vpack.c.b16 %v1959, %v1957
    %v1984 = vpack.c.b16 %v1962, %v1960
    %v1985 = vpack.c.b16 %v1963, %v1961
    %v1986 = vpack.c.b16 %v1966, %v1964
    %v1987 = vpack.c.b16 %v1967, %v1965
    %v1988 = vpack.c.b16 %v1970, %v1968
    %v1989 = vpack.c.b16 %v1971, %v1969
    %v1990 = vpack.c.b16 %v1974, %v1972
    %v1991 = vpack.c.b16 %v1975, %v1973
    %2008 = vmatprep.subr.bf16.mxu0 %v1991
    %2009 = vmatpush1.bf16.msra.mxu0 %v1990
    %2010 = vmatprep.subr.bf16.mxu0 %v1989
    %2011 = vmatpush1.bf16.msra.mxu0 %v1988
    %2012 = vmatprep.subr.bf16.mxu0 %v1987
    %2013 = vmatpush1.bf16.msra.mxu0 %v1986
    %2014 = vmatprep.subr.bf16.mxu0 %v1985
    %2015 = vmatpush1.bf16.msra.mxu0 %v1984
    %2016 = vmatprep.subr.bf16.mxu0 %v1983
    %2017 = vmatpush1.bf16.msra.mxu0 %v1982
    %2018 = vmatprep.subr.bf16.mxu0 %v1981
    %2019 = vmatpush1.bf16.msra.mxu0 %v1980
    %2020 = vmatprep.subr.bf16.mxu0 %v1979
    %2021 = vmatpush1.bf16.msra.mxu0 %v1978
    %2022 = vmatprep.subr.bf16.mxu0 %v1977
    %2023 = vmatpush1.bf16.msra.mxu0 %v1976
    %2024 = vmatprep.subr.bf16.mxu0 0
    %2025 = vmatpush2.bf16.msra.mxu0 0
    %2026 = vmatprep.subr.bf16.mxu0 0
    %2027 = vmatpush2.bf16.msra.mxu0 0
    %2028 = vmatprep.subr.bf16.mxu0 0
    %2029 = vmatpush2.bf16.msra.mxu0 0
    %2030 = vmatprep.subr.bf16.mxu0 0
    %2031 = vmatpush2.bf16.msra.mxu0 0
    %2032 = vmatprep.subr.bf16.mxu0 0
    %2033 = vmatpush2.bf16.msra.mxu0 0
    %2034 = vmatprep.subr.bf16.mxu0 0
    %2035 = vmatpush2.bf16.msra.mxu0 0
    %2036 = vmatprep.subr.bf16.mxu0 0
    %2037 = vmatpush2.bf16.msra.mxu0 0
    %2038 = vmatprep.subr.bf16.mxu0 0
    %2039 = vmatpush2.bf16.msra.mxu0 0
    %2040 = vmatprep.mubr.bf16.mxu0 0
    %2041 = vmatmul.mubr.bf16.gmra.mxu0 %v1891
    %v2042 = vpop.f32.mrf.mxu0
    %v2043 = vadd.f32 0.0, %v2042
    %v2044 = vpop.f32.mrf.mxu0
    %v2045 = vadd.f32 0.0, %v2044
    %v2046 = vpop.f32.mrf.mxu0
    %v2047 = vadd.f32 0.0, %v2046
    %v2048 = vpop.f32.mrf.mxu0
    %v2049 = vadd.f32 0.0, %v2048
    %2050 = vmatprep.mubr.bf16.mxu0 0
    %2051 = vmatmul.mubr.bf16.gmra.mxu0 %v1892
    %v2052 = vpop.f32.mrf.mxu0
    %v2053 = vadd.f32 0.0, %v2052
    %v2054 = vpop.f32.mrf.mxu0
    %v2055 = vadd.f32 0.0, %v2054
    %v2056 = vpop.f32.mrf.mxu0
    %v2057 = vadd.f32 0.0, %v2056
    %v2058 = vpop.f32.mrf.mxu0
    %v2059 = vadd.f32 0.0, %v2058
    %2060 = vmatprep.mubr.bf16.mxu0 0
    %2061 = vmatmul.mubr.bf16.gmra.mxu0 %v1893
    %v2062 = vpop.f32.mrf.mxu0
    %v2063 = vadd.f32 0.0, %v2062
    %v2064 = vpop.f32.mrf.mxu0
    %v2065 = vadd.f32 0.0, %v2064
    %v2066 = vpop.f32.mrf.mxu0
    %v2067 = vadd.f32 0.0, %v2066
    %v2068 = vpop.f32.mrf.mxu0
    %v2069 = vadd.f32 0.0, %v2068
    %2070 = vmatprep.mubr.bf16.mxu0 0
    %2071 = vmatmul.mubr.bf16.gmra.mxu0 %v1894
    %v2072 = vpop.f32.mrf.mxu0
    %v2073 = vadd.f32 0.0, %v2072
    %v2074 = vpop.f32.mrf.mxu0
    %v2075 = vadd.f32 0.0, %v2074
    %v2076 = vpop.f32.mrf.mxu0
    %v2077 = vadd.f32 0.0, %v2076
    %v2078 = vpop.f32.mrf.mxu0
    %v2079 = vadd.f32 0.0, %v2078
    %2080 = vmatprep.mubr.bf16.mxu0 0
    %2081 = vmatmul.mubr.bf16.gmra.mxu0 %v1895
    %v2082 = vpop.f32.mrf.mxu0
    %v2083 = vadd.f32 0.0, %v2082
    %v2084 = vpop.f32.mrf.mxu0
    %v2085 = vadd.f32 0.0, %v2084
    %v2086 = vpop.f32.mrf.mxu0
    %v2087 = vadd.f32 0.0, %v2086
    %v2088 = vpop.f32.mrf.mxu0
    %v2089 = vadd.f32 0.0, %v2088
    %2090 = vmatprep.mubr.bf16.mxu0 0
    %2091 = vmatmul.mubr.bf16.gmra.mxu0 %v1896
    %v2092 = vpop.f32.mrf.mxu0
    %v2093 = vadd.f32 0.0, %v2092
    %v2094 = vpop.f32.mrf.mxu0
    %v2095 = vadd.f32 0.0, %v2094
    %v2096 = vpop.f32.mrf.mxu0
    %v2097 = vadd.f32 0.0, %v2096
    %v2098 = vpop.f32.mrf.mxu0
    %v2099 = vadd.f32 0.0, %v2098
    %2100 = vmatprep.mubr.bf16.mxu0 0
    %2101 = vmatmul.mubr.bf16.gmra.mxu0 %v1897
    %v2102 = vpop.f32.mrf.mxu0
    %v2103 = vadd.f32 0.0, %v2102
    %v2104 = vpop.f32.mrf.mxu0
    %v2105 = vadd.f32 0.0, %v2104
    %v2106 = vpop.f32.mrf.mxu0
    %v2107 = vadd.f32 0.0, %v2106
    %v2108 = vpop.f32.mrf.mxu0
    %v2109 = vadd.f32 0.0, %v2108
    %2110 = vmatprep.mubr.bf16.mxu0 0
    %2111 = vmatmul.mubr.bf16.gmra.mxu0 %v1898
    %v2112 = vpop.f32.mrf.mxu0
    %v2113 = vadd.f32 0.0, %v2112
    %v2114 = vpop.f32.mrf.mxu0
    %v2115 = vadd.f32 0.0, %v2114
    %v2116 = vpop.f32.mrf.mxu0
    %v2117 = vadd.f32 0.0, %v2116
    %v2118 = vpop.f32.mrf.mxu0
    %v2119 = vadd.f32 0.0, %v2118
    %2120 = vmatprep.mubr.bf16.mxu0 0
    %2121 = vmatmul.mubr.bf16.gmra.mxu0 %v1899
    %v2122 = vpop.f32.mrf.mxu0
    %v2123 = vadd.f32 0.0, %v2122
    %v2124 = vpop.f32.mrf.mxu0
    %v2125 = vadd.f32 0.0, %v2124
    %v2126 = vpop.f32.mrf.mxu0
    %v2127 = vadd.f32 0.0, %v2126
    %v2128 = vpop.f32.mrf.mxu0
    %v2129 = vadd.f32 0.0, %v2128
    %2130 = vmatprep.mubr.bf16.mxu0 0
    %2131 = vmatmul.mubr.bf16.gmra.mxu0 %v1900
    %v2132 = vpop.f32.mrf.mxu0
    %v2133 = vadd.f32 0.0, %v2132
    %v2134 = vpop.f32.mrf.mxu0
    %v2135 = vadd.f32 0.0, %v2134
    %v2136 = vpop.f32.mrf.mxu0
    %v2137 = vadd.f32 0.0, %v2136
    %v2138 = vpop.f32.mrf.mxu0
    %v2139 = vadd.f32 0.0, %v2138
    %2140 = vmatprep.mubr.bf16.mxu0 0
    %2141 = vmatmul.mubr.bf16.gmra.mxu0 %v1901
    %v2142 = vpop.f32.mrf.mxu0
    %v2143 = vadd.f32 0.0, %v2142
    %v2144 = vpop.f32.mrf.mxu0
    %v2145 = vadd.f32 0.0, %v2144
    %v2146 = vpop.f32.mrf.mxu0
    %v2147 = vadd.f32 0.0, %v2146
    %v2148 = vpop.f32.mrf.mxu0
    %v2149 = vadd.f32 0.0, %v2148
    %2150 = vmatprep.mubr.bf16.mxu0 0
    %2151 = vmatmul.mubr.bf16.gmra.mxu0 %v1902
    %v2152 = vpop.f32.mrf.mxu0
    %v2153 = vadd.f32 0.0, %v2152
    %v2154 = vpop.f32.mrf.mxu0
    %v2155 = vadd.f32 0.0, %v2154
    %v2156 = vpop.f32.mrf.mxu0
    %v2157 = vadd.f32 0.0, %v2156
    %v2158 = vpop.f32.mrf.mxu0
    %v2159 = vadd.f32 0.0, %v2158
    %2160 = vmatprep.mubr.bf16.mxu0 0
    %2161 = vmatmul.mubr.bf16.gmra.mxu0 %v1903
    %v2162 = vpop.f32.mrf.mxu0
    %v2163 = vadd.f32 0.0, %v2162
    %v2164 = vpop.f32.mrf.mxu0
    %v2165 = vadd.f32 0.0, %v2164
    %v2166 = vpop.f32.mrf.mxu0
    %v2167 = vadd.f32 0.0, %v2166
    %v2168 = vpop.f32.mrf.mxu0
    %v2169 = vadd.f32 0.0, %v2168
    %2170 = vmatprep.mubr.bf16.mxu0 0
    %2171 = vmatmul.mubr.bf16.gmra.mxu0 %v1904
    %v2172 = vpop.f32.mrf.mxu0
    %v2173 = vadd.f32 0.0, %v2172
    %v2174 = vpop.f32.mrf.mxu0
    %v2175 = vadd.f32 0.0, %v2174
    %v2176 = vpop.f32.mrf.mxu0
    %v2177 = vadd.f32 0.0, %v2176
    %v2178 = vpop.f32.mrf.mxu0
    %v2179 = vadd.f32 0.0, %v2178
    %2180 = vmatprep.mubr.bf16.mxu0 0
    %2181 = vmatmul.mubr.bf16.gmra.mxu0 %v1905
    %v2182 = vpop.f32.mrf.mxu0
    %v2183 = vadd.f32 0.0, %v2182
    %v2184 = vpop.f32.mrf.mxu0
    %v2185 = vadd.f32 0.0, %v2184
    %v2186 = vpop.f32.mrf.mxu0
    %v2187 = vadd.f32 0.0, %v2186
    %v2188 = vpop.f32.mrf.mxu0
    %v2189 = vadd.f32 0.0, %v2188
    %2190 = vmatprep.mubr.bf16.mxu0 0
    %2191 = vmatmul.mubr.bf16.gmra.mxu0 %v1906
    %v2192 = vpop.f32.mrf.mxu0
    %v2193 = vadd.f32 0.0, %v2192
    %v2194 = vpop.f32.mrf.mxu0
    %v2195 = vadd.f32 0.0, %v2194
    %v2196 = vpop.f32.mrf.mxu0
    %v2197 = vadd.f32 0.0, %v2196
    %v2198 = vpop.f32.mrf.mxu0
    %v2199 = vadd.f32 0.0, %v2198
    %2200 = vmatprep.mubr.bf16.mxu0 0
    %2201 = vmatmul.mubr.bf16.gmra.mxu0 %v1907
    %v2202 = vpop.f32.mrf.mxu0
    %v2203 = vadd.f32 0.0, %v2202
    %v2204 = vpop.f32.mrf.mxu0
    %v2205 = vadd.f32 0.0, %v2204
    %v2206 = vpop.f32.mrf.mxu0
    %v2207 = vadd.f32 0.0, %v2206
    %v2208 = vpop.f32.mrf.mxu0
    %v2209 = vadd.f32 0.0, %v2208
    %2210 = vmatprep.mubr.bf16.mxu0 0
    %2211 = vmatmul.mubr.bf16.gmra.mxu0 %v1908
    %v2212 = vpop.f32.mrf.mxu0
    %v2213 = vadd.f32 0.0, %v2212
    %v2214 = vpop.f32.mrf.mxu0
    %v2215 = vadd.f32 0.0, %v2214
    %v2216 = vpop.f32.mrf.mxu0
    %v2217 = vadd.f32 0.0, %v2216
    %v2218 = vpop.f32.mrf.mxu0
    %v2219 = vadd.f32 0.0, %v2218
    %2220 = vmatprep.mubr.bf16.mxu0 0
    %2221 = vmatmul.mubr.bf16.gmra.mxu0 %v1909
    %v2222 = vpop.f32.mrf.mxu0
    %v2223 = vadd.f32 0.0, %v2222
    %v2224 = vpop.f32.mrf.mxu0
    %v2225 = vadd.f32 0.0, %v2224
    %v2226 = vpop.f32.mrf.mxu0
    %v2227 = vadd.f32 0.0, %v2226
    %v2228 = vpop.f32.mrf.mxu0
    %v2229 = vadd.f32 0.0, %v2228
    %2230 = vmatprep.mubr.bf16.mxu0 0
    %2231 = vmatmul.mubr.bf16.gmra.mxu0 %v1910
    %v2232 = vpop.f32.mrf.mxu0
    %v2233 = vadd.f32 0.0, %v2232
    %v2234 = vpop.f32.mrf.mxu0
    %v2235 = vadd.f32 0.0, %v2234
    %v2236 = vpop.f32.mrf.mxu0
    %v2237 = vpop.f32.mrf.mxu0
    %2238 = vdwg.mxu0
    %v2239 = vadd.f32 %v1774, %v2043
    %v2240 = vadd.f32 %v1775, %v2045
    %v2241 = vadd.f32 %v1776, %v2047
    %v2242 = vadd.f32 %v1777, %v2049
    %v2243 = vadd.f32 %v1778, %v2053
    %v2244 = vadd.f32 %v1779, %v2055
    %v2245 = vadd.f32 %v1780, %v2057
    %v2246 = vadd.f32 %v1781, %v2059
    %v2247 = vadd.f32 %v1782, %v2063
    %v2248 = vadd.f32 %v1783, %v2065
    %v2249 = vadd.f32 %v1784, %v2067
    %v2250 = vadd.f32 %v1785, %v2069
    %v2251 = vadd.f32 %v1786, %v2073
    %v2252 = vadd.f32 %v1787, %v2075
    %v2253 = vadd.f32 %v1788, %v2077
    %v2254 = vadd.f32 %v1789, %v2079
    %v2255 = vadd.f32 %v1790, %v2083
    %v2256 = vadd.f32 %v1791, %v2085
    %v2257 = vadd.f32 %v1792, %v2087
    %v2258 = vadd.f32 %v1793, %v2089
    %v2259 = vadd.f32 %v1794, %v2093
    %v2260 = vadd.f32 %v1795, %v2095
    %v2261 = vadd.f32 %v1796, %v2097
    %v2262 = vadd.f32 %v1797, %v2099
    %v2263 = vadd.f32 %v1798, %v2103
    %v2264 = vadd.f32 %v1799, %v2105
    %v2265 = vadd.f32 %v1800, %v2107
    %v2266 = vadd.f32 %v1801, %v2109
    %v2267 = vadd.f32 %v1802, %v2113
    %v2268 = vadd.f32 %v1803, %v2115
    %v2269 = vadd.f32 %v1804, %v2117
    %v2270 = vadd.f32 %v1805, %v2119
    %v2271 = vadd.f32 %v1806, %v2123
    %v2272 = vadd.f32 %v1807, %v2125
    %v2273 = vadd.f32 %v1808, %v2127
    %v2274 = vadd.f32 %v1809, %v2129
    %v2275 = vadd.f32 %v1810, %v2133
    %v2276 = vadd.f32 %v1811, %v2135
    %v2277 = vadd.f32 %v1812, %v2137
    %v2278 = vadd.f32 %v1813, %v2139
    %v2279 = vadd.f32 %v1814, %v2143
    %v2280 = vadd.f32 %v1815, %v2145
    %v2281 = vadd.f32 %v1816, %v2147
    %v2282 = vadd.f32 %v1817, %v2149
    %v2283 = vadd.f32 %v1818, %v2153
    %v2284 = vadd.f32 %v1819, %v2155
    %v2285 = vadd.f32 %v1820, %v2157
    %v2286 = vadd.f32 %v1821, %v2159
    %v2287 = vadd.f32 %v1822, %v2163
    %v2288 = vadd.f32 %v1823, %v2165
    %v2289 = vadd.f32 %v1824, %v2167
    %v2290 = vadd.f32 %v1825, %v2169
    %v2291 = vadd.f32 %v1826, %v2173
    %v2292 = vadd.f32 %v1827, %v2175
    %v2293 = vadd.f32 %v1828, %v2177
    %v2294 = vadd.f32 %v1829, %v2179
    %v2295 = vadd.f32 %v1830, %v2183
    %v2296 = vadd.f32 %v1831, %v2185
    %v2297 = vadd.f32 %v1832, %v2187
    %v2298 = vadd.f32 %v1833, %v2189
    %v2299 = vadd.f32 %v1834, %v2193
    %v2300 = vadd.f32 %v1835, %v2195
    %v2301 = vadd.f32 %v1836, %v2197
    %v2302 = vadd.f32 %v1837, %v2199
    %v2303 = vadd.f32 %v1838, %v2203
    %v2304 = vadd.f32 %v1839, %v2205
    %v2305 = vadd.f32 %v1840, %v2207
    %v2306 = vadd.f32 %v1841, %v2209
    %v2307 = vadd.f32 %v1842, %v2213
    %v2308 = vadd.f32 %v1843, %v2215
    %v2309 = vadd.f32 %v1844, %v2217
    %v2310 = vadd.f32 %v1845, %v2219
    %v2311 = vadd.f32 %v1846, %v2223
    %v2312 = vadd.f32 %v1847, %v2225
    %v2313 = vadd.f32 %v1848, %v2227
    %v2314 = vadd.f32 %v1849, %v2229
    %v2315 = vadd.f32 %v1850, %v2233
    %v2316 = vadd.f32 %v1851, %v2235
    %v2317 = vpack.c.bf16 %v2241, %v2239
    %v2318 = vpack.c.bf16 %v2242, %v2240
    %v2319 = vpack.c.bf16 %v2245, %v2243
    %v2320 = vpack.c.bf16 %v2246, %v2244
    %v2321 = vpack.c.bf16 %v2249, %v2247
    %v2322 = vpack.c.bf16 %v2250, %v2248
    %v2323 = vpack.c.bf16 %v2253, %v2251
    %v2324 = vpack.c.bf16 %v2254, %v2252
    %v2325 = vpack.c.bf16 %v2257, %v2255
    %v2326 = vpack.c.bf16 %v2258, %v2256
    %v2327 = vpack.c.bf16 %v2261, %v2259
    %v2328 = vpack.c.bf16 %v2262, %v2260
    %v2329 = vpack.c.bf16 %v2265, %v2263
    %v2330 = vpack.c.bf16 %v2266, %v2264
    %v2331 = vpack.c.bf16 %v2269, %v2267
    %v2332 = vpack.c.bf16 %v2270, %v2268
    %v2333 = vpack.c.bf16 %v2273, %v2271
    %v2334 = vpack.c.bf16 %v2274, %v2272
    %v2335 = vpack.c.bf16 %v2277, %v2275
    %v2336 = vpack.c.bf16 %v2278, %v2276
    %v2337 = vpack.c.bf16 %v2281, %v2279
    %v2338 = vpack.c.bf16 %v2282, %v2280
    %v2339 = vpack.c.bf16 %v2285, %v2283
    %v2340 = vpack.c.bf16 %v2286, %v2284
    %v2341 = vpack.c.bf16 %v2289, %v2287
    %v2342 = vpack.c.bf16 %v2290, %v2288
    %v2343 = vpack.c.bf16 %v2293, %v2291
    %v2344 = vpack.c.bf16 %v2294, %v2292
    %v2345 = vpack.c.bf16 %v2297, %v2295
    %v2346 = vpack.c.bf16 %v2298, %v2296
    %v2347 = vpack.c.bf16 %v2301, %v2299
    %v2348 = vpack.c.bf16 %v2302, %v2300
    %v2349 = vpack.c.bf16 %v2305, %v2303
    %v2350 = vpack.c.bf16 %v2306, %v2304
    %v2351 = vpack.c.bf16 %v2309, %v2307
    %v2352 = vpack.c.bf16 %v2310, %v2308
    %v2353 = vpack.c.bf16 %v2313, %v2311
    %v2354 = vpack.c.bf16 %v2314, %v2312
    %v2355 = vpack.c.bf16 %v2315, %v2315
    %v2356 = vpack.c.bf16 %v2316, %v2316
    %v2357 = vld [vmem:[#allocation4] sm:$0xff]
    %v2358 = vld [vmem:[#allocation4 + $0x8] sm:$0xf]
    %v2359 = vld [vmem:[#allocation4 + $0xc] sm:$0xff]
    %v2360 = vld [vmem:[#allocation4 + $0x14] sm:$0xf]
    %v2361 = vld [vmem:[#allocation4 + $0x18] sm:$0xff]
    %v2362 = vld [vmem:[#allocation4 + $0x20] sm:$0xf]
    %v2363 = vld [vmem:[#allocation4 + $0x24] sm:$0xff]
    %v2364 = vld [vmem:[#allocation4 + $0x2c] sm:$0xf]
    %v2365 = vld [vmem:[#allocation4 + $0x30] sm:$0xff]
    %v2366 = vld [vmem:[#allocation4 + $0x38] sm:$0xf]
    %v2367 = vld [vmem:[#allocation4 + $0x3c] sm:$0xff]
    %v2368 = vld [vmem:[#allocation4 + $0x44] sm:$0xf]
    %v2369 = vld [vmem:[#allocation4 + $0x48] sm:$0xff]
    %v2370 = vld [vmem:[#allocation4 + $0x50] sm:$0xf]
    %v2371 = vld [vmem:[#allocation4 + $0x54] sm:$0xff]
    %v2372 = vld [vmem:[#allocation4 + $0x5c] sm:$0xf]
    %v2373 = vld [vmem:[#allocation4 + $0x60] sm:$0xff]
    %v2374 = vld [vmem:[#allocation4 + $0x68] sm:$0xf]
    %v2375 = vld [vmem:[#allocation4 + $0x6c] sm:$0xff]
    %v2376 = vld [vmem:[#allocation4 + $0x74] sm:$0xf]
    %v2377 = vld [vmem:[#allocation4 + $0x78] sm:$0xff]
    %v2378 = vld [vmem:[#allocation4 + $0x80] sm:$0xf]
    %v2379 = vld [vmem:[#allocation4 + $0x84] sm:$0xff]
    %v2380 = vld [vmem:[#allocation4 + $0x8c] sm:$0xf]
    %v2381 = vld [vmem:[#allocation4 + $0x90] sm:$0xff]
    %v2382 = vld [vmem:[#allocation4 + $0x98] sm:$0xf]
    %v2383 = vld [vmem:[#allocation4 + $0x9c] sm:$0xff]
    %v2384 = vld [vmem:[#allocation4 + $0xa4] sm:$0xf]
    %v2385 = vld [vmem:[#allocation4 + $0xa8] sm:$0xff]
    %v2386 = vld [vmem:[#allocation4 + $0xb0] sm:$0xf]
    %v2387 = vld [vmem:[#allocation4 + $0xb4] sm:$0xff]
    %v2388 = vld [vmem:[#allocation4 + $0xbc] sm:$0xf]
    %v2389 = vld [vmem:[#allocation4 + $0xc0] sm:$0xff]
    %v2390 = vld [vmem:[#allocation4 + $0xc8] sm:$0xf]
    %v2425 = vunpack.c.l.b16 %v2357
    %v2426 = vunpack.c.h.b16 %v2357
    %v2427 = vunpack.c.l.b16 %v2358
    %v2428 = vunpack.c.l.b16 %v2359
    %v2429 = vunpack.c.h.b16 %v2359
    %v2430 = vunpack.c.l.b16 %v2360
    %v2431 = vunpack.c.l.b16 %v2361
    %v2432 = vunpack.c.h.b16 %v2361
    %v2433 = vunpack.c.l.b16 %v2362
    %v2434 = vunpack.c.l.b16 %v2363
    %v2435 = vunpack.c.h.b16 %v2363
    %v2436 = vunpack.c.l.b16 %v2364
    %v2437 = vunpack.c.l.b16 %v2365
    %v2438 = vunpack.c.h.b16 %v2365
    %v2439 = vunpack.c.l.b16 %v2366
    %v2440 = vunpack.c.l.b16 %v2367
    %v2441 = vunpack.c.h.b16 %v2367
    %v2442 = vunpack.c.l.b16 %v2368
    %v2443 = vunpack.c.l.b16 %v2369
    %v2444 = vunpack.c.h.b16 %v2369
    %v2445 = vunpack.c.l.b16 %v2370
    %v2446 = vunpack.c.l.b16 %v2371
    %v2447 = vunpack.c.h.b16 %v2371
    %v2448 = vunpack.c.l.b16 %v2372
    %v2449 = vunpack.c.l.b16 %v2373
    %v2450 = vunpack.c.h.b16 %v2373
    %v2451 = vunpack.c.l.b16 %v2374
    %v2452 = vunpack.c.l.b16 %v2375
    %v2453 = vunpack.c.h.b16 %v2375
    %v2454 = vunpack.c.l.b16 %v2376
    %v2455 = vunpack.c.l.b16 %v2377
    %v2456 = vunpack.c.h.b16 %v2377
    %v2457 = vunpack.c.l.b16 %v2378
    %v2458 = vunpack.c.l.b16 %v2379
    %v2459 = vunpack.c.h.b16 %v2379
    %v2460 = vunpack.c.l.b16 %v2380
    %v2461 = vunpack.c.l.b16 %v2381
    %v2462 = vunpack.c.h.b16 %v2381
    %v2463 = vunpack.c.l.b16 %v2382
    %v2464 = vunpack.c.l.b16 %v2383
    %v2465 = vunpack.c.h.b16 %v2383
    %v2466 = vunpack.c.l.b16 %v2384
    %v2467 = vunpack.c.l.b16 %v2385
    %v2468 = vunpack.c.h.b16 %v2385
    %v2469 = vunpack.c.l.b16 %v2386
    %v2470 = vunpack.c.l.b16 %v2387
    %v2471 = vunpack.c.h.b16 %v2387
    %v2472 = vunpack.c.l.b16 %v2388
    %v2473 = vunpack.c.l.b16 %v2389
    %v2474 = vunpack.c.h.b16 %v2389
    %v2475 = vunpack.c.l.b16 %v2390
    %v2476 = vpack.c.b16 %v2428, %v2425
    %v2477 = vpack.c.b16 %v2429, %v2426
    %v2478 = vpack.c.b16 %v2430, %v2427
    %v2479 = vpack.c.b16 %v2434, %v2431
    %v2480 = vpack.c.b16 %v2435, %v2432
    %v2481 = vpack.c.b16 %v2436, %v2433
    %v2482 = vpack.c.b16 %v2440, %v2437
    %v2483 = vpack.c.b16 %v2441, %v2438
    %v2484 = vpack.c.b16 %v2442, %v2439
    %v2485 = vpack.c.b16 %v2446, %v2443
    %v2486 = vpack.c.b16 %v2447, %v2444
    %v2487 = vpack.c.b16 %v2448, %v2445
    %v2488 = vpack.c.b16 %v2452, %v2449
    %v2489 = vpack.c.b16 %v2453, %v2450
    %v2490 = vpack.c.b16 %v2454, %v2451
    %v2491 = vpack.c.b16 %v2458, %v2455
    %v2492 = vpack.c.b16 %v2459, %v2456
    %v2493 = vpack.c.b16 %v2460, %v2457
    %v2494 = vpack.c.b16 %v2464, %v2461
    %v2495 = vpack.c.b16 %v2465, %v2462
    %v2496 = vpack.c.b16 %v2466, %v2463
    %v2497 = vpack.c.b16 %v2470, %v2467
    %v2498 = vpack.c.b16 %v2471, %v2468
    %v2499 = vpack.c.b16 %v2472, %v2469
    %v2500 = vpack.c.b16 %v2473, %v2473
    %v2501 = vpack.c.b16 %v2474, %v2474
    %v2502 = vpack.c.b16 %v2475, %v2475
    %vm2521 = vcmask 457728
    %v2523 = vsel %vm2521, %v2478, 0
    %v2526 = vsel %vm2521, %v2481, 0
    %v2529 = vsel %vm2521, %v2484, 0
    %v2532 = vsel %vm2521, %v2487, 0
    %v2535 = vsel %vm2521, %v2490, 0
    %v2538 = vsel %vm2521, %v2493, 0
    %v2541 = vsel %vm2521, %v2496, 0
    %v2544 = vsel %vm2521, %v2499, 0
    %v2547 = vsel %vm2521, %v2502, 0
    %vm2549 = vcmask 1043456
    %v2551 = vsel %vm2549, %v2355, 0
    %v2554 = vsel %vm2549, %v2356, 0
    %2556 = vmatprep.subr.bf16.mxu0 %v2332
    %2557 = vmatpush1.bf16.msra.mxu0 %v2331
    %2558 = vmatprep.subr.bf16.mxu0 %v2330
    %2559 = vmatpush1.bf16.msra.mxu0 %v2329
    %2560 = vmatprep.subr.bf16.mxu0 %v2328
    %2561 = vmatpush1.bf16.msra.mxu0 %v2327
    %2562 = vmatprep.subr.bf16.mxu0 %v2326
    %2563 = vmatpush1.bf16.msra.mxu0 %v2325
    %2564 = vmatprep.subr.bf16.mxu0 %v2324
    %2565 = vmatpush1.bf16.msra.mxu0 %v2323
    %2566 = vmatprep.subr.bf16.mxu0 %v2322
    %2567 = vmatpush1.bf16.msra.mxu0 %v2321
    %2568 = vmatprep.subr.bf16.mxu0 %v2320
    %2569 = vmatpush1.bf16.msra.mxu0 %v2319
    %2570 = vmatprep.subr.bf16.mxu0 %v2318
    %2571 = vmatpush1.bf16.msra.mxu0 %v2317
    %2572 = vmatprep.subr.bf16.mxu0 %v2348
    %2573 = vmatpush2.bf16.msra.mxu0 %v2347
    %2574 = vmatprep.subr.bf16.mxu0 %v2346
    %2575 = vmatpush2.bf16.msra.mxu0 %v2345
    %2576 = vmatprep.subr.bf16.mxu0 %v2344
    %2577 = vmatpush2.bf16.msra.mxu0 %v2343
    %2578 = vmatprep.subr.bf16.mxu0 %v2342
    %2579 = vmatpush2.bf16.msra.mxu0 %v2341
    %2580 = vmatprep.subr.bf16.mxu0 %v2340
    %2581 = vmatpush2.bf16.msra.mxu0 %v2339
    %2582 = vmatprep.subr.bf16.mxu0 %v2338
    %2583 = vmatpush2.bf16.msra.mxu0 %v2337
    %2584 = vmatprep.subr.bf16.mxu0 %v2336
    %2585 = vmatpush2.bf16.msra.mxu0 %v2335
    %2586 = vmatprep.subr.bf16.mxu0 %v2334
    %2587 = vmatpush2.bf16.msra.mxu0 %v2333
    %2588 = vmatprep.mubr.bf16.mxu0 %v2477
    %2589 = vmatmul.mubr.bf16.gmra.mxu0 %v2476
    %v2590 = vpop.f32.mrf.mxu0
    %v2591 = vadd.f32 0.0, %v2590
    %v2592 = vpop.f32.mrf.mxu0
    %v2593 = vadd.f32 0.0, %v2592
    %v2594 = vpop.f32.mrf.mxu0
    %v2595 = vadd.f32 0.0, %v2594
    %v2596 = vpop.f32.mrf.mxu0
    %v2597 = vadd.f32 0.0, %v2596
    %2598 = vmatprep.mubr.bf16.mxu0 %v2480
    %2599 = vmatmul.mubr.bf16.gmra.mxu0 %v2479
    %v2600 = vpop.f32.mrf.mxu0
    %v2601 = vadd.f32 0.0, %v2600
    %v2602 = vpop.f32.mrf.mxu0
    %v2603 = vadd.f32 0.0, %v2602
    %v2604 = vpop.f32.mrf.mxu0
    %v2605 = vadd.f32 0.0, %v2604
    %v2606 = vpop.f32.mrf.mxu0
    %v2607 = vadd.f32 0.0, %v2606
    %2608 = vmatprep.mubr.bf16.mxu0 %v2483
    %2609 = vmatmul.mubr.bf16.gmra.mxu0 %v2482
    %v2610 = vpop.f32.mrf.mxu0
    %v2611 = vadd.f32 0.0, %v2610
    %v2612 = vpop.f32.mrf.mxu0
    %v2613 = vadd.f32 0.0, %v2612
    %v2614 = vpop.f32.mrf.mxu0
    %v2615 = vadd.f32 0.0, %v2614
    %v2616 = vpop.f32.mrf.mxu0
    %v2617 = vadd.f32 0.0, %v2616
    %2618 = vmatprep.mubr.bf16.mxu0 %v2486
    %2619 = vmatmul.mubr.bf16.gmra.mxu0 %v2485
    %v2620 = vpop.f32.mrf.mxu0
    %v2621 = vadd.f32 0.0, %v2620
    %v2622 = vpop.f32.mrf.mxu0
    %v2623 = vadd.f32 0.0, %v2622
    %v2624 = vpop.f32.mrf.mxu0
    %v2625 = vadd.f32 0.0, %v2624
    %v2626 = vpop.f32.mrf.mxu0
    %v2627 = vadd.f32 0.0, %v2626
    %2628 = vmatprep.mubr.bf16.mxu0 %v2489
    %2629 = vmatmul.mubr.bf16.gmra.mxu0 %v2488
    %v2630 = vpop.f32.mrf.mxu0
    %v2631 = vadd.f32 0.0, %v2630
    %v2632 = vpop.f32.mrf.mxu0
    %v2633 = vadd.f32 0.0, %v2632
    %v2634 = vpop.f32.mrf.mxu0
    %v2635 = vadd.f32 0.0, %v2634
    %v2636 = vpop.f32.mrf.mxu0
    %v2637 = vadd.f32 0.0, %v2636
    %2638 = vmatprep.mubr.bf16.mxu0 %v2492
    %2639 = vmatmul.mubr.bf16.gmra.mxu0 %v2491
    %v2640 = vpop.f32.mrf.mxu0
    %v2641 = vadd.f32 0.0, %v2640
    %v2642 = vpop.f32.mrf.mxu0
    %v2643 = vadd.f32 0.0, %v2642
    %v2644 = vpop.f32.mrf.mxu0
    %v2645 = vadd.f32 0.0, %v2644
    %v2646 = vpop.f32.mrf.mxu0
    %v2647 = vadd.f32 0.0, %v2646
    %2648 = vmatprep.mubr.bf16.mxu0 %v2495
    %2649 = vmatmul.mubr.bf16.gmra.mxu0 %v2494
    %v2650 = vpop.f32.mrf.mxu0
    %v2651 = vadd.f32 0.0, %v2650
    %v2652 = vpop.f32.mrf.mxu0
    %v2653 = vadd.f32 0.0, %v2652
    %v2654 = vpop.f32.mrf.mxu0
    %v2655 = vadd.f32 0.0, %v2654
    %v2656 = vpop.f32.mrf.mxu0
    %v2657 = vadd.f32 0.0, %v2656
    %2658 = vmatprep.mubr.bf16.mxu0 %v2498
    %2659 = vmatmul.mubr.bf16.gmra.mxu0 %v2497
    %v2660 = vpop.f32.mrf.mxu0
    %v2661 = vadd.f32 0.0, %v2660
    %v2662 = vpop.f32.mrf.mxu0
    %v2663 = vadd.f32 0.0, %v2662
    %v2664 = vpop.f32.mrf.mxu0
    %v2665 = vadd.f32 0.0, %v2664
    %v2666 = vpop.f32.mrf.mxu0
    %v2667 = vadd.f32 0.0, %v2666
    %2668 = vmatprep.mubr.bf16.mxu0 %v2501
    %2669 = vmatmul.mubr.bf16.gmra.mxu0 %v2500
    %v2670 = vpop.f32.mrf.mxu0
    %v2671 = vadd.f32 0.0, %v2670
    %v2672 = vpop.f32.mrf.mxu0
    %v2673 = vadd.f32 0.0, %v2672
    %v2674 = vpop.f32.mrf.mxu0
    %v2675 = vpop.f32.mrf.mxu0
    %2676 = vdwg.mxu0
    %2677 = vmatprep.subr.bf16.mxu0 0
    %2678 = vmatpush1.bf16.msra.mxu0 0
    %2679 = vmatprep.subr.bf16.mxu0 0
    %2680 = vmatpush1.bf16.msra.mxu0 0
    %2681 = vmatprep.subr.bf16.mxu0 0
    %2682 = vmatpush1.bf16.msra.mxu0 0
    %2683 = vmatprep.subr.bf16.mxu0 0
    %2684 = vmatpush1.bf16.msra.mxu0 0
    %2685 = vmatprep.subr.bf16.mxu0 %v2554
    %2686 = vmatpush1.bf16.msra.mxu0 %v2551
    %2687 = vmatprep.subr.bf16.mxu0 %v2354
    %2688 = vmatpush1.bf16.msra.mxu0 %v2353
    %2689 = vmatprep.subr.bf16.mxu0 %v2352
    %2690 = vmatpush1.bf16.msra.mxu0 %v2351
    %2691 = vmatprep.subr.bf16.mxu0 %v2350
    %2692 = vmatpush1.bf16.msra.mxu0 %v2349
    %2693 = vmatprep.subr.bf16.mxu0 0
    %2694 = vmatpush2.bf16.msra.mxu0 0
    %2695 = vmatprep.subr.bf16.mxu0 0
    %2696 = vmatpush2.bf16.msra.mxu0 0
    %2697 = vmatprep.subr.bf16.mxu0 0
    %2698 = vmatpush2.bf16.msra.mxu0 0
    %2699 = vmatprep.subr.bf16.mxu0 0
    %2700 = vmatpush2.bf16.msra.mxu0 0
    %2701 = vmatprep.subr.bf16.mxu0 0
    %2702 = vmatpush2.bf16.msra.mxu0 0
    %2703 = vmatprep.subr.bf16.mxu0 0
    %2704 = vmatpush2.bf16.msra.mxu0 0
    %2705 = vmatprep.subr.bf16.mxu0 0
    %2706 = vmatpush2.bf16.msra.mxu0 0
    %2707 = vmatprep.subr.bf16.mxu0 0
    %2708 = vmatpush2.bf16.msra.mxu0 0
    %2709 = vmatprep.mubr.bf16.mxu0 0
    %2710 = vmatmul.mubr.bf16.gmra.mxu0 %v2523
    %v2711 = vpop.f32.mrf.mxu0
    %v2712 = vadd.f32 %v2591, %v2711
    %v2713 = vpop.f32.mrf.mxu0
    %v2714 = vadd.f32 %v2593, %v2713
    %v2715 = vpop.f32.mrf.mxu0
    %v2716 = vadd.f32 %v2595, %v2715
    %v2717 = vpop.f32.mrf.mxu0
    %v2718 = vadd.f32 %v2597, %v2717
    %2719 = vmatprep.mubr.bf16.mxu0 0
    %2720 = vmatmul.mubr.bf16.gmra.mxu0 %v2526
    %v2721 = vpop.f32.mrf.mxu0
    %v2722 = vadd.f32 %v2601, %v2721
    %v2723 = vpop.f32.mrf.mxu0
    %v2724 = vadd.f32 %v2603, %v2723
    %v2725 = vpop.f32.mrf.mxu0
    %v2726 = vadd.f32 %v2605, %v2725
    %v2727 = vpop.f32.mrf.mxu0
    %v2728 = vadd.f32 %v2607, %v2727
    %2729 = vmatprep.mubr.bf16.mxu0 0
    %2730 = vmatmul.mubr.bf16.gmra.mxu0 %v2529
    %v2731 = vpop.f32.mrf.mxu0
    %v2732 = vadd.f32 %v2611, %v2731
    %v2733 = vpop.f32.mrf.mxu0
    %v2734 = vadd.f32 %v2613, %v2733
    %v2735 = vpop.f32.mrf.mxu0
    %v2736 = vadd.f32 %v2615, %v2735
    %v2737 = vpop.f32.mrf.mxu0
    %v2738 = vadd.f32 %v2617, %v2737
    %2739 = vmatprep.mubr.bf16.mxu0 0
    %2740 = vmatmul.mubr.bf16.gmra.mxu0 %v2532
    %v2741 = vpop.f32.mrf.mxu0
    %v2742 = vadd.f32 %v2621, %v2741
    %v2743 = vpop.f32.mrf.mxu0
    %v2744 = vadd.f32 %v2623, %v2743
    %v2745 = vpop.f32.mrf.mxu0
    %v2746 = vadd.f32 %v2625, %v2745
    %v2747 = vpop.f32.mrf.mxu0
    %v2748 = vadd.f32 %v2627, %v2747
    %2749 = vmatprep.mubr.bf16.mxu0 0
    %2750 = vmatmul.mubr.bf16.gmra.mxu0 %v2535
    %v2751 = vpop.f32.mrf.mxu0
    %v2752 = vadd.f32 %v2631, %v2751
    %v2753 = vpop.f32.mrf.mxu0
    %v2754 = vadd.f32 %v2633, %v2753
    %v2755 = vpop.f32.mrf.mxu0
    %v2756 = vadd.f32 %v2635, %v2755
    %v2757 = vpop.f32.mrf.mxu0
    %v2758 = vadd.f32 %v2637, %v2757
    %2759 = vmatprep.mubr.bf16.mxu0 0
    %2760 = vmatmul.mubr.bf16.gmra.mxu0 %v2538
    %v2761 = vpop.f32.mrf.mxu0
    %v2762 = vadd.f32 %v2641, %v2761
    %v2763 = vpop.f32.mrf.mxu0
    %v2764 = vadd.f32 %v2643, %v2763
    %v2765 = vpop.f32.mrf.mxu0
    %v2766 = vadd.f32 %v2645, %v2765
    %v2767 = vpop.f32.mrf.mxu0
    %v2768 = vadd.f32 %v2647, %v2767
    %2769 = vmatprep.mubr.bf16.mxu0 0
    %2770 = vmatmul.mubr.bf16.gmra.mxu0 %v2541
    %v2771 = vpop.f32.mrf.mxu0
    %v2772 = vadd.f32 %v2651, %v2771
    %v2773 = vpop.f32.mrf.mxu0
    %v2774 = vadd.f32 %v2653, %v2773
    %v2775 = vpop.f32.mrf.mxu0
    %v2776 = vadd.f32 %v2655, %v2775
    %v2777 = vpop.f32.mrf.mxu0
    %v2778 = vadd.f32 %v2657, %v2777
    %2779 = vmatprep.mubr.bf16.mxu0 0
    %2780 = vmatmul.mubr.bf16.gmra.mxu0 %v2544
    %v2781 = vpop.f32.mrf.mxu0
    %v2782 = vadd.f32 %v2661, %v2781
    %v2783 = vpop.f32.mrf.mxu0
    %v2784 = vadd.f32 %v2663, %v2783
    %v2785 = vpop.f32.mrf.mxu0
    %v2786 = vadd.f32 %v2665, %v2785
    %v2787 = vpop.f32.mrf.mxu0
    %v2788 = vadd.f32 %v2667, %v2787
    %2789 = vmatprep.mubr.bf16.mxu0 0
    %2790 = vmatmul.mubr.bf16.gmra.mxu0 %v2547
    %v2791 = vpop.f32.mrf.mxu0
    %v2792 = vadd.f32 %v2671, %v2791
    %v2793 = vpop.f32.mrf.mxu0
    %v2794 = vadd.f32 %v2673, %v2793
    %v2795 = vpop.f32.mrf.mxu0
    %v2796 = vpop.f32.mrf.mxu0
    %2797 = vdwg.mxu0
    %v2798 = vld [vmem:[#allocation6] sm:$0xff]
    %v2799 = vld [vmem:[#allocation6 + $0x8] sm:$0xf]
    %v2800 = vld [vmem:[#allocation6 + $0xc] sm:$0xff]
    %v2801 = vld [vmem:[#allocation6 + $0x14] sm:$0xf]
    %v2802 = vld [vmem:[#allocation6 + $0x18] sm:$0xff]
    %v2803 = vld [vmem:[#allocation6 + $0x20] sm:$0xf]
    %v2804 = vld [vmem:[#allocation6 + $0x24] sm:$0xff]
    %v2805 = vld [vmem:[#allocation6 + $0x2c] sm:$0xf]
    %v2806 = vld [vmem:[#allocation6 + $0x30] sm:$0xff]
    %v2807 = vld [vmem:[#allocation6 + $0x38] sm:$0xf]
    %v2808 = vld [vmem:[#allocation6 + $0x3c] sm:$0xff]
    %v2809 = vld [vmem:[#allocation6 + $0x44] sm:$0xf]
    %v2810 = vld [vmem:[#allocation6 + $0x48] sm:$0xff]
    %v2811 = vld [vmem:[#allocation6 + $0x50] sm:$0xf]
    %v2812 = vld [vmem:[#allocation6 + $0x54] sm:$0xff]
    %v2813 = vld [vmem:[#allocation6 + $0x5c] sm:$0xf]
    %v2814 = vld [vmem:[#allocation6 + $0x60] sm:$0xff]
    %v2815 = vld [vmem:[#allocation6 + $0x68] sm:$0xf]
    %v2816 = vld [vmem:[#allocation6 + $0x6c] sm:$0xff]
    %v2817 = vld [vmem:[#allocation6 + $0x74] sm:$0xf]
    %v2818 = vld [vmem:[#allocation6 + $0x78] sm:$0xff]
    %v2819 = vld [vmem:[#allocation6 + $0x80] sm:$0xf]
    %v2820 = vld [vmem:[#allocation6 + $0x84] sm:$0xff]
    %v2821 = vld [vmem:[#allocation6 + $0x8c] sm:$0xf]
    %v2822 = vld [vmem:[#allocation6 + $0x90] sm:$0xff]
    %v2823 = vld [vmem:[#allocation6 + $0x98] sm:$0xf]
    %v2824 = vld [vmem:[#allocation6 + $0x9c] sm:$0xff]
    %v2825 = vld [vmem:[#allocation6 + $0xa4] sm:$0xf]
    %v2826 = vld [vmem:[#allocation6 + $0xa8] sm:$0xff]
    %v2827 = vld [vmem:[#allocation6 + $0xb0] sm:$0xf]
    %v2828 = vld [vmem:[#allocation6 + $0xb4] sm:$0xff]
    %v2829 = vld [vmem:[#allocation6 + $0xbc] sm:$0xf]
    %v2830 = vld [vmem:[#allocation6 + $0xc0] sm:$0xff]
    %v2831 = vld [vmem:[#allocation6 + $0xc8] sm:$0xf]
    %v2866 = vunpack.c.l.b16 %v2798
    %v2867 = vunpack.c.h.b16 %v2798
    %v2868 = vunpack.c.l.b16 %v2799
    %v2869 = vunpack.c.l.b16 %v2800
    %v2870 = vunpack.c.h.b16 %v2800
    %v2871 = vunpack.c.l.b16 %v2801
    %v2872 = vunpack.c.l.b16 %v2802
    %v2873 = vunpack.c.h.b16 %v2802
    %v2874 = vunpack.c.l.b16 %v2803
    %v2875 = vunpack.c.l.b16 %v2804
    %v2876 = vunpack.c.h.b16 %v2804
    %v2877 = vunpack.c.l.b16 %v2805
    %v2878 = vunpack.c.l.b16 %v2806
    %v2879 = vunpack.c.h.b16 %v2806
    %v2880 = vunpack.c.l.b16 %v2807
    %v2881 = vunpack.c.l.b16 %v2808
    %v2882 = vunpack.c.h.b16 %v2808
    %v2883 = vunpack.c.l.b16 %v2809
    %v2884 = vunpack.c.l.b16 %v2810
    %v2885 = vunpack.c.h.b16 %v2810
    %v2886 = vunpack.c.l.b16 %v2811
    %v2887 = vunpack.c.l.b16 %v2812
    %v2888 = vunpack.c.h.b16 %v2812
    %v2889 = vunpack.c.l.b16 %v2813
    %v2890 = vunpack.c.l.b16 %v2814
    %v2891 = vunpack.c.h.b16 %v2814
    %v2892 = vunpack.c.l.b16 %v2815
    %v2893 = vunpack.c.l.b16 %v2816
    %v2894 = vunpack.c.h.b16 %v2816
    %v2895 = vunpack.c.l.b16 %v2817
    %v2896 = vunpack.c.l.b16 %v2818
    %v2897 = vunpack.c.h.b16 %v2818
    %v2898 = vunpack.c.l.b16 %v2819
    %v2899 = vunpack.c.l.b16 %v2820
    %v2900 = vunpack.c.h.b16 %v2820
    %v2901 = vunpack.c.l.b16 %v2821
    %v2902 = vunpack.c.l.b16 %v2822
    %v2903 = vunpack.c.h.b16 %v2822
    %v2904 = vunpack.c.l.b16 %v2823
    %v2905 = vunpack.c.l.b16 %v2824
    %v2906 = vunpack.c.h.b16 %v2824
    %v2907 = vunpack.c.l.b16 %v2825
    %v2908 = vunpack.c.l.b16 %v2826
    %v2909 = vunpack.c.h.b16 %v2826
    %v2910 = vunpack.c.l.b16 %v2827
    %v2911 = vunpack.c.l.b16 %v2828
    %v2912 = vunpack.c.h.b16 %v2828
    %v2913 = vunpack.c.l.b16 %v2829
    %v2914 = vunpack.c.l.b16 %v2830
    %v2915 = vunpack.c.h.b16 %v2830
    %v2916 = vunpack.c.l.b16 %v2831
    %v2917 = vpack.c.b16 %v2869, %v2866
    %v2918 = vpack.c.b16 %v2870, %v2867
    %v2919 = vpack.c.b16 %v2871, %v2868
    %v2920 = vpack.c.b16 %v2875, %v2872
    %v2921 = vpack.c.b16 %v2876, %v2873
    %v2922 = vpack.c.b16 %v2877, %v2874
    %v2923 = vpack.c.b16 %v2881, %v2878
    %v2924 = vpack.c.b16 %v2882, %v2879
    %v2925 = vpack.c.b16 %v2883, %v2880
    %v2926 = vpack.c.b16 %v2887, %v2884
    %v2927 = vpack.c.b16 %v2888, %v2885
    %v2928 = vpack.c.b16 %v2889, %v2886
    %v2929 = vpack.c.b16 %v2893, %v2890
    %v2930 = vpack.c.b16 %v2894, %v2891
    %v2931 = vpack.c.b16 %v2895, %v2892
    %v2932 = vpack.c.b16 %v2899, %v2896
    %v2933 = vpack.c.b16 %v2900, %v2897
    %v2934 = vpack.c.b16 %v2901, %v2898
    %v2935 = vpack.c.b16 %v2905, %v2902
    %v2936 = vpack.c.b16 %v2906, %v2903
    %v2937 = vpack.c.b16 %v2907, %v2904
    %v2938 = vpack.c.b16 %v2911, %v2908
    %v2939 = vpack.c.b16 %v2912, %v2909
    %v2940 = vpack.c.b16 %v2913, %v2910
    %v2941 = vpack.c.b16 %v2914, %v2914
    %v2942 = vpack.c.b16 %v2915, %v2915
    %v2943 = vpack.c.b16 %v2916, %v2916
    %v2963 = vsel %vm2521, %v2919, 0
    %v2966 = vsel %vm2521, %v2922, 0
    %v2969 = vsel %vm2521, %v2925, 0
    %v2972 = vsel %vm2521, %v2928, 0
    %v2975 = vsel %vm2521, %v2931, 0
    %v2978 = vsel %vm2521, %v2934, 0
    %v2981 = vsel %vm2521, %v2937, 0
    %v2984 = vsel %vm2521, %v2940, 0
    %v2987 = vsel %vm2521, %v2943, 0
    %2989 = vmatprep.subr.bf16.mxu0 %v2332
    %2990 = vmatpush1.bf16.msra.mxu0 %v2331
    %2991 = vmatprep.subr.bf16.mxu0 %v2330
    %2992 = vmatpush1.bf16.msra.mxu0 %v2329
    %2993 = vmatprep.subr.bf16.mxu0 %v2328
    %2994 = vmatpush1.bf16.msra.mxu0 %v2327
    %2995 = vmatprep.subr.bf16.mxu0 %v2326
    %2996 = vmatpush1.bf16.msra.mxu0 %v2325
    %2997 = vmatprep.subr.bf16.mxu0 %v2324
    %2998 = vmatpush1.bf16.msra.mxu0 %v2323
    %2999 = vmatprep.subr.bf16.mxu0 %v2322
    %3000 = vmatpush1.bf16.msra.mxu0 %v2321
    %3001 = vmatprep.subr.bf16.mxu0 %v2320
    %3002 = vmatpush1.bf16.msra.mxu0 %v2319
    %3003 = vmatprep.subr.bf16.mxu0 %v2318
    %3004 = vmatpush1.bf16.msra.mxu0 %v2317
    %3005 = vmatprep.subr.bf16.mxu0 %v2348
    %3006 = vmatpush2.bf16.msra.mxu0 %v2347
    %3007 = vmatprep.subr.bf16.mxu0 %v2346
    %3008 = vmatpush2.bf16.msra.mxu0 %v2345
    %3009 = vmatprep.subr.bf16.mxu0 %v2344
    %3010 = vmatpush2.bf16.msra.mxu0 %v2343
    %3011 = vmatprep.subr.bf16.mxu0 %v2342
    %3012 = vmatpush2.bf16.msra.mxu0 %v2341
    %3013 = vmatprep.subr.bf16.mxu0 %v2340
    %3014 = vmatpush2.bf16.msra.mxu0 %v2339
    %3015 = vmatprep.subr.bf16.mxu0 %v2338
    %3016 = vmatpush2.bf16.msra.mxu0 %v2337
    %3017 = vmatprep.subr.bf16.mxu0 %v2336
    %3018 = vmatpush2.bf16.msra.mxu0 %v2335
    %3019 = vmatprep.subr.bf16.mxu0 %v2334
    %3020 = vmatpush2.bf16.msra.mxu0 %v2333
    %3021 = vmatprep.mubr.bf16.mxu0 %v2918
    %3022 = vmatmul.mubr.bf16.gmra.mxu0 %v2917
    %v3023 = vpop.f32.mrf.mxu0
    %v3024 = vadd.f32 0.0, %v3023
    %v3025 = vpop.f32.mrf.mxu0
    %v3026 = vadd.f32 0.0, %v3025
    %v3027 = vpop.f32.mrf.mxu0
    %v3028 = vadd.f32 0.0, %v3027
    %v3029 = vpop.f32.mrf.mxu0
    %v3030 = vadd.f32 0.0, %v3029
    %3031 = vmatprep.mubr.bf16.mxu0 %v2921
    %3032 = vmatmul.mubr.bf16.gmra.mxu0 %v2920
    %v3033 = vpop.f32.mrf.mxu0
    %v3034 = vadd.f32 0.0, %v3033
    %v3035 = vpop.f32.mrf.mxu0
    %v3036 = vadd.f32 0.0, %v3035
    %v3037 = vpop.f32.mrf.mxu0
    %v3038 = vadd.f32 0.0, %v3037
    %v3039 = vpop.f32.mrf.mxu0
    %v3040 = vadd.f32 0.0, %v3039
    %3041 = vmatprep.mubr.bf16.mxu0 %v2924
    %3042 = vmatmul.mubr.bf16.gmra.mxu0 %v2923
    %v3043 = vpop.f32.mrf.mxu0
    %v3044 = vadd.f32 0.0, %v3043
    %v3045 = vpop.f32.mrf.mxu0
    %v3046 = vadd.f32 0.0, %v3045
    %v3047 = vpop.f32.mrf.mxu0
    %v3048 = vadd.f32 0.0, %v3047
    %v3049 = vpop.f32.mrf.mxu0
    %v3050 = vadd.f32 0.0, %v3049
    %3051 = vmatprep.mubr.bf16.mxu0 %v2927
    %3052 = vmatmul.mubr.bf16.gmra.mxu0 %v2926
    %v3053 = vpop.f32.mrf.mxu0
    %v3054 = vadd.f32 0.0, %v3053
    %v3055 = vpop.f32.mrf.mxu0
    %v3056 = vadd.f32 0.0, %v3055
    %v3057 = vpop.f32.mrf.mxu0
    %v3058 = vadd.f32 0.0, %v3057
    %v3059 = vpop.f32.mrf.mxu0
    %v3060 = vadd.f32 0.0, %v3059
    %3061 = vmatprep.mubr.bf16.mxu0 %v2930
    %3062 = vmatmul.mubr.bf16.gmra.mxu0 %v2929
    %v3063 = vpop.f32.mrf.mxu0
    %v3064 = vadd.f32 0.0, %v3063
    %v3065 = vpop.f32.mrf.mxu0
    %v3066 = vadd.f32 0.0, %v3065
    %v3067 = vpop.f32.mrf.mxu0
    %v3068 = vadd.f32 0.0, %v3067
    %v3069 = vpop.f32.mrf.mxu0
    %v3070 = vadd.f32 0.0, %v3069
    %3071 = vmatprep.mubr.bf16.mxu0 %v2933
    %3072 = vmatmul.mubr.bf16.gmra.mxu0 %v2932
    %v3073 = vpop.f32.mrf.mxu0
    %v3074 = vadd.f32 0.0, %v3073
    %v3075 = vpop.f32.mrf.mxu0
    %v3076 = vadd.f32 0.0, %v3075
    %v3077 = vpop.f32.mrf.mxu0
    %v3078 = vadd.f32 0.0, %v3077
    %v3079 = vpop.f32.mrf.mxu0
    %v3080 = vadd.f32 0.0, %v3079
    %3081 = vmatprep.mubr.bf16.mxu0 %v2936
    %3082 = vmatmul.mubr.bf16.gmra.mxu0 %v2935
    %v3083 = vpop.f32.mrf.mxu0
    %v3084 = vadd.f32 0.0, %v3083
    %v3085 = vpop.f32.mrf.mxu0
    %v3086 = vadd.f32 0.0, %v3085
    %v3087 = vpop.f32.mrf.mxu0
    %v3088 = vadd.f32 0.0, %v3087
    %v3089 = vpop.f32.mrf.mxu0
    %v3090 = vadd.f32 0.0, %v3089
    %3091 = vmatprep.mubr.bf16.mxu0 %v2939
    %3092 = vmatmul.mubr.bf16.gmra.mxu0 %v2938
    %v3093 = vpop.f32.mrf.mxu0
    %v3094 = vadd.f32 0.0, %v3093
    %v3095 = vpop.f32.mrf.mxu0
    %v3096 = vadd.f32 0.0, %v3095
    %v3097 = vpop.f32.mrf.mxu0
    %v3098 = vadd.f32 0.0, %v3097
    %v3099 = vpop.f32.mrf.mxu0
    %v3100 = vadd.f32 0.0, %v3099
    %3101 = vmatprep.mubr.bf16.mxu0 %v2942
    %3102 = vmatmul.mubr.bf16.gmra.mxu0 %v2941
    %v3103 = vpop.f32.mrf.mxu0
    %v3104 = vadd.f32 0.0, %v3103
    %v3105 = vpop.f32.mrf.mxu0
    %v3106 = vadd.f32 0.0, %v3105
    %v3107 = vpop.f32.mrf.mxu0
    %v3108 = vpop.f32.mrf.mxu0
    %3109 = vdwg.mxu0
    %3110 = vmatprep.subr.bf16.mxu0 0
    %3111 = vmatpush1.bf16.msra.mxu0 0
    %3112 = vmatprep.subr.bf16.mxu0 0
    %3113 = vmatpush1.bf16.msra.mxu0 0
    %3114 = vmatprep.subr.bf16.mxu0 0
    %3115 = vmatpush1.bf16.msra.mxu0 0
    %3116 = vmatprep.subr.bf16.mxu0 0
    %3117 = vmatpush1.bf16.msra.mxu0 0
    %3118 = vmatprep.subr.bf16.mxu0 %v2554
    %3119 = vmatpush1.bf16.msra.mxu0 %v2551
    %3120 = vmatprep.subr.bf16.mxu0 %v2354
    %3121 = vmatpush1.bf16.msra.mxu0 %v2353
    %3122 = vmatprep.subr.bf16.mxu0 %v2352
    %3123 = vmatpush1.bf16.msra.mxu0 %v2351
    %3124 = vmatprep.subr.bf16.mxu0 %v2350
    %3125 = vmatpush1.bf16.msra.mxu0 %v2349
    %3126 = vmatprep.subr.bf16.mxu0 0
    %3127 = vmatpush2.bf16.msra.mxu0 0
    %3128 = vmatprep.subr.bf16.mxu0 0
    %3129 = vmatpush2.bf16.msra.mxu0 0
    %3130 = vmatprep.subr.bf16.mxu0 0
    %3131 = vmatpush2.bf16.msra.mxu0 0
    %3132 = vmatprep.subr.bf16.mxu0 0
    %3133 = vmatpush2.bf16.msra.mxu0 0
    %3134 = vmatprep.subr.bf16.mxu0 0
    %3135 = vmatpush2.bf16.msra.mxu0 0
    %3136 = vmatprep.subr.bf16.mxu0 0
    %3137 = vmatpush2.bf16.msra.mxu0 0
    %3138 = vmatprep.subr.bf16.mxu0 0
    %3139 = vmatpush2.bf16.msra.mxu0 0
    %3140 = vmatprep.subr.bf16.mxu0 0
    %3141 = vmatpush2.bf16.msra.mxu0 0
    %3142 = vmatprep.mubr.bf16.mxu0 0
    %3143 = vmatmul.mubr.bf16.gmra.mxu0 %v2963
    %v3144 = vpop.f32.mrf.mxu0
    %v3145 = vadd.f32 %v3024, %v3144
    %v3146 = vpop.f32.mrf.mxu0
    %v3147 = vadd.f32 %v3026, %v3146
    %v3148 = vpop.f32.mrf.mxu0
    %v3149 = vadd.f32 %v3028, %v3148
    %v3150 = vpop.f32.mrf.mxu0
    %v3151 = vadd.f32 %v3030, %v3150
    %3152 = vmatprep.mubr.bf16.mxu0 0
    %3153 = vmatmul.mubr.bf16.gmra.mxu0 %v2966
    %v3154 = vpop.f32.mrf.mxu0
    %v3155 = vadd.f32 %v3034, %v3154
    %v3156 = vpop.f32.mrf.mxu0
    %v3157 = vadd.f32 %v3036, %v3156
    %v3158 = vpop.f32.mrf.mxu0
    %v3159 = vadd.f32 %v3038, %v3158
    %v3160 = vpop.f32.mrf.mxu0
    %v3161 = vadd.f32 %v3040, %v3160
    %3162 = vmatprep.mubr.bf16.mxu0 0
    %3163 = vmatmul.mubr.bf16.gmra.mxu0 %v2969
    %v3164 = vpop.f32.mrf.mxu0
    %v3165 = vadd.f32 %v3044, %v3164
    %v3166 = vpop.f32.mrf.mxu0
    %v3167 = vadd.f32 %v3046, %v3166
    %v3168 = vpop.f32.mrf.mxu0
    %v3169 = vadd.f32 %v3048, %v3168
    %v3170 = vpop.f32.mrf.mxu0
    %v3171 = vadd.f32 %v3050, %v3170
    %3172 = vmatprep.mubr.bf16.mxu0 0
    %3173 = vmatmul.mubr.bf16.gmra.mxu0 %v2972
    %v3174 = vpop.f32.mrf.mxu0
    %v3175 = vadd.f32 %v3054, %v3174
    %v3176 = vpop.f32.mrf.mxu0
    %v3177 = vadd.f32 %v3056, %v3176
    %v3178 = vpop.f32.mrf.mxu0
    %v3179 = vadd.f32 %v3058, %v3178
    %v3180 = vpop.f32.mrf.mxu0
    %v3181 = vadd.f32 %v3060, %v3180
    %3182 = vmatprep.mubr.bf16.mxu0 0
    %3183 = vmatmul.mubr.bf16.gmra.mxu0 %v2975
    %v3184 = vpop.f32.mrf.mxu0
    %v3185 = vadd.f32 %v3064, %v3184
    %v3186 = vpop.f32.mrf.mxu0
    %v3187 = vadd.f32 %v3066, %v3186
    %v3188 = vpop.f32.mrf.mxu0
    %v3189 = vadd.f32 %v3068, %v3188
    %v3190 = vpop.f32.mrf.mxu0
    %v3191 = vadd.f32 %v3070, %v3190
    %3192 = vmatprep.mubr.bf16.mxu0 0
    %3193 = vmatmul.mubr.bf16.gmra.mxu0 %v2978
    %v3194 = vpop.f32.mrf.mxu0
    %v3195 = vadd.f32 %v3074, %v3194
    %v3196 = vpop.f32.mrf.mxu0
    %v3197 = vadd.f32 %v3076, %v3196
    %v3198 = vpop.f32.mrf.mxu0
    %v3199 = vadd.f32 %v3078, %v3198
    %v3200 = vpop.f32.mrf.mxu0
    %v3201 = vadd.f32 %v3080, %v3200
    %3202 = vmatprep.mubr.bf16.mxu0 0
    %3203 = vmatmul.mubr.bf16.gmra.mxu0 %v2981
    %v3204 = vpop.f32.mrf.mxu0
    %v3205 = vadd.f32 %v3084, %v3204
    %v3206 = vpop.f32.mrf.mxu0
    %v3207 = vadd.f32 %v3086, %v3206
    %v3208 = vpop.f32.mrf.mxu0
    %v3209 = vadd.f32 %v3088, %v3208
    %v3210 = vpop.f32.mrf.mxu0
    %v3211 = vadd.f32 %v3090, %v3210
    %3212 = vmatprep.mubr.bf16.mxu0 0
    %3213 = vmatmul.mubr.bf16.gmra.mxu0 %v2984
    %v3214 = vpop.f32.mrf.mxu0
    %v3215 = vadd.f32 %v3094, %v3214
    %v3216 = vpop.f32.mrf.mxu0
    %v3217 = vadd.f32 %v3096, %v3216
    %v3218 = vpop.f32.mrf.mxu0
    %v3219 = vadd.f32 %v3098, %v3218
    %v3220 = vpop.f32.mrf.mxu0
    %v3221 = vadd.f32 %v3100, %v3220
    %3222 = vmatprep.mubr.bf16.mxu0 0
    %3223 = vmatmul.mubr.bf16.gmra.mxu0 %v2987
    %v3224 = vpop.f32.mrf.mxu0
    %v3225 = vadd.f32 %v3104, %v3224
    %v3226 = vpop.f32.mrf.mxu0
    %v3227 = vadd.f32 %v3106, %v3226
    %v3228 = vpop.f32.mrf.mxu0
    %v3229 = vpop.f32.mrf.mxu0
    %3230 = vdwg.mxu0
    %v3231 = vmax.f32 %v2712, %v3145
    %v3232 = vmax.f32 %v2714, %v3147
    %v3233 = vmax.f32 %v2716, %v3149
    %v3234 = vmax.f32 %v2718, %v3151
    %v3235 = vmax.f32 %v2722, %v3155
    %v3236 = vmax.f32 %v2724, %v3157
    %v3237 = vmax.f32 %v2726, %v3159
    %v3238 = vmax.f32 %v2728, %v3161
    %v3239 = vmax.f32 %v2732, %v3165
    %v3240 = vmax.f32 %v2734, %v3167
    %v3241 = vmax.f32 %v2736, %v3169
    %v3242 = vmax.f32 %v2738, %v3171
    %v3243 = vmax.f32 %v2742, %v3175
    %v3244 = vmax.f32 %v2744, %v3177
    %v3245 = vmax.f32 %v2746, %v3179
    %v3246 = vmax.f32 %v2748, %v3181
    %v3247 = vmax.f32 %v2752, %v3185
    %v3248 = vmax.f32 %v2754, %v3187
    %v3249 = vmax.f32 %v2756, %v3189
    %v3250 = vmax.f32 %v2758, %v3191
    %v3251 = vmax.f32 %v2762, %v3195
    %v3252 = vmax.f32 %v2764, %v3197
    %v3253 = vmax.f32 %v2766, %v3199
    %v3254 = vmax.f32 %v2768, %v3201
    %v3255 = vmax.f32 %v2772, %v3205
    %v3256 = vmax.f32 %v2774, %v3207
    %v3257 = vmax.f32 %v2776, %v3209
    %v3258 = vmax.f32 %v2778, %v3211
    %v3259 = vmax.f32 %v2782, %v3215
    %v3260 = vmax.f32 %v2784, %v3217
    %v3261 = vmax.f32 %v2786, %v3219
    %v3262 = vmax.f32 %v2788, %v3221
    %v3263 = vmax.f32 %v2792, %v3225
    %v3264 = vmax.f32 %v2794, %v3227
    %v3265 = vpack.c.bf16 %v3233, %v3231
    %v3266 = vpack.c.bf16 %v3234, %v3232
    %v3267 = vpack.c.bf16 %v3237, %v3235
    %v3268 = vpack.c.bf16 %v3238, %v3236
    %v3269 = vpack.c.bf16 %v3241, %v3239
    %v3270 = vpack.c.bf16 %v3242, %v3240
    %v3271 = vpack.c.bf16 %v3245, %v3243
    %v3272 = vpack.c.bf16 %v3246, %v3244
    %v3273 = vpack.c.bf16 %v3249, %v3247
    %v3274 = vpack.c.bf16 %v3250, %v3248
    %v3275 = vpack.c.bf16 %v3253, %v3251
    %v3276 = vpack.c.bf16 %v3254, %v3252
    %v3277 = vpack.c.bf16 %v3257, %v3255
    %v3278 = vpack.c.bf16 %v3258, %v3256
    %v3279 = vpack.c.bf16 %v3261, %v3259
    %v3280 = vpack.c.bf16 %v3262, %v3260
    %v3281 = vpack.c.bf16 %v3263, %v3263
    %v3282 = vpack.c.bf16 %v3264, %v3264
    %v3283 = vld [vmem:[%s5] sm:$0xff]
    %v3284 = vld [vmem:[%s5 + $0x8] sm:$0xff]
    %v3285 = vld [vmem:[%s5 + $0x10] sm:$0xff]
    %v3286 = vld [vmem:[%s5 + $0x18] sm:$0xff]
    %v3287 = vld [vmem:[%s5 + $0x20] sm:$0xff]
    %v3288 = vld [vmem:[%s5 + $0x28] sm:$0xff]
    %v3289 = vld [vmem:[%s5 + $0x30] sm:$0xff]
    %v3290 = vld [vmem:[%s5 + $0x38] sm:$0xff]
    %v3291 = vld [vmem:[%s5 + $0x40] sm:$0xff]
    %v3292 = vld [vmem:[%s5 + $0x48] sm:$0xff]
    %v3293 = vld [vmem:[%s5 + $0x50] sm:$0xff]
    %v3294 = vld [vmem:[%s5 + $0x58] sm:$0xff]
    %v3295 = vld [vmem:[%s5 + $0x60] sm:$0xff]
    %v3296 = vld [vmem:[%s5 + $0x68] sm:$0xff]
    %v3297 = vld [vmem:[%s5 + $0x70] sm:$0xff]
    %v3298 = vld [vmem:[%s5 + $0x78] sm:$0xff]
    %v3299 = vld [vmem:[%s5 + $0x80] sm:$0xff]
    %v3300 = vld [vmem:[%s5 + $0x88] sm:$0xff]
    %v3301 = vld [vmem:[%s5 + $0x90] sm:$0xff]
    %v3302 = vld [vmem:[%s5 + $0x98] sm:$0xff]
    %v3303 = vld [vmem:[%s5 + $0xa0] sm:$0xff]
    %v3304 = vld [vmem:[%s5 + $0xa8] sm:$0xff]
    %v3305 = vld [vmem:[%s5 + $0xb0] sm:$0xff]
    %v3306 = vld [vmem:[%s5 + $0xb8] sm:$0xff]
    %v3307 = vld [vmem:[%s5 + $0xc0] sm:$0xff]
    %v3308 = vld [vmem:[%s5 + $0xc8] sm:$0xff]
    %v3309 = vld [vmem:[%s5 + $0xd0] sm:$0xff]
    %v3310 = vld [vmem:[%s5 + $0xd8] sm:$0xff]
    %v3311 = vld [vmem:[%s5 + $0xe0] sm:$0xff]
    %v3312 = vld [vmem:[%s5 + $0xe8] sm:$0xff]
    %v3313 = vld [vmem:[%s5 + $0xf0] sm:$0xff]
    %v3314 = vld [vmem:[%s5 + $0xf8] sm:$0xff]
    %v3347 = vunpack.c.l.b16 %v3283
    %v3348 = vunpack.c.h.b16 %v3283
    %v3349 = vunpack.c.l.b16 %v3284
    %v3350 = vunpack.c.h.b16 %v3284
    %v3351 = vunpack.c.l.b16 %v3285
    %v3352 = vunpack.c.h.b16 %v3285
    %v3353 = vunpack.c.l.b16 %v3286
    %v3354 = vunpack.c.h.b16 %v3286
    %v3355 = vunpack.c.l.b16 %v3287
    %v3356 = vunpack.c.h.b16 %v3287
    %v3357 = vunpack.c.l.b16 %v3288
    %v3358 = vunpack.c.h.b16 %v3288
    %v3359 = vunpack.c.l.b16 %v3289
    %v3360 = vunpack.c.h.b16 %v3289
    %v3361 = vunpack.c.l.b16 %v3290
    %v3362 = vunpack.c.h.b16 %v3290
    %v3363 = vunpack.c.l.b16 %v3291
    %v3364 = vunpack.c.h.b16 %v3291
    %v3365 = vunpack.c.l.b16 %v3292
    %v3366 = vunpack.c.h.b16 %v3292
    %v3367 = vunpack.c.l.b16 %v3293
    %v3368 = vunpack.c.h.b16 %v3293
    %v3369 = vunpack.c.l.b16 %v3294
    %v3370 = vunpack.c.h.b16 %v3294
    %v3371 = vunpack.c.l.b16 %v3295
    %v3372 = vunpack.c.h.b16 %v3295
    %v3373 = vunpack.c.l.b16 %v3296
    %v3374 = vunpack.c.h.b16 %v3296
    %v3375 = vunpack.c.l.b16 %v3297
    %v3376 = vunpack.c.h.b16 %v3297
    %v3377 = vunpack.c.l.b16 %v3298
    %v3378 = vunpack.c.h.b16 %v3298
    %v3379 = vunpack.c.l.b16 %v3299
    %v3380 = vunpack.c.h.b16 %v3299
    %v3381 = vunpack.c.l.b16 %v3300
    %v3382 = vunpack.c.h.b16 %v3300
    %v3383 = vunpack.c.l.b16 %v3301
    %v3384 = vunpack.c.h.b16 %v3301
    %v3385 = vunpack.c.l.b16 %v3302
    %v3386 = vunpack.c.h.b16 %v3302
    %v3387 = vunpack.c.l.b16 %v3303
    %v3388 = vunpack.c.h.b16 %v3303
    %v3389 = vunpack.c.l.b16 %v3304
    %v3390 = vunpack.c.h.b16 %v3304
    %v3391 = vunpack.c.l.b16 %v3305
    %v3392 = vunpack.c.h.b16 %v3305
    %v3393 = vunpack.c.l.b16 %v3306
    %v3394 = vunpack.c.h.b16 %v3306
    %v3395 = vunpack.c.l.b16 %v3307
    %v3396 = vunpack.c.h.b16 %v3307
    %v3397 = vunpack.c.l.b16 %v3308
    %v3398 = vunpack.c.h.b16 %v3308
    %v3399 = vunpack.c.l.b16 %v3309
    %v3400 = vunpack.c.h.b16 %v3309
    %v3401 = vunpack.c.l.b16 %v3310
    %v3402 = vunpack.c.h.b16 %v3310
    %v3403 = vunpack.c.l.b16 %v3311
    %v3404 = vunpack.c.h.b16 %v3311
    %v3405 = vunpack.c.l.b16 %v3312
    %v3406 = vunpack.c.h.b16 %v3312
    %v3407 = vunpack.c.l.b16 %v3313
    %v3408 = vunpack.c.h.b16 %v3313
    %v3409 = vunpack.c.l.b16 %v3314
    %v3410 = vunpack.c.h.b16 %v3314
    %v3411 = vpack.c.b16 %v3349, %v3347
    %v3412 = vpack.c.b16 %v3350, %v3348
    %v3413 = vpack.c.b16 %v3353, %v3351
    %v3414 = vpack.c.b16 %v3354, %v3352
    %v3415 = vpack.c.b16 %v3357, %v3355
    %v3416 = vpack.c.b16 %v3358, %v3356
    %v3417 = vpack.c.b16 %v3361, %v3359
    %v3418 = vpack.c.b16 %v3362, %v3360
    %v3419 = vpack.c.b16 %v3365, %v3363
    %v3420 = vpack.c.b16 %v3366, %v3364
    %v3421 = vpack.c.b16 %v3369, %v3367
    %v3422 = vpack.c.b16 %v3370, %v3368
    %v3423 = vpack.c.b16 %v3373, %v3371
    %v3424 = vpack.c.b16 %v3374, %v3372
    %v3425 = vpack.c.b16 %v3377, %v3375
    %v3426 = vpack.c.b16 %v3378, %v3376
    %v3427 = vpack.c.b16 %v3381, %v3379
    %v3428 = vpack.c.b16 %v3382, %v3380
    %v3429 = vpack.c.b16 %v3385, %v3383
    %v3430 = vpack.c.b16 %v3386, %v3384
    %v3431 = vpack.c.b16 %v3389, %v3387
    %v3432 = vpack.c.b16 %v3390, %v3388
    %v3433 = vpack.c.b16 %v3393, %v3391
    %v3434 = vpack.c.b16 %v3394, %v3392
    %v3435 = vpack.c.b16 %v3397, %v3395
    %v3436 = vpack.c.b16 %v3398, %v3396
    %v3437 = vpack.c.b16 %v3401, %v3399
    %v3438 = vpack.c.b16 %v3402, %v3400
    %v3439 = vpack.c.b16 %v3405, %v3403
    %v3440 = vpack.c.b16 %v3406, %v3404
    %v3441 = vpack.c.b16 %v3409, %v3407
    %v3442 = vpack.c.b16 %v3410, %v3408
    %3475 = vmatprep.subr.bf16.mxu0 %v3426
    %3476 = vmatpush1.bf16.msra.mxu0 %v3425
    %3477 = vmatprep.subr.bf16.mxu0 %v3424
    %3478 = vmatpush1.bf16.msra.mxu0 %v3423
    %3479 = vmatprep.subr.bf16.mxu0 %v3422
    %3480 = vmatpush1.bf16.msra.mxu0 %v3421
    %3481 = vmatprep.subr.bf16.mxu0 %v3420
    %3482 = vmatpush1.bf16.msra.mxu0 %v3419
    %3483 = vmatprep.subr.bf16.mxu0 %v3418
    %3484 = vmatpush1.bf16.msra.mxu0 %v3417
    %3485 = vmatprep.subr.bf16.mxu0 %v3416
    %3486 = vmatpush1.bf16.msra.mxu0 %v3415
    %3487 = vmatprep.subr.bf16.mxu0 %v3414
    %3488 = vmatpush1.bf16.msra.mxu0 %v3413
    %3489 = vmatprep.subr.bf16.mxu0 %v3412
    %3490 = vmatpush1.bf16.msra.mxu0 %v3411
    %3491 = vmatprep.subr.bf16.mxu0 %v3442
    %3492 = vmatpush2.bf16.msra.mxu0 %v3441
    %3493 = vmatprep.subr.bf16.mxu0 %v3440
    %3494 = vmatpush2.bf16.msra.mxu0 %v3439
    %3495 = vmatprep.subr.bf16.mxu0 %v3438
    %3496 = vmatpush2.bf16.msra.mxu0 %v3437
    %3497 = vmatprep.subr.bf16.mxu0 %v3436
    %3498 = vmatpush2.bf16.msra.mxu0 %v3435
    %3499 = vmatprep.subr.bf16.mxu0 %v3434
    %3500 = vmatpush2.bf16.msra.mxu0 %v3433
    %3501 = vmatprep.subr.bf16.mxu0 %v3432
    %3502 = vmatpush2.bf16.msra.mxu0 %v3431
    %3503 = vmatprep.subr.bf16.mxu0 %v3430
    %3504 = vmatpush2.bf16.msra.mxu0 %v3429
    %3505 = vmatprep.subr.bf16.mxu0 %v3428
    %3506 = vmatpush2.bf16.msra.mxu0 %v3427
    %3507 = vmatprep.mubr.bf16.mxu0 %v3266
    %3508 = vmatmul.mubr.bf16.gmra.mxu0 %v3265
    %v3509 = vpop.f32.mrf.mxu0
    %v3510 = vadd.f32 0.0, %v3509
    %v3511 = vpop.f32.mrf.mxu0
    %v3512 = vadd.f32 0.0, %v3511
    %v3513 = vpop.f32.mrf.mxu0
    %v3514 = vadd.f32 0.0, %v3513
    %v3515 = vpop.f32.mrf.mxu0
    %v3516 = vadd.f32 0.0, %v3515
    %3517 = vmatprep.mubr.bf16.mxu0 %v3268
    %3518 = vmatmul.mubr.bf16.gmra.mxu0 %v3267
    %v3519 = vpop.f32.mrf.mxu0
    %v3520 = vadd.f32 0.0, %v3519
    %v3521 = vpop.f32.mrf.mxu0
    %v3522 = vadd.f32 0.0, %v3521
    %v3523 = vpop.f32.mrf.mxu0
    %v3524 = vadd.f32 0.0, %v3523
    %v3525 = vpop.f32.mrf.mxu0
    %v3526 = vadd.f32 0.0, %v3525
    %3527 = vmatprep.mubr.bf16.mxu0 %v3270
    %3528 = vmatmul.mubr.bf16.gmra.mxu0 %v3269
    %v3529 = vpop.f32.mrf.mxu0
    %v3530 = vadd.f32 0.0, %v3529
    %v3531 = vpop.f32.mrf.mxu0
    %v3532 = vadd.f32 0.0, %v3531
    %v3533 = vpop.f32.mrf.mxu0
    %v3534 = vadd.f32 0.0, %v3533
    %v3535 = vpop.f32.mrf.mxu0
    %v3536 = vadd.f32 0.0, %v3535
    %3537 = vmatprep.mubr.bf16.mxu0 %v3272
    %3538 = vmatmul.mubr.bf16.gmra.mxu0 %v3271
    %v3539 = vpop.f32.mrf.mxu0
    %v3540 = vadd.f32 0.0, %v3539
    %v3541 = vpop.f32.mrf.mxu0
    %v3542 = vadd.f32 0.0, %v3541
    %v3543 = vpop.f32.mrf.mxu0
    %v3544 = vadd.f32 0.0, %v3543
    %v3545 = vpop.f32.mrf.mxu0
    %v3546 = vadd.f32 0.0, %v3545
    %3547 = vmatprep.mubr.bf16.mxu0 %v3274
    %3548 = vmatmul.mubr.bf16.gmra.mxu0 %v3273
    %v3549 = vpop.f32.mrf.mxu0
    %v3550 = vadd.f32 0.0, %v3549
    %v3551 = vpop.f32.mrf.mxu0
    %v3552 = vadd.f32 0.0, %v3551
    %v3553 = vpop.f32.mrf.mxu0
    %v3554 = vadd.f32 0.0, %v3553
    %v3555 = vpop.f32.mrf.mxu0
    %v3556 = vadd.f32 0.0, %v3555
    %3557 = vmatprep.mubr.bf16.mxu0 %v3276
    %3558 = vmatmul.mubr.bf16.gmra.mxu0 %v3275
    %v3559 = vpop.f32.mrf.mxu0
    %v3560 = vadd.f32 0.0, %v3559
    %v3561 = vpop.f32.mrf.mxu0
    %v3562 = vadd.f32 0.0, %v3561
    %v3563 = vpop.f32.mrf.mxu0
    %v3564 = vadd.f32 0.0, %v3563
    %v3565 = vpop.f32.mrf.mxu0
    %v3566 = vadd.f32 0.0, %v3565
    %3567 = vmatprep.mubr.bf16.mxu0 %v3278
    %3568 = vmatmul.mubr.bf16.gmra.mxu0 %v3277
    %v3569 = vpop.f32.mrf.mxu0
    %v3570 = vadd.f32 0.0, %v3569
    %v3571 = vpop.f32.mrf.mxu0
    %v3572 = vadd.f32 0.0, %v3571
    %v3573 = vpop.f32.mrf.mxu0
    %v3574 = vadd.f32 0.0, %v3573
    %v3575 = vpop.f32.mrf.mxu0
    %v3576 = vadd.f32 0.0, %v3575
    %3577 = vmatprep.mubr.bf16.mxu0 %v3280
    %3578 = vmatmul.mubr.bf16.gmra.mxu0 %v3279
    %v3579 = vpop.f32.mrf.mxu0
    %v3580 = vadd.f32 0.0, %v3579
    %v3581 = vpop.f32.mrf.mxu0
    %v3582 = vadd.f32 0.0, %v3581
    %v3583 = vpop.f32.mrf.mxu0
    %v3584 = vadd.f32 0.0, %v3583
    %v3585 = vpop.f32.mrf.mxu0
    %v3586 = vadd.f32 0.0, %v3585
    %3587 = vmatprep.mubr.bf16.mxu0 %v3282
    %3588 = vmatmul.mubr.bf16.gmra.mxu0 %v3281
    %v3589 = vpop.f32.mrf.mxu0
    %v3590 = vadd.f32 0.0, %v3589
    %v3591 = vpop.f32.mrf.mxu0
    %v3592 = vadd.f32 0.0, %v3591
    %v3593 = vpop.f32.mrf.mxu0
    %v3594 = vpop.f32.mrf.mxu0
    %3595 = vdwg.mxu0
    %v3596 = vmax.f32 %v3231, %v3510
    %v3597 = vmax.f32 %v3232, %v3512
    %v3598 = vmax.f32 %v3233, %v3514
    %v3599 = vmax.f32 %v3234, %v3516
    %v3600 = vmax.f32 %v3235, %v3520
    %v3601 = vmax.f32 %v3236, %v3522
    %v3602 = vmax.f32 %v3237, %v3524
    %v3603 = vmax.f32 %v3238, %v3526
    %v3604 = vmax.f32 %v3239, %v3530
    %v3605 = vmax.f32 %v3240, %v3532
    %v3606 = vmax.f32 %v3241, %v3534
    %v3607 = vmax.f32 %v3242, %v3536
    %v3608 = vmax.f32 %v3243, %v3540
    %v3609 = vmax.f32 %v3244, %v3542
    %v3610 = vmax.f32 %v3245, %v3544
    %v3611 = vmax.f32 %v3246, %v3546
    %v3612 = vmax.f32 %v3247, %v3550
    %v3613 = vmax.f32 %v3248, %v3552
    %v3614 = vmax.f32 %v3249, %v3554
    %v3615 = vmax.f32 %v3250, %v3556
    %v3616 = vmax.f32 %v3251, %v3560
    %v3617 = vmax.f32 %v3252, %v3562
    %v3618 = vmax.f32 %v3253, %v3564
    %v3619 = vmax.f32 %v3254, %v3566
    %v3620 = vmax.f32 %v3255, %v3570
    %v3621 = vmax.f32 %v3256, %v3572
    %v3622 = vmax.f32 %v3257, %v3574
    %v3623 = vmax.f32 %v3258, %v3576
    %v3624 = vmax.f32 %v3259, %v3580
    %v3625 = vmax.f32 %v3260, %v3582
    %v3626 = vmax.f32 %v3261, %v3584
    %v3627 = vmax.f32 %v3262, %v3586
    %v3628 = vmax.f32 %v3263, %v3590
    %v3629 = vmax.f32 %v3264, %v3592
    %v3630 = vld [vmem:[%s2] sm:$0x3]
    %v3632 = vlaneseq
    %v3633 = vshrl.u32 %v3632, 7
    %v3634 = vsub.s32 0, %v3633
    %v3635 = vrot.slane %v3630, %v3634
    %v3636 = vlaneseq
    %v3637 = vshrl.u32 %v3636, 7
    %v3638 = vsub.s32 1, %v3637
    %v3639 = vrot.slane %v3630, %v3638
    %v3642 = vadd.f32 %v3596, %v3635
    %v3643 = vadd.f32 %v3597, %v3639
    %v3644 = vadd.f32 %v3598, %v3635
    %v3645 = vadd.f32 %v3599, %v3639
    %v3646 = vadd.f32 %v3600, %v3635
    %v3647 = vadd.f32 %v3601, %v3639
    %v3648 = vadd.f32 %v3602, %v3635
    %v3649 = vadd.f32 %v3603, %v3639
    %v3650 = vadd.f32 %v3604, %v3635
    %v3651 = vadd.f32 %v3605, %v3639
    %v3652 = vadd.f32 %v3606, %v3635
    %v3653 = vadd.f32 %v3607, %v3639
    %v3654 = vadd.f32 %v3608, %v3635
    %v3655 = vadd.f32 %v3609, %v3639
    %v3656 = vadd.f32 %v3610, %v3635
    %v3657 = vadd.f32 %v3611, %v3639
    %v3658 = vadd.f32 %v3612, %v3635
    %v3659 = vadd.f32 %v3613, %v3639
    %v3660 = vadd.f32 %v3614, %v3635
    %v3661 = vadd.f32 %v3615, %v3639
    %v3662 = vadd.f32 %v3616, %v3635
    %v3663 = vadd.f32 %v3617, %v3639
    %v3664 = vadd.f32 %v3618, %v3635
    %v3665 = vadd.f32 %v3619, %v3639
    %v3666 = vadd.f32 %v3620, %v3635
    %v3667 = vadd.f32 %v3621, %v3639
    %v3668 = vadd.f32 %v3622, %v3635
    %v3669 = vadd.f32 %v3623, %v3639
    %v3670 = vadd.f32 %v3624, %v3635
    %v3671 = vadd.f32 %v3625, %v3639
    %v3672 = vadd.f32 %v3626, %v3635
    %v3673 = vadd.f32 %v3627, %v3639
    %v3674 = vadd.f32 %v3628, %v3635
    %v3675 = vadd.f32 %v3629, %v3639
    %v3676 = vmax.f32 %v3642, 0.0
    %v3677 = vmax.f32 %v3643, 0.0
    %v3678 = vmax.f32 %v3644, 0.0
    %v3679 = vmax.f32 %v3645, 0.0
    %v3680 = vmax.f32 %v3646, 0.0
    %v3681 = vmax.f32 %v3647, 0.0
    %v3682 = vmax.f32 %v3648, 0.0
    %v3683 = vmax.f32 %v3649, 0.0
    %v3684 = vmax.f32 %v3650, 0.0
    %v3685 = vmax.f32 %v3651, 0.0
    %v3686 = vmax.f32 %v3652, 0.0
    %v3687 = vmax.f32 %v3653, 0.0
    %v3688 = vmax.f32 %v3654, 0.0
    %v3689 = vmax.f32 %v3655, 0.0
    %v3690 = vmax.f32 %v3656, 0.0
    %v3691 = vmax.f32 %v3657, 0.0
    %v3692 = vmax.f32 %v3658, 0.0
    %v3693 = vmax.f32 %v3659, 0.0
    %v3694 = vmax.f32 %v3660, 0.0
    %v3695 = vmax.f32 %v3661, 0.0
    %v3696 = vmax.f32 %v3662, 0.0
    %v3697 = vmax.f32 %v3663, 0.0
    %v3698 = vmax.f32 %v3664, 0.0
    %v3699 = vmax.f32 %v3665, 0.0
    %v3700 = vmax.f32 %v3666, 0.0
    %v3701 = vmax.f32 %v3667, 0.0
    %v3702 = vmax.f32 %v3668, 0.0
    %v3703 = vmax.f32 %v3669, 0.0
    %v3704 = vmax.f32 %v3670, 0.0
    %v3705 = vmax.f32 %v3671, 0.0
    %v3706 = vmax.f32 %v3672, 0.0
    %v3707 = vmax.f32 %v3673, 0.0
    %v3708 = vmax.f32 %v3674, 0.0
    %v3709 = vmax.f32 %v3675, 0.0
    %3710 = vst [vmem:[#allocation2] sm:$0xff] %v3676
    %3711 = vst [vmem:[#allocation2 + $0x8] sm:$0xff] %v3677
    %3712 = vst [vmem:[#allocation2 + $0x10] sm:$0xff] %v3678
    %3713 = vst [vmem:[#allocation2 + $0x18] sm:$0xff] %v3679
    %3714 = vst [vmem:[#allocation2 + $0x20] sm:$0xff] %v3680
    %3715 = vst [vmem:[#allocation2 + $0x28] sm:$0xff] %v3681
    %3716 = vst [vmem:[#allocation2 + $0x30] sm:$0xff] %v3682
    %3717 = vst [vmem:[#allocation2 + $0x38] sm:$0xff] %v3683
    %3718 = vst [vmem:[#allocation2 + $0x40] sm:$0xff] %v3684
    %3719 = vst [vmem:[#allocation2 + $0x48] sm:$0xff] %v3685
    %3720 = vst [vmem:[#allocation2 + $0x50] sm:$0xff] %v3686
    %3721 = vst [vmem:[#allocation2 + $0x58] sm:$0xff] %v3687
    %3722 = vst [vmem:[#allocation2 + $0x60] sm:$0xff] %v3688
    %3723 = vst [vmem:[#allocation2 + $0x68] sm:$0xff] %v3689
    %3724 = vst [vmem:[#allocation2 + $0x70] sm:$0xff] %v3690
    %3725 = vst [vmem:[#allocation2 + $0x78] sm:$0xff] %v3691
    %3726 = vst [vmem:[#allocation2 + $0x80] sm:$0xff] %v3692
    %3727 = vst [vmem:[#allocation2 + $0x88] sm:$0xff] %v3693
    %3728 = vst [vmem:[#allocation2 + $0x90] sm:$0xff] %v3694
    %3729 = vst [vmem:[#allocation2 + $0x98] sm:$0xff] %v3695
    %3730 = vst [vmem:[#allocation2 + $0xa0] sm:$0xff] %v3696
    %3731 = vst [vmem:[#allocation2 + $0xa8] sm:$0xff] %v3697
    %3732 = vst [vmem:[#allocation2 + $0xb0] sm:$0xff] %v3698
    %3733 = vst [vmem:[#allocation2 + $0xb8] sm:$0xff] %v3699
    %3734 = vst [vmem:[#allocation2 + $0xc0] sm:$0xff] %v3700
    %3735 = vst [vmem:[#allocation2 + $0xc8] sm:$0xff] %v3701
    %3736 = vst [vmem:[#allocation2 + $0xd0] sm:$0xff] %v3702
    %3737 = vst [vmem:[#allocation2 + $0xd8] sm:$0xff] %v3703
    %3738 = vst [vmem:[#allocation2 + $0xe0] sm:$0xff] %v3704
    %3739 = vst [vmem:[#allocation2 + $0xe8] sm:$0xff] %v3705
    %3740 = vst [vmem:[#allocation2 + $0xf0] sm:$0xff] %v3706
    %3741 = vst [vmem:[#allocation2 + $0xf8] sm:$0xff] %v3707
    %3742 = vst [vmem:[#allocation2 + $0x100] sm:$0xff] %v3708
    %3743 = vst [vmem:[#allocation2 + $0x108] sm:$0xff] %v3709
    %v3744 = vld [vmem:[#allocation2] sm:$0xff]
    %v3745 = vld [vmem:[#allocation2 + $0x8] sm:$0xff]
    %v3746 = vld [vmem:[#allocation2 + $0x10] sm:$0xff]
    %v3747 = vld [vmem:[#allocation2 + $0x18] sm:$0xff]
    %v3748 = vld [vmem:[#allocation2 + $0x20] sm:$0xff]
    %v3749 = vld [vmem:[#allocation2 + $0x28] sm:$0xff]
    %v3750 = vld [vmem:[#allocation2 + $0x30] sm:$0xff]
    %v3751 = vld [vmem:[#allocation2 + $0x38] sm:$0xff]
    %v3752 = vld [vmem:[#allocation2 + $0x40] sm:$0xff]
    %v3753 = vld [vmem:[#allocation2 + $0x48] sm:$0xff]
    %v3754 = vld [vmem:[#allocation2 + $0x50] sm:$0xff]
    %v3755 = vld [vmem:[#allocation2 + $0x58] sm:$0xff]
    %v3756 = vld [vmem:[#allocation2 + $0x60] sm:$0xff]
    %v3757 = vld [vmem:[#allocation2 + $0x68] sm:$0xff]
    %v3758 = vld [vmem:[#allocation2 + $0x70] sm:$0xff]
    %v3759 = vld [vmem:[#allocation2 + $0x78] sm:$0xff]
    %v3760 = vld [vmem:[#allocation2 + $0x80] sm:$0xff]
    %v3761 = vld [vmem:[#allocation2 + $0x88] sm:$0xff]
    %v3762 = vld [vmem:[#allocation2 + $0x90] sm:$0xff]
    %v3763 = vld [vmem:[#allocation2 + $0x98] sm:$0xff]
    %v3764 = vld [vmem:[#allocation2 + $0xa0] sm:$0xff]
    %v3765 = vld [vmem:[#allocation2 + $0xa8] sm:$0xff]
    %v3766 = vld [vmem:[#allocation2 + $0xb0] sm:$0xff]
    %v3767 = vld [vmem:[#allocation2 + $0xb8] sm:$0xff]
    %v3768 = vld [vmem:[#allocation2 + $0xc0] sm:$0xff]
    %v3769 = vld [vmem:[#allocation2 + $0xc8] sm:$0xff]
    %v3770 = vld [vmem:[#allocation2 + $0xd0] sm:$0xff]
    %v3771 = vld [vmem:[#allocation2 + $0xd8] sm:$0xff]
    %v3772 = vld [vmem:[#allocation2 + $0xe0] sm:$0xff]
    %v3773 = vld [vmem:[#allocation2 + $0xe8] sm:$0xff]
    %v3774 = vld [vmem:[#allocation2 + $0xf0] sm:$0xff]
    %v3775 = vld [vmem:[#allocation2 + $0xf8] sm:$0xff]
    %v3776 = vpack.c.bf16 %v3746, %v3744
    %v3777 = vpack.c.bf16 %v3747, %v3745
    %v3778 = vpack.c.bf16 %v3750, %v3748
    %v3779 = vpack.c.bf16 %v3751, %v3749
    %v3780 = vpack.c.bf16 %v3754, %v3752
    %v3781 = vpack.c.bf16 %v3755, %v3753
    %v3782 = vpack.c.bf16 %v3758, %v3756
    %v3783 = vpack.c.bf16 %v3759, %v3757
    %v3784 = vpack.c.bf16 %v3762, %v3760
    %v3785 = vpack.c.bf16 %v3763, %v3761
    %v3786 = vpack.c.bf16 %v3766, %v3764
    %v3787 = vpack.c.bf16 %v3767, %v3765
    %v3788 = vpack.c.bf16 %v3770, %v3768
    %v3789 = vpack.c.bf16 %v3771, %v3769
    %v3790 = vpack.c.bf16 %v3774, %v3772
    %v3791 = vpack.c.bf16 %v3775, %v3773
    %v3792 = vld [vmem:[#allocation8] sm:$0xff]
    %v3793 = vld [vmem:[#allocation8 + $0x8] sm:$0xff]
    %v3794 = vld [vmem:[#allocation8 + $0x10] sm:$0xff]
    %v3795 = vld [vmem:[#allocation8 + $0x18] sm:$0xff]
    %v3796 = vld [vmem:[#allocation8 + $0x20] sm:$0xff]
    %v3797 = vld [vmem:[#allocation8 + $0x28] sm:$0xff]
    %v3798 = vld [vmem:[#allocation8 + $0x30] sm:$0xff]
    %v3799 = vld [vmem:[#allocation8 + $0x38] sm:$0xff]
    %v3800 = vld [vmem:[#allocation8 + $0x40] sm:$0xff]
    %v3801 = vld [vmem:[#allocation8 + $0x48] sm:$0xff]
    %v3802 = vld [vmem:[#allocation8 + $0x50] sm:$0xff]
    %v3803 = vld [vmem:[#allocation8 + $0x58] sm:$0xff]
    %v3804 = vld [vmem:[#allocation8 + $0x60] sm:$0xff]
    %v3805 = vld [vmem:[#allocation8 + $0x68] sm:$0xff]
    %v3806 = vld [vmem:[#allocation8 + $0x70] sm:$0xff]
    %v3807 = vld [vmem:[#allocation8 + $0x78] sm:$0xff]
    %v3808 = vld [vmem:[#allocation8 + $0x80] sm:$0xff]
    %v3809 = vld [vmem:[#allocation8 + $0x88] sm:$0xff]
    %v3810 = vld [vmem:[#allocation8 + $0x90] sm:$0xff]
    %v3811 = vld [vmem:[#allocation8 + $0x98] sm:$0xff]
    %v3812 = vld [vmem:[#allocation8 + $0xa0] sm:$0xff]
    %v3813 = vld [vmem:[#allocation8 + $0xa8] sm:$0xff]
    %v3814 = vld [vmem:[#allocation8 + $0xb0] sm:$0xff]
    %v3815 = vld [vmem:[#allocation8 + $0xb8] sm:$0xff]
    %v3816 = vld [vmem:[#allocation8 + $0xc0] sm:$0xff]
    %v3817 = vld [vmem:[#allocation8 + $0xc8] sm:$0xff]
    %v3818 = vld [vmem:[#allocation8 + $0xd0] sm:$0xff]
    %v3819 = vld [vmem:[#allocation8 + $0xd8] sm:$0xff]
    %v3820 = vld [vmem:[#allocation8 + $0xe0] sm:$0xff]
    %v3821 = vld [vmem:[#allocation8 + $0xe8] sm:$0xff]
    %v3822 = vld [vmem:[#allocation8 + $0xf0] sm:$0xff]
    %v3823 = vld [vmem:[#allocation8 + $0xf8] sm:$0xff]
    %v3824 = vld [vmem:[#allocation2] sm:$0xfe]
    %v3825 = vld [vmem:[#allocation2 + $0x8] sm:$0xfe]
    %v3826 = vld [vmem:[#allocation2 + $0x10] sm:$0xff]
    %v3827 = vld [vmem:[#allocation2 + $0x18] sm:$0xff]
    %v3828 = vld [vmem:[#allocation2 + $0x20] sm:$0xff]
    %v3829 = vld [vmem:[#allocation2 + $0x28] sm:$0xff]
    %v3830 = vld [vmem:[#allocation2 + $0x30] sm:$0xff]
    %v3831 = vld [vmem:[#allocation2 + $0x38] sm:$0xff]
    %v3832 = vld [vmem:[#allocation2 + $0x40] sm:$0xff]
    %v3833 = vld [vmem:[#allocation2 + $0x48] sm:$0xff]
    %v3834 = vld [vmem:[#allocation2 + $0x50] sm:$0xff]
    %v3835 = vld [vmem:[#allocation2 + $0x58] sm:$0xff]
    %v3836 = vld [vmem:[#allocation2 + $0x60] sm:$0xff]
    %v3837 = vld [vmem:[#allocation2 + $0x68] sm:$0xff]
    %v3838 = vld [vmem:[#allocation2 + $0x70] sm:$0xff]
    %v3839 = vld [vmem:[#allocation2 + $0x78] sm:$0xff]
    %v3840 = vld [vmem:[#allocation2 + $0x80] sm:$0xff]
    %v3841 = vld [vmem:[#allocation2 + $0x88] sm:$0xff]
    %v3842 = vld [vmem:[#allocation2 + $0x90] sm:$0xff]
    %v3843 = vld [vmem:[#allocation2 + $0x98] sm:$0xff]
    %v3844 = vld [vmem:[#allocation2 + $0xa0] sm:$0xff]
    %v3845 = vld [vmem:[#allocation2 + $0xa8] sm:$0xff]
    %v3846 = vld [vmem:[#allocation2 + $0xb0] sm:$0xff]
    %v3847 = vld [vmem:[#allocation2 + $0xb8] sm:$0xff]
    %v3848 = vld [vmem:[#allocation2 + $0xc0] sm:$0xff]
    %v3849 = vld [vmem:[#allocation2 + $0xc8] sm:$0xff]
    %v3850 = vld [vmem:[#allocation2 + $0xd0] sm:$0xff]
    %v3851 = vld [vmem:[#allocation2 + $0xd8] sm:$0xff]
    %v3852 = vld [vmem:[#allocation2 + $0xe0] sm:$0xff]
    %v3853 = vld [vmem:[#allocation2 + $0xe8] sm:$0xff]
    %v3854 = vld [vmem:[#allocation2 + $0xf0] sm:$0xff]
    %v3855 = vld [vmem:[#allocation2 + $0xf8] sm:$0xff]
    %v3856 = vld [vmem:[#allocation2 + $0x100] sm:$0x1]
    %v3857 = vld [vmem:[#allocation2 + $0x108] sm:$0x1]
    %v3858 = vpack.c.bf16 %v3826, %v3824
    %v3859 = vpack.c.bf16 %v3827, %v3825
    %v3860 = vpack.c.bf16 %v3830, %v3828
    %v3861 = vpack.c.bf16 %v3831, %v3829
    %v3862 = vpack.c.bf16 %v3834, %v3832
    %v3863 = vpack.c.bf16 %v3835, %v3833
    %v3864 = vpack.c.bf16 %v3838, %v3836
    %v3865 = vpack.c.bf16 %v3839, %v3837
    %v3866 = vpack.c.bf16 %v3842, %v3840
    %v3867 = vpack.c.bf16 %v3843, %v3841
    %v3868 = vpack.c.bf16 %v3846, %v3844
    %v3869 = vpack.c.bf16 %v3847, %v3845
    %v3870 = vpack.c.bf16 %v3850, %v3848
    %v3871 = vpack.c.bf16 %v3851, %v3849
    %v3872 = vpack.c.bf16 %v3854, %v3852
    %v3873 = vpack.c.bf16 %v3855, %v3853
    %v3874 = vpack.c.bf16 %v3856, %v3856
    %v3875 = vpack.c.bf16 %v3857, %v3857
    %s3876 = scalar_lea.vmem [#allocation8], 256
    %v3877 = vld [vmem:[%s3876] sm:$0xff]
    %v3878 = vld [vmem:[%s3876 + $0x8] sm:$0xff]
    %v3879 = vld [vmem:[%s3876 + $0x10] sm:$0xff]
    %v3880 = vld [vmem:[%s3876 + $0x18] sm:$0xff]
    %v3881 = vld [vmem:[%s3876 + $0x20] sm:$0xff]
    %v3882 = vld [vmem:[%s3876 + $0x28] sm:$0xff]
    %v3883 = vld [vmem:[%s3876 + $0x30] sm:$0xff]
    %v3884 = vld [vmem:[%s3876 + $0x38] sm:$0xff]
    %v3885 = vld [vmem:[%s3876 + $0x40] sm:$0xff]
    %v3886 = vld [vmem:[%s3876 + $0x48] sm:$0xff]
    %v3887 = vld [vmem:[%s3876 + $0x50] sm:$0xff]
    %v3888 = vld [vmem:[%s3876 + $0x58] sm:$0xff]
    %v3889 = vld [vmem:[%s3876 + $0x60] sm:$0xff]
    %v3890 = vld [vmem:[%s3876 + $0x68] sm:$0xff]
    %v3891 = vld [vmem:[%s3876 + $0x70] sm:$0xff]
    %v3892 = vld [vmem:[%s3876 + $0x78] sm:$0xff]
    %v3893 = vld [vmem:[%s3876 + $0x80] sm:$0xff]
    %v3894 = vld [vmem:[%s3876 + $0x88] sm:$0xff]
    %v3895 = vld [vmem:[%s3876 + $0x90] sm:$0xff]
    %v3896 = vld [vmem:[%s3876 + $0x98] sm:$0xff]
    %v3897 = vld [vmem:[%s3876 + $0xa0] sm:$0xff]
    %v3898 = vld [vmem:[%s3876 + $0xa8] sm:$0xff]
    %v3899 = vld [vmem:[%s3876 + $0xb0] sm:$0xff]
    %v3900 = vld [vmem:[%s3876 + $0xb8] sm:$0xff]
    %v3901 = vld [vmem:[%s3876 + $0xc0] sm:$0xff]
    %v3902 = vld [vmem:[%s3876 + $0xc8] sm:$0xff]
    %v3903 = vld [vmem:[%s3876 + $0xd0] sm:$0xff]
    %v3904 = vld [vmem:[%s3876 + $0xd8] sm:$0xff]
    %v3905 = vld [vmem:[%s3876 + $0xe0] sm:$0xff]
    %v3906 = vld [vmem:[%s3876 + $0xe8] sm:$0xff]
    %v3907 = vld [vmem:[%s3876 + $0xf0] sm:$0xff]
    %v3908 = vld [vmem:[%s3876 + $0xf8] sm:$0xff]
    %vm3909 = vsmask.f32 7424
    %v3911 = vshrl.u32 %v3858, 16
    %v3913 = vshll.u32 %v3858, 16
    %v3915 = vrot.slane %v3913, 1
    %v3916 = vor.u32 %v3911, %v3915
    %v3918 = vshll.u32 %v3860, 16
    %v3920 = vrot.slane %v3918, 1
    %v3921 = vsel %vm3909, %v3916, %v3920
    %v3923 = vshrl.u32 %v3859, 16
    %v3925 = vshll.u32 %v3859, 16
    %v3927 = vrot.slane %v3925, 1
    %v3928 = vor.u32 %v3923, %v3927
    %v3930 = vshll.u32 %v3861, 16
    %v3932 = vrot.slane %v3930, 1
    %v3933 = vsel %vm3909, %v3928, %v3932
    %v3934 = vshrl.u32 %v3860, 16
    %v3936 = vor.u32 %v3934, %v3920
    %v3938 = vshll.u32 %v3862, 16
    %v3940 = vrot.slane %v3938, 1
    %v3941 = vsel %vm3909, %v3936, %v3940
    %v3942 = vshrl.u32 %v3861, 16
    %v3944 = vor.u32 %v3942, %v3932
    %v3946 = vshll.u32 %v3863, 16
    %v3948 = vrot.slane %v3946, 1
    %v3949 = vsel %vm3909, %v3944, %v3948
    %v3950 = vshrl.u32 %v3862, 16
    %v3952 = vor.u32 %v3950, %v3940
    %v3954 = vshll.u32 %v3864, 16
    %v3956 = vrot.slane %v3954, 1
    %v3957 = vsel %vm3909, %v3952, %v3956
    %v3958 = vshrl.u32 %v3863, 16
    %v3960 = vor.u32 %v3958, %v3948
    %v3962 = vshll.u32 %v3865, 16
    %v3964 = vrot.slane %v3962, 1
    %v3965 = vsel %vm3909, %v3960, %v3964
    %v3966 = vshrl.u32 %v3864, 16
    %v3968 = vor.u32 %v3966, %v3956
    %v3970 = vshll.u32 %v3866, 16
    %v3972 = vrot.slane %v3970, 1
    %v3973 = vsel %vm3909, %v3968, %v3972
    %v3974 = vshrl.u32 %v3865, 16
    %v3976 = vor.u32 %v3974, %v3964
    %v3978 = vshll.u32 %v3867, 16
    %v3980 = vrot.slane %v3978, 1
    %v3981 = vsel %vm3909, %v3976, %v3980
    %v3982 = vshrl.u32 %v3866, 16
    %v3984 = vor.u32 %v3982, %v3972
    %v3986 = vshll.u32 %v3868, 16
    %v3988 = vrot.slane %v3986, 1
    %v3989 = vsel %vm3909, %v3984, %v3988
    %v3990 = vshrl.u32 %v3867, 16
    %v3992 = vor.u32 %v3990, %v3980
    %v3994 = vshll.u32 %v3869, 16
    %v3996 = vrot.slane %v3994, 1
    %v3997 = vsel %vm3909, %v3992, %v3996
    %v3998 = vshrl.u32 %v3868, 16
    %v4000 = vor.u32 %v3998, %v3988
    %v4002 = vshll.u32 %v3870, 16
    %v4004 = vrot.slane %v4002, 1
    %v4005 = vsel %vm3909, %v4000, %v4004
    %v4006 = vshrl.u32 %v3869, 16
    %v4008 = vor.u32 %v4006, %v3996
    %v4010 = vshll.u32 %v3871, 16
    %v4012 = vrot.slane %v4010, 1
    %v4013 = vsel %vm3909, %v4008, %v4012
    %v4014 = vshrl.u32 %v3870, 16
    %v4016 = vor.u32 %v4014, %v4004
    %v4018 = vshll.u32 %v3872, 16
    %v4020 = vrot.slane %v4018, 1
    %v4021 = vsel %vm3909, %v4016, %v4020
    %v4022 = vshrl.u32 %v3871, 16
    %v4024 = vor.u32 %v4022, %v4012
    %v4026 = vshll.u32 %v3873, 16
    %v4028 = vrot.slane %v4026, 1
    %v4029 = vsel %vm3909, %v4024, %v4028
    %v4030 = vshrl.u32 %v3872, 16
    %v4032 = vor.u32 %v4030, %v4020
    %v4034 = vshll.u32 %v3874, 16
    %v4036 = vrot.slane %v4034, 1
    %v4037 = vsel %vm3909, %v4032, %v4036
    %v4038 = vshrl.u32 %v3873, 16
    %v4040 = vor.u32 %v4038, %v4028
    %v4042 = vshll.u32 %v3875, 16
    %v4044 = vrot.slane %v4042, 1
    %v4045 = vsel %vm3909, %v4040, %v4044
    %v4094 = vunpack.c.l.b16 %v3877
    %v4095 = vunpack.c.h.b16 %v3877
    %v4096 = vunpack.c.l.b16 %v3878
    %v4097 = vunpack.c.h.b16 %v3878
    %v4098 = vunpack.c.l.b16 %v3879
    %v4099 = vunpack.c.h.b16 %v3879
    %v4100 = vunpack.c.l.b16 %v3880
    %v4101 = vunpack.c.h.b16 %v3880
    %v4102 = vunpack.c.l.b16 %v3881
    %v4103 = vunpack.c.h.b16 %v3881
    %v4104 = vunpack.c.l.b16 %v3882
    %v4105 = vunpack.c.h.b16 %v3882
    %v4106 = vunpack.c.l.b16 %v3883
    %v4107 = vunpack.c.h.b16 %v3883
    %v4108 = vunpack.c.l.b16 %v3884
    %v4109 = vunpack.c.h.b16 %v3884
    %v4110 = vunpack.c.l.b16 %v3885
    %v4111 = vunpack.c.h.b16 %v3885
    %v4112 = vunpack.c.l.b16 %v3886
    %v4113 = vunpack.c.h.b16 %v3886
    %v4114 = vunpack.c.l.b16 %v3887
    %v4115 = vunpack.c.h.b16 %v3887
    %v4116 = vunpack.c.l.b16 %v3888
    %v4117 = vunpack.c.h.b16 %v3888
    %v4118 = vunpack.c.l.b16 %v3889
    %v4119 = vunpack.c.h.b16 %v3889
    %v4120 = vunpack.c.l.b16 %v3890
    %v4121 = vunpack.c.h.b16 %v3890
    %v4122 = vunpack.c.l.b16 %v3891
    %v4123 = vunpack.c.h.b16 %v3891
    %v4124 = vunpack.c.l.b16 %v3892
    %v4125 = vunpack.c.h.b16 %v3892
    %v4126 = vunpack.c.l.b16 %v3893
    %v4127 = vunpack.c.h.b16 %v3893
    %v4128 = vunpack.c.l.b16 %v3894
    %v4129 = vunpack.c.h.b16 %v3894
    %v4130 = vunpack.c.l.b16 %v3895
    %v4131 = vunpack.c.h.b16 %v3895
    %v4132 = vunpack.c.l.b16 %v3896
    %v4133 = vunpack.c.h.b16 %v3896
    %v4134 = vunpack.c.l.b16 %v3897
    %v4135 = vunpack.c.h.b16 %v3897
    %v4136 = vunpack.c.l.b16 %v3898
    %v4137 = vunpack.c.h.b16 %v3898
    %v4138 = vunpack.c.l.b16 %v3899
    %v4139 = vunpack.c.h.b16 %v3899
    %v4140 = vunpack.c.l.b16 %v3900
    %v4141 = vunpack.c.h.b16 %v3900
    %v4142 = vunpack.c.l.b16 %v3901
    %v4143 = vunpack.c.h.b16 %v3901
    %v4144 = vunpack.c.l.b16 %v3902
    %v4145 = vunpack.c.h.b16 %v3902
    %v4146 = vunpack.c.l.b16 %v3903
    %v4147 = vunpack.c.h.b16 %v3903
    %v4148 = vunpack.c.l.b16 %v3904
    %v4149 = vunpack.c.h.b16 %v3904
    %v4150 = vunpack.c.l.b16 %v3905
    %v4151 = vunpack.c.h.b16 %v3905
    %v4152 = vunpack.c.l.b16 %v3906
    %v4153 = vunpack.c.h.b16 %v3906
    %v4154 = vunpack.c.l.b16 %v3907
    %v4155 = vunpack.c.h.b16 %v3907
    %v4156 = vunpack.c.l.b16 %v3908
    %v4157 = vunpack.c.h.b16 %v3908
    %v4158 = vpack.c.b16 %v4096, %v4094
    %v4159 = vpack.c.b16 %v4097, %v4095
    %v4160 = vpack.c.b16 %v4100, %v4098
    %v4161 = vpack.c.b16 %v4101, %v4099
    %v4162 = vpack.c.b16 %v4104, %v4102
    %v4163 = vpack.c.b16 %v4105, %v4103
    %v4164 = vpack.c.b16 %v4108, %v4106
    %v4165 = vpack.c.b16 %v4109, %v4107
    %v4166 = vpack.c.b16 %v4112, %v4110
    %v4167 = vpack.c.b16 %v4113, %v4111
    %v4168 = vpack.c.b16 %v4116, %v4114
    %v4169 = vpack.c.b16 %v4117, %v4115
    %v4170 = vpack.c.b16 %v4120, %v4118
    %v4171 = vpack.c.b16 %v4121, %v4119
    %v4172 = vpack.c.b16 %v4124, %v4122
    %v4173 = vpack.c.b16 %v4125, %v4123
    %v4174 = vpack.c.b16 %v4128, %v4126
    %v4175 = vpack.c.b16 %v4129, %v4127
    %v4176 = vpack.c.b16 %v4132, %v4130
    %v4177 = vpack.c.b16 %v4133, %v4131
    %v4178 = vpack.c.b16 %v4136, %v4134
    %v4179 = vpack.c.b16 %v4137, %v4135
    %v4180 = vpack.c.b16 %v4140, %v4138
    %v4181 = vpack.c.b16 %v4141, %v4139
    %v4182 = vpack.c.b16 %v4144, %v4142
    %v4183 = vpack.c.b16 %v4145, %v4143
    %v4184 = vpack.c.b16 %v4148, %v4146
    %v4185 = vpack.c.b16 %v4149, %v4147
    %v4186 = vpack.c.b16 %v4152, %v4150
    %v4187 = vpack.c.b16 %v4153, %v4151
    %v4188 = vpack.c.b16 %v4156, %v4154
    %v4189 = vpack.c.b16 %v4157, %v4155
    %4222 = vmatprep.subr.bf16.mxu0 %v4173
    %4223 = vmatpush1.bf16.msra.mxu0 %v4172
    %4224 = vmatprep.subr.bf16.mxu0 %v4171
    %4225 = vmatpush1.bf16.msra.mxu0 %v4170
    %4226 = vmatprep.subr.bf16.mxu0 %v4169
    %4227 = vmatpush1.bf16.msra.mxu0 %v4168
    %4228 = vmatprep.subr.bf16.mxu0 %v4167
    %4229 = vmatpush1.bf16.msra.mxu0 %v4166
    %4230 = vmatprep.subr.bf16.mxu0 %v4165
    %4231 = vmatpush1.bf16.msra.mxu0 %v4164
    %4232 = vmatprep.subr.bf16.mxu0 %v4163
    %4233 = vmatpush1.bf16.msra.mxu0 %v4162
    %4234 = vmatprep.subr.bf16.mxu0 %v4161
    %4235 = vmatpush1.bf16.msra.mxu0 %v4160
    %4236 = vmatprep.subr.bf16.mxu0 %v4159
    %4237 = vmatpush1.bf16.msra.mxu0 %v4158
    %4238 = vmatprep.subr.bf16.mxu0 %v4189
    %4239 = vmatpush2.bf16.msra.mxu0 %v4188
    %4240 = vmatprep.subr.bf16.mxu0 %v4187
    %4241 = vmatpush2.bf16.msra.mxu0 %v4186
    %4242 = vmatprep.subr.bf16.mxu0 %v4185
    %4243 = vmatpush2.bf16.msra.mxu0 %v4184
    %4244 = vmatprep.subr.bf16.mxu0 %v4183
    %4245 = vmatpush2.bf16.msra.mxu0 %v4182
    %4246 = vmatprep.subr.bf16.mxu0 %v4181
    %4247 = vmatpush2.bf16.msra.mxu0 %v4180
    %4248 = vmatprep.subr.bf16.mxu0 %v4179
    %4249 = vmatpush2.bf16.msra.mxu0 %v4178
    %4250 = vmatprep.subr.bf16.mxu0 %v4177
    %4251 = vmatpush2.bf16.msra.mxu0 %v4176
    %4252 = vmatprep.subr.bf16.mxu0 %v4175
    %4253 = vmatpush2.bf16.msra.mxu0 %v4174
    %4254 = vmatprep.mubr.bf16.mxu0 %v3933
    %4255 = vmatmul.mubr.bf16.gmra.mxu0 %v3921
    %v4256 = vpop.f32.mrf.mxu0
    %v4257 = vadd.f32 0.0, %v4256
    %v4258 = vpop.f32.mrf.mxu0
    %v4259 = vadd.f32 0.0, %v4258
    %v4260 = vpop.f32.mrf.mxu0
    %v4261 = vadd.f32 0.0, %v4260
    %v4262 = vpop.f32.mrf.mxu0
    %v4263 = vadd.f32 0.0, %v4262
    %4264 = vmatprep.mubr.bf16.mxu0 %v3949
    %4265 = vmatmul.mubr.bf16.gmra.mxu0 %v3941
    %v4266 = vpop.f32.mrf.mxu0
    %v4267 = vadd.f32 0.0, %v4266
    %v4268 = vpop.f32.mrf.mxu0
    %v4269 = vadd.f32 0.0, %v4268
    %v4270 = vpop.f32.mrf.mxu0
    %v4271 = vadd.f32 0.0, %v4270
    %v4272 = vpop.f32.mrf.mxu0
    %v4273 = vadd.f32 0.0, %v4272
    %4274 = vmatprep.mubr.bf16.mxu0 %v3965
    %4275 = vmatmul.mubr.bf16.gmra.mxu0 %v3957
    %v4276 = vpop.f32.mrf.mxu0
    %v4277 = vadd.f32 0.0, %v4276
    %v4278 = vpop.f32.mrf.mxu0
    %v4279 = vadd.f32 0.0, %v4278
    %v4280 = vpop.f32.mrf.mxu0
    %v4281 = vadd.f32 0.0, %v4280
    %v4282 = vpop.f32.mrf.mxu0
    %v4283 = vadd.f32 0.0, %v4282
    %4284 = vmatprep.mubr.bf16.mxu0 %v3981
    %4285 = vmatmul.mubr.bf16.gmra.mxu0 %v3973
    %v4286 = vpop.f32.mrf.mxu0
    %v4287 = vadd.f32 0.0, %v4286
    %v4288 = vpop.f32.mrf.mxu0
    %v4289 = vadd.f32 0.0, %v4288
    %v4290 = vpop.f32.mrf.mxu0
    %v4291 = vadd.f32 0.0, %v4290
    %v4292 = vpop.f32.mrf.mxu0
    %v4293 = vadd.f32 0.0, %v4292
    %4294 = vmatprep.mubr.bf16.mxu0 %v3997
    %4295 = vmatmul.mubr.bf16.gmra.mxu0 %v3989
    %v4296 = vpop.f32.mrf.mxu0
    %v4297 = vadd.f32 0.0, %v4296
    %v4298 = vpop.f32.mrf.mxu0
    %v4299 = vadd.f32 0.0, %v4298
    %v4300 = vpop.f32.mrf.mxu0
    %v4301 = vadd.f32 0.0, %v4300
    %v4302 = vpop.f32.mrf.mxu0
    %v4303 = vadd.f32 0.0, %v4302
    %4304 = vmatprep.mubr.bf16.mxu0 %v4013
    %4305 = vmatmul.mubr.bf16.gmra.mxu0 %v4005
    %v4306 = vpop.f32.mrf.mxu0
    %v4307 = vadd.f32 0.0, %v4306
    %v4308 = vpop.f32.mrf.mxu0
    %v4309 = vadd.f32 0.0, %v4308
    %v4310 = vpop.f32.mrf.mxu0
    %v4311 = vadd.f32 0.0, %v4310
    %v4312 = vpop.f32.mrf.mxu0
    %v4313 = vadd.f32 0.0, %v4312
    %4314 = vmatprep.mubr.bf16.mxu0 %v4029
    %4315 = vmatmul.mubr.bf16.gmra.mxu0 %v4021
    %v4316 = vpop.f32.mrf.mxu0
    %v4317 = vadd.f32 0.0, %v4316
    %v4318 = vpop.f32.mrf.mxu0
    %v4319 = vadd.f32 0.0, %v4318
    %v4320 = vpop.f32.mrf.mxu0
    %v4321 = vadd.f32 0.0, %v4320
    %v4322 = vpop.f32.mrf.mxu0
    %v4323 = vadd.f32 0.0, %v4322
    %4324 = vmatprep.mubr.bf16.mxu0 %v4045
    %4325 = vmatmul.mubr.bf16.gmra.mxu0 %v4037
    %v4326 = vpop.f32.mrf.mxu0
    %v4327 = vadd.f32 0.0, %v4326
    %v4328 = vpop.f32.mrf.mxu0
    %v4329 = vadd.f32 0.0, %v4328
    %v4330 = vpop.f32.mrf.mxu0
    %v4331 = vadd.f32 0.0, %v4330
    %v4332 = vpop.f32.mrf.mxu0
    %v4333 = vadd.f32 0.0, %v4332
    %4334 = vdwg.mxu0
    %v4367 = vunpack.c.l.b16 %v3792
    %v4368 = vunpack.c.h.b16 %v3792
    %v4369 = vunpack.c.l.b16 %v3793
    %v4370 = vunpack.c.h.b16 %v3793
    %v4371 = vunpack.c.l.b16 %v3794
    %v4372 = vunpack.c.h.b16 %v3794
    %v4373 = vunpack.c.l.b16 %v3795
    %v4374 = vunpack.c.h.b16 %v3795
    %v4375 = vunpack.c.l.b16 %v3796
    %v4376 = vunpack.c.h.b16 %v3796
    %v4377 = vunpack.c.l.b16 %v3797
    %v4378 = vunpack.c.h.b16 %v3797
    %v4379 = vunpack.c.l.b16 %v3798
    %v4380 = vunpack.c.h.b16 %v3798
    %v4381 = vunpack.c.l.b16 %v3799
    %v4382 = vunpack.c.h.b16 %v3799
    %v4383 = vunpack.c.l.b16 %v3800
    %v4384 = vunpack.c.h.b16 %v3800
    %v4385 = vunpack.c.l.b16 %v3801
    %v4386 = vunpack.c.h.b16 %v3801
    %v4387 = vunpack.c.l.b16 %v3802
    %v4388 = vunpack.c.h.b16 %v3802
    %v4389 = vunpack.c.l.b16 %v3803
    %v4390 = vunpack.c.h.b16 %v3803
    %v4391 = vunpack.c.l.b16 %v3804
    %v4392 = vunpack.c.h.b16 %v3804
    %v4393 = vunpack.c.l.b16 %v3805
    %v4394 = vunpack.c.h.b16 %v3805
    %v4395 = vunpack.c.l.b16 %v3806
    %v4396 = vunpack.c.h.b16 %v3806
    %v4397 = vunpack.c.l.b16 %v3807
    %v4398 = vunpack.c.h.b16 %v3807
    %v4399 = vunpack.c.l.b16 %v3808
    %v4400 = vunpack.c.h.b16 %v3808
    %v4401 = vunpack.c.l.b16 %v3809
    %v4402 = vunpack.c.h.b16 %v3809
    %v4403 = vunpack.c.l.b16 %v3810
    %v4404 = vunpack.c.h.b16 %v3810
    %v4405 = vunpack.c.l.b16 %v3811
    %v4406 = vunpack.c.h.b16 %v3811
    %v4407 = vunpack.c.l.b16 %v3812
    %v4408 = vunpack.c.h.b16 %v3812
    %v4409 = vunpack.c.l.b16 %v3813
    %v4410 = vunpack.c.h.b16 %v3813
    %v4411 = vunpack.c.l.b16 %v3814
    %v4412 = vunpack.c.h.b16 %v3814
    %v4413 = vunpack.c.l.b16 %v3815
    %v4414 = vunpack.c.h.b16 %v3815
    %v4415 = vunpack.c.l.b16 %v3816
    %v4416 = vunpack.c.h.b16 %v3816
    %v4417 = vunpack.c.l.b16 %v3817
    %v4418 = vunpack.c.h.b16 %v3817
    %v4419 = vunpack.c.l.b16 %v3818
    %v4420 = vunpack.c.h.b16 %v3818
    %v4421 = vunpack.c.l.b16 %v3819
    %v4422 = vunpack.c.h.b16 %v3819
    %v4423 = vunpack.c.l.b16 %v3820
    %v4424 = vunpack.c.h.b16 %v3820
    %v4425 = vunpack.c.l.b16 %v3821
    %v4426 = vunpack.c.h.b16 %v3821
    %v4427 = vunpack.c.l.b16 %v3822
    %v4428 = vunpack.c.h.b16 %v3822
    %v4429 = vunpack.c.l.b16 %v3823
    %v4430 = vunpack.c.h.b16 %v3823
    %v4431 = vpack.c.b16 %v4369, %v4367
    %v4432 = vpack.c.b16 %v4370, %v4368
    %v4433 = vpack.c.b16 %v4373, %v4371
    %v4434 = vpack.c.b16 %v4374, %v4372
    %v4435 = vpack.c.b16 %v4377, %v4375
    %v4436 = vpack.c.b16 %v4378, %v4376
    %v4437 = vpack.c.b16 %v4381, %v4379
    %v4438 = vpack.c.b16 %v4382, %v4380
    %v4439 = vpack.c.b16 %v4385, %v4383
    %v4440 = vpack.c.b16 %v4386, %v4384
    %v4441 = vpack.c.b16 %v4389, %v4387
    %v4442 = vpack.c.b16 %v4390, %v4388
    %v4443 = vpack.c.b16 %v4393, %v4391
    %v4444 = vpack.c.b16 %v4394, %v4392
    %v4445 = vpack.c.b16 %v4397, %v4395
    %v4446 = vpack.c.b16 %v4398, %v4396
    %v4447 = vpack.c.b16 %v4401, %v4399
    %v4448 = vpack.c.b16 %v4402, %v4400
    %v4449 = vpack.c.b16 %v4405, %v4403
    %v4450 = vpack.c.b16 %v4406, %v4404
    %v4451 = vpack.c.b16 %v4409, %v4407
    %v4452 = vpack.c.b16 %v4410, %v4408
    %v4453 = vpack.c.b16 %v4413, %v4411
    %v4454 = vpack.c.b16 %v4414, %v4412
    %v4455 = vpack.c.b16 %v4417, %v4415
    %v4456 = vpack.c.b16 %v4418, %v4416
    %v4457 = vpack.c.b16 %v4421, %v4419
    %v4458 = vpack.c.b16 %v4422, %v4420
    %v4459 = vpack.c.b16 %v4425, %v4423
    %v4460 = vpack.c.b16 %v4426, %v4424
    %v4461 = vpack.c.b16 %v4429, %v4427
    %v4462 = vpack.c.b16 %v4430, %v4428
    %4495 = vmatprep.subr.bf16.mxu0 %v4446
    %4496 = vmatpush1.bf16.msra.mxu0 %v4445
    %4497 = vmatprep.subr.bf16.mxu0 %v4444
    %4498 = vmatpush1.bf16.msra.mxu0 %v4443
    %4499 = vmatprep.subr.bf16.mxu0 %v4442
    %4500 = vmatpush1.bf16.msra.mxu0 %v4441
    %4501 = vmatprep.subr.bf16.mxu0 %v4440
    %4502 = vmatpush1.bf16.msra.mxu0 %v4439
    %4503 = vmatprep.subr.bf16.mxu0 %v4438
    %4504 = vmatpush1.bf16.msra.mxu0 %v4437
    %4505 = vmatprep.subr.bf16.mxu0 %v4436
    %4506 = vmatpush1.bf16.msra.mxu0 %v4435
    %4507 = vmatprep.subr.bf16.mxu0 %v4434
    %4508 = vmatpush1.bf16.msra.mxu0 %v4433
    %4509 = vmatprep.subr.bf16.mxu0 %v4432
    %4510 = vmatpush1.bf16.msra.mxu0 %v4431
    %4511 = vmatprep.subr.bf16.mxu0 %v4462
    %4512 = vmatpush2.bf16.msra.mxu0 %v4461
    %4513 = vmatprep.subr.bf16.mxu0 %v4460
    %4514 = vmatpush2.bf16.msra.mxu0 %v4459
    %4515 = vmatprep.subr.bf16.mxu0 %v4458
    %4516 = vmatpush2.bf16.msra.mxu0 %v4457
    %4517 = vmatprep.subr.bf16.mxu0 %v4456
    %4518 = vmatpush2.bf16.msra.mxu0 %v4455
    %4519 = vmatprep.subr.bf16.mxu0 %v4454
    %4520 = vmatpush2.bf16.msra.mxu0 %v4453
    %4521 = vmatprep.subr.bf16.mxu0 %v4452
    %4522 = vmatpush2.bf16.msra.mxu0 %v4451
    %4523 = vmatprep.subr.bf16.mxu0 %v4450
    %4524 = vmatpush2.bf16.msra.mxu0 %v4449
    %4525 = vmatprep.subr.bf16.mxu0 %v4448
    %4526 = vmatpush2.bf16.msra.mxu0 %v4447
    %4527 = vmatprep.mubr.bf16.mxu0 %v3777
    %4528 = vmatmul.mubr.bf16.gmra.mxu0 %v3776
    %v4529 = vpop.f32.mrf.mxu0
    %v4530 = vadd.f32 %v4257, %v4529
    %v4531 = vpop.f32.mrf.mxu0
    %v4532 = vadd.f32 %v4259, %v4531
    %v4533 = vpop.f32.mrf.mxu0
    %v4534 = vadd.f32 %v4261, %v4533
    %v4535 = vpop.f32.mrf.mxu0
    %v4536 = vadd.f32 %v4263, %v4535
    %4537 = vmatprep.mubr.bf16.mxu0 %v3779
    %4538 = vmatmul.mubr.bf16.gmra.mxu0 %v3778
    %v4539 = vpop.f32.mrf.mxu0
    %v4540 = vadd.f32 %v4267, %v4539
    %v4541 = vpop.f32.mrf.mxu0
    %v4542 = vadd.f32 %v4269, %v4541
    %v4543 = vpop.f32.mrf.mxu0
    %v4544 = vadd.f32 %v4271, %v4543
    %v4545 = vpop.f32.mrf.mxu0
    %v4546 = vadd.f32 %v4273, %v4545
    %4547 = vmatprep.mubr.bf16.mxu0 %v3781
    %4548 = vmatmul.mubr.bf16.gmra.mxu0 %v3780
    %v4549 = vpop.f32.mrf.mxu0
    %v4550 = vadd.f32 %v4277, %v4549
    %v4551 = vpop.f32.mrf.mxu0
    %v4552 = vadd.f32 %v4279, %v4551
    %v4553 = vpop.f32.mrf.mxu0
    %v4554 = vadd.f32 %v4281, %v4553
    %v4555 = vpop.f32.mrf.mxu0
    %v4556 = vadd.f32 %v4283, %v4555
    %4557 = vmatprep.mubr.bf16.mxu0 %v3783
    %4558 = vmatmul.mubr.bf16.gmra.mxu0 %v3782
    %v4559 = vpop.f32.mrf.mxu0
    %v4560 = vadd.f32 %v4287, %v4559
    %v4561 = vpop.f32.mrf.mxu0
    %v4562 = vadd.f32 %v4289, %v4561
    %v4563 = vpop.f32.mrf.mxu0
    %v4564 = vadd.f32 %v4291, %v4563
    %v4565 = vpop.f32.mrf.mxu0
    %v4566 = vadd.f32 %v4293, %v4565
    %4567 = vmatprep.mubr.bf16.mxu0 %v3785
    %4568 = vmatmul.mubr.bf16.gmra.mxu0 %v3784
    %v4569 = vpop.f32.mrf.mxu0
    %v4570 = vadd.f32 %v4297, %v4569
    %v4571 = vpop.f32.mrf.mxu0
    %v4572 = vadd.f32 %v4299, %v4571
    %v4573 = vpop.f32.mrf.mxu0
    %v4574 = vadd.f32 %v4301, %v4573
    %v4575 = vpop.f32.mrf.mxu0
    %v4576 = vadd.f32 %v4303, %v4575
    %4577 = vmatprep.mubr.bf16.mxu0 %v3787
    %4578 = vmatmul.mubr.bf16.gmra.mxu0 %v3786
    %v4579 = vpop.f32.mrf.mxu0
    %v4580 = vadd.f32 %v4307, %v4579
    %v4581 = vpop.f32.mrf.mxu0
    %v4582 = vadd.f32 %v4309, %v4581
    %v4583 = vpop.f32.mrf.mxu0
    %v4584 = vadd.f32 %v4311, %v4583
    %v4585 = vpop.f32.mrf.mxu0
    %v4586 = vadd.f32 %v4313, %v4585
    %4587 = vmatprep.mubr.bf16.mxu0 %v3789
    %4588 = vmatmul.mubr.bf16.gmra.mxu0 %v3788
    %v4589 = vpop.f32.mrf.mxu0
    %v4590 = vadd.f32 %v4317, %v4589
    %v4591 = vpop.f32.mrf.mxu0
    %v4592 = vadd.f32 %v4319, %v4591
    %v4593 = vpop.f32.mrf.mxu0
    %v4594 = vadd.f32 %v4321, %v4593
    %v4595 = vpop.f32.mrf.mxu0
    %v4596 = vadd.f32 %v4323, %v4595
    %4597 = vmatprep.mubr.bf16.mxu0 %v3791
    %4598 = vmatmul.mubr.bf16.gmra.mxu0 %v3790
    %v4599 = vpop.f32.mrf.mxu0
    %v4600 = vadd.f32 %v4327, %v4599
    %v4601 = vpop.f32.mrf.mxu0
    %v4602 = vadd.f32 %v4329, %v4601
    %v4603 = vpop.f32.mrf.mxu0
    %v4604 = vadd.f32 %v4331, %v4603
    %v4605 = vpop.f32.mrf.mxu0
    %v4606 = vadd.f32 %v4333, %v4605
    %4607 = vdwg.mxu0
    %v4608 = vld [vmem:[#allocation2] sm:$0xfc]
    %v4609 = vld [vmem:[#allocation2 + $0x8] sm:$0xfc]
    %v4610 = vld [vmem:[#allocation2 + $0x100] sm:$0x3]
    %v4611 = vld [vmem:[#allocation2 + $0x108] sm:$0x3]
    %v4612 = vpack.c.bf16 %v3826, %v4608
    %v4613 = vpack.c.bf16 %v3827, %v4609
    %v4614 = vpack.c.bf16 %v4610, %v4610
    %v4615 = vpack.c.bf16 %v4611, %v4611
    %s4616 = scalar_lea.vmem [#allocation8], 512
    %v4617 = vld [vmem:[%s4616] sm:$0xff]
    %v4618 = vld [vmem:[%s4616 + $0x8] sm:$0xff]
    %v4619 = vld [vmem:[%s4616 + $0x10] sm:$0xff]
    %v4620 = vld [vmem:[%s4616 + $0x18] sm:$0xff]
    %v4621 = vld [vmem:[%s4616 + $0x20] sm:$0xff]
    %v4622 = vld [vmem:[%s4616 + $0x28] sm:$0xff]
    %v4623 = vld [vmem:[%s4616 + $0x30] sm:$0xff]
    %v4624 = vld [vmem:[%s4616 + $0x38] sm:$0xff]
    %v4625 = vld [vmem:[%s4616 + $0x40] sm:$0xff]
    %v4626 = vld [vmem:[%s4616 + $0x48] sm:$0xff]
    %v4627 = vld [vmem:[%s4616 + $0x50] sm:$0xff]
    %v4628 = vld [vmem:[%s4616 + $0x58] sm:$0xff]
    %v4629 = vld [vmem:[%s4616 + $0x60] sm:$0xff]
    %v4630 = vld [vmem:[%s4616 + $0x68] sm:$0xff]
    %v4631 = vld [vmem:[%s4616 + $0x70] sm:$0xff]
    %v4632 = vld [vmem:[%s4616 + $0x78] sm:$0xff]
    %v4633 = vld [vmem:[%s4616 + $0x80] sm:$0xff]
    %v4634 = vld [vmem:[%s4616 + $0x88] sm:$0xff]
    %v4635 = vld [vmem:[%s4616 + $0x90] sm:$0xff]
    %v4636 = vld [vmem:[%s4616 + $0x98] sm:$0xff]
    %v4637 = vld [vmem:[%s4616 + $0xa0] sm:$0xff]
    %v4638 = vld [vmem:[%s4616 + $0xa8] sm:$0xff]
    %v4639 = vld [vmem:[%s4616 + $0xb0] sm:$0xff]
    %v4640 = vld [vmem:[%s4616 + $0xb8] sm:$0xff]
    %v4641 = vld [vmem:[%s4616 + $0xc0] sm:$0xff]
    %v4642 = vld [vmem:[%s4616 + $0xc8] sm:$0xff]
    %v4643 = vld [vmem:[%s4616 + $0xd0] sm:$0xff]
    %v4644 = vld [vmem:[%s4616 + $0xd8] sm:$0xff]
    %v4645 = vld [vmem:[%s4616 + $0xe0] sm:$0xff]
    %v4646 = vld [vmem:[%s4616 + $0xe8] sm:$0xff]
    %v4647 = vld [vmem:[%s4616 + $0xf0] sm:$0xff]
    %v4648 = vld [vmem:[%s4616 + $0xf8] sm:$0xff]
    %vm4667 = vcmask 1046528
    %v4668 = vrot.slane %v4612, 1
    %v4669 = vrot.slane %v3860, 1
    %v4670 = vsel %vm4667, %v4668, %v4669
    %v4671 = vrot.slane %v4613, 1
    %v4672 = vrot.slane %v3861, 1
    %v4673 = vsel %vm4667, %v4671, %v4672
    %v4674 = vrot.slane %v3862, 1
    %v4675 = vsel %vm4667, %v4669, %v4674
    %v4676 = vrot.slane %v3863, 1
    %v4677 = vsel %vm4667, %v4672, %v4676
    %v4678 = vrot.slane %v3864, 1
    %v4679 = vsel %vm4667, %v4674, %v4678
    %v4680 = vrot.slane %v3865, 1
    %v4681 = vsel %vm4667, %v4676, %v4680
    %v4682 = vrot.slane %v3866, 1
    %v4683 = vsel %vm4667, %v4678, %v4682
    %v4684 = vrot.slane %v3867, 1
    %v4685 = vsel %vm4667, %v4680, %v4684
    %v4686 = vrot.slane %v3868, 1
    %v4687 = vsel %vm4667, %v4682, %v4686
    %v4688 = vrot.slane %v3869, 1
    %v4689 = vsel %vm4667, %v4684, %v4688
    %v4690 = vrot.slane %v3870, 1
    %v4691 = vsel %vm4667, %v4686, %v4690
    %v4692 = vrot.slane %v3871, 1
    %v4693 = vsel %vm4667, %v4688, %v4692
    %v4694 = vrot.slane %v3872, 1
    %v4695 = vsel %vm4667, %v4690, %v4694
    %v4696 = vrot.slane %v3873, 1
    %v4697 = vsel %vm4667, %v4692, %v4696
    %v4698 = vrot.slane %v4614, 1
    %v4699 = vsel %vm4667, %v4694, %v4698
    %v4700 = vrot.slane %v4615, 1
    %v4701 = vsel %vm4667, %v4696, %v4700
    %v4750 = vunpack.c.l.b16 %v4617
    %v4751 = vunpack.c.h.b16 %v4617
    %v4752 = vunpack.c.l.b16 %v4618
    %v4753 = vunpack.c.h.b16 %v4618
    %v4754 = vunpack.c.l.b16 %v4619
    %v4755 = vunpack.c.h.b16 %v4619
    %v4756 = vunpack.c.l.b16 %v4620
    %v4757 = vunpack.c.h.b16 %v4620
    %v4758 = vunpack.c.l.b16 %v4621
    %v4759 = vunpack.c.h.b16 %v4621
    %v4760 = vunpack.c.l.b16 %v4622
    %v4761 = vunpack.c.h.b16 %v4622
    %v4762 = vunpack.c.l.b16 %v4623
    %v4763 = vunpack.c.h.b16 %v4623
    %v4764 = vunpack.c.l.b16 %v4624
    %v4765 = vunpack.c.h.b16 %v4624
    %v4766 = vunpack.c.l.b16 %v4625
    %v4767 = vunpack.c.h.b16 %v4625
    %v4768 = vunpack.c.l.b16 %v4626
    %v4769 = vunpack.c.h.b16 %v4626
    %v4770 = vunpack.c.l.b16 %v4627
    %v4771 = vunpack.c.h.b16 %v4627
    %v4772 = vunpack.c.l.b16 %v4628
    %v4773 = vunpack.c.h.b16 %v4628
    %v4774 = vunpack.c.l.b16 %v4629
    %v4775 = vunpack.c.h.b16 %v4629
    %v4776 = vunpack.c.l.b16 %v4630
    %v4777 = vunpack.c.h.b16 %v4630
    %v4778 = vunpack.c.l.b16 %v4631
    %v4779 = vunpack.c.h.b16 %v4631
    %v4780 = vunpack.c.l.b16 %v4632
    %v4781 = vunpack.c.h.b16 %v4632
    %v4782 = vunpack.c.l.b16 %v4633
    %v4783 = vunpack.c.h.b16 %v4633
    %v4784 = vunpack.c.l.b16 %v4634
    %v4785 = vunpack.c.h.b16 %v4634
    %v4786 = vunpack.c.l.b16 %v4635
    %v4787 = vunpack.c.h.b16 %v4635
    %v4788 = vunpack.c.l.b16 %v4636
    %v4789 = vunpack.c.h.b16 %v4636
    %v4790 = vunpack.c.l.b16 %v4637
    %v4791 = vunpack.c.h.b16 %v4637
    %v4792 = vunpack.c.l.b16 %v4638
    %v4793 = vunpack.c.h.b16 %v4638
    %v4794 = vunpack.c.l.b16 %v4639
    %v4795 = vunpack.c.h.b16 %v4639
    %v4796 = vunpack.c.l.b16 %v4640
    %v4797 = vunpack.c.h.b16 %v4640
    %v4798 = vunpack.c.l.b16 %v4641
    %v4799 = vunpack.c.h.b16 %v4641
    %v4800 = vunpack.c.l.b16 %v4642
    %v4801 = vunpack.c.h.b16 %v4642
    %v4802 = vunpack.c.l.b16 %v4643
    %v4803 = vunpack.c.h.b16 %v4643
    %v4804 = vunpack.c.l.b16 %v4644
    %v4805 = vunpack.c.h.b16 %v4644
    %v4806 = vunpack.c.l.b16 %v4645
    %v4807 = vunpack.c.h.b16 %v4645
    %v4808 = vunpack.c.l.b16 %v4646
    %v4809 = vunpack.c.h.b16 %v4646
    %v4810 = vunpack.c.l.b16 %v4647
    %v4811 = vunpack.c.h.b16 %v4647
    %v4812 = vunpack.c.l.b16 %v4648
    %v4813 = vunpack.c.h.b16 %v4648
    %v4814 = vpack.c.b16 %v4752, %v4750
    %v4815 = vpack.c.b16 %v4753, %v4751
    %v4816 = vpack.c.b16 %v4756, %v4754
    %v4817 = vpack.c.b16 %v4757, %v4755
    %v4818 = vpack.c.b16 %v4760, %v4758
    %v4819 = vpack.c.b16 %v4761, %v4759
    %v4820 = vpack.c.b16 %v4764, %v4762
    %v4821 = vpack.c.b16 %v4765, %v4763
    %v4822 = vpack.c.b16 %v4768, %v4766
    %v4823 = vpack.c.b16 %v4769, %v4767
    %v4824 = vpack.c.b16 %v4772, %v4770
    %v4825 = vpack.c.b16 %v4773, %v4771
    %v4826 = vpack.c.b16 %v4776, %v4774
    %v4827 = vpack.c.b16 %v4777, %v4775
    %v4828 = vpack.c.b16 %v4780, %v4778
    %v4829 = vpack.c.b16 %v4781, %v4779
    %v4830 = vpack.c.b16 %v4784, %v4782
    %v4831 = vpack.c.b16 %v4785, %v4783
    %v4832 = vpack.c.b16 %v4788, %v4786
    %v4833 = vpack.c.b16 %v4789, %v4787
    %v4834 = vpack.c.b16 %v4792, %v4790
    %v4835 = vpack.c.b16 %v4793, %v4791
    %v4836 = vpack.c.b16 %v4796, %v4794
    %v4837 = vpack.c.b16 %v4797, %v4795
    %v4838 = vpack.c.b16 %v4800, %v4798
    %v4839 = vpack.c.b16 %v4801, %v4799
    %v4840 = vpack.c.b16 %v4804, %v4802
    %v4841 = vpack.c.b16 %v4805, %v4803
    %v4842 = vpack.c.b16 %v4808, %v4806
    %v4843 = vpack.c.b16 %v4809, %v4807
    %v4844 = vpack.c.b16 %v4812, %v4810
    %v4845 = vpack.c.b16 %v4813, %v4811
    %4878 = vmatprep.subr.bf16.mxu0 %v4829
    %4879 = vmatpush1.bf16.msra.mxu0 %v4828
    %4880 = vmatprep.subr.bf16.mxu0 %v4827
    %4881 = vmatpush1.bf16.msra.mxu0 %v4826
    %4882 = vmatprep.subr.bf16.mxu0 %v4825
    %4883 = vmatpush1.bf16.msra.mxu0 %v4824
    %4884 = vmatprep.subr.bf16.mxu0 %v4823
    %4885 = vmatpush1.bf16.msra.mxu0 %v4822
    %4886 = vmatprep.subr.bf16.mxu0 %v4821
    %4887 = vmatpush1.bf16.msra.mxu0 %v4820
    %4888 = vmatprep.subr.bf16.mxu0 %v4819
    %4889 = vmatpush1.bf16.msra.mxu0 %v4818
    %4890 = vmatprep.subr.bf16.mxu0 %v4817
    %4891 = vmatpush1.bf16.msra.mxu0 %v4816
    %4892 = vmatprep.subr.bf16.mxu0 %v4815
    %4893 = vmatpush1.bf16.msra.mxu0 %v4814
    %4894 = vmatprep.subr.bf16.mxu0 %v4845
    %4895 = vmatpush2.bf16.msra.mxu0 %v4844
    %4896 = vmatprep.subr.bf16.mxu0 %v4843
    %4897 = vmatpush2.bf16.msra.mxu0 %v4842
    %4898 = vmatprep.subr.bf16.mxu0 %v4841
    %4899 = vmatpush2.bf16.msra.mxu0 %v4840
    %4900 = vmatprep.subr.bf16.mxu0 %v4839
    %4901 = vmatpush2.bf16.msra.mxu0 %v4838
    %4902 = vmatprep.subr.bf16.mxu0 %v4837
    %4903 = vmatpush2.bf16.msra.mxu0 %v4836
    %4904 = vmatprep.subr.bf16.mxu0 %v4835
    %4905 = vmatpush2.bf16.msra.mxu0 %v4834
    %4906 = vmatprep.subr.bf16.mxu0 %v4833
    %4907 = vmatpush2.bf16.msra.mxu0 %v4832
    %4908 = vmatprep.subr.bf16.mxu0 %v4831
    %4909 = vmatpush2.bf16.msra.mxu0 %v4830
    %4910 = vmatprep.mubr.bf16.mxu0 %v4673
    %4911 = vmatmul.mubr.bf16.gmra.mxu0 %v4670
    %v4912 = vpop.f32.mrf.mxu0
    %v4913 = vadd.f32 0.0, %v4912
    %v4914 = vpop.f32.mrf.mxu0
    %v4915 = vadd.f32 0.0, %v4914
    %v4916 = vpop.f32.mrf.mxu0
    %v4917 = vadd.f32 0.0, %v4916
    %v4918 = vpop.f32.mrf.mxu0
    %v4919 = vadd.f32 0.0, %v4918
    %4920 = vmatprep.mubr.bf16.mxu0 %v4677
    %4921 = vmatmul.mubr.bf16.gmra.mxu0 %v4675
    %v4922 = vpop.f32.mrf.mxu0
    %v4923 = vadd.f32 0.0, %v4922
    %v4924 = vpop.f32.mrf.mxu0
    %v4925 = vadd.f32 0.0, %v4924
    %v4926 = vpop.f32.mrf.mxu0
    %v4927 = vadd.f32 0.0, %v4926
    %v4928 = vpop.f32.mrf.mxu0
    %v4929 = vadd.f32 0.0, %v4928
    %4930 = vmatprep.mubr.bf16.mxu0 %v4681
    %4931 = vmatmul.mubr.bf16.gmra.mxu0 %v4679
    %v4932 = vpop.f32.mrf.mxu0
    %v4933 = vadd.f32 0.0, %v4932
    %v4934 = vpop.f32.mrf.mxu0
    %v4935 = vadd.f32 0.0, %v4934
    %v4936 = vpop.f32.mrf.mxu0
    %v4937 = vadd.f32 0.0, %v4936
    %v4938 = vpop.f32.mrf.mxu0
    %v4939 = vadd.f32 0.0, %v4938
    %4940 = vmatprep.mubr.bf16.mxu0 %v4685
    %4941 = vmatmul.mubr.bf16.gmra.mxu0 %v4683
    %v4942 = vpop.f32.mrf.mxu0
    %v4943 = vadd.f32 0.0, %v4942
    %v4944 = vpop.f32.mrf.mxu0
    %v4945 = vadd.f32 0.0, %v4944
    %v4946 = vpop.f32.mrf.mxu0
    %v4947 = vadd.f32 0.0, %v4946
    %v4948 = vpop.f32.mrf.mxu0
    %v4949 = vadd.f32 0.0, %v4948
    %4950 = vmatprep.mubr.bf16.mxu0 %v4689
    %4951 = vmatmul.mubr.bf16.gmra.mxu0 %v4687
    %v4952 = vpop.f32.mrf.mxu0
    %v4953 = vadd.f32 0.0, %v4952
    %v4954 = vpop.f32.mrf.mxu0
    %v4955 = vadd.f32 0.0, %v4954
    %v4956 = vpop.f32.mrf.mxu0
    %v4957 = vadd.f32 0.0, %v4956
    %v4958 = vpop.f32.mrf.mxu0
    %v4959 = vadd.f32 0.0, %v4958
    %4960 = vmatprep.mubr.bf16.mxu0 %v4693
    %4961 = vmatmul.mubr.bf16.gmra.mxu0 %v4691
    %v4962 = vpop.f32.mrf.mxu0
    %v4963 = vadd.f32 0.0, %v4962
    %v4964 = vpop.f32.mrf.mxu0
    %v4965 = vadd.f32 0.0, %v4964
    %v4966 = vpop.f32.mrf.mxu0
    %v4967 = vadd.f32 0.0, %v4966
    %v4968 = vpop.f32.mrf.mxu0
    %v4969 = vadd.f32 0.0, %v4968
    %4970 = vmatprep.mubr.bf16.mxu0 %v4697
    %4971 = vmatmul.mubr.bf16.gmra.mxu0 %v4695
    %v4972 = vpop.f32.mrf.mxu0
    %v4973 = vadd.f32 0.0, %v4972
    %v4974 = vpop.f32.mrf.mxu0
    %v4975 = vadd.f32 0.0, %v4974
    %v4976 = vpop.f32.mrf.mxu0
    %v4977 = vadd.f32 0.0, %v4976
    %v4978 = vpop.f32.mrf.mxu0
    %v4979 = vadd.f32 0.0, %v4978
    %4980 = vmatprep.mubr.bf16.mxu0 %v4701
    %4981 = vmatmul.mubr.bf16.gmra.mxu0 %v4699
    %v4982 = vpop.f32.mrf.mxu0
    %v4983 = vadd.f32 0.0, %v4982
    %v4984 = vpop.f32.mrf.mxu0
    %v4985 = vadd.f32 0.0, %v4984
    %v4986 = vpop.f32.mrf.mxu0
    %v4987 = vadd.f32 0.0, %v4986
    %v4988 = vpop.f32.mrf.mxu0
    %v4989 = vadd.f32 0.0, %v4988
    %4990 = vdwg.mxu0
    %v4991 = vadd.f32 %v4530, %v4913
    %v4992 = vadd.f32 %v4532, %v4915
    %v4993 = vadd.f32 %v4534, %v4917
    %v4994 = vadd.f32 %v4536, %v4919
    %v4995 = vadd.f32 %v4540, %v4923
    %v4996 = vadd.f32 %v4542, %v4925
    %v4997 = vadd.f32 %v4544, %v4927
    %v4998 = vadd.f32 %v4546, %v4929
    %v4999 = vadd.f32 %v4550, %v4933
    %v5000 = vadd.f32 %v4552, %v4935
    %v5001 = vadd.f32 %v4554, %v4937
    %v5002 = vadd.f32 %v4556, %v4939
    %v5003 = vadd.f32 %v4560, %v4943
    %v5004 = vadd.f32 %v4562, %v4945
    %v5005 = vadd.f32 %v4564, %v4947
    %v5006 = vadd.f32 %v4566, %v4949
    %v5007 = vadd.f32 %v4570, %v4953
    %v5008 = vadd.f32 %v4572, %v4955
    %v5009 = vadd.f32 %v4574, %v4957
    %v5010 = vadd.f32 %v4576, %v4959
    %v5011 = vadd.f32 %v4580, %v4963
    %v5012 = vadd.f32 %v4582, %v4965
    %v5013 = vadd.f32 %v4584, %v4967
    %v5014 = vadd.f32 %v4586, %v4969
    %v5015 = vadd.f32 %v4590, %v4973
    %v5016 = vadd.f32 %v4592, %v4975
    %v5017 = vadd.f32 %v4594, %v4977
    %v5018 = vadd.f32 %v4596, %v4979
    %v5019 = vadd.f32 %v4600, %v4983
    %v5020 = vadd.f32 %v4602, %v4985
    %v5021 = vadd.f32 %v4604, %v4987
    %v5022 = vadd.f32 %v4606, %v4989
    %v5023 = vld [vmem:[#allocation2] sm:$0xf8]
    %v5024 = vld [vmem:[#allocation2 + $0x8] sm:$0xf8]
    %v5025 = vld [vmem:[#allocation2 + $0x100] sm:$0x7]
    %v5026 = vld [vmem:[#allocation2 + $0x108] sm:$0x7]
    %v5027 = vpack.c.bf16 %v3826, %v5023
    %v5028 = vpack.c.bf16 %v3827, %v5024
    %v5029 = vpack.c.bf16 %v5025, %v5025
    %v5030 = vpack.c.bf16 %v5026, %v5026
    %s5031 = scalar_lea.vmem [#allocation8], 768
    %v5032 = vld [vmem:[%s5031] sm:$0xff]
    %v5033 = vld [vmem:[%s5031 + $0x8] sm:$0xff]
    %v5034 = vld [vmem:[%s5031 + $0x10] sm:$0xff]
    %v5035 = vld [vmem:[%s5031 + $0x18] sm:$0xff]
    %v5036 = vld [vmem:[%s5031 + $0x20] sm:$0xff]
    %v5037 = vld [vmem:[%s5031 + $0x28] sm:$0xff]
    %v5038 = vld [vmem:[%s5031 + $0x30] sm:$0xff]
    %v5039 = vld [vmem:[%s5031 + $0x38] sm:$0xff]
    %v5040 = vld [vmem:[%s5031 + $0x40] sm:$0xff]
    %v5041 = vld [vmem:[%s5031 + $0x48] sm:$0xff]
    %v5042 = vld [vmem:[%s5031 + $0x50] sm:$0xff]
    %v5043 = vld [vmem:[%s5031 + $0x58] sm:$0xff]
    %v5044 = vld [vmem:[%s5031 + $0x60] sm:$0xff]
    %v5045 = vld [vmem:[%s5031 + $0x68] sm:$0xff]
    %v5046 = vld [vmem:[%s5031 + $0x70] sm:$0xff]
    %v5047 = vld [vmem:[%s5031 + $0x78] sm:$0xff]
    %v5048 = vld [vmem:[%s5031 + $0x80] sm:$0xff]
    %v5049 = vld [vmem:[%s5031 + $0x88] sm:$0xff]
    %v5050 = vld [vmem:[%s5031 + $0x90] sm:$0xff]
    %v5051 = vld [vmem:[%s5031 + $0x98] sm:$0xff]
    %v5052 = vld [vmem:[%s5031 + $0xa0] sm:$0xff]
    %v5053 = vld [vmem:[%s5031 + $0xa8] sm:$0xff]
    %v5054 = vld [vmem:[%s5031 + $0xb0] sm:$0xff]
    %v5055 = vld [vmem:[%s5031 + $0xb8] sm:$0xff]
    %v5056 = vld [vmem:[%s5031 + $0xc0] sm:$0xff]
    %v5057 = vld [vmem:[%s5031 + $0xc8] sm:$0xff]
    %v5058 = vld [vmem:[%s5031 + $0xd0] sm:$0xff]
    %v5059 = vld [vmem:[%s5031 + $0xd8] sm:$0xff]
    %v5060 = vld [vmem:[%s5031 + $0xe0] sm:$0xff]
    %v5061 = vld [vmem:[%s5031 + $0xe8] sm:$0xff]
    %v5062 = vld [vmem:[%s5031 + $0xf0] sm:$0xff]
    %v5063 = vld [vmem:[%s5031 + $0xf8] sm:$0xff]
    %vm5064 = vsmask.f32 6400
    %v5066 = vshrl.u32 %v5027, 16
    %v5068 = vrot.slane %v5066, 1
    %v5069 = vshll.u32 %v5027, 16
    %v5071 = vrot.slane %v5069, 2
    %v5072 = vor.u32 %v5068, %v5071
    %v5073 = vrot.slane %v3934, 1
    %v5074 = vrot.slane %v3918, 2
    %v5075 = vor.u32 %v5073, %v5074
    %v5076 = vsel %vm5064, %v5072, %v5075
    %v5078 = vshrl.u32 %v5028, 16
    %v5080 = vrot.slane %v5078, 1
    %v5081 = vshll.u32 %v5028, 16
    %v5083 = vrot.slane %v5081, 2
    %v5084 = vor.u32 %v5080, %v5083
    %v5085 = vrot.slane %v3942, 1
    %v5086 = vrot.slane %v3930, 2
    %v5087 = vor.u32 %v5085, %v5086
    %v5088 = vsel %vm5064, %v5084, %v5087
    %v5089 = vrot.slane %v3950, 1
    %v5090 = vrot.slane %v3938, 2
    %v5091 = vor.u32 %v5089, %v5090
    %v5092 = vsel %vm5064, %v5075, %v5091
    %v5093 = vrot.slane %v3958, 1
    %v5094 = vrot.slane %v3946, 2
    %v5095 = vor.u32 %v5093, %v5094
    %v5096 = vsel %vm5064, %v5087, %v5095
    %v5097 = vrot.slane %v3966, 1
    %v5098 = vrot.slane %v3954, 2
    %v5099 = vor.u32 %v5097, %v5098
    %v5100 = vsel %vm5064, %v5091, %v5099
    %v5101 = vrot.slane %v3974, 1
    %v5102 = vrot.slane %v3962, 2
    %v5103 = vor.u32 %v5101, %v5102
    %v5104 = vsel %vm5064, %v5095, %v5103
    %v5105 = vrot.slane %v3982, 1
    %v5106 = vrot.slane %v3970, 2
    %v5107 = vor.u32 %v5105, %v5106
    %v5108 = vsel %vm5064, %v5099, %v5107
    %v5109 = vrot.slane %v3990, 1
    %v5110 = vrot.slane %v3978, 2
    %v5111 = vor.u32 %v5109, %v5110
    %v5112 = vsel %vm5064, %v5103, %v5111
    %v5113 = vrot.slane %v3998, 1
    %v5114 = vrot.slane %v3986, 2
    %v5115 = vor.u32 %v5113, %v5114
    %v5116 = vsel %vm5064, %v5107, %v5115
    %v5117 = vrot.slane %v4006, 1
    %v5118 = vrot.slane %v3994, 2
    %v5119 = vor.u32 %v5117, %v5118
    %v5120 = vsel %vm5064, %v5111, %v5119
    %v5121 = vrot.slane %v4014, 1
    %v5122 = vrot.slane %v4002, 2
    %v5123 = vor.u32 %v5121, %v5122
    %v5124 = vsel %vm5064, %v5115, %v5123
    %v5125 = vrot.slane %v4022, 1
    %v5126 = vrot.slane %v4010, 2
    %v5127 = vor.u32 %v5125, %v5126
    %v5128 = vsel %vm5064, %v5119, %v5127
    %v5129 = vrot.slane %v4030, 1
    %v5130 = vrot.slane %v4018, 2
    %v5131 = vor.u32 %v5129, %v5130
    %v5132 = vsel %vm5064, %v5123, %v5131
    %v5133 = vrot.slane %v4038, 1
    %v5134 = vrot.slane %v4026, 2
    %v5135 = vor.u32 %v5133, %v5134
    %v5136 = vsel %vm5064, %v5127, %v5135
    %v5138 = vshrl.u32 %v5029, 16
    %v5140 = vrot.slane %v5138, 1
    %v5141 = vshll.u32 %v5029, 16
    %v5143 = vrot.slane %v5141, 2
    %v5144 = vor.u32 %v5140, %v5143
    %v5145 = vsel %vm5064, %v5131, %v5144
    %v5147 = vshrl.u32 %v5030, 16
    %v5149 = vrot.slane %v5147, 1
    %v5150 = vshll.u32 %v5030, 16
    %v5152 = vrot.slane %v5150, 2
    %v5153 = vor.u32 %v5149, %v5152
    %v5154 = vsel %vm5064, %v5135, %v5153
    %v5203 = vunpack.c.l.b16 %v5032
    %v5204 = vunpack.c.h.b16 %v5032
    %v5205 = vunpack.c.l.b16 %v5033
    %v5206 = vunpack.c.h.b16 %v5033
    %v5207 = vunpack.c.l.b16 %v5034
    %v5208 = vunpack.c.h.b16 %v5034
    %v5209 = vunpack.c.l.b16 %v5035
    %v5210 = vunpack.c.h.b16 %v5035
    %v5211 = vunpack.c.l.b16 %v5036
    %v5212 = vunpack.c.h.b16 %v5036
    %v5213 = vunpack.c.l.b16 %v5037
    %v5214 = vunpack.c.h.b16 %v5037
    %v5215 = vunpack.c.l.b16 %v5038
    %v5216 = vunpack.c.h.b16 %v5038
    %v5217 = vunpack.c.l.b16 %v5039
    %v5218 = vunpack.c.h.b16 %v5039
    %v5219 = vunpack.c.l.b16 %v5040
    %v5220 = vunpack.c.h.b16 %v5040
    %v5221 = vunpack.c.l.b16 %v5041
    %v5222 = vunpack.c.h.b16 %v5041
    %v5223 = vunpack.c.l.b16 %v5042
    %v5224 = vunpack.c.h.b16 %v5042
    %v5225 = vunpack.c.l.b16 %v5043
    %v5226 = vunpack.c.h.b16 %v5043
    %v5227 = vunpack.c.l.b16 %v5044
    %v5228 = vunpack.c.h.b16 %v5044
    %v5229 = vunpack.c.l.b16 %v5045
    %v5230 = vunpack.c.h.b16 %v5045
    %v5231 = vunpack.c.l.b16 %v5046
    %v5232 = vunpack.c.h.b16 %v5046
    %v5233 = vunpack.c.l.b16 %v5047
    %v5234 = vunpack.c.h.b16 %v5047
    %v5235 = vunpack.c.l.b16 %v5048
    %v5236 = vunpack.c.h.b16 %v5048
    %v5237 = vunpack.c.l.b16 %v5049
    %v5238 = vunpack.c.h.b16 %v5049
    %v5239 = vunpack.c.l.b16 %v5050
    %v5240 = vunpack.c.h.b16 %v5050
    %v5241 = vunpack.c.l.b16 %v5051
    %v5242 = vunpack.c.h.b16 %v5051
    %v5243 = vunpack.c.l.b16 %v5052
    %v5244 = vunpack.c.h.b16 %v5052
    %v5245 = vunpack.c.l.b16 %v5053
    %v5246 = vunpack.c.h.b16 %v5053
    %v5247 = vunpack.c.l.b16 %v5054
    %v5248 = vunpack.c.h.b16 %v5054
    %v5249 = vunpack.c.l.b16 %v5055
    %v5250 = vunpack.c.h.b16 %v5055
    %v5251 = vunpack.c.l.b16 %v5056
    %v5252 = vunpack.c.h.b16 %v5056
    %v5253 = vunpack.c.l.b16 %v5057
    %v5254 = vunpack.c.h.b16 %v5057
    %v5255 = vunpack.c.l.b16 %v5058
    %v5256 = vunpack.c.h.b16 %v5058
    %v5257 = vunpack.c.l.b16 %v5059
    %v5258 = vunpack.c.h.b16 %v5059
    %v5259 = vunpack.c.l.b16 %v5060
    %v5260 = vunpack.c.h.b16 %v5060
    %v5261 = vunpack.c.l.b16 %v5061
    %v5262 = vunpack.c.h.b16 %v5061
    %v5263 = vunpack.c.l.b16 %v5062
    %v5264 = vunpack.c.h.b16 %v5062
    %v5265 = vunpack.c.l.b16 %v5063
    %v5266 = vunpack.c.h.b16 %v5063
    %v5267 = vpack.c.b16 %v5205, %v5203
    %v5268 = vpack.c.b16 %v5206, %v5204
    %v5269 = vpack.c.b16 %v5209, %v5207
    %v5270 = vpack.c.b16 %v5210, %v5208
    %v5271 = vpack.c.b16 %v5213, %v5211
    %v5272 = vpack.c.b16 %v5214, %v5212
    %v5273 = vpack.c.b16 %v5217, %v5215
    %v5274 = vpack.c.b16 %v5218, %v5216
    %v5275 = vpack.c.b16 %v5221, %v5219
    %v5276 = vpack.c.b16 %v5222, %v5220
    %v5277 = vpack.c.b16 %v5225, %v5223
    %v5278 = vpack.c.b16 %v5226, %v5224
    %v5279 = vpack.c.b16 %v5229, %v5227
    %v5280 = vpack.c.b16 %v5230, %v5228
    %v5281 = vpack.c.b16 %v5233, %v5231
    %v5282 = vpack.c.b16 %v5234, %v5232
    %v5283 = vpack.c.b16 %v5237, %v5235
    %v5284 = vpack.c.b16 %v5238, %v5236
    %v5285 = vpack.c.b16 %v5241, %v5239
    %v5286 = vpack.c.b16 %v5242, %v5240
    %v5287 = vpack.c.b16 %v5245, %v5243
    %v5288 = vpack.c.b16 %v5246, %v5244
    %v5289 = vpack.c.b16 %v5249, %v5247
    %v5290 = vpack.c.b16 %v5250, %v5248
    %v5291 = vpack.c.b16 %v5253, %v5251
    %v5292 = vpack.c.b16 %v5254, %v5252
    %v5293 = vpack.c.b16 %v5257, %v5255
    %v5294 = vpack.c.b16 %v5258, %v5256
    %v5295 = vpack.c.b16 %v5261, %v5259
    %v5296 = vpack.c.b16 %v5262, %v5260
    %v5297 = vpack.c.b16 %v5265, %v5263
    %v5298 = vpack.c.b16 %v5266, %v5264
    %5331 = vmatprep.subr.bf16.mxu0 %v5282
    %5332 = vmatpush1.bf16.msra.mxu0 %v5281
    %5333 = vmatprep.subr.bf16.mxu0 %v5280
    %5334 = vmatpush1.bf16.msra.mxu0 %v5279
    %5335 = vmatprep.subr.bf16.mxu0 %v5278
    %5336 = vmatpush1.bf16.msra.mxu0 %v5277
    %5337 = vmatprep.subr.bf16.mxu0 %v5276
    %5338 = vmatpush1.bf16.msra.mxu0 %v5275
    %5339 = vmatprep.subr.bf16.mxu0 %v5274
    %5340 = vmatpush1.bf16.msra.mxu0 %v5273
    %5341 = vmatprep.subr.bf16.mxu0 %v5272
    %5342 = vmatpush1.bf16.msra.mxu0 %v5271
    %5343 = vmatprep.subr.bf16.mxu0 %v5270
    %5344 = vmatpush1.bf16.msra.mxu0 %v5269
    %5345 = vmatprep.subr.bf16.mxu0 %v5268
    %5346 = vmatpush1.bf16.msra.mxu0 %v5267
    %5347 = vmatprep.subr.bf16.mxu0 %v5298
    %5348 = vmatpush2.bf16.msra.mxu0 %v5297
    %5349 = vmatprep.subr.bf16.mxu0 %v5296
    %5350 = vmatpush2.bf16.msra.mxu0 %v5295
    %5351 = vmatprep.subr.bf16.mxu0 %v5294
    %5352 = vmatpush2.bf16.msra.mxu0 %v5293
    %5353 = vmatprep.subr.bf16.mxu0 %v5292
    %5354 = vmatpush2.bf16.msra.mxu0 %v5291
    %5355 = vmatprep.subr.bf16.mxu0 %v5290
    %5356 = vmatpush2.bf16.msra.mxu0 %v5289
    %5357 = vmatprep.subr.bf16.mxu0 %v5288
    %5358 = vmatpush2.bf16.msra.mxu0 %v5287
    %5359 = vmatprep.subr.bf16.mxu0 %v5286
    %5360 = vmatpush2.bf16.msra.mxu0 %v5285
    %5361 = vmatprep.subr.bf16.mxu0 %v5284
    %5362 = vmatpush2.bf16.msra.mxu0 %v5283
    %5363 = vmatprep.mubr.bf16.mxu0 %v5088
    %5364 = vmatmul.mubr.bf16.gmra.mxu0 %v5076
    %v5365 = vpop.f32.mrf.mxu0
    %v5366 = vadd.f32 0.0, %v5365
    %v5367 = vpop.f32.mrf.mxu0
    %v5368 = vadd.f32 0.0, %v5367
    %v5369 = vpop.f32.mrf.mxu0
    %v5370 = vadd.f32 0.0, %v5369
    %v5371 = vpop.f32.mrf.mxu0
    %v5372 = vadd.f32 0.0, %v5371
    %5373 = vmatprep.mubr.bf16.mxu0 %v5096
    %5374 = vmatmul.mubr.bf16.gmra.mxu0 %v5092
    %v5375 = vpop.f32.mrf.mxu0
    %v5376 = vadd.f32 0.0, %v5375
    %v5377 = vpop.f32.mrf.mxu0
    %v5378 = vadd.f32 0.0, %v5377
    %v5379 = vpop.f32.mrf.mxu0
    %v5380 = vadd.f32 0.0, %v5379
    %v5381 = vpop.f32.mrf.mxu0
    %v5382 = vadd.f32 0.0, %v5381
    %5383 = vmatprep.mubr.bf16.mxu0 %v5104
    %5384 = vmatmul.mubr.bf16.gmra.mxu0 %v5100
    %v5385 = vpop.f32.mrf.mxu0
    %v5386 = vadd.f32 0.0, %v5385
    %v5387 = vpop.f32.mrf.mxu0
    %v5388 = vadd.f32 0.0, %v5387
    %v5389 = vpop.f32.mrf.mxu0
    %v5390 = vadd.f32 0.0, %v5389
    %v5391 = vpop.f32.mrf.mxu0
    %v5392 = vadd.f32 0.0, %v5391
    %5393 = vmatprep.mubr.bf16.mxu0 %v5112
    %5394 = vmatmul.mubr.bf16.gmra.mxu0 %v5108
    %v5395 = vpop.f32.mrf.mxu0
    %v5396 = vadd.f32 0.0, %v5395
    %v5397 = vpop.f32.mrf.mxu0
    %v5398 = vadd.f32 0.0, %v5397
    %v5399 = vpop.f32.mrf.mxu0
    %v5400 = vadd.f32 0.0, %v5399
    %v5401 = vpop.f32.mrf.mxu0
    %v5402 = vadd.f32 0.0, %v5401
    %5403 = vmatprep.mubr.bf16.mxu0 %v5120
    %5404 = vmatmul.mubr.bf16.gmra.mxu0 %v5116
    %v5405 = vpop.f32.mrf.mxu0
    %v5406 = vadd.f32 0.0, %v5405
    %v5407 = vpop.f32.mrf.mxu0
    %v5408 = vadd.f32 0.0, %v5407
    %v5409 = vpop.f32.mrf.mxu0
    %v5410 = vadd.f32 0.0, %v5409
    %v5411 = vpop.f32.mrf.mxu0
    %v5412 = vadd.f32 0.0, %v5411
    %5413 = vmatprep.mubr.bf16.mxu0 %v5128
    %5414 = vmatmul.mubr.bf16.gmra.mxu0 %v5124
    %v5415 = vpop.f32.mrf.mxu0
    %v5416 = vadd.f32 0.0, %v5415
    %v5417 = vpop.f32.mrf.mxu0
    %v5418 = vadd.f32 0.0, %v5417
    %v5419 = vpop.f32.mrf.mxu0
    %v5420 = vadd.f32 0.0, %v5419
    %v5421 = vpop.f32.mrf.mxu0
    %v5422 = vadd.f32 0.0, %v5421
    %5423 = vmatprep.mubr.bf16.mxu0 %v5136
    %5424 = vmatmul.mubr.bf16.gmra.mxu0 %v5132
    %v5425 = vpop.f32.mrf.mxu0
    %v5426 = vadd.f32 0.0, %v5425
    %v5427 = vpop.f32.mrf.mxu0
    %v5428 = vadd.f32 0.0, %v5427
    %v5429 = vpop.f32.mrf.mxu0
    %v5430 = vadd.f32 0.0, %v5429
    %v5431 = vpop.f32.mrf.mxu0
    %v5432 = vadd.f32 0.0, %v5431
    %5433 = vmatprep.mubr.bf16.mxu0 %v5154
    %5434 = vmatmul.mubr.bf16.gmra.mxu0 %v5145
    %v5435 = vpop.f32.mrf.mxu0
    %v5436 = vadd.f32 0.0, %v5435
    %v5437 = vpop.f32.mrf.mxu0
    %v5438 = vadd.f32 0.0, %v5437
    %v5439 = vpop.f32.mrf.mxu0
    %v5440 = vadd.f32 0.0, %v5439
    %v5441 = vpop.f32.mrf.mxu0
    %v5442 = vadd.f32 0.0, %v5441
    %5443 = vdwg.mxu0
    %v5444 = vadd.f32 %v4991, %v5366
    %v5445 = vadd.f32 %v4992, %v5368
    %v5446 = vadd.f32 %v4993, %v5370
    %v5447 = vadd.f32 %v4994, %v5372
    %v5448 = vadd.f32 %v4995, %v5376
    %v5449 = vadd.f32 %v4996, %v5378
    %v5450 = vadd.f32 %v4997, %v5380
    %v5451 = vadd.f32 %v4998, %v5382
    %v5452 = vadd.f32 %v4999, %v5386
    %v5453 = vadd.f32 %v5000, %v5388
    %v5454 = vadd.f32 %v5001, %v5390
    %v5455 = vadd.f32 %v5002, %v5392
    %v5456 = vadd.f32 %v5003, %v5396
    %v5457 = vadd.f32 %v5004, %v5398
    %v5458 = vadd.f32 %v5005, %v5400
    %v5459 = vadd.f32 %v5006, %v5402
    %v5460 = vadd.f32 %v5007, %v5406
    %v5461 = vadd.f32 %v5008, %v5408
    %v5462 = vadd.f32 %v5009, %v5410
    %v5463 = vadd.f32 %v5010, %v5412
    %v5464 = vadd.f32 %v5011, %v5416
    %v5465 = vadd.f32 %v5012, %v5418
    %v5466 = vadd.f32 %v5013, %v5420
    %v5467 = vadd.f32 %v5014, %v5422
    %v5468 = vadd.f32 %v5015, %v5426
    %v5469 = vadd.f32 %v5016, %v5428
    %v5470 = vadd.f32 %v5017, %v5430
    %v5471 = vadd.f32 %v5018, %v5432
    %v5472 = vadd.f32 %v5019, %v5436
    %v5473 = vadd.f32 %v5020, %v5438
    %v5474 = vadd.f32 %v5021, %v5440
    %v5475 = vadd.f32 %v5022, %v5442
    %v5476 = vld [vmem:[#allocation2] sm:$0xf0]
    %v5477 = vld [vmem:[#allocation2 + $0x8] sm:$0xf0]
    %v5478 = vld [vmem:[#allocation2 + $0x100] sm:$0xf]
    %v5479 = vld [vmem:[#allocation2 + $0x108] sm:$0xf]
    %v5480 = vpack.c.bf16 %v3826, %v5476
    %v5481 = vpack.c.bf16 %v3827, %v5477
    %v5482 = vpack.c.bf16 %v5478, %v5478
    %v5483 = vpack.c.bf16 %v5479, %v5479
    %s5484 = scalar_lea.vmem [#allocation8], 1024
    %v5485 = vld [vmem:[%s5484] sm:$0xff]
    %v5486 = vld [vmem:[%s5484 + $0x8] sm:$0xff]
    %v5487 = vld [vmem:[%s5484 + $0x10] sm:$0xff]
    %v5488 = vld [vmem:[%s5484 + $0x18] sm:$0xff]
    %v5489 = vld [vmem:[%s5484 + $0x20] sm:$0xff]
    %v5490 = vld [vmem:[%s5484 + $0x28] sm:$0xff]
    %v5491 = vld [vmem:[%s5484 + $0x30] sm:$0xff]
    %v5492 = vld [vmem:[%s5484 + $0x38] sm:$0xff]
    %v5493 = vld [vmem:[%s5484 + $0x40] sm:$0xff]
    %v5494 = vld [vmem:[%s5484 + $0x48] sm:$0xff]
    %v5495 = vld [vmem:[%s5484 + $0x50] sm:$0xff]
    %v5496 = vld [vmem:[%s5484 + $0x58] sm:$0xff]
    %v5497 = vld [vmem:[%s5484 + $0x60] sm:$0xff]
    %v5498 = vld [vmem:[%s5484 + $0x68] sm:$0xff]
    %v5499 = vld [vmem:[%s5484 + $0x70] sm:$0xff]
    %v5500 = vld [vmem:[%s5484 + $0x78] sm:$0xff]
    %v5501 = vld [vmem:[%s5484 + $0x80] sm:$0xff]
    %v5502 = vld [vmem:[%s5484 + $0x88] sm:$0xff]
    %v5503 = vld [vmem:[%s5484 + $0x90] sm:$0xff]
    %v5504 = vld [vmem:[%s5484 + $0x98] sm:$0xff]
    %v5505 = vld [vmem:[%s5484 + $0xa0] sm:$0xff]
    %v5506 = vld [vmem:[%s5484 + $0xa8] sm:$0xff]
    %v5507 = vld [vmem:[%s5484 + $0xb0] sm:$0xff]
    %v5508 = vld [vmem:[%s5484 + $0xb8] sm:$0xff]
    %v5509 = vld [vmem:[%s5484 + $0xc0] sm:$0xff]
    %v5510 = vld [vmem:[%s5484 + $0xc8] sm:$0xff]
    %v5511 = vld [vmem:[%s5484 + $0xd0] sm:$0xff]
    %v5512 = vld [vmem:[%s5484 + $0xd8] sm:$0xff]
    %v5513 = vld [vmem:[%s5484 + $0xe0] sm:$0xff]
    %v5514 = vld [vmem:[%s5484 + $0xe8] sm:$0xff]
    %v5515 = vld [vmem:[%s5484 + $0xf0] sm:$0xff]
    %v5516 = vld [vmem:[%s5484 + $0xf8] sm:$0xff]
    %vm5521 = vcmask 1045504
    %v5522 = vrot.slane %v5480, 2
    %v5523 = vrot.slane %v3860, 2
    %v5524 = vsel %vm5521, %v5522, %v5523
    %v5525 = vrot.slane %v5481, 2
    %v5526 = vrot.slane %v3861, 2
    %v5527 = vsel %vm5521, %v5525, %v5526
    %v5528 = vrot.slane %v3862, 2
    %v5529 = vsel %vm5521, %v5523, %v5528
    %v5530 = vrot.slane %v3863, 2
    %v5531 = vsel %vm5521, %v5526, %v5530
    %v5532 = vrot.slane %v3864, 2
    %v5533 = vsel %vm5521, %v5528, %v5532
    %v5534 = vrot.slane %v3865, 2
    %v5535 = vsel %vm5521, %v5530, %v5534
    %v5536 = vrot.slane %v3866, 2
    %v5537 = vsel %vm5521, %v5532, %v5536
    %v5538 = vrot.slane %v3867, 2
    %v5539 = vsel %vm5521, %v5534, %v5538
    %v5540 = vrot.slane %v3868, 2
    %v5541 = vsel %vm5521, %v5536, %v5540
    %v5542 = vrot.slane %v3869, 2
    %v5543 = vsel %vm5521, %v5538, %v5542
    %v5544 = vrot.slane %v3870, 2
    %v5545 = vsel %vm5521, %v5540, %v5544
    %v5546 = vrot.slane %v3871, 2
    %v5547 = vsel %vm5521, %v5542, %v5546
    %v5548 = vrot.slane %v3872, 2
    %v5549 = vsel %vm5521, %v5544, %v5548
    %v5550 = vrot.slane %v3873, 2
    %v5551 = vsel %vm5521, %v5546, %v5550
    %v5552 = vrot.slane %v5482, 2
    %v5553 = vsel %vm5521, %v5548, %v5552
    %v5554 = vrot.slane %v5483, 2
    %v5555 = vsel %vm5521, %v5550, %v5554
    %v5604 = vunpack.c.l.b16 %v5485
    %v5605 = vunpack.c.h.b16 %v5485
    %v5606 = vunpack.c.l.b16 %v5486
    %v5607 = vunpack.c.h.b16 %v5486
    %v5608 = vunpack.c.l.b16 %v5487
    %v5609 = vunpack.c.h.b16 %v5487
    %v5610 = vunpack.c.l.b16 %v5488
    %v5611 = vunpack.c.h.b16 %v5488
    %v5612 = vunpack.c.l.b16 %v5489
    %v5613 = vunpack.c.h.b16 %v5489
    %v5614 = vunpack.c.l.b16 %v5490
    %v5615 = vunpack.c.h.b16 %v5490
    %v5616 = vunpack.c.l.b16 %v5491
    %v5617 = vunpack.c.h.b16 %v5491
    %v5618 = vunpack.c.l.b16 %v5492
    %v5619 = vunpack.c.h.b16 %v5492
    %v5620 = vunpack.c.l.b16 %v5493
    %v5621 = vunpack.c.h.b16 %v5493
    %v5622 = vunpack.c.l.b16 %v5494
    %v5623 = vunpack.c.h.b16 %v5494
    %v5624 = vunpack.c.l.b16 %v5495
    %v5625 = vunpack.c.h.b16 %v5495
    %v5626 = vunpack.c.l.b16 %v5496
    %v5627 = vunpack.c.h.b16 %v5496
    %v5628 = vunpack.c.l.b16 %v5497
    %v5629 = vunpack.c.h.b16 %v5497
    %v5630 = vunpack.c.l.b16 %v5498
    %v5631 = vunpack.c.h.b16 %v5498
    %v5632 = vunpack.c.l.b16 %v5499
    %v5633 = vunpack.c.h.b16 %v5499
    %v5634 = vunpack.c.l.b16 %v5500
    %v5635 = vunpack.c.h.b16 %v5500
    %v5636 = vunpack.c.l.b16 %v5501
    %v5637 = vunpack.c.h.b16 %v5501
    %v5638 = vunpack.c.l.b16 %v5502
    %v5639 = vunpack.c.h.b16 %v5502
    %v5640 = vunpack.c.l.b16 %v5503
    %v5641 = vunpack.c.h.b16 %v5503
    %v5642 = vunpack.c.l.b16 %v5504
    %v5643 = vunpack.c.h.b16 %v5504
    %v5644 = vunpack.c.l.b16 %v5505
    %v5645 = vunpack.c.h.b16 %v5505
    %v5646 = vunpack.c.l.b16 %v5506
    %v5647 = vunpack.c.h.b16 %v5506
    %v5648 = vunpack.c.l.b16 %v5507
    %v5649 = vunpack.c.h.b16 %v5507
    %v5650 = vunpack.c.l.b16 %v5508
    %v5651 = vunpack.c.h.b16 %v5508
    %v5652 = vunpack.c.l.b16 %v5509
    %v5653 = vunpack.c.h.b16 %v5509
    %v5654 = vunpack.c.l.b16 %v5510
    %v5655 = vunpack.c.h.b16 %v5510
    %v5656 = vunpack.c.l.b16 %v5511
    %v5657 = vunpack.c.h.b16 %v5511
    %v5658 = vunpack.c.l.b16 %v5512
    %v5659 = vunpack.c.h.b16 %v5512
    %v5660 = vunpack.c.l.b16 %v5513
    %v5661 = vunpack.c.h.b16 %v5513
    %v5662 = vunpack.c.l.b16 %v5514
    %v5663 = vunpack.c.h.b16 %v5514
    %v5664 = vunpack.c.l.b16 %v5515
    %v5665 = vunpack.c.h.b16 %v5515
    %v5666 = vunpack.c.l.b16 %v5516
    %v5667 = vunpack.c.h.b16 %v5516
    %v5668 = vpack.c.b16 %v5606, %v5604
    %v5669 = vpack.c.b16 %v5607, %v5605
    %v5670 = vpack.c.b16 %v5610, %v5608
    %v5671 = vpack.c.b16 %v5611, %v5609
    %v5672 = vpack.c.b16 %v5614, %v5612
    %v5673 = vpack.c.b16 %v5615, %v5613
    %v5674 = vpack.c.b16 %v5618, %v5616
    %v5675 = vpack.c.b16 %v5619, %v5617
    %v5676 = vpack.c.b16 %v5622, %v5620
    %v5677 = vpack.c.b16 %v5623, %v5621
    %v5678 = vpack.c.b16 %v5626, %v5624
    %v5679 = vpack.c.b16 %v5627, %v5625
    %v5680 = vpack.c.b16 %v5630, %v5628
    %v5681 = vpack.c.b16 %v5631, %v5629
    %v5682 = vpack.c.b16 %v5634, %v5632
    %v5683 = vpack.c.b16 %v5635, %v5633
    %v5684 = vpack.c.b16 %v5638, %v5636
    %v5685 = vpack.c.b16 %v5639, %v5637
    %v5686 = vpack.c.b16 %v5642, %v5640
    %v5687 = vpack.c.b16 %v5643, %v5641
    %v5688 = vpack.c.b16 %v5646, %v5644
    %v5689 = vpack.c.b16 %v5647, %v5645
    %v5690 = vpack.c.b16 %v5650, %v5648
    %v5691 = vpack.c.b16 %v5651, %v5649
    %v5692 = vpack.c.b16 %v5654, %v5652
    %v5693 = vpack.c.b16 %v5655, %v5653
    %v5694 = vpack.c.b16 %v5658, %v5656
    %v5695 = vpack.c.b16 %v5659, %v5657
    %v5696 = vpack.c.b16 %v5662, %v5660
    %v5697 = vpack.c.b16 %v5663, %v5661
    %v5698 = vpack.c.b16 %v5666, %v5664
    %v5699 = vpack.c.b16 %v5667, %v5665
    %5732 = vmatprep.subr.bf16.mxu0 %v5683
    %5733 = vmatpush1.bf16.msra.mxu0 %v5682
    %5734 = vmatprep.subr.bf16.mxu0 %v5681
    %5735 = vmatpush1.bf16.msra.mxu0 %v5680
    %5736 = vmatprep.subr.bf16.mxu0 %v5679
    %5737 = vmatpush1.bf16.msra.mxu0 %v5678
    %5738 = vmatprep.subr.bf16.mxu0 %v5677
    %5739 = vmatpush1.bf16.msra.mxu0 %v5676
    %5740 = vmatprep.subr.bf16.mxu0 %v5675
    %5741 = vmatpush1.bf16.msra.mxu0 %v5674
    %5742 = vmatprep.subr.bf16.mxu0 %v5673
    %5743 = vmatpush1.bf16.msra.mxu0 %v5672
    %5744 = vmatprep.subr.bf16.mxu0 %v5671
    %5745 = vmatpush1.bf16.msra.mxu0 %v5670
    %5746 = vmatprep.subr.bf16.mxu0 %v5669
    %5747 = vmatpush1.bf16.msra.mxu0 %v5668
    %5748 = vmatprep.subr.bf16.mxu0 %v5699
    %5749 = vmatpush2.bf16.msra.mxu0 %v5698
    %5750 = vmatprep.subr.bf16.mxu0 %v5697
    %5751 = vmatpush2.bf16.msra.mxu0 %v5696
    %5752 = vmatprep.subr.bf16.mxu0 %v5695
    %5753 = vmatpush2.bf16.msra.mxu0 %v5694
    %5754 = vmatprep.subr.bf16.mxu0 %v5693
    %5755 = vmatpush2.bf16.msra.mxu0 %v5692
    %5756 = vmatprep.subr.bf16.mxu0 %v5691
    %5757 = vmatpush2.bf16.msra.mxu0 %v5690
    %5758 = vmatprep.subr.bf16.mxu0 %v5689
    %5759 = vmatpush2.bf16.msra.mxu0 %v5688
    %5760 = vmatprep.subr.bf16.mxu0 %v5687
    %5761 = vmatpush2.bf16.msra.mxu0 %v5686
    %5762 = vmatprep.subr.bf16.mxu0 %v5685
    %5763 = vmatpush2.bf16.msra.mxu0 %v5684
    %5764 = vmatprep.mubr.bf16.mxu0 %v5527
    %5765 = vmatmul.mubr.bf16.gmra.mxu0 %v5524
    %v5766 = vpop.f32.mrf.mxu0
    %v5767 = vadd.f32 0.0, %v5766
    %v5768 = vpop.f32.mrf.mxu0
    %v5769 = vadd.f32 0.0, %v5768
    %v5770 = vpop.f32.mrf.mxu0
    %v5771 = vadd.f32 0.0, %v5770
    %v5772 = vpop.f32.mrf.mxu0
    %v5773 = vadd.f32 0.0, %v5772
    %5774 = vmatprep.mubr.bf16.mxu0 %v5531
    %5775 = vmatmul.mubr.bf16.gmra.mxu0 %v5529
    %v5776 = vpop.f32.mrf.mxu0
    %v5777 = vadd.f32 0.0, %v5776
    %v5778 = vpop.f32.mrf.mxu0
    %v5779 = vadd.f32 0.0, %v5778
    %v5780 = vpop.f32.mrf.mxu0
    %v5781 = vadd.f32 0.0, %v5780
    %v5782 = vpop.f32.mrf.mxu0
    %v5783 = vadd.f32 0.0, %v5782
    %5784 = vmatprep.mubr.bf16.mxu0 %v5535
    %5785 = vmatmul.mubr.bf16.gmra.mxu0 %v5533
    %v5786 = vpop.f32.mrf.mxu0
    %v5787 = vadd.f32 0.0, %v5786
    %v5788 = vpop.f32.mrf.mxu0
    %v5789 = vadd.f32 0.0, %v5788
    %v5790 = vpop.f32.mrf.mxu0
    %v5791 = vadd.f32 0.0, %v5790
    %v5792 = vpop.f32.mrf.mxu0
    %v5793 = vadd.f32 0.0, %v5792
    %5794 = vmatprep.mubr.bf16.mxu0 %v5539
    %5795 = vmatmul.mubr.bf16.gmra.mxu0 %v5537
    %v5796 = vpop.f32.mrf.mxu0
    %v5797 = vadd.f32 0.0, %v5796
    %v5798 = vpop.f32.mrf.mxu0
    %v5799 = vadd.f32 0.0, %v5798
    %v5800 = vpop.f32.mrf.mxu0
    %v5801 = vadd.f32 0.0, %v5800
    %v5802 = vpop.f32.mrf.mxu0
    %v5803 = vadd.f32 0.0, %v5802
    %5804 = vmatprep.mubr.bf16.mxu0 %v5543
    %5805 = vmatmul.mubr.bf16.gmra.mxu0 %v5541
    %v5806 = vpop.f32.mrf.mxu0
    %v5807 = vadd.f32 0.0, %v5806
    %v5808 = vpop.f32.mrf.mxu0
    %v5809 = vadd.f32 0.0, %v5808
    %v5810 = vpop.f32.mrf.mxu0
    %v5811 = vadd.f32 0.0, %v5810
    %v5812 = vpop.f32.mrf.mxu0
    %v5813 = vadd.f32 0.0, %v5812
    %5814 = vmatprep.mubr.bf16.mxu0 %v5547
    %5815 = vmatmul.mubr.bf16.gmra.mxu0 %v5545
    %v5816 = vpop.f32.mrf.mxu0
    %v5817 = vadd.f32 0.0, %v5816
    %v5818 = vpop.f32.mrf.mxu0
    %v5819 = vadd.f32 0.0, %v5818
    %v5820 = vpop.f32.mrf.mxu0
    %v5821 = vadd.f32 0.0, %v5820
    %v5822 = vpop.f32.mrf.mxu0
    %v5823 = vadd.f32 0.0, %v5822
    %5824 = vmatprep.mubr.bf16.mxu0 %v5551
    %5825 = vmatmul.mubr.bf16.gmra.mxu0 %v5549
    %v5826 = vpop.f32.mrf.mxu0
    %v5827 = vadd.f32 0.0, %v5826
    %v5828 = vpop.f32.mrf.mxu0
    %v5829 = vadd.f32 0.0, %v5828
    %v5830 = vpop.f32.mrf.mxu0
    %v5831 = vadd.f32 0.0, %v5830
    %v5832 = vpop.f32.mrf.mxu0
    %v5833 = vadd.f32 0.0, %v5832
    %5834 = vmatprep.mubr.bf16.mxu0 %v5555
    %5835 = vmatmul.mubr.bf16.gmra.mxu0 %v5553
    %v5836 = vpop.f32.mrf.mxu0
    %v5837 = vadd.f32 0.0, %v5836
    %v5838 = vpop.f32.mrf.mxu0
    %v5839 = vadd.f32 0.0, %v5838
    %v5840 = vpop.f32.mrf.mxu0
    %v5841 = vadd.f32 0.0, %v5840
    %v5842 = vpop.f32.mrf.mxu0
    %v5843 = vadd.f32 0.0, %v5842
    %5844 = vdwg.mxu0
    %v5845 = vadd.f32 %v5444, %v5767
    %v5846 = vadd.f32 %v5445, %v5769
    %v5847 = vadd.f32 %v5446, %v5771
    %v5848 = vadd.f32 %v5447, %v5773
    %v5849 = vadd.f32 %v5448, %v5777
    %v5850 = vadd.f32 %v5449, %v5779
    %v5851 = vadd.f32 %v5450, %v5781
    %v5852 = vadd.f32 %v5451, %v5783
    %v5853 = vadd.f32 %v5452, %v5787
    %v5854 = vadd.f32 %v5453, %v5789
    %v5855 = vadd.f32 %v5454, %v5791
    %v5856 = vadd.f32 %v5455, %v5793
    %v5857 = vadd.f32 %v5456, %v5797
    %v5858 = vadd.f32 %v5457, %v5799
    %v5859 = vadd.f32 %v5458, %v5801
    %v5860 = vadd.f32 %v5459, %v5803
    %v5861 = vadd.f32 %v5460, %v5807
    %v5862 = vadd.f32 %v5461, %v5809
    %v5863 = vadd.f32 %v5462, %v5811
    %v5864 = vadd.f32 %v5463, %v5813
    %v5865 = vadd.f32 %v5464, %v5817
    %v5866 = vadd.f32 %v5465, %v5819
    %v5867 = vadd.f32 %v5466, %v5821
    %v5868 = vadd.f32 %v5467, %v5823
    %v5869 = vadd.f32 %v5468, %v5827
    %v5870 = vadd.f32 %v5469, %v5829
    %v5871 = vadd.f32 %v5470, %v5831
    %v5872 = vadd.f32 %v5471, %v5833
    %v5873 = vadd.f32 %v5472, %v5837
    %v5874 = vadd.f32 %v5473, %v5839
    %v5875 = vadd.f32 %v5474, %v5841
    %v5876 = vadd.f32 %v5475, %v5843
    %v5877 = vpack.c.bf16 %v5847, %v5845
    %v5878 = vpack.c.bf16 %v5848, %v5846
    %v5879 = vpack.c.bf16 %v5851, %v5849
    %v5880 = vpack.c.bf16 %v5852, %v5850
    %v5881 = vpack.c.bf16 %v5855, %v5853
    %v5882 = vpack.c.bf16 %v5856, %v5854
    %v5883 = vpack.c.bf16 %v5859, %v5857
    %v5884 = vpack.c.bf16 %v5860, %v5858
    %v5885 = vpack.c.bf16 %v5863, %v5861
    %v5886 = vpack.c.bf16 %v5864, %v5862
    %v5887 = vpack.c.bf16 %v5867, %v5865
    %v5888 = vpack.c.bf16 %v5868, %v5866
    %v5889 = vpack.c.bf16 %v5871, %v5869
    %v5890 = vpack.c.bf16 %v5872, %v5870
    %v5891 = vpack.c.bf16 %v5875, %v5873
    %v5892 = vpack.c.bf16 %v5876, %v5874
    %v5893 = vld [vmem:[#allocation9] sm:$0xf]
    %v5894 = vld [vmem:[#allocation9 + $0x4] sm:$0xf]
    %v5895 = vld [vmem:[#allocation9 + $0x8] sm:$0xf]
    %v5896 = vld [vmem:[#allocation9 + $0xc] sm:$0xf]
    %v5897 = vld [vmem:[#allocation9 + $0x10] sm:$0xf]
    %v5898 = vld [vmem:[#allocation9 + $0x14] sm:$0xf]
    %v5899 = vld [vmem:[#allocation9 + $0x18] sm:$0xf]
    %v5900 = vld [vmem:[#allocation9 + $0x1c] sm:$0xf]
    %v5901 = vld [vmem:[#allocation9 + $0x20] sm:$0xf]
    %v5911 = vunpack.c.l.b16 %v5893
    %v5912 = vunpack.c.l.b16 %v5894
    %v5913 = vunpack.c.l.b16 %v5895
    %v5914 = vunpack.c.l.b16 %v5896
    %v5915 = vunpack.c.l.b16 %v5897
    %v5916 = vunpack.c.l.b16 %v5898
    %v5917 = vunpack.c.l.b16 %v5899
    %v5918 = vunpack.c.l.b16 %v5900
    %v5919 = vunpack.c.l.b16 %v5901
    %v5920 = vpack.c.b16 %v5912, %v5911
    %v5921 = vpack.c.b16 %v5914, %v5913
    %v5922 = vpack.c.b16 %v5916, %v5915
    %v5923 = vpack.c.b16 %v5918, %v5917
    %v5924 = vpack.c.b16 %v5919, %v5919
    %5930 = vmatprep.subr.bf16.mxu0 %v5892
    %5931 = vmatpush1.bf16.msra.mxu0 %v5891
    %5932 = vmatprep.subr.bf16.mxu0 %v5890
    %5933 = vmatpush1.bf16.msra.mxu0 %v5889
    %5934 = vmatprep.subr.bf16.mxu0 %v5888
    %5935 = vmatpush1.bf16.msra.mxu0 %v5887
    %5936 = vmatprep.subr.bf16.mxu0 %v5886
    %5937 = vmatpush1.bf16.msra.mxu0 %v5885
    %5938 = vmatprep.subr.bf16.mxu0 %v5884
    %5939 = vmatpush1.bf16.msra.mxu0 %v5883
    %5940 = vmatprep.subr.bf16.mxu0 %v5882
    %5941 = vmatpush1.bf16.msra.mxu0 %v5881
    %5942 = vmatprep.subr.bf16.mxu0 %v5880
    %5943 = vmatpush1.bf16.msra.mxu0 %v5879
    %5944 = vmatprep.subr.bf16.mxu0 %v5878
    %5945 = vmatpush1.bf16.msra.mxu0 %v5877
    %5946 = vmatprep.subr.bf16.mxu0 0
    %5947 = vmatpush2.bf16.msra.mxu0 0
    %5948 = vmatprep.subr.bf16.mxu0 0
    %5949 = vmatpush2.bf16.msra.mxu0 0
    %5950 = vmatprep.subr.bf16.mxu0 0
    %5951 = vmatpush2.bf16.msra.mxu0 0
    %5952 = vmatprep.subr.bf16.mxu0 0
    %5953 = vmatpush2.bf16.msra.mxu0 0
    %5954 = vmatprep.subr.bf16.mxu0 0
    %5955 = vmatpush2.bf16.msra.mxu0 0
    %5956 = vmatprep.subr.bf16.mxu0 0
    %5957 = vmatpush2.bf16.msra.mxu0 0
    %5958 = vmatprep.subr.bf16.mxu0 0
    %5959 = vmatpush2.bf16.msra.mxu0 0
    %5960 = vmatprep.subr.bf16.mxu0 0
    %5961 = vmatpush2.bf16.msra.mxu0 0
    %5962 = vmatprep.mubr.bf16.mxu0 0
    %5963 = vmatmul.mubr.bf16.gmra.mxu0 %v5920
    %v5964 = vpop.f32.mrf.mxu0
    %v5965 = vadd.f32 0.0, %v5964
    %v5966 = vpop.f32.mrf.mxu0
    %v5967 = vadd.f32 0.0, %v5966
    %v5968 = vpop.f32.mrf.mxu0
    %v5969 = vadd.f32 0.0, %v5968
    %v5970 = vpop.f32.mrf.mxu0
    %v5971 = vadd.f32 0.0, %v5970
    %5972 = vmatprep.mubr.bf16.mxu0 0
    %5973 = vmatmul.mubr.bf16.gmra.mxu0 %v5921
    %v5974 = vpop.f32.mrf.mxu0
    %v5975 = vadd.f32 0.0, %v5974
    %v5976 = vpop.f32.mrf.mxu0
    %v5977 = vadd.f32 0.0, %v5976
    %v5978 = vpop.f32.mrf.mxu0
    %v5979 = vadd.f32 0.0, %v5978
    %v5980 = vpop.f32.mrf.mxu0
    %v5981 = vadd.f32 0.0, %v5980
    %5982 = vmatprep.mubr.bf16.mxu0 0
    %5983 = vmatmul.mubr.bf16.gmra.mxu0 %v5922
    %v5984 = vpop.f32.mrf.mxu0
    %v5985 = vadd.f32 0.0, %v5984
    %v5986 = vpop.f32.mrf.mxu0
    %v5987 = vadd.f32 0.0, %v5986
    %v5988 = vpop.f32.mrf.mxu0
    %v5989 = vadd.f32 0.0, %v5988
    %v5990 = vpop.f32.mrf.mxu0
    %v5991 = vadd.f32 0.0, %v5990
    %5992 = vmatprep.mubr.bf16.mxu0 0
    %5993 = vmatmul.mubr.bf16.gmra.mxu0 %v5923
    %v5994 = vpop.f32.mrf.mxu0
    %v5995 = vadd.f32 0.0, %v5994
    %v5996 = vpop.f32.mrf.mxu0
    %v5997 = vadd.f32 0.0, %v5996
    %v5998 = vpop.f32.mrf.mxu0
    %v5999 = vadd.f32 0.0, %v5998
    %v6000 = vpop.f32.mrf.mxu0
    %v6001 = vadd.f32 0.0, %v6000
    %6002 = vmatprep.mubr.bf16.mxu0 0
    %6003 = vmatmul.mubr.bf16.gmra.mxu0 %v5924
    %v6004 = vpop.f32.mrf.mxu0
    %v6005 = vadd.f32 0.0, %v6004
    %v6006 = vpop.f32.mrf.mxu0
    %v6007 = vadd.f32 0.0, %v6006
    %v6008 = vpop.f32.mrf.mxu0
    %v6009 = vpop.f32.mrf.mxu0
    %6010 = vdwg.mxu0
    %v6011 = vld [vmem:[#allocation11] sm:$0xf]
    %v6012 = vld [vmem:[#allocation11 + $0x4] sm:$0xf]
    %v6013 = vld [vmem:[#allocation11 + $0x8] sm:$0xf]
    %v6014 = vld [vmem:[#allocation11 + $0xc] sm:$0xf]
    %v6015 = vld [vmem:[#allocation11 + $0x10] sm:$0xf]
    %v6016 = vld [vmem:[#allocation11 + $0x14] sm:$0xf]
    %v6017 = vld [vmem:[#allocation11 + $0x18] sm:$0xf]
    %v6018 = vld [vmem:[#allocation11 + $0x1c] sm:$0xf]
    %v6019 = vld [vmem:[#allocation11 + $0x20] sm:$0xf]
    %v6029 = vunpack.c.l.b16 %v6011
    %v6030 = vunpack.c.l.b16 %v6012
    %v6031 = vunpack.c.l.b16 %v6013
    %v6032 = vunpack.c.l.b16 %v6014
    %v6033 = vunpack.c.l.b16 %v6015
    %v6034 = vunpack.c.l.b16 %v6016
    %v6035 = vunpack.c.l.b16 %v6017
    %v6036 = vunpack.c.l.b16 %v6018
    %v6037 = vunpack.c.l.b16 %v6019
    %v6038 = vpack.c.b16 %v6030, %v6029
    %v6039 = vpack.c.b16 %v6032, %v6031
    %v6040 = vpack.c.b16 %v6034, %v6033
    %v6041 = vpack.c.b16 %v6036, %v6035
    %v6042 = vpack.c.b16 %v6037, %v6037
    %6048 = vmatprep.subr.bf16.mxu0 %v5892
    %6049 = vmatpush1.bf16.msra.mxu0 %v5891
    %6050 = vmatprep.subr.bf16.mxu0 %v5890
    %6051 = vmatpush1.bf16.msra.mxu0 %v5889
    %6052 = vmatprep.subr.bf16.mxu0 %v5888
    %6053 = vmatpush1.bf16.msra.mxu0 %v5887
    %6054 = vmatprep.subr.bf16.mxu0 %v5886
    %6055 = vmatpush1.bf16.msra.mxu0 %v5885
    %6056 = vmatprep.subr.bf16.mxu0 %v5884
    %6057 = vmatpush1.bf16.msra.mxu0 %v5883
    %6058 = vmatprep.subr.bf16.mxu0 %v5882
    %6059 = vmatpush1.bf16.msra.mxu0 %v5881
    %6060 = vmatprep.subr.bf16.mxu0 %v5880
    %6061 = vmatpush1.bf16.msra.mxu0 %v5879
    %6062 = vmatprep.subr.bf16.mxu0 %v5878
    %6063 = vmatpush1.bf16.msra.mxu0 %v5877
    %6064 = vmatprep.subr.bf16.mxu0 0
    %6065 = vmatpush2.bf16.msra.mxu0 0
    %6066 = vmatprep.subr.bf16.mxu0 0
    %6067 = vmatpush2.bf16.msra.mxu0 0
    %6068 = vmatprep.subr.bf16.mxu0 0
    %6069 = vmatpush2.bf16.msra.mxu0 0
    %6070 = vmatprep.subr.bf16.mxu0 0
    %6071 = vmatpush2.bf16.msra.mxu0 0
    %6072 = vmatprep.subr.bf16.mxu0 0
    %6073 = vmatpush2.bf16.msra.mxu0 0
    %6074 = vmatprep.subr.bf16.mxu0 0
    %6075 = vmatpush2.bf16.msra.mxu0 0
    %6076 = vmatprep.subr.bf16.mxu0 0
    %6077 = vmatpush2.bf16.msra.mxu0 0
    %6078 = vmatprep.subr.bf16.mxu0 0
    %6079 = vmatpush2.bf16.msra.mxu0 0
    %6080 = vmatprep.mubr.bf16.mxu0 0
    %6081 = vmatmul.mubr.bf16.gmra.mxu0 %v6038
    %v6082 = vpop.f32.mrf.mxu0
    %v6083 = vadd.f32 0.0, %v6082
    %v6084 = vpop.f32.mrf.mxu0
    %v6085 = vadd.f32 0.0, %v6084
    %v6086 = vpop.f32.mrf.mxu0
    %v6087 = vadd.f32 0.0, %v6086
    %v6088 = vpop.f32.mrf.mxu0
    %v6089 = vadd.f32 0.0, %v6088
    %6090 = vmatprep.mubr.bf16.mxu0 0
    %6091 = vmatmul.mubr.bf16.gmra.mxu0 %v6039
    %v6092 = vpop.f32.mrf.mxu0
    %v6093 = vadd.f32 0.0, %v6092
    %v6094 = vpop.f32.mrf.mxu0
    %v6095 = vadd.f32 0.0, %v6094
    %v6096 = vpop.f32.mrf.mxu0
    %v6097 = vadd.f32 0.0, %v6096
    %v6098 = vpop.f32.mrf.mxu0
    %v6099 = vadd.f32 0.0, %v6098
    %6100 = vmatprep.mubr.bf16.mxu0 0
    %6101 = vmatmul.mubr.bf16.gmra.mxu0 %v6040
    %v6102 = vpop.f32.mrf.mxu0
    %v6103 = vadd.f32 0.0, %v6102
    %v6104 = vpop.f32.mrf.mxu0
    %v6105 = vadd.f32 0.0, %v6104
    %v6106 = vpop.f32.mrf.mxu0
    %v6107 = vadd.f32 0.0, %v6106
    %v6108 = vpop.f32.mrf.mxu0
    %v6109 = vadd.f32 0.0, %v6108
    %6110 = vmatprep.mubr.bf16.mxu0 0
    %6111 = vmatmul.mubr.bf16.gmra.mxu0 %v6041
    %v6112 = vpop.f32.mrf.mxu0
    %v6113 = vadd.f32 0.0, %v6112
    %v6114 = vpop.f32.mrf.mxu0
    %v6115 = vadd.f32 0.0, %v6114
    %v6116 = vpop.f32.mrf.mxu0
    %v6117 = vadd.f32 0.0, %v6116
    %v6118 = vpop.f32.mrf.mxu0
    %v6119 = vadd.f32 0.0, %v6118
    %6120 = vmatprep.mubr.bf16.mxu0 0
    %6121 = vmatmul.mubr.bf16.gmra.mxu0 %v6042
    %v6122 = vpop.f32.mrf.mxu0
    %v6123 = vadd.f32 0.0, %v6122
    %v6124 = vpop.f32.mrf.mxu0
    %v6125 = vadd.f32 0.0, %v6124
    %v6126 = vpop.f32.mrf.mxu0
    %v6127 = vpop.f32.mrf.mxu0
    %6128 = vdwg.mxu0
    %v6129 = vmax.f32 %v5965, %v6083
    %v6130 = vmax.f32 %v5967, %v6085
    %v6131 = vmax.f32 %v5969, %v6087
    %v6132 = vmax.f32 %v5971, %v6089
    %v6133 = vmax.f32 %v5975, %v6093
    %v6134 = vmax.f32 %v5977, %v6095
    %v6135 = vmax.f32 %v5979, %v6097
    %v6136 = vmax.f32 %v5981, %v6099
    %v6137 = vmax.f32 %v5985, %v6103
    %v6138 = vmax.f32 %v5987, %v6105
    %v6139 = vmax.f32 %v5989, %v6107
    %v6140 = vmax.f32 %v5991, %v6109
    %v6141 = vmax.f32 %v5995, %v6113
    %v6142 = vmax.f32 %v5997, %v6115
    %v6143 = vmax.f32 %v5999, %v6117
    %v6144 = vmax.f32 %v6001, %v6119
    %v6145 = vmax.f32 %v6005, %v6123
    %v6146 = vmax.f32 %v6007, %v6125
    %v6147 = vpack.c.bf16 %v6131, %v6129
    %v6148 = vpack.c.bf16 %v6132, %v6130
    %v6149 = vpack.c.bf16 %v6135, %v6133
    %v6150 = vpack.c.bf16 %v6136, %v6134
    %v6151 = vpack.c.bf16 %v6139, %v6137
    %v6152 = vpack.c.bf16 %v6140, %v6138
    %v6153 = vpack.c.bf16 %v6143, %v6141
    %v6154 = vpack.c.bf16 %v6144, %v6142
    %v6155 = vpack.c.bf16 %v6145, %v6145
    %v6156 = vpack.c.bf16 %v6146, %v6146
    %v6157 = vld [vmem:[%s5] sm:$0xff]
    %v6158 = vld [vmem:[%s5 + $0x8] sm:$0xff]
    %v6159 = vld [vmem:[%s5 + $0x10] sm:$0xff]
    %v6160 = vld [vmem:[%s5 + $0x18] sm:$0xff]
    %v6161 = vld [vmem:[%s5 + $0x20] sm:$0xff]
    %v6162 = vld [vmem:[%s5 + $0x28] sm:$0xff]
    %v6163 = vld [vmem:[%s5 + $0x30] sm:$0xff]
    %v6164 = vld [vmem:[%s5 + $0x38] sm:$0xff]
    %v6165 = vld [vmem:[%s5 + $0x40] sm:$0xff]
    %v6166 = vld [vmem:[%s5 + $0x48] sm:$0xff]
    %v6167 = vld [vmem:[%s5 + $0x50] sm:$0xff]
    %v6168 = vld [vmem:[%s5 + $0x58] sm:$0xff]
    %v6169 = vld [vmem:[%s5 + $0x60] sm:$0xff]
    %v6170 = vld [vmem:[%s5 + $0x68] sm:$0xff]
    %v6171 = vld [vmem:[%s5 + $0x70] sm:$0xff]
    %v6172 = vld [vmem:[%s5 + $0x78] sm:$0xff]
    %v6173 = vld [vmem:[%s5 + $0x80] sm:$0xff]
    %v6174 = vld [vmem:[%s5 + $0x88] sm:$0xff]
    %v6175 = vld [vmem:[%s5 + $0x90] sm:$0xff]
    %v6176 = vld [vmem:[%s5 + $0x98] sm:$0xff]
    %v6177 = vld [vmem:[%s5 + $0xa0] sm:$0xff]
    %v6178 = vld [vmem:[%s5 + $0xa8] sm:$0xff]
    %v6179 = vld [vmem:[%s5 + $0xb0] sm:$0xff]
    %v6180 = vld [vmem:[%s5 + $0xb8] sm:$0xff]
    %v6181 = vld [vmem:[%s5 + $0xc0] sm:$0xff]
    %v6182 = vld [vmem:[%s5 + $0xc8] sm:$0xff]
    %v6183 = vld [vmem:[%s5 + $0xd0] sm:$0xff]
    %v6184 = vld [vmem:[%s5 + $0xd8] sm:$0xff]
    %v6185 = vld [vmem:[%s5 + $0xe0] sm:$0xff]
    %v6186 = vld [vmem:[%s5 + $0xe8] sm:$0xff]
    %v6187 = vld [vmem:[%s5 + $0xf0] sm:$0xff]
    %v6188 = vld [vmem:[%s5 + $0xf8] sm:$0xff]
    %v6221 = vunpack.c.l.b16 %v6157
    %v6222 = vunpack.c.h.b16 %v6157
    %v6223 = vunpack.c.l.b16 %v6158
    %v6224 = vunpack.c.h.b16 %v6158
    %v6225 = vunpack.c.l.b16 %v6159
    %v6226 = vunpack.c.h.b16 %v6159
    %v6227 = vunpack.c.l.b16 %v6160
    %v6228 = vunpack.c.h.b16 %v6160
    %v6229 = vunpack.c.l.b16 %v6161
    %v6230 = vunpack.c.h.b16 %v6161
    %v6231 = vunpack.c.l.b16 %v6162
    %v6232 = vunpack.c.h.b16 %v6162
    %v6233 = vunpack.c.l.b16 %v6163
    %v6234 = vunpack.c.h.b16 %v6163
    %v6235 = vunpack.c.l.b16 %v6164
    %v6236 = vunpack.c.h.b16 %v6164
    %v6237 = vunpack.c.l.b16 %v6165
    %v6238 = vunpack.c.h.b16 %v6165
    %v6239 = vunpack.c.l.b16 %v6166
    %v6240 = vunpack.c.h.b16 %v6166
    %v6241 = vunpack.c.l.b16 %v6167
    %v6242 = vunpack.c.h.b16 %v6167
    %v6243 = vunpack.c.l.b16 %v6168
    %v6244 = vunpack.c.h.b16 %v6168
    %v6245 = vunpack.c.l.b16 %v6169
    %v6246 = vunpack.c.h.b16 %v6169
    %v6247 = vunpack.c.l.b16 %v6170
    %v6248 = vunpack.c.h.b16 %v6170
    %v6249 = vunpack.c.l.b16 %v6171
    %v6250 = vunpack.c.h.b16 %v6171
    %v6251 = vunpack.c.l.b16 %v6172
    %v6252 = vunpack.c.h.b16 %v6172
    %v6253 = vunpack.c.l.b16 %v6173
    %v6254 = vunpack.c.h.b16 %v6173
    %v6255 = vunpack.c.l.b16 %v6174
    %v6256 = vunpack.c.h.b16 %v6174
    %v6257 = vunpack.c.l.b16 %v6175
    %v6258 = vunpack.c.h.b16 %v6175
    %v6259 = vunpack.c.l.b16 %v6176
    %v6260 = vunpack.c.h.b16 %v6176
    %v6261 = vunpack.c.l.b16 %v6177
    %v6262 = vunpack.c.h.b16 %v6177
    %v6263 = vunpack.c.l.b16 %v6178
    %v6264 = vunpack.c.h.b16 %v6178
    %v6265 = vunpack.c.l.b16 %v6179
    %v6266 = vunpack.c.h.b16 %v6179
    %v6267 = vunpack.c.l.b16 %v6180
    %v6268 = vunpack.c.h.b16 %v6180
    %v6269 = vunpack.c.l.b16 %v6181
    %v6270 = vunpack.c.h.b16 %v6181
    %v6271 = vunpack.c.l.b16 %v6182
    %v6272 = vunpack.c.h.b16 %v6182
    %v6273 = vunpack.c.l.b16 %v6183
    %v6274 = vunpack.c.h.b16 %v6183
    %v6275 = vunpack.c.l.b16 %v6184
    %v6276 = vunpack.c.h.b16 %v6184
    %v6277 = vunpack.c.l.b16 %v6185
    %v6278 = vunpack.c.h.b16 %v6185
    %v6279 = vunpack.c.l.b16 %v6186
    %v6280 = vunpack.c.h.b16 %v6186
    %v6281 = vunpack.c.l.b16 %v6187
    %v6282 = vunpack.c.h.b16 %v6187
    %v6283 = vunpack.c.l.b16 %v6188
    %v6284 = vunpack.c.h.b16 %v6188
    %v6285 = vpack.c.b16 %v6223, %v6221
    %v6286 = vpack.c.b16 %v6224, %v6222
    %v6287 = vpack.c.b16 %v6227, %v6225
    %v6288 = vpack.c.b16 %v6228, %v6226
    %v6289 = vpack.c.b16 %v6231, %v6229
    %v6290 = vpack.c.b16 %v6232, %v6230
    %v6291 = vpack.c.b16 %v6235, %v6233
    %v6292 = vpack.c.b16 %v6236, %v6234
    %v6293 = vpack.c.b16 %v6239, %v6237
    %v6294 = vpack.c.b16 %v6240, %v6238
    %v6295 = vpack.c.b16 %v6243, %v6241
    %v6296 = vpack.c.b16 %v6244, %v6242
    %v6297 = vpack.c.b16 %v6247, %v6245
    %v6298 = vpack.c.b16 %v6248, %v6246
    %v6299 = vpack.c.b16 %v6251, %v6249
    %v6300 = vpack.c.b16 %v6252, %v6250
    %v6301 = vpack.c.b16 %v6255, %v6253
    %v6302 = vpack.c.b16 %v6256, %v6254
    %v6303 = vpack.c.b16 %v6259, %v6257
    %v6304 = vpack.c.b16 %v6260, %v6258
    %v6305 = vpack.c.b16 %v6263, %v6261
    %v6306 = vpack.c.b16 %v6264, %v6262
    %v6307 = vpack.c.b16 %v6267, %v6265
    %v6308 = vpack.c.b16 %v6268, %v6266
    %v6309 = vpack.c.b16 %v6271, %v6269
    %v6310 = vpack.c.b16 %v6272, %v6270
    %v6311 = vpack.c.b16 %v6275, %v6273
    %v6312 = vpack.c.b16 %v6276, %v6274
    %v6313 = vpack.c.b16 %v6279, %v6277
    %v6314 = vpack.c.b16 %v6280, %v6278
    %v6315 = vpack.c.b16 %v6283, %v6281
    %v6316 = vpack.c.b16 %v6284, %v6282
    %6349 = vmatprep.subr.bf16.mxu0 %v6300
    %6350 = vmatpush1.bf16.msra.mxu0 %v6299
    %6351 = vmatprep.subr.bf16.mxu0 %v6298
    %6352 = vmatpush1.bf16.msra.mxu0 %v6297
    %6353 = vmatprep.subr.bf16.mxu0 %v6296
    %6354 = vmatpush1.bf16.msra.mxu0 %v6295
    %6355 = vmatprep.subr.bf16.mxu0 %v6294
    %6356 = vmatpush1.bf16.msra.mxu0 %v6293
    %6357 = vmatprep.subr.bf16.mxu0 %v6292
    %6358 = vmatpush1.bf16.msra.mxu0 %v6291
    %6359 = vmatprep.subr.bf16.mxu0 %v6290
    %6360 = vmatpush1.bf16.msra.mxu0 %v6289
    %6361 = vmatprep.subr.bf16.mxu0 %v6288
    %6362 = vmatpush1.bf16.msra.mxu0 %v6287
    %6363 = vmatprep.subr.bf16.mxu0 %v6286
    %6364 = vmatpush1.bf16.msra.mxu0 %v6285
    %6365 = vmatprep.subr.bf16.mxu0 %v6316
    %6366 = vmatpush2.bf16.msra.mxu0 %v6315
    %6367 = vmatprep.subr.bf16.mxu0 %v6314
    %6368 = vmatpush2.bf16.msra.mxu0 %v6313
    %6369 = vmatprep.subr.bf16.mxu0 %v6312
    %6370 = vmatpush2.bf16.msra.mxu0 %v6311
    %6371 = vmatprep.subr.bf16.mxu0 %v6310
    %6372 = vmatpush2.bf16.msra.mxu0 %v6309
    %6373 = vmatprep.subr.bf16.mxu0 %v6308
    %6374 = vmatpush2.bf16.msra.mxu0 %v6307
    %6375 = vmatprep.subr.bf16.mxu0 %v6306
    %6376 = vmatpush2.bf16.msra.mxu0 %v6305
    %6377 = vmatprep.subr.bf16.mxu0 %v6304
    %6378 = vmatpush2.bf16.msra.mxu0 %v6303
    %6379 = vmatprep.subr.bf16.mxu0 %v6302
    %6380 = vmatpush2.bf16.msra.mxu0 %v6301
    %6381 = vmatprep.mubr.bf16.mxu0 %v6148
    %6382 = vmatmul.mubr.bf16.gmra.mxu0 %v6147
    %v6383 = vpop.f32.mrf.mxu0
    %v6384 = vadd.f32 0.0, %v6383
    %v6385 = vpop.f32.mrf.mxu0
    %v6386 = vadd.f32 0.0, %v6385
    %v6387 = vpop.f32.mrf.mxu0
    %v6388 = vadd.f32 0.0, %v6387
    %v6389 = vpop.f32.mrf.mxu0
    %v6390 = vadd.f32 0.0, %v6389
    %6391 = vmatprep.mubr.bf16.mxu0 %v6150
    %6392 = vmatmul.mubr.bf16.gmra.mxu0 %v6149
    %v6393 = vpop.f32.mrf.mxu0
    %v6394 = vadd.f32 0.0, %v6393
    %v6395 = vpop.f32.mrf.mxu0
    %v6396 = vadd.f32 0.0, %v6395
    %v6397 = vpop.f32.mrf.mxu0
    %v6398 = vadd.f32 0.0, %v6397
    %v6399 = vpop.f32.mrf.mxu0
    %v6400 = vadd.f32 0.0, %v6399
    %6401 = vmatprep.mubr.bf16.mxu0 %v6152
    %6402 = vmatmul.mubr.bf16.gmra.mxu0 %v6151
    %v6403 = vpop.f32.mrf.mxu0
    %v6404 = vadd.f32 0.0, %v6403
    %v6405 = vpop.f32.mrf.mxu0
    %v6406 = vadd.f32 0.0, %v6405
    %v6407 = vpop.f32.mrf.mxu0
    %v6408 = vadd.f32 0.0, %v6407
    %v6409 = vpop.f32.mrf.mxu0
    %v6410 = vadd.f32 0.0, %v6409
    %6411 = vmatprep.mubr.bf16.mxu0 %v6154
    %6412 = vmatmul.mubr.bf16.gmra.mxu0 %v6153
    %v6413 = vpop.f32.mrf.mxu0
    %v6414 = vadd.f32 0.0, %v6413
    %v6415 = vpop.f32.mrf.mxu0
    %v6416 = vadd.f32 0.0, %v6415
    %v6417 = vpop.f32.mrf.mxu0
    %v6418 = vadd.f32 0.0, %v6417
    %v6419 = vpop.f32.mrf.mxu0
    %v6420 = vadd.f32 0.0, %v6419
    %6421 = vmatprep.mubr.bf16.mxu0 %v6156
    %6422 = vmatmul.mubr.bf16.gmra.mxu0 %v6155
    %v6423 = vpop.f32.mrf.mxu0
    %v6424 = vadd.f32 0.0, %v6423
    %v6425 = vpop.f32.mrf.mxu0
    %v6426 = vadd.f32 0.0, %v6425
    %v6427 = vpop.f32.mrf.mxu0
    %v6428 = vpop.f32.mrf.mxu0
    %6429 = vdwg.mxu0
    %v6430 = vmax.f32 %v6129, %v6384
    %v6431 = vmax.f32 %v6130, %v6386
    %v6432 = vmax.f32 %v6131, %v6388
    %v6433 = vmax.f32 %v6132, %v6390
    %v6434 = vmax.f32 %v6133, %v6394
    %v6435 = vmax.f32 %v6134, %v6396
    %v6436 = vmax.f32 %v6135, %v6398
    %v6437 = vmax.f32 %v6136, %v6400
    %v6438 = vmax.f32 %v6137, %v6404
    %v6439 = vmax.f32 %v6138, %v6406
    %v6440 = vmax.f32 %v6139, %v6408
    %v6441 = vmax.f32 %v6140, %v6410
    %v6442 = vmax.f32 %v6141, %v6414
    %v6443 = vmax.f32 %v6142, %v6416
    %v6444 = vmax.f32 %v6143, %v6418
    %v6445 = vmax.f32 %v6144, %v6420
    %v6446 = vmax.f32 %v6145, %v6424
    %v6447 = vmax.f32 %v6146, %v6426
    %v6448 = vld [vmem:[%s7] sm:$0x3]
    %v6450 = vlaneseq
    %v6451 = vshrl.u32 %v6450, 7
    %v6452 = vsub.s32 0, %v6451
    %v6453 = vrot.slane %v6448, %v6452
    %v6454 = vlaneseq
    %v6455 = vshrl.u32 %v6454, 7
    %v6456 = vsub.s32 1, %v6455
    %v6457 = vrot.slane %v6448, %v6456
    %v6460 = vadd.f32 %v6430, %v6453
    %v6461 = vadd.f32 %v6431, %v6457
    %v6462 = vadd.f32 %v6432, %v6453
    %v6463 = vadd.f32 %v6433, %v6457
    %v6464 = vadd.f32 %v6434, %v6453
    %v6465 = vadd.f32 %v6435, %v6457
    %v6466 = vadd.f32 %v6436, %v6453
    %v6467 = vadd.f32 %v6437, %v6457
    %v6468 = vadd.f32 %v6438, %v6453
    %v6469 = vadd.f32 %v6439, %v6457
    %v6470 = vadd.f32 %v6440, %v6453
    %v6471 = vadd.f32 %v6441, %v6457
    %v6472 = vadd.f32 %v6442, %v6453
    %v6473 = vadd.f32 %v6443, %v6457
    %v6474 = vadd.f32 %v6444, %v6453
    %v6475 = vadd.f32 %v6445, %v6457
    %v6476 = vadd.f32 %v6446, %v6453
    %v6477 = vadd.f32 %v6447, %v6457
    %v6478 = vmax.f32 %v6460, 0.0
    %v6479 = vmax.f32 %v6461, 0.0
    %v6480 = vmax.f32 %v6462, 0.0
    %v6481 = vmax.f32 %v6463, 0.0
    %v6482 = vmax.f32 %v6464, 0.0
    %v6483 = vmax.f32 %v6465, 0.0
    %v6484 = vmax.f32 %v6466, 0.0
    %v6485 = vmax.f32 %v6467, 0.0
    %v6486 = vmax.f32 %v6468, 0.0
    %v6487 = vmax.f32 %v6469, 0.0
    %v6488 = vmax.f32 %v6470, 0.0
    %v6489 = vmax.f32 %v6471, 0.0
    %v6490 = vmax.f32 %v6472, 0.0
    %v6491 = vmax.f32 %v6473, 0.0
    %v6492 = vmax.f32 %v6474, 0.0
    %v6493 = vmax.f32 %v6475, 0.0
    %v6494 = vmax.f32 %v6476, 0.0
    %v6495 = vmax.f32 %v6477, 0.0
    %6496 = vst [vmem:[#allocation3] sm:$0xff] %v6478
    %6497 = vst [vmem:[#allocation3 + $0x8] sm:$0xff] %v6479
    %6498 = vst [vmem:[#allocation3 + $0x10] sm:$0xff] %v6480
    %6499 = vst [vmem:[#allocation3 + $0x18] sm:$0xff] %v6481
    %6500 = vst [vmem:[#allocation3 + $0x20] sm:$0xff] %v6482
    %6501 = vst [vmem:[#allocation3 + $0x28] sm:$0xff] %v6483
    %6502 = vst [vmem:[#allocation3 + $0x30] sm:$0xff] %v6484
    %6503 = vst [vmem:[#allocation3 + $0x38] sm:$0xff] %v6485
    %6504 = vst [vmem:[#allocation3 + $0x40] sm:$0xff] %v6486
    %6505 = vst [vmem:[#allocation3 + $0x48] sm:$0xff] %v6487
    %6506 = vst [vmem:[#allocation3 + $0x50] sm:$0xff] %v6488
    %6507 = vst [vmem:[#allocation3 + $0x58] sm:$0xff] %v6489
    %6508 = vst [vmem:[#allocation3 + $0x60] sm:$0xff] %v6490
    %6509 = vst [vmem:[#allocation3 + $0x68] sm:$0xff] %v6491
    %6510 = vst [vmem:[#allocation3 + $0x70] sm:$0xff] %v6492
    %6511 = vst [vmem:[#allocation3 + $0x78] sm:$0xff] %v6493
    %6512 = vst [vmem:[#allocation3 + $0x80] sm:$0xff] %v6494
    %6513 = vst [vmem:[#allocation3 + $0x88] sm:$0xff] %v6495
    %v6514 = vld [vmem:[#allocation3] sm:$0xff]
    %v6515 = vld [vmem:[#allocation3 + $0x8] sm:$0xff]
    %v6516 = vld [vmem:[#allocation3 + $0x10] sm:$0xff]
    %v6517 = vld [vmem:[#allocation3 + $0x18] sm:$0xff]
    %v6518 = vld [vmem:[#allocation3 + $0x20] sm:$0xff]
    %v6519 = vld [vmem:[#allocation3 + $0x28] sm:$0xff]
    %v6520 = vld [vmem:[#allocation3 + $0x30] sm:$0xff]
    %v6521 = vld [vmem:[#allocation3 + $0x38] sm:$0xff]
    %v6522 = vld [vmem:[#allocation3 + $0x40] sm:$0xff]
    %v6523 = vld [vmem:[#allocation3 + $0x48] sm:$0xff]
    %v6524 = vld [vmem:[#allocation3 + $0x50] sm:$0xff]
    %v6525 = vld [vmem:[#allocation3 + $0x58] sm:$0xff]
    %v6526 = vld [vmem:[#allocation3 + $0x60] sm:$0xff]
    %v6527 = vld [vmem:[#allocation3 + $0x68] sm:$0xff]
    %v6528 = vld [vmem:[#allocation3 + $0x70] sm:$0xff]
    %v6529 = vld [vmem:[#allocation3 + $0x78] sm:$0xff]
    %v6530 = vpack.c.bf16 %v6516, %v6514
    %v6531 = vpack.c.bf16 %v6517, %v6515
    %v6532 = vpack.c.bf16 %v6520, %v6518
    %v6533 = vpack.c.bf16 %v6521, %v6519
    %v6534 = vpack.c.bf16 %v6524, %v6522
    %v6535 = vpack.c.bf16 %v6525, %v6523
    %v6536 = vpack.c.bf16 %v6528, %v6526
    %v6537 = vpack.c.bf16 %v6529, %v6527
    %v6538 = vld [vmem:[#allocation12] sm:$0xf]
    %v6539 = vld [vmem:[#allocation12 + $0x4] sm:$0xf]
    %v6540 = vld [vmem:[#allocation12 + $0x8] sm:$0xf]
    %v6541 = vld [vmem:[#allocation12 + $0xc] sm:$0xf]
    %v6542 = vld [vmem:[#allocation12 + $0x10] sm:$0xf]
    %v6543 = vld [vmem:[#allocation12 + $0x14] sm:$0xf]
    %v6544 = vld [vmem:[#allocation12 + $0x18] sm:$0xf]
    %v6545 = vld [vmem:[#allocation12 + $0x1c] sm:$0xf]
    %v6546 = vld [vmem:[#allocation12 + $0x20] sm:$0xf]
    %v6547 = vld [vmem:[#allocation12 + $0x24] sm:$0xf]
    %v6548 = vld [vmem:[#allocation12 + $0x28] sm:$0xf]
    %v6549 = vld [vmem:[#allocation12 + $0x2c] sm:$0xf]
    %v6550 = vld [vmem:[#allocation12 + $0x30] sm:$0xf]
    %v6551 = vld [vmem:[#allocation12 + $0x34] sm:$0xf]
    %v6552 = vld [vmem:[#allocation12 + $0x38] sm:$0xf]
    %v6553 = vld [vmem:[#allocation12 + $0x3c] sm:$0xf]
    %v6554 = vld [vmem:[#allocation12 + $0x40] sm:$0xf]
    %v6555 = vld [vmem:[#allocation12 + $0x44] sm:$0xf]
    %v6556 = vld [vmem:[#allocation12 + $0x48] sm:$0xf]
    %v6557 = vld [vmem:[#allocation12 + $0x4c] sm:$0xf]
    %v6558 = vld [vmem:[#allocation12 + $0x50] sm:$0xf]
    %v6559 = vld [vmem:[#allocation12 + $0x54] sm:$0xf]
    %v6560 = vld [vmem:[#allocation12 + $0x58] sm:$0xf]
    %v6561 = vld [vmem:[#allocation12 + $0x5c] sm:$0xf]
    %v6562 = vld [vmem:[#allocation12 + $0x60] sm:$0xf]
    %v6563 = vld [vmem:[#allocation12 + $0x64] sm:$0xf]
    %v6564 = vld [vmem:[#allocation12 + $0x68] sm:$0xf]
    %v6565 = vld [vmem:[#allocation12 + $0x6c] sm:$0xf]
    %v6566 = vld [vmem:[#allocation12 + $0x70] sm:$0xf]
    %v6567 = vld [vmem:[#allocation12 + $0x74] sm:$0xf]
    %v6568 = vld [vmem:[#allocation12 + $0x78] sm:$0xf]
    %v6569 = vld [vmem:[#allocation12 + $0x7c] sm:$0xf]
    %v6570 = vld [vmem:[#allocation3] sm:$0xfe]
    %v6571 = vld [vmem:[#allocation3 + $0x8] sm:$0xfe]
    %v6572 = vld [vmem:[#allocation3 + $0x10] sm:$0xff]
    %v6573 = vld [vmem:[#allocation3 + $0x18] sm:$0xff]
    %v6574 = vld [vmem:[#allocation3 + $0x20] sm:$0xff]
    %v6575 = vld [vmem:[#allocation3 + $0x28] sm:$0xff]
    %v6576 = vld [vmem:[#allocation3 + $0x30] sm:$0xff]
    %v6577 = vld [vmem:[#allocation3 + $0x38] sm:$0xff]
    %v6578 = vld [vmem:[#allocation3 + $0x40] sm:$0xff]
    %v6579 = vld [vmem:[#allocation3 + $0x48] sm:$0xff]
    %v6580 = vld [vmem:[#allocation3 + $0x50] sm:$0xff]
    %v6581 = vld [vmem:[#allocation3 + $0x58] sm:$0xff]
    %v6582 = vld [vmem:[#allocation3 + $0x60] sm:$0xff]
    %v6583 = vld [vmem:[#allocation3 + $0x68] sm:$0xff]
    %v6584 = vld [vmem:[#allocation3 + $0x70] sm:$0xff]
    %v6585 = vld [vmem:[#allocation3 + $0x78] sm:$0xff]
    %v6586 = vld [vmem:[#allocation3 + $0x80] sm:$0x1]
    %v6587 = vld [vmem:[#allocation3 + $0x88] sm:$0x1]
    %v6588 = vpack.c.bf16 %v6572, %v6570
    %v6589 = vpack.c.bf16 %v6573, %v6571
    %v6590 = vpack.c.bf16 %v6576, %v6574
    %v6591 = vpack.c.bf16 %v6577, %v6575
    %v6592 = vpack.c.bf16 %v6580, %v6578
    %v6593 = vpack.c.bf16 %v6581, %v6579
    %v6594 = vpack.c.bf16 %v6584, %v6582
    %v6595 = vpack.c.bf16 %v6585, %v6583
    %v6596 = vpack.c.bf16 %v6586, %v6586
    %v6597 = vpack.c.bf16 %v6587, %v6587
    %s6598 = scalar_lea.vmem [#allocation12], 128
    %v6599 = vld [vmem:[%s6598] sm:$0xf]
    %v6600 = vld [vmem:[%s6598 + $0x4] sm:$0xf]
    %v6601 = vld [vmem:[%s6598 + $0x8] sm:$0xf]
    %v6602 = vld [vmem:[%s6598 + $0xc] sm:$0xf]
    %v6603 = vld [vmem:[%s6598 + $0x10] sm:$0xf]
    %v6604 = vld [vmem:[%s6598 + $0x14] sm:$0xf]
    %v6605 = vld [vmem:[%s6598 + $0x18] sm:$0xf]
    %v6606 = vld [vmem:[%s6598 + $0x1c] sm:$0xf]
    %v6607 = vld [vmem:[%s6598 + $0x20] sm:$0xf]
    %v6608 = vld [vmem:[%s6598 + $0x24] sm:$0xf]
    %v6609 = vld [vmem:[%s6598 + $0x28] sm:$0xf]
    %v6610 = vld [vmem:[%s6598 + $0x2c] sm:$0xf]
    %v6611 = vld [vmem:[%s6598 + $0x30] sm:$0xf]
    %v6612 = vld [vmem:[%s6598 + $0x34] sm:$0xf]
    %v6613 = vld [vmem:[%s6598 + $0x38] sm:$0xf]
    %v6614 = vld [vmem:[%s6598 + $0x3c] sm:$0xf]
    %v6615 = vld [vmem:[%s6598 + $0x40] sm:$0xf]
    %v6616 = vld [vmem:[%s6598 + $0x44] sm:$0xf]
    %v6617 = vld [vmem:[%s6598 + $0x48] sm:$0xf]
    %v6618 = vld [vmem:[%s6598 + $0x4c] sm:$0xf]
    %v6619 = vld [vmem:[%s6598 + $0x50] sm:$0xf]
    %v6620 = vld [vmem:[%s6598 + $0x54] sm:$0xf]
    %v6621 = vld [vmem:[%s6598 + $0x58] sm:$0xf]
    %v6622 = vld [vmem:[%s6598 + $0x5c] sm:$0xf]
    %v6623 = vld [vmem:[%s6598 + $0x60] sm:$0xf]
    %v6624 = vld [vmem:[%s6598 + $0x64] sm:$0xf]
    %v6625 = vld [vmem:[%s6598 + $0x68] sm:$0xf]
    %v6626 = vld [vmem:[%s6598 + $0x6c] sm:$0xf]
    %v6627 = vld [vmem:[%s6598 + $0x70] sm:$0xf]
    %v6628 = vld [vmem:[%s6598 + $0x74] sm:$0xf]
    %v6629 = vld [vmem:[%s6598 + $0x78] sm:$0xf]
    %v6630 = vld [vmem:[%s6598 + $0x7c] sm:$0xf]
    %v6632 = vshrl.u32 %v6588, 16
    %v6634 = vshll.u32 %v6588, 16
    %v6636 = vrot.slane %v6634, 1
    %v6637 = vor.u32 %v6632, %v6636
    %v6639 = vshll.u32 %v6590, 16
    %v6641 = vrot.slane %v6639, 1
    %v6642 = vsel %vm3909, %v6637, %v6641
    %v6644 = vshrl.u32 %v6589, 16
    %v6646 = vshll.u32 %v6589, 16
    %v6648 = vrot.slane %v6646, 1
    %v6649 = vor.u32 %v6644, %v6648
    %v6651 = vshll.u32 %v6591, 16
    %v6653 = vrot.slane %v6651, 1
    %v6654 = vsel %vm3909, %v6649, %v6653
    %v6655 = vshrl.u32 %v6590, 16
    %v6657 = vor.u32 %v6655, %v6641
    %v6659 = vshll.u32 %v6592, 16
    %v6661 = vrot.slane %v6659, 1
    %v6662 = vsel %vm3909, %v6657, %v6661
    %v6663 = vshrl.u32 %v6591, 16
    %v6665 = vor.u32 %v6663, %v6653
    %v6667 = vshll.u32 %v6593, 16
    %v6669 = vrot.slane %v6667, 1
    %v6670 = vsel %vm3909, %v6665, %v6669
    %v6671 = vshrl.u32 %v6592, 16
    %v6673 = vor.u32 %v6671, %v6661
    %v6675 = vshll.u32 %v6594, 16
    %v6677 = vrot.slane %v6675, 1
    %v6678 = vsel %vm3909, %v6673, %v6677
    %v6679 = vshrl.u32 %v6593, 16
    %v6681 = vor.u32 %v6679, %v6669
    %v6683 = vshll.u32 %v6595, 16
    %v6685 = vrot.slane %v6683, 1
    %v6686 = vsel %vm3909, %v6681, %v6685
    %v6687 = vshrl.u32 %v6594, 16
    %v6689 = vor.u32 %v6687, %v6677
    %v6691 = vshll.u32 %v6596, 16
    %v6693 = vrot.slane %v6691, 1
    %v6694 = vsel %vm3909, %v6689, %v6693
    %v6695 = vshrl.u32 %v6595, 16
    %v6697 = vor.u32 %v6695, %v6685
    %v6699 = vshll.u32 %v6597, 16
    %v6701 = vrot.slane %v6699, 1
    %v6702 = vsel %vm3909, %v6697, %v6701
    %v6743 = vunpack.c.l.b16 %v6599
    %v6744 = vunpack.c.l.b16 %v6600
    %v6745 = vunpack.c.l.b16 %v6601
    %v6746 = vunpack.c.l.b16 %v6602
    %v6747 = vunpack.c.l.b16 %v6603
    %v6748 = vunpack.c.l.b16 %v6604
    %v6749 = vunpack.c.l.b16 %v6605
    %v6750 = vunpack.c.l.b16 %v6606
    %v6751 = vunpack.c.l.b16 %v6607
    %v6752 = vunpack.c.l.b16 %v6608
    %v6753 = vunpack.c.l.b16 %v6609
    %v6754 = vunpack.c.l.b16 %v6610
    %v6755 = vunpack.c.l.b16 %v6611
    %v6756 = vunpack.c.l.b16 %v6612
    %v6757 = vunpack.c.l.b16 %v6613
    %v6758 = vunpack.c.l.b16 %v6614
    %v6759 = vunpack.c.l.b16 %v6615
    %v6760 = vunpack.c.l.b16 %v6616
    %v6761 = vunpack.c.l.b16 %v6617
    %v6762 = vunpack.c.l.b16 %v6618
    %v6763 = vunpack.c.l.b16 %v6619
    %v6764 = vunpack.c.l.b16 %v6620
    %v6765 = vunpack.c.l.b16 %v6621
    %v6766 = vunpack.c.l.b16 %v6622
    %v6767 = vunpack.c.l.b16 %v6623
    %v6768 = vunpack.c.l.b16 %v6624
    %v6769 = vunpack.c.l.b16 %v6625
    %v6770 = vunpack.c.l.b16 %v6626
    %v6771 = vunpack.c.l.b16 %v6627
    %v6772 = vunpack.c.l.b16 %v6628
    %v6773 = vunpack.c.l.b16 %v6629
    %v6774 = vunpack.c.l.b16 %v6630
    %v6775 = vpack.c.b16 %v6744, %v6743
    %v6776 = vpack.c.b16 %v6746, %v6745
    %v6777 = vpack.c.b16 %v6748, %v6747
    %v6778 = vpack.c.b16 %v6750, %v6749
    %v6779 = vpack.c.b16 %v6752, %v6751
    %v6780 = vpack.c.b16 %v6754, %v6753
    %v6781 = vpack.c.b16 %v6756, %v6755
    %v6782 = vpack.c.b16 %v6758, %v6757
    %v6783 = vpack.c.b16 %v6760, %v6759
    %v6784 = vpack.c.b16 %v6762, %v6761
    %v6785 = vpack.c.b16 %v6764, %v6763
    %v6786 = vpack.c.b16 %v6766, %v6765
    %v6787 = vpack.c.b16 %v6768, %v6767
    %v6788 = vpack.c.b16 %v6770, %v6769
    %v6789 = vpack.c.b16 %v6772, %v6771
    %v6790 = vpack.c.b16 %v6774, %v6773
    %6807 = vmatprep.subr.bf16.mxu0 0
    %6808 = vmatpush1.bf16.msra.mxu0 %v6782
    %6809 = vmatprep.subr.bf16.mxu0 0
    %6810 = vmatpush1.bf16.msra.mxu0 %v6781
    %6811 = vmatprep.subr.bf16.mxu0 0
    %6812 = vmatpush1.bf16.msra.mxu0 %v6780
    %6813 = vmatprep.subr.bf16.mxu0 0
    %6814 = vmatpush1.bf16.msra.mxu0 %v6779
    %6815 = vmatprep.subr.bf16.mxu0 0
    %6816 = vmatpush1.bf16.msra.mxu0 %v6778
    %6817 = vmatprep.subr.bf16.mxu0 0
    %6818 = vmatpush1.bf16.msra.mxu0 %v6777
    %6819 = vmatprep.subr.bf16.mxu0 0
    %6820 = vmatpush1.bf16.msra.mxu0 %v6776
    %6821 = vmatprep.subr.bf16.mxu0 0
    %6822 = vmatpush1.bf16.msra.mxu0 %v6775
    %6823 = vmatprep.subr.bf16.mxu0 0
    %6824 = vmatpush2.bf16.msra.mxu0 %v6790
    %6825 = vmatprep.subr.bf16.mxu0 0
    %6826 = vmatpush2.bf16.msra.mxu0 %v6789
    %6827 = vmatprep.subr.bf16.mxu0 0
    %6828 = vmatpush2.bf16.msra.mxu0 %v6788
    %6829 = vmatprep.subr.bf16.mxu0 0
    %6830 = vmatpush2.bf16.msra.mxu0 %v6787
    %6831 = vmatprep.subr.bf16.mxu0 0
    %6832 = vmatpush2.bf16.msra.mxu0 %v6786
    %6833 = vmatprep.subr.bf16.mxu0 0
    %6834 = vmatpush2.bf16.msra.mxu0 %v6785
    %6835 = vmatprep.subr.bf16.mxu0 0
    %6836 = vmatpush2.bf16.msra.mxu0 %v6784
    %6837 = vmatprep.subr.bf16.mxu0 0
    %6838 = vmatpush2.bf16.msra.mxu0 %v6783
    %6839 = vmatprep.mubr.bf16.mxu0 %v6654
    %6840 = vmatmul.mubr.bf16.gmra.mxu0 %v6642
    %v6841 = vpop.f32.mrf.mxu0
    %v6842 = vadd.f32 0.0, %v6841
    %v6843 = vpop.f32.mrf.mxu0
    %v6844 = vpop.f32.mrf.mxu0
    %v6845 = vadd.f32 0.0, %v6844
    %v6846 = vpop.f32.mrf.mxu0
    %6847 = vmatprep.mubr.bf16.mxu0 %v6670
    %6848 = vmatmul.mubr.bf16.gmra.mxu0 %v6662
    %v6849 = vpop.f32.mrf.mxu0
    %v6850 = vadd.f32 0.0, %v6849
    %v6851 = vpop.f32.mrf.mxu0
    %v6852 = vpop.f32.mrf.mxu0
    %v6853 = vadd.f32 0.0, %v6852
    %v6854 = vpop.f32.mrf.mxu0
    %6855 = vmatprep.mubr.bf16.mxu0 %v6686
    %6856 = vmatmul.mubr.bf16.gmra.mxu0 %v6678
    %v6857 = vpop.f32.mrf.mxu0
    %v6858 = vadd.f32 0.0, %v6857
    %v6859 = vpop.f32.mrf.mxu0
    %v6860 = vpop.f32.mrf.mxu0
    %v6861 = vadd.f32 0.0, %v6860
    %v6862 = vpop.f32.mrf.mxu0
    %6863 = vmatprep.mubr.bf16.mxu0 %v6702
    %6864 = vmatmul.mubr.bf16.gmra.mxu0 %v6694
    %v6865 = vpop.f32.mrf.mxu0
    %v6866 = vadd.f32 0.0, %v6865
    %v6867 = vpop.f32.mrf.mxu0
    %v6868 = vpop.f32.mrf.mxu0
    %v6869 = vadd.f32 0.0, %v6868
    %v6870 = vpop.f32.mrf.mxu0
    %6871 = vdwg.mxu0
    %v6904 = vunpack.c.l.b16 %v6538
    %v6905 = vunpack.c.l.b16 %v6539
    %v6906 = vunpack.c.l.b16 %v6540
    %v6907 = vunpack.c.l.b16 %v6541
    %v6908 = vunpack.c.l.b16 %v6542
    %v6909 = vunpack.c.l.b16 %v6543
    %v6910 = vunpack.c.l.b16 %v6544
    %v6911 = vunpack.c.l.b16 %v6545
    %v6912 = vunpack.c.l.b16 %v6546
    %v6913 = vunpack.c.l.b16 %v6547
    %v6914 = vunpack.c.l.b16 %v6548
    %v6915 = vunpack.c.l.b16 %v6549
    %v6916 = vunpack.c.l.b16 %v6550
    %v6917 = vunpack.c.l.b16 %v6551
    %v6918 = vunpack.c.l.b16 %v6552
    %v6919 = vunpack.c.l.b16 %v6553
    %v6920 = vunpack.c.l.b16 %v6554
    %v6921 = vunpack.c.l.b16 %v6555
    %v6922 = vunpack.c.l.b16 %v6556
    %v6923 = vunpack.c.l.b16 %v6557
    %v6924 = vunpack.c.l.b16 %v6558
    %v6925 = vunpack.c.l.b16 %v6559
    %v6926 = vunpack.c.l.b16 %v6560
    %v6927 = vunpack.c.l.b16 %v6561
    %v6928 = vunpack.c.l.b16 %v6562
    %v6929 = vunpack.c.l.b16 %v6563
    %v6930 = vunpack.c.l.b16 %v6564
    %v6931 = vunpack.c.l.b16 %v6565
    %v6932 = vunpack.c.l.b16 %v6566
    %v6933 = vunpack.c.l.b16 %v6567
    %v6934 = vunpack.c.l.b16 %v6568
    %v6935 = vunpack.c.l.b16 %v6569
    %v6936 = vpack.c.b16 %v6905, %v6904
    %v6937 = vpack.c.b16 %v6907, %v6906
    %v6938 = vpack.c.b16 %v6909, %v6908
    %v6939 = vpack.c.b16 %v6911, %v6910
    %v6940 = vpack.c.b16 %v6913, %v6912
    %v6941 = vpack.c.b16 %v6915, %v6914
    %v6942 = vpack.c.b16 %v6917, %v6916
    %v6943 = vpack.c.b16 %v6919, %v6918
    %v6944 = vpack.c.b16 %v6921, %v6920
    %v6945 = vpack.c.b16 %v6923, %v6922
    %v6946 = vpack.c.b16 %v6925, %v6924
    %v6947 = vpack.c.b16 %v6927, %v6926
    %v6948 = vpack.c.b16 %v6929, %v6928
    %v6949 = vpack.c.b16 %v6931, %v6930
    %v6950 = vpack.c.b16 %v6933, %v6932
    %v6951 = vpack.c.b16 %v6935, %v6934
    %6968 = vmatprep.subr.bf16.mxu0 0
    %6969 = vmatpush1.bf16.msra.mxu0 %v6943
    %6970 = vmatprep.subr.bf16.mxu0 0
    %6971 = vmatpush1.bf16.msra.mxu0 %v6942
    %6972 = vmatprep.subr.bf16.mxu0 0
    %6973 = vmatpush1.bf16.msra.mxu0 %v6941
    %6974 = vmatprep.subr.bf16.mxu0 0
    %6975 = vmatpush1.bf16.msra.mxu0 %v6940
    %6976 = vmatprep.subr.bf16.mxu0 0
    %6977 = vmatpush1.bf16.msra.mxu0 %v6939
    %6978 = vmatprep.subr.bf16.mxu0 0
    %6979 = vmatpush1.bf16.msra.mxu0 %v6938
    %6980 = vmatprep.subr.bf16.mxu0 0
    %6981 = vmatpush1.bf16.msra.mxu0 %v6937
    %6982 = vmatprep.subr.bf16.mxu0 0
    %6983 = vmatpush1.bf16.msra.mxu0 %v6936
    %6984 = vmatprep.subr.bf16.mxu0 0
    %6985 = vmatpush2.bf16.msra.mxu0 %v6951
    %6986 = vmatprep.subr.bf16.mxu0 0
    %6987 = vmatpush2.bf16.msra.mxu0 %v6950
    %6988 = vmatprep.subr.bf16.mxu0 0
    %6989 = vmatpush2.bf16.msra.mxu0 %v6949
    %6990 = vmatprep.subr.bf16.mxu0 0
    %6991 = vmatpush2.bf16.msra.mxu0 %v6948
    %6992 = vmatprep.subr.bf16.mxu0 0
    %6993 = vmatpush2.bf16.msra.mxu0 %v6947
    %6994 = vmatprep.subr.bf16.mxu0 0
    %6995 = vmatpush2.bf16.msra.mxu0 %v6946
    %6996 = vmatprep.subr.bf16.mxu0 0
    %6997 = vmatpush2.bf16.msra.mxu0 %v6945
    %6998 = vmatprep.subr.bf16.mxu0 0
    %6999 = vmatpush2.bf16.msra.mxu0 %v6944
    %7000 = vmatprep.mubr.bf16.mxu0 %v6531
    %7001 = vmatmul.mubr.bf16.gmra.mxu0 %v6530
    %v7002 = vpop.f32.mrf.mxu0
    %v7003 = vadd.f32 %v6842, %v7002
    %v7004 = vpop.f32.mrf.mxu0
    %v7005 = vpop.f32.mrf.mxu0
    %v7006 = vadd.f32 %v6845, %v7005
    %v7007 = vpop.f32.mrf.mxu0
    %7008 = vmatprep.mubr.bf16.mxu0 %v6533
    %7009 = vmatmul.mubr.bf16.gmra.mxu0 %v6532
    %v7010 = vpop.f32.mrf.mxu0
    %v7011 = vadd.f32 %v6850, %v7010
    %v7012 = vpop.f32.mrf.mxu0
    %v7013 = vpop.f32.mrf.mxu0
    %v7014 = vadd.f32 %v6853, %v7013
    %v7015 = vpop.f32.mrf.mxu0
    %7016 = vmatprep.mubr.bf16.mxu0 %v6535
    %7017 = vmatmul.mubr.bf16.gmra.mxu0 %v6534
    %v7018 = vpop.f32.mrf.mxu0
    %v7019 = vadd.f32 %v6858, %v7018
    %v7020 = vpop.f32.mrf.mxu0
    %v7021 = vpop.f32.mrf.mxu0
    %v7022 = vadd.f32 %v6861, %v7021
    %v7023 = vpop.f32.mrf.mxu0
    %7024 = vmatprep.mubr.bf16.mxu0 %v6537
    %7025 = vmatmul.mubr.bf16.gmra.mxu0 %v6536
    %v7026 = vpop.f32.mrf.mxu0
    %v7027 = vadd.f32 %v6866, %v7026
    %v7028 = vpop.f32.mrf.mxu0
    %v7029 = vpop.f32.mrf.mxu0
    %v7030 = vadd.f32 %v6869, %v7029
    %v7031 = vpop.f32.mrf.mxu0
    %7032 = vdwg.mxu0
    %v7033 = vld [vmem:[#allocation3] sm:$0xfc]
    %v7034 = vld [vmem:[#allocation3 + $0x8] sm:$0xfc]
    %v7035 = vld [vmem:[#allocation3 + $0x80] sm:$0x3]
    %v7036 = vld [vmem:[#allocation3 + $0x88] sm:$0x3]
    %v7037 = vpack.c.bf16 %v6572, %v7033
    %v7038 = vpack.c.bf16 %v6573, %v7034
    %v7039 = vpack.c.bf16 %v7035, %v7035
    %v7040 = vpack.c.bf16 %v7036, %v7036
    %s7041 = scalar_lea.vmem [#allocation12], 256
    %v7042 = vld [vmem:[%s7041] sm:$0xf]
    %v7043 = vld [vmem:[%s7041 + $0x4] sm:$0xf]
    %v7044 = vld [vmem:[%s7041 + $0x8] sm:$0xf]
    %v7045 = vld [vmem:[%s7041 + $0xc] sm:$0xf]
    %v7046 = vld [vmem:[%s7041 + $0x10] sm:$0xf]
    %v7047 = vld [vmem:[%s7041 + $0x14] sm:$0xf]
    %v7048 = vld [vmem:[%s7041 + $0x18] sm:$0xf]
    %v7049 = vld [vmem:[%s7041 + $0x1c] sm:$0xf]
    %v7050 = vld [vmem:[%s7041 + $0x20] sm:$0xf]
    %v7051 = vld [vmem:[%s7041 + $0x24] sm:$0xf]
    %v7052 = vld [vmem:[%s7041 + $0x28] sm:$0xf]
    %v7053 = vld [vmem:[%s7041 + $0x2c] sm:$0xf]
    %v7054 = vld [vmem:[%s7041 + $0x30] sm:$0xf]
    %v7055 = vld [vmem:[%s7041 + $0x34] sm:$0xf]
    %v7056 = vld [vmem:[%s7041 + $0x38] sm:$0xf]
    %v7057 = vld [vmem:[%s7041 + $0x3c] sm:$0xf]
    %v7058 = vld [vmem:[%s7041 + $0x40] sm:$0xf]
    %v7059 = vld [vmem:[%s7041 + $0x44] sm:$0xf]
    %v7060 = vld [vmem:[%s7041 + $0x48] sm:$0xf]
    %v7061 = vld [vmem:[%s7041 + $0x4c] sm:$0xf]
    %v7062 = vld [vmem:[%s7041 + $0x50] sm:$0xf]
    %v7063 = vld [vmem:[%s7041 + $0x54] sm:$0xf]
    %v7064 = vld [vmem:[%s7041 + $0x58] sm:$0xf]
    %v7065 = vld [vmem:[%s7041 + $0x5c] sm:$0xf]
    %v7066 = vld [vmem:[%s7041 + $0x60] sm:$0xf]
    %v7067 = vld [vmem:[%s7041 + $0x64] sm:$0xf]
    %v7068 = vld [vmem:[%s7041 + $0x68] sm:$0xf]
    %v7069 = vld [vmem:[%s7041 + $0x6c] sm:$0xf]
    %v7070 = vld [vmem:[%s7041 + $0x70] sm:$0xf]
    %v7071 = vld [vmem:[%s7041 + $0x74] sm:$0xf]
    %v7072 = vld [vmem:[%s7041 + $0x78] sm:$0xf]
    %v7073 = vld [vmem:[%s7041 + $0x7c] sm:$0xf]
    %v7084 = vrot.slane %v7037, 1
    %v7085 = vrot.slane %v6590, 1
    %v7086 = vsel %vm4667, %v7084, %v7085
    %v7087 = vrot.slane %v7038, 1
    %v7088 = vrot.slane %v6591, 1
    %v7089 = vsel %vm4667, %v7087, %v7088
    %v7090 = vrot.slane %v6592, 1
    %v7091 = vsel %vm4667, %v7085, %v7090
    %v7092 = vrot.slane %v6593, 1
    %v7093 = vsel %vm4667, %v7088, %v7092
    %v7094 = vrot.slane %v6594, 1
    %v7095 = vsel %vm4667, %v7090, %v7094
    %v7096 = vrot.slane %v6595, 1
    %v7097 = vsel %vm4667, %v7092, %v7096
    %v7098 = vrot.slane %v7039, 1
    %v7099 = vsel %vm4667, %v7094, %v7098
    %v7100 = vrot.slane %v7040, 1
    %v7101 = vsel %vm4667, %v7096, %v7100
    %v7142 = vunpack.c.l.b16 %v7042
    %v7143 = vunpack.c.l.b16 %v7043
    %v7144 = vunpack.c.l.b16 %v7044
    %v7145 = vunpack.c.l.b16 %v7045
    %v7146 = vunpack.c.l.b16 %v7046
    %v7147 = vunpack.c.l.b16 %v7047
    %v7148 = vunpack.c.l.b16 %v7048
    %v7149 = vunpack.c.l.b16 %v7049
    %v7150 = vunpack.c.l.b16 %v7050
    %v7151 = vunpack.c.l.b16 %v7051
    %v7152 = vunpack.c.l.b16 %v7052
    %v7153 = vunpack.c.l.b16 %v7053
    %v7154 = vunpack.c.l.b16 %v7054
    %v7155 = vunpack.c.l.b16 %v7055
    %v7156 = vunpack.c.l.b16 %v7056
    %v7157 = vunpack.c.l.b16 %v7057
    %v7158 = vunpack.c.l.b16 %v7058
    %v7159 = vunpack.c.l.b16 %v7059
    %v7160 = vunpack.c.l.b16 %v7060
    %v7161 = vunpack.c.l.b16 %v7061
    %v7162 = vunpack.c.l.b16 %v7062
    %v7163 = vunpack.c.l.b16 %v7063
    %v7164 = vunpack.c.l.b16 %v7064
    %v7165 = vunpack.c.l.b16 %v7065
    %v7166 = vunpack.c.l.b16 %v7066
    %v7167 = vunpack.c.l.b16 %v7067
    %v7168 = vunpack.c.l.b16 %v7068
    %v7169 = vunpack.c.l.b16 %v7069
    %v7170 = vunpack.c.l.b16 %v7070
    %v7171 = vunpack.c.l.b16 %v7071
    %v7172 = vunpack.c.l.b16 %v7072
    %v7173 = vunpack.c.l.b16 %v7073
    %v7174 = vpack.c.b16 %v7143, %v7142
    %v7175 = vpack.c.b16 %v7145, %v7144
    %v7176 = vpack.c.b16 %v7147, %v7146
    %v7177 = vpack.c.b16 %v7149, %v7148
    %v7178 = vpack.c.b16 %v7151, %v7150
    %v7179 = vpack.c.b16 %v7153, %v7152
    %v7180 = vpack.c.b16 %v7155, %v7154
    %v7181 = vpack.c.b16 %v7157, %v7156
    %v7182 = vpack.c.b16 %v7159, %v7158
    %v7183 = vpack.c.b16 %v7161, %v7160
    %v7184 = vpack.c.b16 %v7163, %v7162
    %v7185 = vpack.c.b16 %v7165, %v7164
    %v7186 = vpack.c.b16 %v7167, %v7166
    %v7187 = vpack.c.b16 %v7169, %v7168
    %v7188 = vpack.c.b16 %v7171, %v7170
    %v7189 = vpack.c.b16 %v7173, %v7172
    %7206 = vmatprep.subr.bf16.mxu0 0
    %7207 = vmatpush1.bf16.msra.mxu0 %v7181
    %7208 = vmatprep.subr.bf16.mxu0 0
    %7209 = vmatpush1.bf16.msra.mxu0 %v7180
    %7210 = vmatprep.subr.bf16.mxu0 0
    %7211 = vmatpush1.bf16.msra.mxu0 %v7179
    %7212 = vmatprep.subr.bf16.mxu0 0
    %7213 = vmatpush1.bf16.msra.mxu0 %v7178
    %7214 = vmatprep.subr.bf16.mxu0 0
    %7215 = vmatpush1.bf16.msra.mxu0 %v7177
    %7216 = vmatprep.subr.bf16.mxu0 0
    %7217 = vmatpush1.bf16.msra.mxu0 %v7176
    %7218 = vmatprep.subr.bf16.mxu0 0
    %7219 = vmatpush1.bf16.msra.mxu0 %v7175
    %7220 = vmatprep.subr.bf16.mxu0 0
    %7221 = vmatpush1.bf16.msra.mxu0 %v7174
    %7222 = vmatprep.subr.bf16.mxu0 0
    %7223 = vmatpush2.bf16.msra.mxu0 %v7189
    %7224 = vmatprep.subr.bf16.mxu0 0
    %7225 = vmatpush2.bf16.msra.mxu0 %v7188
    %7226 = vmatprep.subr.bf16.mxu0 0
    %7227 = vmatpush2.bf16.msra.mxu0 %v7187
    %7228 = vmatprep.subr.bf16.mxu0 0
    %7229 = vmatpush2.bf16.msra.mxu0 %v7186
    %7230 = vmatprep.subr.bf16.mxu0 0
    %7231 = vmatpush2.bf16.msra.mxu0 %v7185
    %7232 = vmatprep.subr.bf16.mxu0 0
    %7233 = vmatpush2.bf16.msra.mxu0 %v7184
    %7234 = vmatprep.subr.bf16.mxu0 0
    %7235 = vmatpush2.bf16.msra.mxu0 %v7183
    %7236 = vmatprep.subr.bf16.mxu0 0
    %7237 = vmatpush2.bf16.msra.mxu0 %v7182
    %7238 = vmatprep.mubr.bf16.mxu0 %v7089
    %7239 = vmatmul.mubr.bf16.gmra.mxu0 %v7086
    %v7240 = vpop.f32.mrf.mxu0
    %v7241 = vadd.f32 0.0, %v7240
    %v7242 = vpop.f32.mrf.mxu0
    %v7243 = vpop.f32.mrf.mxu0
    %v7244 = vadd.f32 0.0, %v7243
    %v7245 = vpop.f32.mrf.mxu0
    %7246 = vmatprep.mubr.bf16.mxu0 %v7093
    %7247 = vmatmul.mubr.bf16.gmra.mxu0 %v7091
    %v7248 = vpop.f32.mrf.mxu0
    %v7249 = vadd.f32 0.0, %v7248
    %v7250 = vpop.f32.mrf.mxu0
    %v7251 = vpop.f32.mrf.mxu0
    %v7252 = vadd.f32 0.0, %v7251
    %v7253 = vpop.f32.mrf.mxu0
    %7254 = vmatprep.mubr.bf16.mxu0 %v7097
    %7255 = vmatmul.mubr.bf16.gmra.mxu0 %v7095
    %v7256 = vpop.f32.mrf.mxu0
    %v7257 = vadd.f32 0.0, %v7256
    %v7258 = vpop.f32.mrf.mxu0
    %v7259 = vpop.f32.mrf.mxu0
    %v7260 = vadd.f32 0.0, %v7259
    %v7261 = vpop.f32.mrf.mxu0
    %7262 = vmatprep.mubr.bf16.mxu0 %v7101
    %7263 = vmatmul.mubr.bf16.gmra.mxu0 %v7099
    %v7264 = vpop.f32.mrf.mxu0
    %v7265 = vadd.f32 0.0, %v7264
    %v7266 = vpop.f32.mrf.mxu0
    %v7267 = vpop.f32.mrf.mxu0
    %v7268 = vadd.f32 0.0, %v7267
    %v7269 = vpop.f32.mrf.mxu0
    %7270 = vdwg.mxu0
    %v7271 = vadd.f32 %v7003, %v7241
    %v7272 = vadd.f32 %v7006, %v7244
    %v7273 = vadd.f32 %v7011, %v7249
    %v7274 = vadd.f32 %v7014, %v7252
    %v7275 = vadd.f32 %v7019, %v7257
    %v7276 = vadd.f32 %v7022, %v7260
    %v7277 = vadd.f32 %v7027, %v7265
    %v7278 = vadd.f32 %v7030, %v7268
    %v7279 = vld [vmem:[#allocation3] sm:$0xf8]
    %v7280 = vld [vmem:[#allocation3 + $0x8] sm:$0xf8]
    %v7281 = vld [vmem:[#allocation3 + $0x80] sm:$0x7]
    %v7282 = vld [vmem:[#allocation3 + $0x88] sm:$0x7]
    %v7283 = vpack.c.bf16 %v6572, %v7279
    %v7284 = vpack.c.bf16 %v6573, %v7280
    %v7285 = vpack.c.bf16 %v7281, %v7281
    %v7286 = vpack.c.bf16 %v7282, %v7282
    %s7287 = scalar_lea.vmem [#allocation12], 384
    %v7288 = vld [vmem:[%s7287] sm:$0xf]
    %v7289 = vld [vmem:[%s7287 + $0x4] sm:$0xf]
    %v7290 = vld [vmem:[%s7287 + $0x8] sm:$0xf]
    %v7291 = vld [vmem:[%s7287 + $0xc] sm:$0xf]
    %v7292 = vld [vmem:[%s7287 + $0x10] sm:$0xf]
    %v7293 = vld [vmem:[%s7287 + $0x14] sm:$0xf]
    %v7294 = vld [vmem:[%s7287 + $0x18] sm:$0xf]
    %v7295 = vld [vmem:[%s7287 + $0x1c] sm:$0xf]
    %v7296 = vld [vmem:[%s7287 + $0x20] sm:$0xf]
    %v7297 = vld [vmem:[%s7287 + $0x24] sm:$0xf]
    %v7298 = vld [vmem:[%s7287 + $0x28] sm:$0xf]
    %v7299 = vld [vmem:[%s7287 + $0x2c] sm:$0xf]
    %v7300 = vld [vmem:[%s7287 + $0x30] sm:$0xf]
    %v7301 = vld [vmem:[%s7287 + $0x34] sm:$0xf]
    %v7302 = vld [vmem:[%s7287 + $0x38] sm:$0xf]
    %v7303 = vld [vmem:[%s7287 + $0x3c] sm:$0xf]
    %v7304 = vld [vmem:[%s7287 + $0x40] sm:$0xf]
    %v7305 = vld [vmem:[%s7287 + $0x44] sm:$0xf]
    %v7306 = vld [vmem:[%s7287 + $0x48] sm:$0xf]
    %v7307 = vld [vmem:[%s7287 + $0x4c] sm:$0xf]
    %v7308 = vld [vmem:[%s7287 + $0x50] sm:$0xf]
    %v7309 = vld [vmem:[%s7287 + $0x54] sm:$0xf]
    %v7310 = vld [vmem:[%s7287 + $0x58] sm:$0xf]
    %v7311 = vld [vmem:[%s7287 + $0x5c] sm:$0xf]
    %v7312 = vld [vmem:[%s7287 + $0x60] sm:$0xf]
    %v7313 = vld [vmem:[%s7287 + $0x64] sm:$0xf]
    %v7314 = vld [vmem:[%s7287 + $0x68] sm:$0xf]
    %v7315 = vld [vmem:[%s7287 + $0x6c] sm:$0xf]
    %v7316 = vld [vmem:[%s7287 + $0x70] sm:$0xf]
    %v7317 = vld [vmem:[%s7287 + $0x74] sm:$0xf]
    %v7318 = vld [vmem:[%s7287 + $0x78] sm:$0xf]
    %v7319 = vld [vmem:[%s7287 + $0x7c] sm:$0xf]
    %v7321 = vshrl.u32 %v7283, 16
    %v7323 = vrot.slane %v7321, 1
    %v7324 = vshll.u32 %v7283, 16
    %v7326 = vrot.slane %v7324, 2
    %v7327 = vor.u32 %v7323, %v7326
    %v7328 = vrot.slane %v6655, 1
    %v7329 = vrot.slane %v6639, 2
    %v7330 = vor.u32 %v7328, %v7329
    %v7331 = vsel %vm5064, %v7327, %v7330
    %v7333 = vshrl.u32 %v7284, 16
    %v7335 = vrot.slane %v7333, 1
    %v7336 = vshll.u32 %v7284, 16
    %v7338 = vrot.slane %v7336, 2
    %v7339 = vor.u32 %v7335, %v7338
    %v7340 = vrot.slane %v6663, 1
    %v7341 = vrot.slane %v6651, 2
    %v7342 = vor.u32 %v7340, %v7341
    %v7343 = vsel %vm5064, %v7339, %v7342
    %v7344 = vrot.slane %v6671, 1
    %v7345 = vrot.slane %v6659, 2
    %v7346 = vor.u32 %v7344, %v7345
    %v7347 = vsel %vm5064, %v7330, %v7346
    %v7348 = vrot.slane %v6679, 1
    %v7349 = vrot.slane %v6667, 2
    %v7350 = vor.u32 %v7348, %v7349
    %v7351 = vsel %vm5064, %v7342, %v7350
    %v7352 = vrot.slane %v6687, 1
    %v7353 = vrot.slane %v6675, 2
    %v7354 = vor.u32 %v7352, %v7353
    %v7355 = vsel %vm5064, %v7346, %v7354
    %v7356 = vrot.slane %v6695, 1
    %v7357 = vrot.slane %v6683, 2
    %v7358 = vor.u32 %v7356, %v7357
    %v7359 = vsel %vm5064, %v7350, %v7358
    %v7361 = vshrl.u32 %v7285, 16
    %v7363 = vrot.slane %v7361, 1
    %v7364 = vshll.u32 %v7285, 16
    %v7366 = vrot.slane %v7364, 2
    %v7367 = vor.u32 %v7363, %v7366
    %v7368 = vsel %vm5064, %v7354, %v7367
    %v7370 = vshrl.u32 %v7286, 16
    %v7372 = vrot.slane %v7370, 1
    %v7373 = vshll.u32 %v7286, 16
    %v7375 = vrot.slane %v7373, 2
    %v7376 = vor.u32 %v7372, %v7375
    %v7377 = vsel %vm5064, %v7358, %v7376
    %v7418 = vunpack.c.l.b16 %v7288
    %v7419 = vunpack.c.l.b16 %v7289
    %v7420 = vunpack.c.l.b16 %v7290
    %v7421 = vunpack.c.l.b16 %v7291
    %v7422 = vunpack.c.l.b16 %v7292
    %v7423 = vunpack.c.l.b16 %v7293
    %v7424 = vunpack.c.l.b16 %v7294
    %v7425 = vunpack.c.l.b16 %v7295
    %v7426 = vunpack.c.l.b16 %v7296
    %v7427 = vunpack.c.l.b16 %v7297
    %v7428 = vunpack.c.l.b16 %v7298
    %v7429 = vunpack.c.l.b16 %v7299
    %v7430 = vunpack.c.l.b16 %v7300
    %v7431 = vunpack.c.l.b16 %v7301
    %v7432 = vunpack.c.l.b16 %v7302
    %v7433 = vunpack.c.l.b16 %v7303
    %v7434 = vunpack.c.l.b16 %v7304
    %v7435 = vunpack.c.l.b16 %v7305
    %v7436 = vunpack.c.l.b16 %v7306
    %v7437 = vunpack.c.l.b16 %v7307
    %v7438 = vunpack.c.l.b16 %v7308
    %v7439 = vunpack.c.l.b16 %v7309
    %v7440 = vunpack.c.l.b16 %v7310
    %v7441 = vunpack.c.l.b16 %v7311
    %v7442 = vunpack.c.l.b16 %v7312
    %v7443 = vunpack.c.l.b16 %v7313
    %v7444 = vunpack.c.l.b16 %v7314
    %v7445 = vunpack.c.l.b16 %v7315
    %v7446 = vunpack.c.l.b16 %v7316
    %v7447 = vunpack.c.l.b16 %v7317
    %v7448 = vunpack.c.l.b16 %v7318
    %v7449 = vunpack.c.l.b16 %v7319
    %v7450 = vpack.c.b16 %v7419, %v7418
    %v7451 = vpack.c.b16 %v7421, %v7420
    %v7452 = vpack.c.b16 %v7423, %v7422
    %v7453 = vpack.c.b16 %v7425, %v7424
    %v7454 = vpack.c.b16 %v7427, %v7426
    %v7455 = vpack.c.b16 %v7429, %v7428
    %v7456 = vpack.c.b16 %v7431, %v7430
    %v7457 = vpack.c.b16 %v7433, %v7432
    %v7458 = vpack.c.b16 %v7435, %v7434
    %v7459 = vpack.c.b16 %v7437, %v7436
    %v7460 = vpack.c.b16 %v7439, %v7438
    %v7461 = vpack.c.b16 %v7441, %v7440
    %v7462 = vpack.c.b16 %v7443, %v7442
    %v7463 = vpack.c.b16 %v7445, %v7444
    %v7464 = vpack.c.b16 %v7447, %v7446
    %v7465 = vpack.c.b16 %v7449, %v7448
    %7482 = vmatprep.subr.bf16.mxu0 0
    %7483 = vmatpush1.bf16.msra.mxu0 %v7457
    %7484 = vmatprep.subr.bf16.mxu0 0
    %7485 = vmatpush1.bf16.msra.mxu0 %v7456
    %7486 = vmatprep.subr.bf16.mxu0 0
    %7487 = vmatpush1.bf16.msra.mxu0 %v7455
    %7488 = vmatprep.subr.bf16.mxu0 0
    %7489 = vmatpush1.bf16.msra.mxu0 %v7454
    %7490 = vmatprep.subr.bf16.mxu0 0
    %7491 = vmatpush1.bf16.msra.mxu0 %v7453
    %7492 = vmatprep.subr.bf16.mxu0 0
    %7493 = vmatpush1.bf16.msra.mxu0 %v7452
    %7494 = vmatprep.subr.bf16.mxu0 0
    %7495 = vmatpush1.bf16.msra.mxu0 %v7451
    %7496 = vmatprep.subr.bf16.mxu0 0
    %7497 = vmatpush1.bf16.msra.mxu0 %v7450
    %7498 = vmatprep.subr.bf16.mxu0 0
    %7499 = vmatpush2.bf16.msra.mxu0 %v7465
    %7500 = vmatprep.subr.bf16.mxu0 0
    %7501 = vmatpush2.bf16.msra.mxu0 %v7464
    %7502 = vmatprep.subr.bf16.mxu0 0
    %7503 = vmatpush2.bf16.msra.mxu0 %v7463
    %7504 = vmatprep.subr.bf16.mxu0 0
    %7505 = vmatpush2.bf16.msra.mxu0 %v7462
    %7506 = vmatprep.subr.bf16.mxu0 0
    %7507 = vmatpush2.bf16.msra.mxu0 %v7461
    %7508 = vmatprep.subr.bf16.mxu0 0
    %7509 = vmatpush2.bf16.msra.mxu0 %v7460
    %7510 = vmatprep.subr.bf16.mxu0 0
    %7511 = vmatpush2.bf16.msra.mxu0 %v7459
    %7512 = vmatprep.subr.bf16.mxu0 0
    %7513 = vmatpush2.bf16.msra.mxu0 %v7458
    %7514 = vmatprep.mubr.bf16.mxu0 %v7343
    %7515 = vmatmul.mubr.bf16.gmra.mxu0 %v7331
    %v7516 = vpop.f32.mrf.mxu0
    %v7517 = vadd.f32 0.0, %v7516
    %v7518 = vpop.f32.mrf.mxu0
    %v7519 = vpop.f32.mrf.mxu0
    %v7520 = vadd.f32 0.0, %v7519
    %v7521 = vpop.f32.mrf.mxu0
    %7522 = vmatprep.mubr.bf16.mxu0 %v7351
    %7523 = vmatmul.mubr.bf16.gmra.mxu0 %v7347
    %v7524 = vpop.f32.mrf.mxu0
    %v7525 = vadd.f32 0.0, %v7524
    %v7526 = vpop.f32.mrf.mxu0
    %v7527 = vpop.f32.mrf.mxu0
    %v7528 = vadd.f32 0.0, %v7527
    %v7529 = vpop.f32.mrf.mxu0
    %7530 = vmatprep.mubr.bf16.mxu0 %v7359
    %7531 = vmatmul.mubr.bf16.gmra.mxu0 %v7355
    %v7532 = vpop.f32.mrf.mxu0
    %v7533 = vadd.f32 0.0, %v7532
    %v7534 = vpop.f32.mrf.mxu0
    %v7535 = vpop.f32.mrf.mxu0
    %v7536 = vadd.f32 0.0, %v7535
    %v7537 = vpop.f32.mrf.mxu0
    %7538 = vmatprep.mubr.bf16.mxu0 %v7377
    %7539 = vmatmul.mubr.bf16.gmra.mxu0 %v7368
    %v7540 = vpop.f32.mrf.mxu0
    %v7541 = vadd.f32 0.0, %v7540
    %v7542 = vpop.f32.mrf.mxu0
    %v7543 = vpop.f32.mrf.mxu0
    %v7544 = vadd.f32 0.0, %v7543
    %v7545 = vpop.f32.mrf.mxu0
    %7546 = vdwg.mxu0
    %v7547 = vadd.f32 %v7271, %v7517
    %v7548 = vadd.f32 %v7272, %v7520
    %v7549 = vadd.f32 %v7273, %v7525
    %v7550 = vadd.f32 %v7274, %v7528
    %v7551 = vadd.f32 %v7275, %v7533
    %v7552 = vadd.f32 %v7276, %v7536
    %v7553 = vadd.f32 %v7277, %v7541
    %v7554 = vadd.f32 %v7278, %v7544
    %v7555 = vld [vmem:[#allocation3] sm:$0xf0]
    %v7556 = vld [vmem:[#allocation3 + $0x8] sm:$0xf0]
    %v7557 = vld [vmem:[#allocation3 + $0x80] sm:$0xf]
    %v7558 = vld [vmem:[#allocation3 + $0x88] sm:$0xf]
    %v7559 = vpack.c.bf16 %v6572, %v7555
    %v7560 = vpack.c.bf16 %v6573, %v7556
    %v7561 = vpack.c.bf16 %v7557, %v7557
    %v7562 = vpack.c.bf16 %v7558, %v7558
    %s7563 = scalar_lea.vmem [#allocation12], 512
    %v7564 = vld [vmem:[%s7563] sm:$0xf]
    %v7565 = vld [vmem:[%s7563 + $0x4] sm:$0xf]
    %v7566 = vld [vmem:[%s7563 + $0x8] sm:$0xf]
    %v7567 = vld [vmem:[%s7563 + $0xc] sm:$0xf]
    %v7568 = vld [vmem:[%s7563 + $0x10] sm:$0xf]
    %v7569 = vld [vmem:[%s7563 + $0x14] sm:$0xf]
    %v7570 = vld [vmem:[%s7563 + $0x18] sm:$0xf]
    %v7571 = vld [vmem:[%s7563 + $0x1c] sm:$0xf]
    %v7572 = vld [vmem:[%s7563 + $0x20] sm:$0xf]
    %v7573 = vld [vmem:[%s7563 + $0x24] sm:$0xf]
    %v7574 = vld [vmem:[%s7563 + $0x28] sm:$0xf]
    %v7575 = vld [vmem:[%s7563 + $0x2c] sm:$0xf]
    %v7576 = vld [vmem:[%s7563 + $0x30] sm:$0xf]
    %v7577 = vld [vmem:[%s7563 + $0x34] sm:$0xf]
    %v7578 = vld [vmem:[%s7563 + $0x38] sm:$0xf]
    %v7579 = vld [vmem:[%s7563 + $0x3c] sm:$0xf]
    %v7580 = vld [vmem:[%s7563 + $0x40] sm:$0xf]
    %v7581 = vld [vmem:[%s7563 + $0x44] sm:$0xf]
    %v7582 = vld [vmem:[%s7563 + $0x48] sm:$0xf]
    %v7583 = vld [vmem:[%s7563 + $0x4c] sm:$0xf]
    %v7584 = vld [vmem:[%s7563 + $0x50] sm:$0xf]
    %v7585 = vld [vmem:[%s7563 + $0x54] sm:$0xf]
    %v7586 = vld [vmem:[%s7563 + $0x58] sm:$0xf]
    %v7587 = vld [vmem:[%s7563 + $0x5c] sm:$0xf]
    %v7588 = vld [vmem:[%s7563 + $0x60] sm:$0xf]
    %v7589 = vld [vmem:[%s7563 + $0x64] sm:$0xf]
    %v7590 = vld [vmem:[%s7563 + $0x68] sm:$0xf]
    %v7591 = vld [vmem:[%s7563 + $0x6c] sm:$0xf]
    %v7592 = vld [vmem:[%s7563 + $0x70] sm:$0xf]
    %v7593 = vld [vmem:[%s7563 + $0x74] sm:$0xf]
    %v7594 = vld [vmem:[%s7563 + $0x78] sm:$0xf]
    %v7595 = vld [vmem:[%s7563 + $0x7c] sm:$0xf]
    %v7600 = vrot.slane %v7559, 2
    %v7601 = vrot.slane %v6590, 2
    %v7602 = vsel %vm5521, %v7600, %v7601
    %v7603 = vrot.slane %v7560, 2
    %v7604 = vrot.slane %v6591, 2
    %v7605 = vsel %vm5521, %v7603, %v7604
    %v7606 = vrot.slane %v6592, 2
    %v7607 = vsel %vm5521, %v7601, %v7606
    %v7608 = vrot.slane %v6593, 2
    %v7609 = vsel %vm5521, %v7604, %v7608
    %v7610 = vrot.slane %v6594, 2
    %v7611 = vsel %vm5521, %v7606, %v7610
    %v7612 = vrot.slane %v6595, 2
    %v7613 = vsel %vm5521, %v7608, %v7612
    %v7614 = vrot.slane %v7561, 2
    %v7615 = vsel %vm5521, %v7610, %v7614
    %v7616 = vrot.slane %v7562, 2
    %v7617 = vsel %vm5521, %v7612, %v7616
    %v7658 = vunpack.c.l.b16 %v7564
    %v7659 = vunpack.c.l.b16 %v7565
    %v7660 = vunpack.c.l.b16 %v7566
    %v7661 = vunpack.c.l.b16 %v7567
    %v7662 = vunpack.c.l.b16 %v7568
    %v7663 = vunpack.c.l.b16 %v7569
    %v7664 = vunpack.c.l.b16 %v7570
    %v7665 = vunpack.c.l.b16 %v7571
    %v7666 = vunpack.c.l.b16 %v7572
    %v7667 = vunpack.c.l.b16 %v7573
    %v7668 = vunpack.c.l.b16 %v7574
    %v7669 = vunpack.c.l.b16 %v7575
    %v7670 = vunpack.c.l.b16 %v7576
    %v7671 = vunpack.c.l.b16 %v7577
    %v7672 = vunpack.c.l.b16 %v7578
    %v7673 = vunpack.c.l.b16 %v7579
    %v7674 = vunpack.c.l.b16 %v7580
    %v7675 = vunpack.c.l.b16 %v7581
    %v7676 = vunpack.c.l.b16 %v7582
    %v7677 = vunpack.c.l.b16 %v7583
    %v7678 = vunpack.c.l.b16 %v7584
    %v7679 = vunpack.c.l.b16 %v7585
    %v7680 = vunpack.c.l.b16 %v7586
    %v7681 = vunpack.c.l.b16 %v7587
    %v7682 = vunpack.c.l.b16 %v7588
    %v7683 = vunpack.c.l.b16 %v7589
    %v7684 = vunpack.c.l.b16 %v7590
    %v7685 = vunpack.c.l.b16 %v7591
    %v7686 = vunpack.c.l.b16 %v7592
    %v7687 = vunpack.c.l.b16 %v7593
    %v7688 = vunpack.c.l.b16 %v7594
    %v7689 = vunpack.c.l.b16 %v7595
    %v7690 = vpack.c.b16 %v7659, %v7658
    %v7691 = vpack.c.b16 %v7661, %v7660
    %v7692 = vpack.c.b16 %v7663, %v7662
    %v7693 = vpack.c.b16 %v7665, %v7664
    %v7694 = vpack.c.b16 %v7667, %v7666
    %v7695 = vpack.c.b16 %v7669, %v7668
    %v7696 = vpack.c.b16 %v7671, %v7670
    %v7697 = vpack.c.b16 %v7673, %v7672
    %v7698 = vpack.c.b16 %v7675, %v7674
    %v7699 = vpack.c.b16 %v7677, %v7676
    %v7700 = vpack.c.b16 %v7679, %v7678
    %v7701 = vpack.c.b16 %v7681, %v7680
    %v7702 = vpack.c.b16 %v7683, %v7682
    %v7703 = vpack.c.b16 %v7685, %v7684
    %v7704 = vpack.c.b16 %v7687, %v7686
    %v7705 = vpack.c.b16 %v7689, %v7688
    %7722 = vmatprep.subr.bf16.mxu0 0
    %7723 = vmatpush1.bf16.msra.mxu0 %v7697
    %7724 = vmatprep.subr.bf16.mxu0 0
    %7725 = vmatpush1.bf16.msra.mxu0 %v7696
    %7726 = vmatprep.subr.bf16.mxu0 0
    %7727 = vmatpush1.bf16.msra.mxu0 %v7695
    %7728 = vmatprep.subr.bf16.mxu0 0
    %7729 = vmatpush1.bf16.msra.mxu0 %v7694
    %7730 = vmatprep.subr.bf16.mxu0 0
    %7731 = vmatpush1.bf16.msra.mxu0 %v7693
    %7732 = vmatprep.subr.bf16.mxu0 0
    %7733 = vmatpush1.bf16.msra.mxu0 %v7692
    %7734 = vmatprep.subr.bf16.mxu0 0
    %7735 = vmatpush1.bf16.msra.mxu0 %v7691
    %7736 = vmatprep.subr.bf16.mxu0 0
    %7737 = vmatpush1.bf16.msra.mxu0 %v7690
    %7738 = vmatprep.subr.bf16.mxu0 0
    %7739 = vmatpush2.bf16.msra.mxu0 %v7705
    %7740 = vmatprep.subr.bf16.mxu0 0
    %7741 = vmatpush2.bf16.msra.mxu0 %v7704
    %7742 = vmatprep.subr.bf16.mxu0 0
    %7743 = vmatpush2.bf16.msra.mxu0 %v7703
    %7744 = vmatprep.subr.bf16.mxu0 0
    %7745 = vmatpush2.bf16.msra.mxu0 %v7702
    %7746 = vmatprep.subr.bf16.mxu0 0
    %7747 = vmatpush2.bf16.msra.mxu0 %v7701
    %7748 = vmatprep.subr.bf16.mxu0 0
    %7749 = vmatpush2.bf16.msra.mxu0 %v7700
    %7750 = vmatprep.subr.bf16.mxu0 0
    %7751 = vmatpush2.bf16.msra.mxu0 %v7699
    %7752 = vmatprep.subr.bf16.mxu0 0
    %7753 = vmatpush2.bf16.msra.mxu0 %v7698
    %7754 = vmatprep.mubr.bf16.mxu0 %v7605
    %7755 = vmatmul.mubr.bf16.gmra.mxu0 %v7602
    %v7756 = vpop.f32.mrf.mxu0
    %v7757 = vadd.f32 0.0, %v7756
    %v7758 = vpop.f32.mrf.mxu0
    %v7759 = vpop.f32.mrf.mxu0
    %v7760 = vadd.f32 0.0, %v7759
    %v7761 = vpop.f32.mrf.mxu0
    %7762 = vmatprep.mubr.bf16.mxu0 %v7609
    %7763 = vmatmul.mubr.bf16.gmra.mxu0 %v7607
    %v7764 = vpop.f32.mrf.mxu0
    %v7765 = vadd.f32 0.0, %v7764
    %v7766 = vpop.f32.mrf.mxu0
    %v7767 = vpop.f32.mrf.mxu0
    %v7768 = vadd.f32 0.0, %v7767
    %v7769 = vpop.f32.mrf.mxu0
    %7770 = vmatprep.mubr.bf16.mxu0 %v7613
    %7771 = vmatmul.mubr.bf16.gmra.mxu0 %v7611
    %v7772 = vpop.f32.mrf.mxu0
    %v7773 = vadd.f32 0.0, %v7772
    %v7774 = vpop.f32.mrf.mxu0
    %v7775 = vpop.f32.mrf.mxu0
    %v7776 = vadd.f32 0.0, %v7775
    %v7777 = vpop.f32.mrf.mxu0
    %7778 = vmatprep.mubr.bf16.mxu0 %v7617
    %7779 = vmatmul.mubr.bf16.gmra.mxu0 %v7615
    %v7780 = vpop.f32.mrf.mxu0
    %v7781 = vadd.f32 0.0, %v7780
    %v7782 = vpop.f32.mrf.mxu0
    %v7783 = vpop.f32.mrf.mxu0
    %v7784 = vadd.f32 0.0, %v7783
    %v7785 = vpop.f32.mrf.mxu0
    %7786 = vdwg.mxu0
    %v7787 = vadd.f32 %v7547, %v7757
    %v7788 = vadd.f32 %v7548, %v7760
    %v7789 = vadd.f32 %v7549, %v7765
    %v7790 = vadd.f32 %v7550, %v7768
    %v7791 = vadd.f32 %v7551, %v7773
    %v7792 = vadd.f32 %v7552, %v7776
    %v7793 = vadd.f32 %v7553, %v7781
    %v7794 = vadd.f32 %v7554, %v7784
    %v7795 = vld [vmem:[%s11] sm:$0x1]
    %v7797 = vlaneseq
    %v7798 = vshrl.u32 %v7797, 7
    %v7799 = vsub.s32 0, %v7798
    %v7800 = vrot.slane %v7795, %v7799
    %v7802 = vadd.f32 %v7787, %v7800
    %v7803 = vadd.f32 %v7788, %v7800
    %v7804 = vadd.f32 %v7789, %v7800
    %v7805 = vadd.f32 %v7790, %v7800
    %v7806 = vadd.f32 %v7791, %v7800
    %v7807 = vadd.f32 %v7792, %v7800
    %v7808 = vadd.f32 %v7793, %v7800
    %v7809 = vadd.f32 %v7794, %v7800
    %v7810 = vmax.f32 %v7802, 0.0
    %v7811 = vmax.f32 %v7803, 0.0
    %v7812 = vmax.f32 %v7804, 0.0
    %v7813 = vmax.f32 %v7805, 0.0
    %v7814 = vmax.f32 %v7806, 0.0
    %v7815 = vmax.f32 %v7807, 0.0
    %v7816 = vmax.f32 %v7808, 0.0
    %v7817 = vmax.f32 %v7809, 0.0
    %v7818 = vpack.c.bf16 %v7811, %v7810
    %v7819 = vpack.c.bf16 %v7813, %v7812
    %v7820 = vpack.c.bf16 %v7815, %v7814
    %v7821 = vpack.c.bf16 %v7817, %v7816
    %v7822 = vld [vmem:[#allocation14] sm:$0xf]
    %v7823 = vld [vmem:[#allocation14 + $0x4] sm:$0xf]
    %v7824 = vld [vmem:[#allocation14 + $0x8] sm:$0xf]
    %v7825 = vld [vmem:[#allocation14 + $0xc] sm:$0xf]
    %v7826 = vld [vmem:[#allocation14 + $0x10] sm:$0xf]
    %v7827 = vld [vmem:[#allocation14 + $0x14] sm:$0xf]
    %v7828 = vld [vmem:[#allocation14 + $0x18] sm:$0xf]
    %v7829 = vld [vmem:[#allocation14 + $0x1c] sm:$0xf]
    %v7830 = vld [vmem:[#allocation14 + $0x20] sm:$0xf]
    %v7831 = vld [vmem:[#allocation14 + $0x24] sm:$0xf]
    %v7832 = vld [vmem:[#allocation14 + $0x28] sm:$0xf]
    %v7833 = vld [vmem:[#allocation14 + $0x2c] sm:$0xf]
    %v7834 = vld [vmem:[#allocation14 + $0x30] sm:$0xf]
    %v7835 = vld [vmem:[#allocation14 + $0x34] sm:$0xf]
    %v7836 = vld [vmem:[#allocation14 + $0x38] sm:$0xf]
    %v7837 = vld [vmem:[#allocation14 + $0x3c] sm:$0xf]
    %v7838 = vld [vmem:[%s13] sm:$0x1]
    %v7840 = vlaneseq
    %v7841 = vshrl.u32 %v7840, 7
    %v7842 = vsub.s32 0, %v7841
    %v7843 = vrot.slane %v7838, %v7842
    %v7861 = vunpack.c.l.b16 %v7822
    %v7862 = vunpack.c.l.b16 %v7823
    %v7863 = vunpack.c.l.b16 %v7824
    %v7864 = vunpack.c.l.b16 %v7825
    %v7865 = vunpack.c.l.b16 %v7826
    %v7866 = vunpack.c.l.b16 %v7827
    %v7867 = vunpack.c.l.b16 %v7828
    %v7868 = vunpack.c.l.b16 %v7829
    %v7869 = vunpack.c.l.b16 %v7830
    %v7870 = vunpack.c.l.b16 %v7831
    %v7871 = vunpack.c.l.b16 %v7832
    %v7872 = vunpack.c.l.b16 %v7833
    %v7873 = vunpack.c.l.b16 %v7834
    %v7874 = vunpack.c.l.b16 %v7835
    %v7875 = vunpack.c.l.b16 %v7836
    %v7876 = vunpack.c.l.b16 %v7837
    %v7877 = vpack.c.b16 %v7862, %v7861
    %v7878 = vpack.c.b16 %v7864, %v7863
    %v7879 = vpack.c.b16 %v7866, %v7865
    %v7880 = vpack.c.b16 %v7868, %v7867
    %v7881 = vpack.c.b16 %v7870, %v7869
    %v7882 = vpack.c.b16 %v7872, %v7871
    %v7883 = vpack.c.b16 %v7874, %v7873
    %v7884 = vpack.c.b16 %v7876, %v7875
    %7893 = vmatprep.subr.bf16.mxu0 0
    %7894 = vmatpush1.bf16.msra.mxu0 %v7884
    %7895 = vmatprep.subr.bf16.mxu0 0
    %7896 = vmatpush1.bf16.msra.mxu0 %v7883
    %7897 = vmatprep.subr.bf16.mxu0 0
    %7898 = vmatpush1.bf16.msra.mxu0 %v7882
    %7899 = vmatprep.subr.bf16.mxu0 0
    %7900 = vmatpush1.bf16.msra.mxu0 %v7881
    %7901 = vmatprep.subr.bf16.mxu0 0
    %7902 = vmatpush1.bf16.msra.mxu0 %v7880
    %7903 = vmatprep.subr.bf16.mxu0 0
    %7904 = vmatpush1.bf16.msra.mxu0 %v7879
    %7905 = vmatprep.subr.bf16.mxu0 0
    %7906 = vmatpush1.bf16.msra.mxu0 %v7878
    %7907 = vmatprep.subr.bf16.mxu0 0
    %7908 = vmatpush1.bf16.msra.mxu0 %v7877
    %7909 = vmatprep.subr.bf16.mxu0 0
    %7910 = vmatpush2.bf16.msra.mxu0 0
    %7911 = vmatprep.subr.bf16.mxu0 0
    %7912 = vmatpush2.bf16.msra.mxu0 0
    %7913 = vmatprep.subr.bf16.mxu0 0
    %7914 = vmatpush2.bf16.msra.mxu0 0
    %7915 = vmatprep.subr.bf16.mxu0 0
    %7916 = vmatpush2.bf16.msra.mxu0 0
    %7917 = vmatprep.subr.bf16.mxu0 0
    %7918 = vmatpush2.bf16.msra.mxu0 0
    %7919 = vmatprep.subr.bf16.mxu0 0
    %7920 = vmatpush2.bf16.msra.mxu0 0
    %7921 = vmatprep.subr.bf16.mxu0 0
    %7922 = vmatpush2.bf16.msra.mxu0 0
    %7923 = vmatprep.subr.bf16.mxu0 0
    %7924 = vmatpush2.bf16.msra.mxu0 0
    %7925 = vmatprep.mubr.bf16.mxu0 0
    %7926 = vmatmul.mubr.bf16.gmra.mxu0 %v7818
    %v7927 = vpop.f32.mrf.mxu0
    %v7928 = vadd.f32 %v7843, %v7927
    %v7929 = vpop.f32.mrf.mxu0
    %v7930 = vpop.f32.mrf.mxu0
    %v7931 = vadd.f32 %v7843, %v7930
    %v7932 = vpop.f32.mrf.mxu0
    %7933 = vmatprep.mubr.bf16.mxu0 0
    %7934 = vmatmul.mubr.bf16.gmra.mxu0 %v7819
    %v7935 = vpop.f32.mrf.mxu0
    %v7936 = vadd.f32 %v7843, %v7935
    %v7937 = vpop.f32.mrf.mxu0
    %v7938 = vpop.f32.mrf.mxu0
    %v7939 = vadd.f32 %v7843, %v7938
    %v7940 = vpop.f32.mrf.mxu0
    %7941 = vmatprep.mubr.bf16.mxu0 0
    %7942 = vmatmul.mubr.bf16.gmra.mxu0 %v7820
    %v7943 = vpop.f32.mrf.mxu0
    %v7944 = vadd.f32 %v7843, %v7943
    %v7945 = vpop.f32.mrf.mxu0
    %v7946 = vpop.f32.mrf.mxu0
    %v7947 = vadd.f32 %v7843, %v7946
    %v7948 = vpop.f32.mrf.mxu0
    %7949 = vmatprep.mubr.bf16.mxu0 0
    %7950 = vmatmul.mubr.bf16.gmra.mxu0 %v7821
    %v7951 = vpop.f32.mrf.mxu0
    %v7952 = vadd.f32 %v7843, %v7951
    %v7953 = vpop.f32.mrf.mxu0
    %v7954 = vpop.f32.mrf.mxu0
    %v7955 = vadd.f32 %v7843, %v7954
    %v7956 = vpop.f32.mrf.mxu0
    %7957 = vdwg.mxu0
    %v7958 = vmax.f32 %v7928, 0.0
    %v7959 = vmax.f32 %v7931, 0.0
    %v7960 = vmax.f32 %v7936, 0.0
    %v7961 = vmax.f32 %v7939, 0.0
    %v7962 = vmax.f32 %v7944, 0.0
    %v7963 = vmax.f32 %v7947, 0.0
    %v7964 = vmax.f32 %v7952, 0.0
    %v7965 = vmax.f32 %v7955, 0.0
    %v7966 = vpack.c.bf16 %v7959, %v7958
    %v7967 = vpack.c.bf16 %v7961, %v7960
    %v7968 = vpack.c.bf16 %v7963, %v7962
    %v7969 = vpack.c.bf16 %v7965, %v7964
    %v7970 = vld [vmem:[%s14] sm:$0xff]
    %v7971 = vld [vmem:[%s14 + $0x8] sm:$0xff]
    %v7972 = vld [vmem:[%s14 + $0x10] sm:$0xff]
    %v7973 = vld [vmem:[%s14 + $0x18] sm:$0xff]
    %v7974 = vld [vmem:[%s14 + $0x20] sm:$0xff]
    %v7975 = vld [vmem:[%s14 + $0x28] sm:$0xff]
    %v7976 = vld [vmem:[%s14 + $0x30] sm:$0xff]
    %v7977 = vld [vmem:[%s14 + $0x38] sm:$0xff]
    %v7978 = vld [vmem:[%s14 + $0x40] sm:$0xff]
    %v7979 = vld [vmem:[%s14 + $0x48] sm:$0xff]
    %v7980 = vld [vmem:[%s14 + $0x50] sm:$0xff]
    %v7981 = vld [vmem:[%s14 + $0x58] sm:$0xff]
    %v7982 = vld [vmem:[%s14 + $0x60] sm:$0xff]
    %v7983 = vld [vmem:[%s14 + $0x68] sm:$0xff]
    %v7984 = vld [vmem:[%s14 + $0x70] sm:$0xff]
    %v7985 = vld [vmem:[%s14 + $0x78] sm:$0xff]
    %v7986 = vld [vmem:[%s15] sm:$0x3]
    %v7988 = vlaneseq
    %v7989 = vshrl.u32 %v7988, 7
    %v7990 = vsub.s32 0, %v7989
    %v7991 = vrot.slane %v7986, %v7990
    %v7992 = vlaneseq
    %v7993 = vshrl.u32 %v7992, 7
    %v7994 = vsub.s32 1, %v7993
    %v7995 = vrot.slane %v7986, %v7994
    %v8014 = vunpack.c.l.b16 %v7970
    %v8015 = vunpack.c.h.b16 %v7970
    %v8016 = vunpack.c.l.b16 %v7971
    %v8017 = vunpack.c.h.b16 %v7971
    %v8018 = vunpack.c.l.b16 %v7972
    %v8019 = vunpack.c.h.b16 %v7972
    %v8020 = vunpack.c.l.b16 %v7973
    %v8021 = vunpack.c.h.b16 %v7973
    %v8022 = vunpack.c.l.b16 %v7974
    %v8023 = vunpack.c.h.b16 %v7974
    %v8024 = vunpack.c.l.b16 %v7975
    %v8025 = vunpack.c.h.b16 %v7975
    %v8026 = vunpack.c.l.b16 %v7976
    %v8027 = vunpack.c.h.b16 %v7976
    %v8028 = vunpack.c.l.b16 %v7977
    %v8029 = vunpack.c.h.b16 %v7977
    %v8030 = vunpack.c.l.b16 %v7978
    %v8031 = vunpack.c.h.b16 %v7978
    %v8032 = vunpack.c.l.b16 %v7979
    %v8033 = vunpack.c.h.b16 %v7979
    %v8034 = vunpack.c.l.b16 %v7980
    %v8035 = vunpack.c.h.b16 %v7980
    %v8036 = vunpack.c.l.b16 %v7981
    %v8037 = vunpack.c.h.b16 %v7981
    %v8038 = vunpack.c.l.b16 %v7982
    %v8039 = vunpack.c.h.b16 %v7982
    %v8040 = vunpack.c.l.b16 %v7983
    %v8041 = vunpack.c.h.b16 %v7983
    %v8042 = vunpack.c.l.b16 %v7984
    %v8043 = vunpack.c.h.b16 %v7984
    %v8044 = vunpack.c.l.b16 %v7985
    %v8045 = vunpack.c.h.b16 %v7985
    %v8046 = vpack.c.b16 %v8016, %v8014
    %v8047 = vpack.c.b16 %v8017, %v8015
    %v8048 = vpack.c.b16 %v8020, %v8018
    %v8049 = vpack.c.b16 %v8021, %v8019
    %v8050 = vpack.c.b16 %v8024, %v8022
    %v8051 = vpack.c.b16 %v8025, %v8023
    %v8052 = vpack.c.b16 %v8028, %v8026
    %v8053 = vpack.c.b16 %v8029, %v8027
    %v8054 = vpack.c.b16 %v8032, %v8030
    %v8055 = vpack.c.b16 %v8033, %v8031
    %v8056 = vpack.c.b16 %v8036, %v8034
    %v8057 = vpack.c.b16 %v8037, %v8035
    %v8058 = vpack.c.b16 %v8040, %v8038
    %v8059 = vpack.c.b16 %v8041, %v8039
    %v8060 = vpack.c.b16 %v8044, %v8042
    %v8061 = vpack.c.b16 %v8045, %v8043
    %8078 = vmatprep.subr.bf16.mxu0 %v8061
    %8079 = vmatpush1.bf16.msra.mxu0 %v8060
    %8080 = vmatprep.subr.bf16.mxu0 %v8059
    %8081 = vmatpush1.bf16.msra.mxu0 %v8058
    %8082 = vmatprep.subr.bf16.mxu0 %v8057
    %8083 = vmatpush1.bf16.msra.mxu0 %v8056
    %8084 = vmatprep.subr.bf16.mxu0 %v8055
    %8085 = vmatpush1.bf16.msra.mxu0 %v8054
    %8086 = vmatprep.subr.bf16.mxu0 %v8053
    %8087 = vmatpush1.bf16.msra.mxu0 %v8052
    %8088 = vmatprep.subr.bf16.mxu0 %v8051
    %8089 = vmatpush1.bf16.msra.mxu0 %v8050
    %8090 = vmatprep.subr.bf16.mxu0 %v8049
    %8091 = vmatpush1.bf16.msra.mxu0 %v8048
    %8092 = vmatprep.subr.bf16.mxu0 %v8047
    %8093 = vmatpush1.bf16.msra.mxu0 %v8046
    %8094 = vmatprep.subr.bf16.mxu0 0
    %8095 = vmatpush2.bf16.msra.mxu0 0
    %8096 = vmatprep.subr.bf16.mxu0 0
    %8097 = vmatpush2.bf16.msra.mxu0 0
    %8098 = vmatprep.subr.bf16.mxu0 0
    %8099 = vmatpush2.bf16.msra.mxu0 0
    %8100 = vmatprep.subr.bf16.mxu0 0
    %8101 = vmatpush2.bf16.msra.mxu0 0
    %8102 = vmatprep.subr.bf16.mxu0 0
    %8103 = vmatpush2.bf16.msra.mxu0 0
    %8104 = vmatprep.subr.bf16.mxu0 0
    %8105 = vmatpush2.bf16.msra.mxu0 0
    %8106 = vmatprep.subr.bf16.mxu0 0
    %8107 = vmatpush2.bf16.msra.mxu0 0
    %8108 = vmatprep.subr.bf16.mxu0 0
    %8109 = vmatpush2.bf16.msra.mxu0 0
    %8110 = vmatprep.mubr.bf16.mxu0 0
    %8111 = vmatmul.mubr.bf16.gmra.mxu0 %v7966
    %v8112 = vpop.f32.mrf.mxu0
    %v8113 = vadd.f32 %v7991, %v8112
    %v8114 = vpop.f32.mrf.mxu0
    %v8115 = vadd.f32 %v7995, %v8114
    %v8116 = vpop.f32.mrf.mxu0
    %v8117 = vadd.f32 %v7991, %v8116
    %v8118 = vpop.f32.mrf.mxu0
    %v8119 = vadd.f32 %v7995, %v8118
    %8120 = vmatprep.mubr.bf16.mxu0 0
    %8121 = vmatmul.mubr.bf16.gmra.mxu0 %v7967
    %v8122 = vpop.f32.mrf.mxu0
    %v8123 = vadd.f32 %v7991, %v8122
    %v8124 = vpop.f32.mrf.mxu0
    %v8125 = vadd.f32 %v7995, %v8124
    %v8126 = vpop.f32.mrf.mxu0
    %v8127 = vadd.f32 %v7991, %v8126
    %v8128 = vpop.f32.mrf.mxu0
    %v8129 = vadd.f32 %v7995, %v8128
    %8130 = vmatprep.mubr.bf16.mxu0 0
    %8131 = vmatmul.mubr.bf16.gmra.mxu0 %v7968
    %v8132 = vpop.f32.mrf.mxu0
    %v8133 = vadd.f32 %v7991, %v8132
    %v8134 = vpop.f32.mrf.mxu0
    %v8135 = vadd.f32 %v7995, %v8134
    %v8136 = vpop.f32.mrf.mxu0
    %v8137 = vadd.f32 %v7991, %v8136
    %v8138 = vpop.f32.mrf.mxu0
    %v8139 = vadd.f32 %v7995, %v8138
    %8140 = vmatprep.mubr.bf16.mxu0 0
    %8141 = vmatmul.mubr.bf16.gmra.mxu0 %v7969
    %v8142 = vpop.f32.mrf.mxu0
    %v8143 = vadd.f32 %v7991, %v8142
    %v8144 = vpop.f32.mrf.mxu0
    %v8145 = vadd.f32 %v7995, %v8144
    %v8146 = vpop.f32.mrf.mxu0
    %v8147 = vadd.f32 %v7991, %v8146
    %v8148 = vpop.f32.mrf.mxu0
    %v8149 = vadd.f32 %v7995, %v8148
    %8150 = vdwg.mxu0
    %8151 = vst [vmem:[%s16] sm:$0xff] %v8113
    %8152 = vst [vmem:[%s16 + $0x8] sm:$0xff] %v8115
    %8153 = vst [vmem:[%s16 + $0x10] sm:$0xff] %v8117
    %8154 = vst [vmem:[%s16 + $0x18] sm:$0xff] %v8119
    %8155 = vst [vmem:[%s16 + $0x20] sm:$0xff] %v8123
    %8156 = vst [vmem:[%s16 + $0x28] sm:$0xff] %v8125
    %8157 = vst [vmem:[%s16 + $0x30] sm:$0xff] %v8127
    %8158 = vst [vmem:[%s16 + $0x38] sm:$0xff] %v8129
    %8159 = vst [vmem:[%s16 + $0x40] sm:$0xff] %v8133
    %8160 = vst [vmem:[%s16 + $0x48] sm:$0xff] %v8135
    %8161 = vst [vmem:[%s16 + $0x50] sm:$0xff] %v8137
    %8162 = vst [vmem:[%s16 + $0x58] sm:$0xff] %v8139
    %8163 = vst [vmem:[%s16 + $0x60] sm:$0xff] %v8143
    %8164 = vst [vmem:[%s16 + $0x68] sm:$0xff] %v8145
    %8165 = vst [vmem:[%s16 + $0x70] sm:$0xff] %v8147
    %8166 = vst [vmem:[%s16 + $0x78] sm:$0xff] %v8149
    // Predicated region
    $region94: #{lenet_forward.1} parent=1 // pred_check
      _
    $region95: #{lenet_forward.1} parent=1 // pred_check_branch
      %8168 = sbr.rel (0) target = $region97
    $region96: #{lenet_forward.1} parent=1 // pred_region
      _
    $region97: #{lenet_forward.1} parent=1 // pred_fallthru
      _
    // Predicated region
    $region98: #{lenet_forward.1} parent=1 // pred_check
      _
    $region99: #{lenet_forward.1} parent=1 // pred_check_branch
      %8170 = sbr.rel (0) target = $region101
    $region100: #{lenet_forward.1} parent=1 // pred_region
      _
    $region101: #{lenet_forward.1} parent=1 // pred_fallthru
      _
    %8171 = vsyncpa [#allocation5], 1
    %8172 = vsyncpa [#allocation7], 1
    %8173 = vsyncpa [#allocation10], 1
    %8174 = vsyncpa [#allocation13], 1

</llo_original>
